<compile_context>
chip_gen: v6e
topology: v6e:2x2x1
jax: 0.10.0
libtpu: 0.0.40
codegen_flags: <defaults>
</compile_context>

<pallas_src>
from functools import partial

import numpy as np
import jax
import jax.numpy as jnp
from jax import lax
from jax.experimental import pallas as pl
from jax.experimental.pallas import tpu as pltpu

BN_EPS = 1e-5


def _round_up(n, m):
    return -(-n // m) * m


# ---------------------------------------------------------------------------
# In-kernel helpers
# ---------------------------------------------------------------------------
def _pool2x2_relu6(y_flat, n, ho, wo, c):
    """2x2 average pool + relu6 on flattened conv output.

    y_flat: (n*2*ho*2*wo, c) with rows ordered (b, h, w).
    Returns (n, ho, wo, c).  Only uses leading-dim reshapes (last dim kept)
    and static slices -> pure VPU, no MXU, no pool matrices.
    """
    y = y_flat.reshape(n * ho, 2, wo, 2, c)
    p = 0.25 * (y[:, 0, :, 0, :] + y[:, 0, :, 1, :] +
                y[:, 1, :, 0, :] + y[:, 1, :, 1, :])
    return jnp.clip(p, 0.0, 6.0).reshape(n, ho, wo, c)


# ---------------------------------------------------------------------------
# Fused forward kernel: one batch tile per grid step.
#   x_ref   : (BT, H, W, 3)            NHWC input tile
#   w0_ref  : (27, 32)                 conv0 im2col weight, BN0 folded
#   b0_ref  : (1, 32)                  folded BN0 bias
#   w1_ref  : (800, 64)                conv1 im2col weight, BN1 folded, Cout padded 57->64
#   b1_ref  : (1, 64)
#   fcw_ref : (H2*W2*64, NC_PAD)       fc weight, NCHW-flatten order folded in
#   fcb_ref : (1, NC_PAD)
#   o_ref   : (BT, NC_PAD)
#   scratch : zero-halo'd conv inputs (VMEM)
# ---------------------------------------------------------------------------
def _fused_forward_kernel(x_ref, w0_ref, b0_ref, w1_ref, b1_ref,
                          fcw_ref, fcb_ref, o_ref,
                          xpad_ref, apad_ref, *, H, W):
    BT = x_ref.shape[0]
    Cin = x_ref.shape[-1]           # 3
    C0 = w0_ref.shape[-1]           # 32
    C1 = w1_ref.shape[-1]           # 64 (57 + zero pad)
    H1, W1 = H // 2, W // 2
    H2, W2 = H1 // 2, W1 // 2
    f32 = jnp.float32

    # ---- conv0 3x3 'same' (eval BN0 folded) ---------------------------------
    # Zero only the 1-pixel halo frame; interior is fully overwritten.
    xpad_ref[:, 0:1, :, :] = jnp.zeros((BT, 1, W + 2, Cin), f32)
    xpad_ref[:, H + 1:H + 2, :, :] = jnp.zeros((BT, 1, W + 2, Cin), f32)
    xpad_ref[:, 1:1 + H, 0:1, :] = jnp.zeros((BT, H, 1, Cin), f32)
    xpad_ref[:, 1:1 + H, W + 1:W + 2, :] = jnp.zeros((BT, H, 1, Cin), f32)
    xpad_ref[:, 1:1 + H, 1:1 + W, :] = x_ref[...]

    # im2col: (BT*H*W, 9*Cin) -> single MXU matmul, K = 27
    patches0 = jnp.concatenate(
        [xpad_ref[:, kh:kh + H, kw:kw + W, :].reshape(BT * H * W, Cin)
         for kh in range(3) for kw in range(3)], axis=-1)
    y0 = jnp.dot(patches0, w0_ref[...],
                 preferred_element_type=f32) + b0_ref[...]        # (BT*H*W, 32)

    # ---- avgpool(2) + relu6 (VPU) -------------------------------------------
    a0 = _pool2x2_relu6(y0, BT, H1, W1, C0)                        # (BT,H1,W1,32)

    # ---- conv1 5x5 'same' (eval BN1 folded; Cout zero-padded to 64) ---------
    apad_ref[:, 0:2, :, :] = jnp.zeros((BT, 2, W1 + 4, C0), f32)
    apad_ref[:, H1 + 2:H1 + 4, :, :] = jnp.zeros((BT, 2, W1 + 4, C0), f32)
    apad_ref[:, 2:2 + H1, 0:2, :] = jnp.zeros((BT, H1, 2, C0), f32)
    apad_ref[:, 2:2 + H1, W1 + 2:W1 + 4, :] = jnp.zeros((BT, H1, 2, C0), f32)
    apad_ref[:, 2:2 + H1, 2:2 + W1, :] = a0

    # im2col: (BT*H1*W1, 25*32) -> single MXU matmul, K = 800
    patches1 = jnp.concatenate(
        [apad_ref[:, kh:kh + H1, kw:kw + W1, :].reshape(BT * H1 * W1, C0)
         for kh in range(5) for kw in range(5)], axis=-1)
    y1 = jnp.dot(patches1, w1_ref[...],
                 preferred_element_type=f32) + b1_ref[...]         # (BT*H1*W1, 64)

    # ---- avgpool(2) + relu6 (VPU) -------------------------------------------
    a1 = _pool2x2_relu6(y1, BT, H2, W2, C1)                        # (BT,H2,W2,64)

    # ---- dropout (eval identity), flatten (order folded into fcw), fc -------
    # Single (BT, H2*W2*64) x (H2*W2*64, NC_PAD) matmul instead of a per-
    # position loop; spatial-major / channel-minor column order matches fcw.
    feat = jnp.concatenate(
        [a1[:, ph, pw, :] for ph in range(H2) for pw in range(W2)], axis=-1)
    o_ref[...] = jnp.dot(feat, fcw_ref[...],
                         preferred_element_type=f32) + fcb_ref[...]


# ---------------------------------------------------------------------------
# One-time parameter preparation (fold BN, flatten / pad weights).
# ---------------------------------------------------------------------------
def prepare_params(params, input_shape=(3, 16, 16), num_classes=3):
    H, W = input_shape[1], input_shape[2]
    H2, W2 = H // 4, W // 4
    c1 = params["conv1_w"].shape[0]                         # 57
    c1_pad = _round_up(c1, 8)                               # 64
    nc_pad = max(8, _round_up(num_classes, 8))              # 8

    # conv0 + bn0 (eval): y = conv(x, w*s) + (beta - mean*s)
    s0 = params["bn0_gamma"] * lax.rsqrt(params["bn0_var"] + BN_EPS)
    w0 = params["conv0_w"] * s0[:, None, None, None]        # OIHW scaled
    b0 = params["bn0_beta"] - params["bn0_mean"] * s0
    # im2col order (kh, kw, cin) along K
    w0k = jnp.transpose(w0, (2, 3, 1, 0)).reshape(9 * 3, 32)

    # conv1 + bn1, out channels zero-padded 57 -> 64
    s1 = params["bn1_gamma"] * lax.rsqrt(params["bn1_var"] + BN_EPS)
    w1 = params["conv1_w"] * s1[:, None, None, None]
    b1 = params["bn1_beta"] - params["bn1_mean"] * s1
    w1k = jnp.transpose(w1, (2, 3, 1, 0)).reshape(25 * 32, c1)
    w1k = jnp.pad(w1k, ((0, 0), (0, c1_pad - c1)))
    b1k = jnp.pad(b1, (0, c1_pad - c1)).reshape(1, c1_pad)

    # fc: fold the PyTorch NCHW flatten order into the weight; pad channels
    # and classes; pre-flatten to (H2*W2*c1_pad, nc_pad) so the kernel does a
    # single matmul.  fcw[(h*W2+w)*c1_pad + c, n] = fc_w[n, c*H2*W2 + h*W2 + w]
    fcw = params["fc_w"].reshape(num_classes, c1, H2, W2)   # (n, c, h, w)
    fcw = jnp.transpose(fcw, (2, 3, 1, 0))                  # (h, w, c, n)
    fcw = jnp.pad(fcw, ((0, 0), (0, 0), (0, c1_pad - c1),
                        (0, nc_pad - num_classes)))
    fcw = fcw.reshape(H2 * W2 * c1_pad, nc_pad)
    fcb = jnp.pad(params["fc_b"], (0, nc_pad - num_classes)).reshape(1, nc_pad)

    return {"w0": w0k, "b0": b0.reshape(1, 32), "w1": w1k, "b1": b1k,
            "fcw": fcw, "fcb": fcb}


# ---------------------------------------------------------------------------
# Forward wrapper: one transpose + one fused pallas_call + one slice.
# ---------------------------------------------------------------------------
@partial(jax.jit, static_argnames=("num_classes", "batch_block"))
def simple_nn2d_forward(kparams, x_nchw, num_classes=3, batch_block=None):
    B, Cin, H, W = x_nchw.shape
    assert H % 4 == 0 and W % 4 == 0
    bt = batch_block if batch_block is not None else min(B, 8)
    assert B % bt == 0, "batch must be divisible by the batch tile"
    nb = B // bt
    H1, W1 = H // 2, W // 2
    C0 = kparams["w0"].shape[-1]
    nc_pad = kparams["fcw"].shape[-1]

    x = jnp.transpose(x_nchw, (0, 2, 3, 1)).astype(jnp.float32)   # NCHW -> NHWC

    operands = (x, kparams["w0"], kparams["b0"], kparams["w1"], kparams["b1"],
                kparams["fcw"], kparams["fcb"])

    def resident(a):  # weights: same block every step -> fetched once
        n = a.ndim
        return pl.BlockSpec(a.shape, lambda i, n=n: (0,) * n)

    out = pl.pallas_call(
        partial(_fused_forward_kernel, H=H, W=W),
        out_shape=jax.ShapeDtypeStruct((B, nc_pad), jnp.float32),
        grid=(nb,),
        in_specs=[pl.BlockSpec((bt, H, W, Cin), lambda i: (i, 0, 0, 0))]
                 + [resident(a) for a in operands[1:]],
        out_specs=pl.BlockSpec((bt, nc_pad), lambda i: (i, 0)),
        scratch_shapes=[
            pltpu.VMEM((bt, H + 2, W + 2, Cin), jnp.float32),   # conv0 'same' pad
            pltpu.VMEM((bt, H1 + 4, W1 + 4, C0), jnp.float32),  # conv1 'same' pad
        ],
        compiler_params=pltpu.CompilerParams(
            dimension_semantics=("parallel",),        # batch tiles -> 2 TCs on v7x
            vmem_limit_bytes=32 * 1024 * 1024),
    )(*operands)
    return out[:, :num_classes]


# ---------------------------------------------------------------------------
# Parameter init (PyTorch-style layouts: OIHW convs, (out,in) linear).
# ---------------------------------------------------------------------------
def init_params(key, input_shape=(3, 16, 16), num_classes=3):
    H = input_shape[-1]
    fc_in = 57 * (H // 2 // 2) ** 2
    ks = jax.random.split(key, 12)

    def u(k, shape, fan_in):
        b = 1.0 / np.sqrt(fan_in)
        return jax.random.uniform(k, shape, jnp.float32, -b, b)

    return {
        "conv0_w": u(ks[0], (32, 3, 3, 3), 3 * 3 * 3),
        "bn0_gamma": jax.random.uniform(ks[1], (32,), jnp.float32, 0.5, 1.5),
        "bn0_beta": 0.1 * jax.random.normal(ks[2], (32,), jnp.float32),
        "bn0_mean": 0.1 * jax.random.normal(ks[3], (32,), jnp.float32),
        "bn0_var": jax.random.uniform(ks[4], (32,), jnp.float32, 0.5, 1.5),
        "conv1_w": u(ks[5], (57, 32, 5, 5), 32 * 5 * 5),
        "bn1_gamma": jax.random.uniform(ks[6], (57,), jnp.float32, 0.5, 1.5),
        "bn1_beta": 0.1 * jax.random.normal(ks[7], (57,), jnp.float32),
        "bn1_mean": 0.1 * jax.random.normal(ks[8], (57,), jnp.float32),
        "bn1_var": jax.random.uniform(ks[9], (57,), jnp.float32, 0.5, 1.5),
        "fc_w": u(ks[10], (num_classes, fc_in), fc_in),
        "fc_b": u(ks[11], (num_classes,), fc_in),
    }


# ---------------------------------------------------------------------------
# Pure-JAX reference (eval-mode semantics of the PyTorch module).
# ---------------------------------------------------------------------------
def _reference_forward(params, x_nchw):
    dn = ("NCHW", "OIHW", "NCHW")
    hi = lax.Precision.HIGHEST

    def bn(y, g, b, m, v):
        s = g * lax.rsqrt(v + BN_EPS)
        return y * s[None, :, None, None] + (b - m * s)[None, :, None, None]

    def pool_relu6(y):
        B, C, H, W = y.shape
        y = y.reshape(B, C, H // 2, 2, W // 2, 2).mean(axis=(3, 5))
        return jnp.clip(y, 0.0, 6.0)

    y = x_nchw.astype(jnp.float32)
    y = lax.conv_general_dilated(y, params["conv0_w"], (1, 1), "SAME",
                                 dimension_numbers=dn, precision=hi)
    y = pool_relu6(bn(y, params["bn0_gamma"], params["bn0_beta"],
                      params["bn0_mean"], params["bn0_var"]))
    y = lax.conv_general_dilated(y, params["conv1_w"], (1, 1), "SAME",
                                 dimension_numbers=dn, precision=hi)
    y = pool_relu6(bn(y, params["bn1_gamma"], params["bn1_beta"],
                      params["bn1_mean"], params["bn1_var"]))
    y = y.reshape(y.shape[0], -1)                    # NCHW flatten (dropout=id)
    return jnp.dot(y, params["fc_w"].T, precision=hi) + params["fc_b"]


if __name__ == "__main__":
    key = jax.random.PRNGKey(0)
    k_param, k_x = jax.random.split(key)

    input_shape = (3, 16, 16)   # small square input; fc_in = 57 * 4 * 4
    num_classes = 3
    batch = 2

    params = init_params(k_param, input_shape, num_classes)
    kparams = prepare_params(params, input_shape, num_classes)   # once, at init
    x = jax.random.normal(k_x, (batch,) + input_shape, jnp.float32)  # NCHW

    out = jax.block_until_ready(
        simple_nn2d_forward(kparams, x, num_classes=num_classes))
    ref = jax.block_until_ready(_reference_forward(params, x))

    assert out.shape == (batch, num_classes), out.shape
    err = float(jnp.max(jnp.abs(out - ref)))
    assert jnp.allclose(out, ref, rtol=2e-3, atol=2e-3), \
        f"mismatch vs reference, max abs err = {err}"
    print("KERNEL_OK")
</pallas_src>

<mosaic_0001>
module attributes {stable_mosaic.version = 11 : i64} {
  func.func @_fused_forward_kernel(%arg0: i32, %arg1: memref<2x16x16x3xf32, #tpu.memory_space<vmem>>, %arg2: memref<27x32xf32, #tpu.memory_space<vmem>>, %arg3: memref<1x32xf32, #tpu.memory_space<vmem>>, %arg4: memref<800x64xf32, #tpu.memory_space<vmem>>, %arg5: memref<1x64xf32, #tpu.memory_space<vmem>>, %arg6: memref<1024x8xf32, #tpu.memory_space<vmem>>, %arg7: memref<1x8xf32, #tpu.memory_space<vmem>>, %arg8: memref<2x8xf32, #tpu.memory_space<vmem>>, %arg9: memref<2x18x18x3xf32, #tpu.memory_space<vmem>>, %arg10: memref<2x12x12x32xf32, #tpu.memory_space<vmem>>) attributes {dimension_semantics = [#tpu.dimension_semantics<parallel>], iteration_bounds = array<i64: 1>, scalar_prefetch = 0 : i64, scratch_operands = 2 : i64, tpu.core_type = #tpu.core_type<tc>, window_params = [{transform_indices = @transform_0, window_bounds = array<i64: 2, 16, 16, 3>}, {pipeline_mode = #tpu.pipeline_mode<synchronous>, transform_indices = @transform_1, window_bounds = array<i64: 27, 32>}, {pipeline_mode = #tpu.pipeline_mode<synchronous>, transform_indices = @transform_2, window_bounds = array<i64: 1, 32>}, {pipeline_mode = #tpu.pipeline_mode<synchronous>, transform_indices = @transform_3, window_bounds = array<i64: 800, 64>}, {pipeline_mode = #tpu.pipeline_mode<synchronous>, transform_indices = @transform_4, window_bounds = array<i64: 1, 64>}, {pipeline_mode = #tpu.pipeline_mode<synchronous>, transform_indices = @transform_5, window_bounds = array<i64: 1024, 8>}, {pipeline_mode = #tpu.pipeline_mode<synchronous>, transform_indices = @transform_6, window_bounds = array<i64: 1, 8>}, {transform_indices = @transform_7, window_bounds = array<i64: 2, 8>}]} {
    %cst = arith.constant 0.000000e+00 : f32
    %0 = vector.broadcast %cst : f32 to vector<2x1x18x3xf32>
    %c0 = arith.constant 0 : index
    %c0_0 = arith.constant 0 : index
    %c0_1 = arith.constant 0 : index
    %c0_2 = arith.constant 0 : index
    %1 = vector.load %arg9[%c0, %c0_0, %c0_1, %c0_2] : memref<2x18x18x3xf32, #tpu.memory_space<vmem>>, vector<2x1x18x3xf32>
    tpu.vector_store %arg9[%c0, %c0_0, %c0_1, %c0_2], %0 {strides = array<i32>} : memref<2x18x18x3xf32, #tpu.memory_space<vmem>>, vector<2x1x18x3xf32>,
    %cst_3 = arith.constant 0.000000e+00 : f32
    %2 = vector.broadcast %cst_3 : f32 to vector<2x1x18x3xf32>
    %c0_4 = arith.constant 0 : index
    %c17 = arith.constant 17 : index
    %c0_5 = arith.constant 0 : index
    %c0_6 = arith.constant 0 : index
    %3 = vector.load %arg9[%c0_4, %c17, %c0_5, %c0_6] : memref<2x18x18x3xf32, #tpu.memory_space<vmem>>, vector<2x1x18x3xf32>
    tpu.vector_store %arg9[%c0_4, %c17, %c0_5, %c0_6], %2 {strides = array<i32>} : memref<2x18x18x3xf32, #tpu.memory_space<vmem>>, vector<2x1x18x3xf32>,
    %cst_7 = arith.constant 0.000000e+00 : f32
    %4 = vector.broadcast %cst_7 : f32 to vector<2x16x1x3xf32>
    %c0_8 = arith.constant 0 : index
    %c1 = arith.constant 1 : index
    %c0_9 = arith.constant 0 : index
    %c0_10 = arith.constant 0 : index
    %5 = vector.load %arg9[%c0_8, %c1, %c0_9, %c0_10] : memref<2x18x18x3xf32, #tpu.memory_space<vmem>>, vector<2x16x1x3xf32>
    tpu.vector_store %arg9[%c0_8, %c1, %c0_9, %c0_10], %4 {strides = array<i32>} : memref<2x18x18x3xf32, #tpu.memory_space<vmem>>, vector<2x16x1x3xf32>,
    %cst_11 = arith.constant 0.000000e+00 : f32
    %6 = vector.broadcast %cst_11 : f32 to vector<2x16x1x3xf32>
    %c0_12 = arith.constant 0 : index
    %c1_13 = arith.constant 1 : index
    %c17_14 = arith.constant 17 : index
    %c0_15 = arith.constant 0 : index
    %7 = vector.load %arg9[%c0_12, %c1_13, %c17_14, %c0_15] : memref<2x18x18x3xf32, #tpu.memory_space<vmem>>, vector<2x16x1x3xf32>
    tpu.vector_store %arg9[%c0_12, %c1_13, %c17_14, %c0_15], %6 {strides = array<i32>} : memref<2x18x18x3xf32, #tpu.memory_space<vmem>>, vector<2x16x1x3xf32>,
    %c0_16 = arith.constant 0 : index
    %c0_17 = arith.constant 0 : index
    %c0_18 = arith.constant 0 : index
    %c0_19 = arith.constant 0 : index
    %8 = vector.load %arg1[%c0_16, %c0_17, %c0_18, %c0_19] : memref<2x16x16x3xf32, #tpu.memory_space<vmem>>, vector<2x16x16x3xf32>
    %c0_20 = arith.constant 0 : index
    %c1_21 = arith.constant 1 : index
    %c1_22 = arith.constant 1 : index
    %c0_23 = arith.constant 0 : index
    %9 = vector.load %arg9[%c0_20, %c1_21, %c1_22, %c0_23] : memref<2x18x18x3xf32, #tpu.memory_space<vmem>>, vector<2x16x16x3xf32>
    tpu.vector_store %arg9[%c0_20, %c1_21, %c1_22, %c0_23], %8 {strides = array<i32>} : memref<2x18x18x3xf32, #tpu.memory_space<vmem>>, vector<2x16x16x3xf32>,
    %c0_24 = arith.constant 0 : index
    %c0_25 = arith.constant 0 : index
    %c0_26 = arith.constant 0 : index
    %c0_27 = arith.constant 0 : index
    %10 = vector.load %arg9[%c0_24, %c0_25, %c0_26, %c0_27] : memref<2x18x18x3xf32, #tpu.memory_space<vmem>>, vector<2x16x16x3xf32>
    %11 = vector.shape_cast %10 : vector<2x16x16x3xf32> to vector<512x3xf32>
    %c0_28 = arith.constant 0 : index
    %c0_29 = arith.constant 0 : index
    %c1_30 = arith.constant 1 : index
    %c0_31 = arith.constant 0 : index
    %12 = vector.load %arg9[%c0_28, %c0_29, %c1_30, %c0_31] : memref<2x18x18x3xf32, #tpu.memory_space<vmem>>, vector<2x16x16x3xf32>
    %13 = vector.shape_cast %12 : vector<2x16x16x3xf32> to vector<512x3xf32>
    %c0_32 = arith.constant 0 : index
    %c0_33 = arith.constant 0 : index
    %c2 = arith.constant 2 : index
    %c0_34 = arith.constant 0 : index
    %14 = vector.load %arg9[%c0_32, %c0_33, %c2, %c0_34] : memref<2x18x18x3xf32, #tpu.memory_space<vmem>>, vector<2x16x16x3xf32>
    %15 = vector.shape_cast %14 : vector<2x16x16x3xf32> to vector<512x3xf32>
    %c0_35 = arith.constant 0 : index
    %c1_36 = arith.constant 1 : index
    %c0_37 = arith.constant 0 : index
    %c0_38 = arith.constant 0 : index
    %16 = vector.load %arg9[%c0_35, %c1_36, %c0_37, %c0_38] : memref<2x18x18x3xf32, #tpu.memory_space<vmem>>, vector<2x16x16x3xf32>
    %17 = vector.shape_cast %16 : vector<2x16x16x3xf32> to vector<512x3xf32>
    %c0_39 = arith.constant 0 : index
    %c1_40 = arith.constant 1 : index
    %c1_41 = arith.constant 1 : index
    %c0_42 = arith.constant 0 : index
    %18 = vector.load %arg9[%c0_39, %c1_40, %c1_41, %c0_42] : memref<2x18x18x3xf32, #tpu.memory_space<vmem>>, vector<2x16x16x3xf32>
    %19 = vector.shape_cast %18 : vector<2x16x16x3xf32> to vector<512x3xf32>
    %c0_43 = arith.constant 0 : index
    %c1_44 = arith.constant 1 : index
    %c2_45 = arith.constant 2 : index
    %c0_46 = arith.constant 0 : index
    %20 = vector.load %arg9[%c0_43, %c1_44, %c2_45, %c0_46] : memref<2x18x18x3xf32, #tpu.memory_space<vmem>>, vector<2x16x16x3xf32>
    %21 = vector.shape_cast %20 : vector<2x16x16x3xf32> to vector<512x3xf32>
    %c0_47 = arith.constant 0 : index
    %c2_48 = arith.constant 2 : index
    %c0_49 = arith.constant 0 : index
    %c0_50 = arith.constant 0 : index
    %22 = vector.load %arg9[%c0_47, %c2_48, %c0_49, %c0_50] : memref<2x18x18x3xf32, #tpu.memory_space<vmem>>, vector<2x16x16x3xf32>
    %23 = vector.shape_cast %22 : vector<2x16x16x3xf32> to vector<512x3xf32>
    %c0_51 = arith.constant 0 : index
    %c2_52 = arith.constant 2 : index
    %c1_53 = arith.constant 1 : index
    %c0_54 = arith.constant 0 : index
    %24 = vector.load %arg9[%c0_51, %c2_52, %c1_53, %c0_54] : memref<2x18x18x3xf32, #tpu.memory_space<vmem>>, vector<2x16x16x3xf32>
    %25 = vector.shape_cast %24 : vector<2x16x16x3xf32> to vector<512x3xf32>
    %c0_55 = arith.constant 0 : index
    %c2_56 = arith.constant 2 : index
    %c2_57 = arith.constant 2 : index
    %c0_58 = arith.constant 0 : index
    %26 = vector.load %arg9[%c0_55, %c2_56, %c2_57, %c0_58] : memref<2x18x18x3xf32, #tpu.memory_space<vmem>>, vector<2x16x16x3xf32>
    %27 = vector.shape_cast %26 : vector<2x16x16x3xf32> to vector<512x3xf32>
    %28 = tpu.concatenate %11, %13, %15, %17, %19, %21, %23, %25, %27 in 1 : vector<512x3xf32>, vector<512x3xf32>, vector<512x3xf32>, vector<512x3xf32>, vector<512x3xf32>, vector<512x3xf32>, vector<512x3xf32>, vector<512x3xf32>, vector<512x3xf32> -> vector<512x27xf32>
    %c0_59 = arith.constant 0 : index
    %c0_60 = arith.constant 0 : index
    %29 = vector.load %arg2[%c0_59, %c0_60] : memref<27x32xf32, #tpu.memory_space<vmem>>, vector<27x32xf32>
    %cst_61 = arith.constant dense<0.000000e+00> : vector<512x32xf32>
    %30 = tpu.matmul %28, %29, %cst_61 {dimension_numbers = #tpu.dot_dimension_numbers<[1], [0], [0], [1], [0, 0, 1, 1], [], []>} : vector<512x27xf32>, vector<27x32xf32>, vector<512x32xf32> -> vector<512x32xf32>
    %c0_62 = arith.constant 0 : index
    %c0_63 = arith.constant 0 : index
    %31 = vector.load %arg3[%c0_62, %c0_63] : memref<1x32xf32, #tpu.memory_space<vmem>>, vector<1x32xf32>
    %32 = vector.broadcast %31 : vector<1x32xf32> to vector<512x32xf32>
    %33 = arith.addf %30, %32 : vector<512x32xf32>
    %34 = vector.shape_cast %33 : vector<512x32xf32> to vector<16x2x8x2x32xf32>
    %35 = vector.extract_strided_slice %34 {offsets = [0, 0, 0, 0, 0], sizes = [16, 1, 8, 1, 32], strides = [1, 1, 1, 1, 1]} : vector<16x2x8x2x32xf32> to vector<16x1x8x1x32xf32>
    %36 = vector.shape_cast %35 : vector<16x1x8x1x32xf32> to vector<16x8x32xf32>
    %37 = vector.extract_strided_slice %34 {offsets = [0, 0, 0, 1, 0], sizes = [16, 1, 8, 1, 32], strides = [1, 1, 1, 1, 1]} : vector<16x2x8x2x32xf32> to vector<16x1x8x1x32xf32>
    %38 = vector.shape_cast %37 : vector<16x1x8x1x32xf32> to vector<16x8x32xf32>
    %39 = arith.addf %36, %38 : vector<16x8x32xf32>
    %40 = vector.extract_strided_slice %34 {offsets = [0, 1, 0, 0, 0], sizes = [16, 1, 8, 1, 32], strides = [1, 1, 1, 1, 1]} : vector<16x2x8x2x32xf32> to vector<16x1x8x1x32xf32>
    %41 = vector.shape_cast %40 : vector<16x1x8x1x32xf32> to vector<16x8x32xf32>
    %42 = arith.addf %39, %41 : vector<16x8x32xf32>
    %43 = vector.extract_strided_slice %34 {offsets = [0, 1, 0, 1, 0], sizes = [16, 1, 8, 1, 32], strides = [1, 1, 1, 1, 1]} : vector<16x2x8x2x32xf32> to vector<16x1x8x1x32xf32>
    %44 = vector.shape_cast %43 : vector<16x1x8x1x32xf32> to vector<16x8x32xf32>
    %45 = arith.addf %42, %44 : vector<16x8x32xf32>
    %cst_64 = arith.constant 2.500000e-01 : f32
    %46 = vector.broadcast %cst_64 : f32 to vector<16x8x32xf32>
    %47 = arith.mulf %46, %45 : vector<16x8x32xf32>
    %cst_65 = arith.constant 0.000000e+00 : f32
    %cst_66 = arith.constant 6.000000e+00 : f32
    %48 = vector.broadcast %cst_65 : f32 to vector<16x8x32xf32>
    %49 = arith.maximumf %48, %47 : vector<16x8x32xf32>
    %50 = vector.broadcast %cst_66 : f32 to vector<16x8x32xf32>
    %51 = arith.minimumf %50, %49 : vector<16x8x32xf32>
    %52 = vector.shape_cast %51 : vector<16x8x32xf32> to vector<2x8x8x32xf32>
    %cst_67 = arith.constant 0.000000e+00 : f32
    %53 = vector.broadcast %cst_67 : f32 to vector<2x2x12x32xf32>
    %c0_68 = arith.constant 0 : index
    %c0_69 = arith.constant 0 : index
    %c0_70 = arith.constant 0 : index
    %c0_71 = arith.constant 0 : index
    %54 = vector.load %arg10[%c0_68, %c0_69, %c0_70, %c0_71] : memref<2x12x12x32xf32, #tpu.memory_space<vmem>>, vector<2x2x12x32xf32>
    tpu.vector_store %arg10[%c0_68, %c0_69, %c0_70, %c0_71], %53 {strides = array<i32>} : memref<2x12x12x32xf32, #tpu.memory_space<vmem>>, vector<2x2x12x32xf32>,
    %cst_72 = arith.constant 0.000000e+00 : f32
    %55 = vector.broadcast %cst_72 : f32 to vector<2x2x12x32xf32>
    %c0_73 = arith.constant 0 : index
    %c10 = arith.constant 10 : index
    %c0_74 = arith.constant 0 : index
    %c0_75 = arith.constant 0 : index
    %56 = vector.load %arg10[%c0_73, %c10, %c0_74, %c0_75] : memref<2x12x12x32xf32, #tpu.memory_space<vmem>>, vector<2x2x12x32xf32>
    tpu.vector_store %arg10[%c0_73, %c10, %c0_74, %c0_75], %55 {strides = array<i32>} : memref<2x12x12x32xf32, #tpu.memory_space<vmem>>, vector<2x2x12x32xf32>,
    %cst_76 = arith.constant 0.000000e+00 : f32
    %57 = vector.broadcast %cst_76 : f32 to vector<2x8x2x32xf32>
    %c0_77 = arith.constant 0 : index
    %c2_78 = arith.constant 2 : index
    %c0_79 = arith.constant 0 : index
    %c0_80 = arith.constant 0 : index
    %58 = vector.load %arg10[%c0_77, %c2_78, %c0_79, %c0_80] : memref<2x12x12x32xf32, #tpu.memory_space<vmem>>, vector<2x8x2x32xf32>
    tpu.vector_store %arg10[%c0_77, %c2_78, %c0_79, %c0_80], %57 {strides = array<i32>} : memref<2x12x12x32xf32, #tpu.memory_space<vmem>>, vector<2x8x2x32xf32>,
    %cst_81 = arith.constant 0.000000e+00 : f32
    %59 = vector.broadcast %cst_81 : f32 to vector<2x8x2x32xf32>
    %c0_82 = arith.constant 0 : index
    %c2_83 = arith.constant 2 : index
    %c10_84 = arith.constant 10 : index
    %c0_85 = arith.constant 0 : index
    %60 = vector.load %arg10[%c0_82, %c2_83, %c10_84, %c0_85] : memref<2x12x12x32xf32, #tpu.memory_space<vmem>>, vector<2x8x2x32xf32>
    tpu.vector_store %arg10[%c0_82, %c2_83, %c10_84, %c0_85], %59 {strides = array<i32>} : memref<2x12x12x32xf32, #tpu.memory_space<vmem>>, vector<2x8x2x32xf32>,
    %c0_86 = arith.constant 0 : index
    %c2_87 = arith.constant 2 : index
    %c2_88 = arith.constant 2 : index
    %c0_89 = arith.constant 0 : index
    %61 = vector.load %arg10[%c0_86, %c2_87, %c2_88, %c0_89] : memref<2x12x12x32xf32, #tpu.memory_space<vmem>>, vector<2x8x8x32xf32>
    tpu.vector_store %arg10[%c0_86, %c2_87, %c2_88, %c0_89], %52 {strides = array<i32>} : memref<2x12x12x32xf32, #tpu.memory_space<vmem>>, vector<2x8x8x32xf32>,
    %c0_90 = arith.constant 0 : index
    %c0_91 = arith.constant 0 : index
    %c0_92 = arith.constant 0 : index
    %c0_93 = arith.constant 0 : index
    %62 = vector.load %arg10[%c0_90, %c0_91, %c0_92, %c0_93] : memref<2x12x12x32xf32, #tpu.memory_space<vmem>>, vector<2x8x8x32xf32>
    %63 = vector.shape_cast %62 : vector<2x8x8x32xf32> to vector<128x32xf32>
    %c0_94 = arith.constant 0 : index
    %c0_95 = arith.constant 0 : index
    %c1_96 = arith.constant 1 : index
    %c0_97 = arith.constant 0 : index
    %64 = vector.load %arg10[%c0_94, %c0_95, %c1_96, %c0_97] : memref<2x12x12x32xf32, #tpu.memory_space<vmem>>, vector<2x8x8x32xf32>
    %65 = vector.shape_cast %64 : vector<2x8x8x32xf32> to vector<128x32xf32>
    %c0_98 = arith.constant 0 : index
    %c0_99 = arith.constant 0 : index
    %c2_100 = arith.constant 2 : index
    %c0_101 = arith.constant 0 : index
    %66 = vector.load %arg10[%c0_98, %c0_99, %c2_100, %c0_101] : memref<2x12x12x32xf32, #tpu.memory_space<vmem>>, vector<2x8x8x32xf32>
    %67 = vector.shape_cast %66 : vector<2x8x8x32xf32> to vector<128x32xf32>
    %c0_102 = arith.constant 0 : index
    %c0_103 = arith.constant 0 : index
    %c3 = arith.constant 3 : index
    %c0_104 = arith.constant 0 : index
    %68 = vector.load %arg10[%c0_102, %c0_103, %c3, %c0_104] : memref<2x12x12x32xf32, #tpu.memory_space<vmem>>, vector<2x8x8x32xf32>
    %69 = vector.shape_cast %68 : vector<2x8x8x32xf32> to vector<128x32xf32>
    %c0_105 = arith.constant 0 : index
    %c0_106 = arith.constant 0 : index
    %c4 = arith.constant 4 : index
    %c0_107 = arith.constant 0 : index
    %70 = vector.load %arg10[%c0_105, %c0_106, %c4, %c0_107] : memref<2x12x12x32xf32, #tpu.memory_space<vmem>>, vector<2x8x8x32xf32>
    %71 = vector.shape_cast %70 : vector<2x8x8x32xf32> to vector<128x32xf32>
    %c0_108 = arith.constant 0 : index
    %c1_109 = arith.constant 1 : index
    %c0_110 = arith.constant 0 : index
    %c0_111 = arith.constant 0 : index
    %72 = vector.load %arg10[%c0_108, %c1_109, %c0_110, %c0_111] : memref<2x12x12x32xf32, #tpu.memory_space<vmem>>, vector<2x8x8x32xf32>
    %73 = vector.shape_cast %72 : vector<2x8x8x32xf32> to vector<128x32xf32>
    %c0_112 = arith.constant 0 : index
    %c1_113 = arith.constant 1 : index
    %c1_114 = arith.constant 1 : index
    %c0_115 = arith.constant 0 : index
    %74 = vector.load %arg10[%c0_112, %c1_113, %c1_114, %c0_115] : memref<2x12x12x32xf32, #tpu.memory_space<vmem>>, vector<2x8x8x32xf32>
    %75 = vector.shape_cast %74 : vector<2x8x8x32xf32> to vector<128x32xf32>
    %c0_116 = arith.constant 0 : index
    %c1_117 = arith.constant 1 : index
    %c2_118 = arith.constant 2 : index
    %c0_119 = arith.constant 0 : index
    %76 = vector.load %arg10[%c0_116, %c1_117, %c2_118, %c0_119] : memref<2x12x12x32xf32, #tpu.memory_space<vmem>>, vector<2x8x8x32xf32>
    %77 = vector.shape_cast %76 : vector<2x8x8x32xf32> to vector<128x32xf32>
    %c0_120 = arith.constant 0 : index
    %c1_121 = arith.constant 1 : index
    %c3_122 = arith.constant 3 : index
    %c0_123 = arith.constant 0 : index
    %78 = vector.load %arg10[%c0_120, %c1_121, %c3_122, %c0_123] : memref<2x12x12x32xf32, #tpu.memory_space<vmem>>, vector<2x8x8x32xf32>
    %79 = vector.shape_cast %78 : vector<2x8x8x32xf32> to vector<128x32xf32>
    %c0_124 = arith.constant 0 : index
    %c1_125 = arith.constant 1 : index
    %c4_126 = arith.constant 4 : index
    %c0_127 = arith.constant 0 : index
    %80 = vector.load %arg10[%c0_124, %c1_125, %c4_126, %c0_127] : memref<2x12x12x32xf32, #tpu.memory_space<vmem>>, vector<2x8x8x32xf32>
    %81 = vector.shape_cast %80 : vector<2x8x8x32xf32> to vector<128x32xf32>
    %c0_128 = arith.constant 0 : index
    %c2_129 = arith.constant 2 : index
    %c0_130 = arith.constant 0 : index
    %c0_131 = arith.constant 0 : index
    %82 = vector.load %arg10[%c0_128, %c2_129, %c0_130, %c0_131] : memref<2x12x12x32xf32, #tpu.memory_space<vmem>>, vector<2x8x8x32xf32>
    %83 = vector.shape_cast %82 : vector<2x8x8x32xf32> to vector<128x32xf32>
    %c0_132 = arith.constant 0 : index
    %c2_133 = arith.constant 2 : index
    %c1_134 = arith.constant 1 : index
    %c0_135 = arith.constant 0 : index
    %84 = vector.load %arg10[%c0_132, %c2_133, %c1_134, %c0_135] : memref<2x12x12x32xf32, #tpu.memory_space<vmem>>, vector<2x8x8x32xf32>
    %85 = vector.shape_cast %84 : vector<2x8x8x32xf32> to vector<128x32xf32>
    %c0_136 = arith.constant 0 : index
    %c2_137 = arith.constant 2 : index
    %c2_138 = arith.constant 2 : index
    %c0_139 = arith.constant 0 : index
    %86 = vector.load %arg10[%c0_136, %c2_137, %c2_138, %c0_139] : memref<2x12x12x32xf32, #tpu.memory_space<vmem>>, vector<2x8x8x32xf32>
    %87 = vector.shape_cast %86 : vector<2x8x8x32xf32> to vector<128x32xf32>
    %c0_140 = arith.constant 0 : index
    %c2_141 = arith.constant 2 : index
    %c3_142 = arith.constant 3 : index
    %c0_143 = arith.constant 0 : index
    %88 = vector.load %arg10[%c0_140, %c2_141, %c3_142, %c0_143] : memref<2x12x12x32xf32, #tpu.memory_space<vmem>>, vector<2x8x8x32xf32>
    %89 = vector.shape_cast %88 : vector<2x8x8x32xf32> to vector<128x32xf32>
    %c0_144 = arith.constant 0 : index
    %c2_145 = arith.constant 2 : index
    %c4_146 = arith.constant 4 : index
    %c0_147 = arith.constant 0 : index
    %90 = vector.load %arg10[%c0_144, %c2_145, %c4_146, %c0_147] : memref<2x12x12x32xf32, #tpu.memory_space<vmem>>, vector<2x8x8x32xf32>
    %91 = vector.shape_cast %90 : vector<2x8x8x32xf32> to vector<128x32xf32>
    %c0_148 = arith.constant 0 : index
    %c3_149 = arith.constant 3 : index
    %c0_150 = arith.constant 0 : index
    %c0_151 = arith.constant 0 : index
    %92 = vector.load %arg10[%c0_148, %c3_149, %c0_150, %c0_151] : memref<2x12x12x32xf32, #tpu.memory_space<vmem>>, vector<2x8x8x32xf32>
    %93 = vector.shape_cast %92 : vector<2x8x8x32xf32> to vector<128x32xf32>
    %c0_152 = arith.constant 0 : index
    %c3_153 = arith.constant 3 : index
    %c1_154 = arith.constant 1 : index
    %c0_155 = arith.constant 0 : index
    %94 = vector.load %arg10[%c0_152, %c3_153, %c1_154, %c0_155] : memref<2x12x12x32xf32, #tpu.memory_space<vmem>>, vector<2x8x8x32xf32>
    %95 = vector.shape_cast %94 : vector<2x8x8x32xf32> to vector<128x32xf32>
    %c0_156 = arith.constant 0 : index
    %c3_157 = arith.constant 3 : index
    %c2_158 = arith.constant 2 : index
    %c0_159 = arith.constant 0 : index
    %96 = vector.load %arg10[%c0_156, %c3_157, %c2_158, %c0_159] : memref<2x12x12x32xf32, #tpu.memory_space<vmem>>, vector<2x8x8x32xf32>
    %97 = vector.shape_cast %96 : vector<2x8x8x32xf32> to vector<128x32xf32>
    %c0_160 = arith.constant 0 : index
    %c3_161 = arith.constant 3 : index
    %c3_162 = arith.constant 3 : index
    %c0_163 = arith.constant 0 : index
    %98 = vector.load %arg10[%c0_160, %c3_161, %c3_162, %c0_163] : memref<2x12x12x32xf32, #tpu.memory_space<vmem>>, vector<2x8x8x32xf32>
    %99 = vector.shape_cast %98 : vector<2x8x8x32xf32> to vector<128x32xf32>
    %c0_164 = arith.constant 0 : index
    %c3_165 = arith.constant 3 : index
    %c4_166 = arith.constant 4 : index
    %c0_167 = arith.constant 0 : index
    %100 = vector.load %arg10[%c0_164, %c3_165, %c4_166, %c0_167] : memref<2x12x12x32xf32, #tpu.memory_space<vmem>>, vector<2x8x8x32xf32>
    %101 = vector.shape_cast %100 : vector<2x8x8x32xf32> to vector<128x32xf32>
    %c0_168 = arith.constant 0 : index
    %c4_169 = arith.constant 4 : index
    %c0_170 = arith.constant 0 : index
    %c0_171 = arith.constant 0 : index
    %102 = vector.load %arg10[%c0_168, %c4_169, %c0_170, %c0_171] : memref<2x12x12x32xf32, #tpu.memory_space<vmem>>, vector<2x8x8x32xf32>
    %103 = vector.shape_cast %102 : vector<2x8x8x32xf32> to vector<128x32xf32>
    %c0_172 = arith.constant 0 : index
    %c4_173 = arith.constant 4 : index
    %c1_174 = arith.constant 1 : index
    %c0_175 = arith.constant 0 : index
    %104 = vector.load %arg10[%c0_172, %c4_173, %c1_174, %c0_175] : memref<2x12x12x32xf32, #tpu.memory_space<vmem>>, vector<2x8x8x32xf32>
    %105 = vector.shape_cast %104 : vector<2x8x8x32xf32> to vector<128x32xf32>
    %c0_176 = arith.constant 0 : index
    %c4_177 = arith.constant 4 : index
    %c2_178 = arith.constant 2 : index
    %c0_179 = arith.constant 0 : index
    %106 = vector.load %arg10[%c0_176, %c4_177, %c2_178, %c0_179] : memref<2x12x12x32xf32, #tpu.memory_space<vmem>>, vector<2x8x8x32xf32>
    %107 = vector.shape_cast %106 : vector<2x8x8x32xf32> to vector<128x32xf32>
    %c0_180 = arith.constant 0 : index
    %c4_181 = arith.constant 4 : index
    %c3_182 = arith.constant 3 : index
    %c0_183 = arith.constant 0 : index
    %108 = vector.load %arg10[%c0_180, %c4_181, %c3_182, %c0_183] : memref<2x12x12x32xf32, #tpu.memory_space<vmem>>, vector<2x8x8x32xf32>
    %109 = vector.shape_cast %108 : vector<2x8x8x32xf32> to vector<128x32xf32>
    %c0_184 = arith.constant 0 : index
    %c4_185 = arith.constant 4 : index
    %c4_186 = arith.constant 4 : index
    %c0_187 = arith.constant 0 : index
    %110 = vector.load %arg10[%c0_184, %c4_185, %c4_186, %c0_187] : memref<2x12x12x32xf32, #tpu.memory_space<vmem>>, vector<2x8x8x32xf32>
    %111 = vector.shape_cast %110 : vector<2x8x8x32xf32> to vector<128x32xf32>
    %112 = tpu.concatenate %63, %65, %67, %69, %71, %73, %75, %77, %79, %81, %83, %85, %87, %89, %91, %93 in 1 : vector<128x32xf32>, vector<128x32xf32>, vector<128x32xf32>, vector<128x32xf32>, vector<128x32xf32>, vector<128x32xf32>, vector<128x32xf32>, vector<128x32xf32>, vector<128x32xf32>, vector<128x32xf32>, vector<128x32xf32>, vector<128x32xf32>, vector<128x32xf32>, vector<128x32xf32>, vector<128x32xf32>, vector<128x32xf32> -> vector<128x512xf32>
    %113 = tpu.concatenate %95, %97, %99, %101, %103, %105, %107, %109, %111 in 1 : vector<128x32xf32>, vector<128x32xf32>, vector<128x32xf32>, vector<128x32xf32>, vector<128x32xf32>, vector<128x32xf32>, vector<128x32xf32>, vector<128x32xf32>, vector<128x32xf32> -> vector<128x288xf32>
    %114 = tpu.concatenate %112, %113 in 1 : vector<128x512xf32>, vector<128x288xf32> -> vector<128x800xf32>
    %c0_188 = arith.constant 0 : index
    %c0_189 = arith.constant 0 : index
    %115 = vector.load %arg4[%c0_188, %c0_189] : memref<800x64xf32, #tpu.memory_space<vmem>>, vector<800x64xf32>
    %cst_190 = arith.constant dense<0.000000e+00> : vector<128x64xf32>
    %116 = tpu.matmul %114, %115, %cst_190 {dimension_numbers = #tpu.dot_dimension_numbers<[1], [0], [0], [1], [0, 0, 1, 1], [], []>} : vector<128x800xf32>, vector<800x64xf32>, vector<128x64xf32> -> vector<128x64xf32>
    %c0_191 = arith.constant 0 : index
    %c0_192 = arith.constant 0 : index
    %117 = vector.load %arg5[%c0_191, %c0_192] : memref<1x64xf32, #tpu.memory_space<vmem>>, vector<1x64xf32>
    %118 = vector.broadcast %117 : vector<1x64xf32> to vector<128x64xf32>
    %119 = arith.addf %116, %118 : vector<128x64xf32>
    %120 = vector.shape_cast %119 : vector<128x64xf32> to vector<8x2x4x2x64xf32>
    %121 = vector.extract_strided_slice %120 {offsets = [0, 0, 0, 0, 0], sizes = [8, 1, 4, 1, 64], strides = [1, 1, 1, 1, 1]} : vector<8x2x4x2x64xf32> to vector<8x1x4x1x64xf32>
    %122 = vector.shape_cast %121 : vector<8x1x4x1x64xf32> to vector<8x4x64xf32>
    %123 = vector.extract_strided_slice %120 {offsets = [0, 0, 0, 1, 0], sizes = [8, 1, 4, 1, 64], strides = [1, 1, 1, 1, 1]} : vector<8x2x4x2x64xf32> to vector<8x1x4x1x64xf32>
    %124 = vector.shape_cast %123 : vector<8x1x4x1x64xf32> to vector<8x4x64xf32>
    %125 = arith.addf %122, %124 : vector<8x4x64xf32>
    %126 = vector.extract_strided_slice %120 {offsets = [0, 1, 0, 0, 0], sizes = [8, 1, 4, 1, 64], strides = [1, 1, 1, 1, 1]} : vector<8x2x4x2x64xf32> to vector<8x1x4x1x64xf32>
    %127 = vector.shape_cast %126 : vector<8x1x4x1x64xf32> to vector<8x4x64xf32>
    %128 = arith.addf %125, %127 : vector<8x4x64xf32>
    %129 = vector.extract_strided_slice %120 {offsets = [0, 1, 0, 1, 0], sizes = [8, 1, 4, 1, 64], strides = [1, 1, 1, 1, 1]} : vector<8x2x4x2x64xf32> to vector<8x1x4x1x64xf32>
    %130 = vector.shape_cast %129 : vector<8x1x4x1x64xf32> to vector<8x4x64xf32>
    %131 = arith.addf %128, %130 : vector<8x4x64xf32>
    %cst_193 = arith.constant 2.500000e-01 : f32
    %132 = vector.broadcast %cst_193 : f32 to vector<8x4x64xf32>
    %133 = arith.mulf %132, %131 : vector<8x4x64xf32>
    %cst_194 = arith.constant 0.000000e+00 : f32
    %cst_195 = arith.constant 6.000000e+00 : f32
    %134 = vector.broadcast %cst_194 : f32 to vector<8x4x64xf32>
    %135 = arith.maximumf %134, %133 : vector<8x4x64xf32>
    %136 = vector.broadcast %cst_195 : f32 to vector<8x4x64xf32>
    %137 = arith.minimumf %136, %135 : vector<8x4x64xf32>
    %138 = vector.shape_cast %137 : vector<8x4x64xf32> to vector<2x4x4x64xf32>
    %139 = vector.extract_strided_slice %138 {offsets = [0, 0, 0, 0], sizes = [2, 1, 1, 64], strides = [1, 1, 1, 1]} : vector<2x4x4x64xf32> to vector<2x1x1x64xf32>
    %140 = vector.shape_cast %139 : vector<2x1x1x64xf32> to vector<2x64xf32>
    %141 = vector.extract_strided_slice %138 {offsets = [0, 0, 1, 0], sizes = [2, 1, 1, 64], strides = [1, 1, 1, 1]} : vector<2x4x4x64xf32> to vector<2x1x1x64xf32>
    %142 = vector.shape_cast %141 : vector<2x1x1x64xf32> to vector<2x64xf32>
    %143 = vector.extract_strided_slice %138 {offsets = [0, 0, 2, 0], sizes = [2, 1, 1, 64], strides = [1, 1, 1, 1]} : vector<2x4x4x64xf32> to vector<2x1x1x64xf32>
    %144 = vector.shape_cast %143 : vector<2x1x1x64xf32> to vector<2x64xf32>
    %145 = vector.extract_strided_slice %138 {offsets = [0, 0, 3, 0], sizes = [2, 1, 1, 64], strides = [1, 1, 1, 1]} : vector<2x4x4x64xf32> to vector<2x1x1x64xf32>
    %146 = vector.shape_cast %145 : vector<2x1x1x64xf32> to vector<2x64xf32>
    %147 = vector.extract_strided_slice %138 {offsets = [0, 1, 0, 0], sizes = [2, 1, 1, 64], strides = [1, 1, 1, 1]} : vector<2x4x4x64xf32> to vector<2x1x1x64xf32>
    %148 = vector.shape_cast %147 : vector<2x1x1x64xf32> to vector<2x64xf32>
    %149 = vector.extract_strided_slice %138 {offsets = [0, 1, 1, 0], sizes = [2, 1, 1, 64], strides = [1, 1, 1, 1]} : vector<2x4x4x64xf32> to vector<2x1x1x64xf32>
    %150 = vector.shape_cast %149 : vector<2x1x1x64xf32> to vector<2x64xf32>
    %151 = vector.extract_strided_slice %138 {offsets = [0, 1, 2, 0], sizes = [2, 1, 1, 64], strides = [1, 1, 1, 1]} : vector<2x4x4x64xf32> to vector<2x1x1x64xf32>
    %152 = vector.shape_cast %151 : vector<2x1x1x64xf32> to vector<2x64xf32>
    %153 = vector.extract_strided_slice %138 {offsets = [0, 1, 3, 0], sizes = [2, 1, 1, 64], strides = [1, 1, 1, 1]} : vector<2x4x4x64xf32> to vector<2x1x1x64xf32>
    %154 = vector.shape_cast %153 : vector<2x1x1x64xf32> to vector<2x64xf32>
    %155 = vector.extract_strided_slice %138 {offsets = [0, 2, 0, 0], sizes = [2, 1, 1, 64], strides = [1, 1, 1, 1]} : vector<2x4x4x64xf32> to vector<2x1x1x64xf32>
    %156 = vector.shape_cast %155 : vector<2x1x1x64xf32> to vector<2x64xf32>
    %157 = vector.extract_strided_slice %138 {offsets = [0, 2, 1, 0], sizes = [2, 1, 1, 64], strides = [1, 1, 1, 1]} : vector<2x4x4x64xf32> to vector<2x1x1x64xf32>
    %158 = vector.shape_cast %157 : vector<2x1x1x64xf32> to vector<2x64xf32>
    %159 = vector.extract_strided_slice %138 {offsets = [0, 2, 2, 0], sizes = [2, 1, 1, 64], strides = [1, 1, 1, 1]} : vector<2x4x4x64xf32> to vector<2x1x1x64xf32>
    %160 = vector.shape_cast %159 : vector<2x1x1x64xf32> to vector<2x64xf32>
    %161 = vector.extract_strided_slice %138 {offsets = [0, 2, 3, 0], sizes = [2, 1, 1, 64], strides = [1, 1, 1, 1]} : vector<2x4x4x64xf32> to vector<2x1x1x64xf32>
    %162 = vector.shape_cast %161 : vector<2x1x1x64xf32> to vector<2x64xf32>
    %163 = vector.extract_strided_slice %138 {offsets = [0, 3, 0, 0], sizes = [2, 1, 1, 64], strides = [1, 1, 1, 1]} : vector<2x4x4x64xf32> to vector<2x1x1x64xf32>
    %164 = vector.shape_cast %163 : vector<2x1x1x64xf32> to vector<2x64xf32>
    %165 = vector.extract_strided_slice %138 {offsets = [0, 3, 1, 0], sizes = [2, 1, 1, 64], strides = [1, 1, 1, 1]} : vector<2x4x4x64xf32> to vector<2x1x1x64xf32>
    %166 = vector.shape_cast %165 : vector<2x1x1x64xf32> to vector<2x64xf32>
    %167 = vector.extract_strided_slice %138 {offsets = [0, 3, 2, 0], sizes = [2, 1, 1, 64], strides = [1, 1, 1, 1]} : vector<2x4x4x64xf32> to vector<2x1x1x64xf32>
    %168 = vector.shape_cast %167 : vector<2x1x1x64xf32> to vector<2x64xf32>
    %169 = vector.extract_strided_slice %138 {offsets = [0, 3, 3, 0], sizes = [2, 1, 1, 64], strides = [1, 1, 1, 1]} : vector<2x4x4x64xf32> to vector<2x1x1x64xf32>
    %170 = vector.shape_cast %169 : vector<2x1x1x64xf32> to vector<2x64xf32>
    %171 = tpu.concatenate %140, %142, %144, %146, %148, %150, %152, %154, %156, %158, %160, %162, %164, %166, %168, %170 in 1 : vector<2x64xf32>, vector<2x64xf32>, vector<2x64xf32>, vector<2x64xf32>, vector<2x64xf32>, vector<2x64xf32>, vector<2x64xf32>, vector<2x64xf32>, vector<2x64xf32>, vector<2x64xf32>, vector<2x64xf32>, vector<2x64xf32>, vector<2x64xf32>, vector<2x64xf32>, vector<2x64xf32>, vector<2x64xf32> -> vector<2x1024xf32>
    %c0_196 = arith.constant 0 : index
    %c0_197 = arith.constant 0 : index
    %172 = vector.load %arg6[%c0_196, %c0_197] : memref<1024x8xf32, #tpu.memory_space<vmem>>, vector<1024x8xf32>
    %cst_198 = arith.constant dense<0.000000e+00> : vector<2x8xf32>
    %173 = tpu.matmul %171, %172, %cst_198 {dimension_numbers = #tpu.dot_dimension_numbers<[1], [0], [0], [1], [0, 0, 1, 1], [], []>} : vector<2x1024xf32>, vector<1024x8xf32>, vector<2x8xf32> -> vector<2x8xf32>
    %c0_199 = arith.constant 0 : index
    %c0_200 = arith.constant 0 : index
    %174 = vector.load %arg7[%c0_199, %c0_200] : memref<1x8xf32, #tpu.memory_space<vmem>>, vector<1x8xf32>
    %175 = vector.broadcast %174 : vector<1x8xf32> to vector<2x8xf32>
    %176 = arith.addf %173, %175 : vector<2x8xf32>
    %c0_201 = arith.constant 0 : index
    %c0_202 = arith.constant 0 : index
    %177 = vector.load %arg8[%c0_201, %c0_202] : memref<2x8xf32, #tpu.memory_space<vmem>>, vector<2x8xf32>
    tpu.vector_store %arg8[%c0_201, %c0_202], %176 {strides = array<i32>} : memref<2x8xf32, #tpu.memory_space<vmem>>, vector<2x8xf32>,
    return
  }
  func.func @transform_0(%arg0: i32) -> (i32, i32, i32, i32) {
    %c0_i32 = arith.constant 0 : i32
    %c0_i32_0 = arith.constant 0 : i32
    %c0_i32_1 = arith.constant 0 : i32
    %c0_i32_2 = arith.constant 0 : i32
    return %arg0, %c0_i32, %c0_i32_0, %c0_i32_1 : i32, i32, i32, i32
  }
  func.func @transform_1(%arg0: i32) -> (i32, i32) {
    %c0_i32 = arith.constant 0 : i32
    %c0_i32_0 = arith.constant 0 : i32
    %c0_i32_1 = arith.constant 0 : i32
    return %c0_i32, %c0_i32_0 : i32, i32
  }
  func.func @transform_2(%arg0: i32) -> (i32, i32) {
    %c0_i32 = arith.constant 0 : i32
    %c0_i32_0 = arith.constant 0 : i32
    %c0_i32_1 = arith.constant 0 : i32
    return %c0_i32, %c0_i32_0 : i32, i32
  }
  func.func @transform_3(%arg0: i32) -> (i32, i32) {
    %c0_i32 = arith.constant 0 : i32
    %c0_i32_0 = arith.constant 0 : i32
    %c0_i32_1 = arith.constant 0 : i32
    return %c0_i32, %c0_i32_0 : i32, i32
  }
  func.func @transform_4(%arg0: i32) -> (i32, i32) {
    %c0_i32 = arith.constant 0 : i32
    %c0_i32_0 = arith.constant 0 : i32
    %c0_i32_1 = arith.constant 0 : i32
    return %c0_i32, %c0_i32_0 : i32, i32
  }
  func.func @transform_5(%arg0: i32) -> (i32, i32) {
    %c0_i32 = arith.constant 0 : i32
    %c0_i32_0 = arith.constant 0 : i32
    %c0_i32_1 = arith.constant 0 : i32
    return %c0_i32, %c0_i32_0 : i32, i32
  }
  func.func @transform_6(%arg0: i32) -> (i32, i32) {
    %c0_i32 = arith.constant 0 : i32
    %c0_i32_0 = arith.constant 0 : i32
    %c0_i32_1 = arith.constant 0 : i32
    return %c0_i32, %c0_i32_0 : i32, i32
  }
  func.func @transform_7(%arg0: i32) -> (i32, i32) {
    %c0_i32 = arith.constant 0 : i32
    %c0_i32_0 = arith.constant 0 : i32
    return %arg0, %c0_i32 : i32, i32
  }
}

</mosaic_0001>

<llo_original>
// kernel: simple_nn2d_forward.1
$region0: #{simple_nn2d_forward.1}
  #allocation0 [shape = 'u32[]', space=smem, size = 0x4, offset = 0x4, fixed_abs, tag = 'smem constant byte address 0x4 - core index']
  #allocation1 [shape = 'u32[144,128]{1,0:T(1,128)}', space=vmem, size = 0x12000, scoped, tag = 'internal scratch']
  #allocation2 [shape = 'f32[2,18,18,3]{3,2,1,0:T(8,128)}', space=vmem, size = 0x6c000, scoped, tag = 'scratch operand']
  #allocation3 [shape = 'f32[2,12,12,32]{3,2,1,0:T(8,128)}', space=vmem, size = 0x30000, scoped, tag = 'scratch operand']
  %s0 = inlined_call_operand.vmem [shape: f32[2,16,16,3], index: 0, kind: input, shape index: {}]
  %s1 = inlined_call_operand.vmem [shape: f32[27,32], index: 1, kind: input, shape index: {}]
  %s2 = inlined_call_operand.vmem [shape: f32[1,32], index: 2, kind: input, shape index: {}]
  %s3 = inlined_call_operand.vmem [shape: f32[800,64], index: 3, kind: input, shape index: {}]
  %s4 = inlined_call_operand.vmem [shape: f32[1,64], index: 4, kind: input, shape index: {}]
  %s5 = inlined_call_operand.vmem [shape: f32[1024,8], index: 5, kind: input, shape index: {}]
  %s6 = inlined_call_operand.vmem [shape: f32[1,8], index: 6, kind: input, shape index: {}]
  %s7 = inlined_call_operand.hbm [shape: f32[2,8], index: 7, kind: output, shape index: {}]
  %s8 = sld [smem:[#allocation0]]
  $region38: #{simple_nn2d_forward.1} parent=0
    _
  %s10 = ssub.s32 1, %s8
  %s11 = scalar_select 0, %s10, %s8
  $region1: #{simple_nn2d_forward.1} parent=0
    #allocation4 [shape = 'u8[1024]{0}', space=vmem, size = 0x400, scoped, tag = 'output window, operand 0, single buffered']
    #allocation5 [shape = 's32[1]{0}', space=sflag, size = 0x4, scoped, tag = 'scoped memory for simple_nn2d_forward.1']
    %12 = vsyncpa [#allocation5], 0
    // Predicated region
    $region2: #{simple_nn2d_forward.1} parent=1 // pred_check
      _
    $region3: #{simple_nn2d_forward.1} parent=1 // pred_check_branch
      %14 = sbr.rel (0) target = $region5
    $region4: #{simple_nn2d_forward.1} parent=1 // pred_region
      _
    $region5: #{simple_nn2d_forward.1} parent=1 // pred_fallthru
      _
    // Predicated region
    $region6: #{simple_nn2d_forward.1} parent=1 // pred_check
      _
    $region7: #{simple_nn2d_forward.1} parent=1 // pred_check_branch
      %16 = sbr.rel (0) target = $region9
    $region8: #{simple_nn2d_forward.1} parent=1 // pred_region
      _
    $region9: #{simple_nn2d_forward.1} parent=1 // pred_fallthru
      _
    // Predicated region
    $region10: #{simple_nn2d_forward.1} parent=1 // pred_check
      _
    $region11: #{simple_nn2d_forward.1} parent=1 // pred_check_branch
      %18 = sbr.rel (0) target = $region13
    $region12: #{simple_nn2d_forward.1} parent=1 // pred_region
      _
    $region13: #{simple_nn2d_forward.1} parent=1 // pred_fallthru
      _
    // Predicated region
    $region14: #{simple_nn2d_forward.1} parent=1 // pred_check
      _
    $region15: #{simple_nn2d_forward.1} parent=1 // pred_check_branch
      %20 = sbr.rel (0) target = $region17
    $region16: #{simple_nn2d_forward.1} parent=1 // pred_region
      _
    $region17: #{simple_nn2d_forward.1} parent=1 // pred_fallthru
      _
    // Predicated region
    $region18: #{simple_nn2d_forward.1} parent=1 // pred_check
      _
    $region19: #{simple_nn2d_forward.1} parent=1 // pred_check_branch
      %22 = sbr.rel (0) target = $region21
    $region20: #{simple_nn2d_forward.1} parent=1 // pred_region
      _
    $region21: #{simple_nn2d_forward.1} parent=1 // pred_fallthru
      _
    // Predicated region
    $region22: #{simple_nn2d_forward.1} parent=1 // pred_check
      _
    $region23: #{simple_nn2d_forward.1} parent=1 // pred_check_branch
      %24 = sbr.rel (0) target = $region25
    $region24: #{simple_nn2d_forward.1} parent=1 // pred_region
      _
    $region25: #{simple_nn2d_forward.1} parent=1 // pred_fallthru
      _
    // Predicated region
    $region26: #{simple_nn2d_forward.1} parent=1 // pred_check
      _
    $region27: #{simple_nn2d_forward.1} parent=1 // pred_check_branch
      %26 = sbr.rel (0) target = $region29
    $region28: #{simple_nn2d_forward.1} parent=1 // pred_region
      _
    $region29: #{simple_nn2d_forward.1} parent=1 // pred_fallthru
      _
    %vm27 = vcmask 23552
    %28 = vst.msk [vmem:[#allocation2] sm:$0xff] %vm27, 0.0
    %29 = vst.msk [vmem:[#allocation2 + $0x8] sm:$0xff] %vm27, 0.0
    %vm30 = vcmask 17408
    %31 = vst.msk [vmem:[#allocation2 + $0x10] sm:$0x3] %vm30, 0.0
    %32 = vst.msk [vmem:[#allocation2 + $0x1b0] sm:$0xff] %vm27, 0.0
    %33 = vst.msk [vmem:[#allocation2 + $0x1b8] sm:$0xff] %vm27, 0.0
    %34 = vst.msk [vmem:[#allocation2 + $0x1c0] sm:$0x3] %vm30, 0.0
    %s35 = scalar_lea.vmem [#allocation2], 408
    %36 = vst.msk [vmem:[%s35] sm:$0xff] %vm27, 0.0
    %37 = vst.msk [vmem:[%s35 + $0x8] sm:$0xff] %vm27, 0.0
    %38 = vst.msk [vmem:[%s35 + $0x10] sm:$0x3] %vm30, 0.0
    %39 = vst.msk [vmem:[%s35 + $0x1b0] sm:$0xff] %vm27, 0.0
    %40 = vst.msk [vmem:[%s35 + $0x1b8] sm:$0xff] %vm27, 0.0
    %41 = vst.msk [vmem:[%s35 + $0x1c0] sm:$0x3] %vm30, 0.0
    %s42 = scalar_lea.vmem [#allocation2], 24
    %vm43 = vcmask 16384
    %44 = vst.msk [vmem:[%s42] sm:$0x1] %vm43, 0.0
    %45 = vst.msk [vmem:[%s42 + $0x18] sm:$0x1] %vm43, 0.0
    %46 = vst.msk [vmem:[%s42 + $0x30] sm:$0x1] %vm43, 0.0
    %47 = vst.msk [vmem:[%s42 + $0x48] sm:$0x1] %vm43, 0.0
    %48 = vst.msk [vmem:[%s42 + $0x60] sm:$0x1] %vm43, 0.0
    %49 = vst.msk [vmem:[%s42 + $0x78] sm:$0x1] %vm43, 0.0
    %50 = vst.msk [vmem:[%s42 + $0x90] sm:$0x1] %vm43, 0.0
    %51 = vst.msk [vmem:[%s42 + $0xa8] sm:$0x1] %vm43, 0.0
    %52 = vst.msk [vmem:[%s42 + $0xc0] sm:$0x1] %vm43, 0.0
    %53 = vst.msk [vmem:[%s42 + $0xd8] sm:$0x1] %vm43, 0.0
    %54 = vst.msk [vmem:[%s42 + $0xf0] sm:$0x1] %vm43, 0.0
    %55 = vst.msk [vmem:[%s42 + $0x108] sm:$0x1] %vm43, 0.0
    %56 = vst.msk [vmem:[%s42 + $0x120] sm:$0x1] %vm43, 0.0
    %57 = vst.msk [vmem:[%s42 + $0x138] sm:$0x1] %vm43, 0.0
    %58 = vst.msk [vmem:[%s42 + $0x150] sm:$0x1] %vm43, 0.0
    %59 = vst.msk [vmem:[%s42 + $0x168] sm:$0x1] %vm43, 0.0
    %60 = vst.msk [vmem:[%s42 + $0x1b0] sm:$0x1] %vm43, 0.0
    %61 = vst.msk [vmem:[%s42 + $0x1c8] sm:$0x1] %vm43, 0.0
    %62 = vst.msk [vmem:[%s42 + $0x1e0] sm:$0x1] %vm43, 0.0
    %63 = vst.msk [vmem:[%s42 + $0x1f8] sm:$0x1] %vm43, 0.0
    %64 = vst.msk [vmem:[%s42 + $0x210] sm:$0x1] %vm43, 0.0
    %65 = vst.msk [vmem:[%s42 + $0x228] sm:$0x1] %vm43, 0.0
    %66 = vst.msk [vmem:[%s42 + $0x240] sm:$0x1] %vm43, 0.0
    %67 = vst.msk [vmem:[%s42 + $0x258] sm:$0x1] %vm43, 0.0
    %68 = vst.msk [vmem:[%s42 + $0x270] sm:$0x1] %vm43, 0.0
    %69 = vst.msk [vmem:[%s42 + $0x288] sm:$0x1] %vm43, 0.0
    %70 = vst.msk [vmem:[%s42 + $0x2a0] sm:$0x1] %vm43, 0.0
    %71 = vst.msk [vmem:[%s42 + $0x2b8] sm:$0x1] %vm43, 0.0
    %72 = vst.msk [vmem:[%s42 + $0x2d0] sm:$0x1] %vm43, 0.0
    %73 = vst.msk [vmem:[%s42 + $0x2e8] sm:$0x1] %vm43, 0.0
    %74 = vst.msk [vmem:[%s42 + $0x300] sm:$0x1] %vm43, 0.0
    %75 = vst.msk [vmem:[%s42 + $0x318] sm:$0x1] %vm43, 0.0
    %76 = vst.msk [vmem:[%s42 + $0x11] sm:$0x1] %vm43, 0.0
    %77 = vst.msk [vmem:[%s42 + $0x29] sm:$0x1] %vm43, 0.0
    %78 = vst.msk [vmem:[%s42 + $0x41] sm:$0x1] %vm43, 0.0
    %79 = vst.msk [vmem:[%s42 + $0x59] sm:$0x1] %vm43, 0.0
    %80 = vst.msk [vmem:[%s42 + $0x71] sm:$0x1] %vm43, 0.0
    %81 = vst.msk [vmem:[%s42 + $0x89] sm:$0x1] %vm43, 0.0
    %82 = vst.msk [vmem:[%s42 + $0xa1] sm:$0x1] %vm43, 0.0
    %83 = vst.msk [vmem:[%s42 + $0xb9] sm:$0x1] %vm43, 0.0
    %84 = vst.msk [vmem:[%s42 + $0xd1] sm:$0x1] %vm43, 0.0
    %85 = vst.msk [vmem:[%s42 + $0xe9] sm:$0x1] %vm43, 0.0
    %86 = vst.msk [vmem:[%s42 + $0x101] sm:$0x1] %vm43, 0.0
    %87 = vst.msk [vmem:[%s42 + $0x119] sm:$0x1] %vm43, 0.0
    %88 = vst.msk [vmem:[%s42 + $0x131] sm:$0x1] %vm43, 0.0
    %89 = vst.msk [vmem:[%s42 + $0x149] sm:$0x1] %vm43, 0.0
    %90 = vst.msk [vmem:[%s42 + $0x161] sm:$0x1] %vm43, 0.0
    %91 = vst.msk [vmem:[%s42 + $0x179] sm:$0x1] %vm43, 0.0
    %92 = vst.msk [vmem:[%s42 + $0x1c1] sm:$0x1] %vm43, 0.0
    %93 = vst.msk [vmem:[%s42 + $0x1d9] sm:$0x1] %vm43, 0.0
    %94 = vst.msk [vmem:[%s42 + $0x1f1] sm:$0x1] %vm43, 0.0
    %95 = vst.msk [vmem:[%s42 + $0x209] sm:$0x1] %vm43, 0.0
    %96 = vst.msk [vmem:[%s42 + $0x221] sm:$0x1] %vm43, 0.0
    %97 = vst.msk [vmem:[%s42 + $0x239] sm:$0x1] %vm43, 0.0
    %98 = vst.msk [vmem:[%s42 + $0x251] sm:$0x1] %vm43, 0.0
    %99 = vst.msk [vmem:[%s42 + $0x269] sm:$0x1] %vm43, 0.0
    %100 = vst.msk [vmem:[%s42 + $0x281] sm:$0x1] %vm43, 0.0
    %101 = vst.msk [vmem:[%s42 + $0x299] sm:$0x1] %vm43, 0.0
    %102 = vst.msk [vmem:[%s42 + $0x2b1] sm:$0x1] %vm43, 0.0
    %103 = vst.msk [vmem:[%s42 + $0x2c9] sm:$0x1] %vm43, 0.0
    %104 = vst.msk [vmem:[%s42 + $0x2e1] sm:$0x1] %vm43, 0.0
    %105 = vst.msk [vmem:[%s42 + $0x2f9] sm:$0x1] %vm43, 0.0
    %106 = vst.msk [vmem:[%s42 + $0x311] sm:$0x1] %vm43, 0.0
    %107 = vst.msk [vmem:[%s42 + $0x329] sm:$0x1] %vm43, 0.0
    %v108 = vld [vmem:[%s0] sm:$0xff]
    %v109 = vld [vmem:[%s0 + $0x8] sm:$0xff]
    %v110 = vld [vmem:[%s0 + $0x10] sm:$0xff]
    %v111 = vld [vmem:[%s0 + $0x18] sm:$0xff]
    %v112 = vld [vmem:[%s0 + $0x20] sm:$0xff]
    %v113 = vld [vmem:[%s0 + $0x28] sm:$0xff]
    %v114 = vld [vmem:[%s0 + $0x30] sm:$0xff]
    %v115 = vld [vmem:[%s0 + $0x38] sm:$0xff]
    %v116 = vld [vmem:[%s0 + $0x40] sm:$0xff]
    %v117 = vld [vmem:[%s0 + $0x48] sm:$0xff]
    %v118 = vld [vmem:[%s0 + $0x50] sm:$0xff]
    %v119 = vld [vmem:[%s0 + $0x58] sm:$0xff]
    %v120 = vld [vmem:[%s0 + $0x60] sm:$0xff]
    %v121 = vld [vmem:[%s0 + $0x68] sm:$0xff]
    %v122 = vld [vmem:[%s0 + $0x70] sm:$0xff]
    %v123 = vld [vmem:[%s0 + $0x78] sm:$0xff]
    %v124 = vld [vmem:[%s0 + $0x80] sm:$0xff]
    %v125 = vld [vmem:[%s0 + $0x88] sm:$0xff]
    %v126 = vld [vmem:[%s0 + $0x90] sm:$0xff]
    %v127 = vld [vmem:[%s0 + $0x98] sm:$0xff]
    %v128 = vld [vmem:[%s0 + $0xa0] sm:$0xff]
    %v129 = vld [vmem:[%s0 + $0xa8] sm:$0xff]
    %v130 = vld [vmem:[%s0 + $0xb0] sm:$0xff]
    %v131 = vld [vmem:[%s0 + $0xb8] sm:$0xff]
    %v132 = vld [vmem:[%s0 + $0xc0] sm:$0xff]
    %v133 = vld [vmem:[%s0 + $0xc8] sm:$0xff]
    %v134 = vld [vmem:[%s0 + $0xd0] sm:$0xff]
    %v135 = vld [vmem:[%s0 + $0xd8] sm:$0xff]
    %v136 = vld [vmem:[%s0 + $0xe0] sm:$0xff]
    %v137 = vld [vmem:[%s0 + $0xe8] sm:$0xff]
    %v138 = vld [vmem:[%s0 + $0xf0] sm:$0xff]
    %v139 = vld [vmem:[%s0 + $0xf8] sm:$0xff]
    %v140 = vld [vmem:[%s0 + $0x100] sm:$0xff]
    %v141 = vld [vmem:[%s0 + $0x108] sm:$0xff]
    %v142 = vld [vmem:[%s0 + $0x110] sm:$0xff]
    %v143 = vld [vmem:[%s0 + $0x118] sm:$0xff]
    %v144 = vld [vmem:[%s0 + $0x120] sm:$0xff]
    %v145 = vld [vmem:[%s0 + $0x128] sm:$0xff]
    %v146 = vld [vmem:[%s0 + $0x130] sm:$0xff]
    %v147 = vld [vmem:[%s0 + $0x138] sm:$0xff]
    %v148 = vld [vmem:[%s0 + $0x140] sm:$0xff]
    %v149 = vld [vmem:[%s0 + $0x148] sm:$0xff]
    %v150 = vld [vmem:[%s0 + $0x150] sm:$0xff]
    %v151 = vld [vmem:[%s0 + $0x158] sm:$0xff]
    %v152 = vld [vmem:[%s0 + $0x160] sm:$0xff]
    %v153 = vld [vmem:[%s0 + $0x168] sm:$0xff]
    %v154 = vld [vmem:[%s0 + $0x170] sm:$0xff]
    %v155 = vld [vmem:[%s0 + $0x178] sm:$0xff]
    %v156 = vld [vmem:[%s0 + $0x180] sm:$0xff]
    %v157 = vld [vmem:[%s0 + $0x188] sm:$0xff]
    %v158 = vld [vmem:[%s0 + $0x190] sm:$0xff]
    %v159 = vld [vmem:[%s0 + $0x198] sm:$0xff]
    %v160 = vld [vmem:[%s0 + $0x1a0] sm:$0xff]
    %v161 = vld [vmem:[%s0 + $0x1a8] sm:$0xff]
    %v162 = vld [vmem:[%s0 + $0x1b0] sm:$0xff]
    %v163 = vld [vmem:[%s0 + $0x1b8] sm:$0xff]
    %v164 = vld [vmem:[%s0 + $0x1c0] sm:$0xff]
    %v165 = vld [vmem:[%s0 + $0x1c8] sm:$0xff]
    %v166 = vld [vmem:[%s0 + $0x1d0] sm:$0xff]
    %v167 = vld [vmem:[%s0 + $0x1d8] sm:$0xff]
    %v168 = vld [vmem:[%s0 + $0x1e0] sm:$0xff]
    %v169 = vld [vmem:[%s0 + $0x1e8] sm:$0xff]
    %v170 = vld [vmem:[%s0 + $0x1f0] sm:$0xff]
    %v171 = vld [vmem:[%s0 + $0x1f8] sm:$0xff]
    %172 = vst.msk [vmem:[%s42 + $0x1] sm:$0xff] %vm27, %v108
    %173 = vst.msk [vmem:[%s42 + $0x9] sm:$0xff] %vm27, %v109
    %174 = vst.msk [vmem:[%s42 + $0x19] sm:$0xff] %vm27, %v110
    %175 = vst.msk [vmem:[%s42 + $0x21] sm:$0xff] %vm27, %v111
    %176 = vst.msk [vmem:[%s42 + $0x31] sm:$0xff] %vm27, %v112
    %177 = vst.msk [vmem:[%s42 + $0x39] sm:$0xff] %vm27, %v113
    %178 = vst.msk [vmem:[%s42 + $0x49] sm:$0xff] %vm27, %v114
    %179 = vst.msk [vmem:[%s42 + $0x51] sm:$0xff] %vm27, %v115
    %180 = vst.msk [vmem:[%s42 + $0x61] sm:$0xff] %vm27, %v116
    %181 = vst.msk [vmem:[%s42 + $0x69] sm:$0xff] %vm27, %v117
    %182 = vst.msk [vmem:[%s42 + $0x79] sm:$0xff] %vm27, %v118
    %183 = vst.msk [vmem:[%s42 + $0x81] sm:$0xff] %vm27, %v119
    %184 = vst.msk [vmem:[%s42 + $0x91] sm:$0xff] %vm27, %v120
    %185 = vst.msk [vmem:[%s42 + $0x99] sm:$0xff] %vm27, %v121
    %186 = vst.msk [vmem:[%s42 + $0xa9] sm:$0xff] %vm27, %v122
    %187 = vst.msk [vmem:[%s42 + $0xb1] sm:$0xff] %vm27, %v123
    %188 = vst.msk [vmem:[%s42 + $0xc1] sm:$0xff] %vm27, %v124
    %189 = vst.msk [vmem:[%s42 + $0xc9] sm:$0xff] %vm27, %v125
    %190 = vst.msk [vmem:[%s42 + $0xd9] sm:$0xff] %vm27, %v126
    %191 = vst.msk [vmem:[%s42 + $0xe1] sm:$0xff] %vm27, %v127
    %192 = vst.msk [vmem:[%s42 + $0xf1] sm:$0xff] %vm27, %v128
    %193 = vst.msk [vmem:[%s42 + $0xf9] sm:$0xff] %vm27, %v129
    %194 = vst.msk [vmem:[%s42 + $0x109] sm:$0xff] %vm27, %v130
    %195 = vst.msk [vmem:[%s42 + $0x111] sm:$0xff] %vm27, %v131
    %196 = vst.msk [vmem:[%s42 + $0x121] sm:$0xff] %vm27, %v132
    %197 = vst.msk [vmem:[%s42 + $0x129] sm:$0xff] %vm27, %v133
    %198 = vst.msk [vmem:[%s42 + $0x139] sm:$0xff] %vm27, %v134
    %199 = vst.msk [vmem:[%s42 + $0x141] sm:$0xff] %vm27, %v135
    %200 = vst.msk [vmem:[%s42 + $0x151] sm:$0xff] %vm27, %v136
    %201 = vst.msk [vmem:[%s42 + $0x159] sm:$0xff] %vm27, %v137
    %202 = vst.msk [vmem:[%s42 + $0x169] sm:$0xff] %vm27, %v138
    %203 = vst.msk [vmem:[%s42 + $0x171] sm:$0xff] %vm27, %v139
    %204 = vst.msk [vmem:[%s42 + $0x1b1] sm:$0xff] %vm27, %v140
    %205 = vst.msk [vmem:[%s42 + $0x1b9] sm:$0xff] %vm27, %v141
    %206 = vst.msk [vmem:[%s42 + $0x1c9] sm:$0xff] %vm27, %v142
    %207 = vst.msk [vmem:[%s42 + $0x1d1] sm:$0xff] %vm27, %v143
    %208 = vst.msk [vmem:[%s42 + $0x1e1] sm:$0xff] %vm27, %v144
    %209 = vst.msk [vmem:[%s42 + $0x1e9] sm:$0xff] %vm27, %v145
    %210 = vst.msk [vmem:[%s42 + $0x1f9] sm:$0xff] %vm27, %v146
    %211 = vst.msk [vmem:[%s42 + $0x201] sm:$0xff] %vm27, %v147
    %212 = vst.msk [vmem:[%s42 + $0x211] sm:$0xff] %vm27, %v148
    %213 = vst.msk [vmem:[%s42 + $0x219] sm:$0xff] %vm27, %v149
    %214 = vst.msk [vmem:[%s42 + $0x229] sm:$0xff] %vm27, %v150
    %215 = vst.msk [vmem:[%s42 + $0x231] sm:$0xff] %vm27, %v151
    %216 = vst.msk [vmem:[%s42 + $0x241] sm:$0xff] %vm27, %v152
    %217 = vst.msk [vmem:[%s42 + $0x249] sm:$0xff] %vm27, %v153
    %218 = vst.msk [vmem:[%s42 + $0x259] sm:$0xff] %vm27, %v154
    %219 = vst.msk [vmem:[%s42 + $0x261] sm:$0xff] %vm27, %v155
    %220 = vst.msk [vmem:[%s42 + $0x271] sm:$0xff] %vm27, %v156
    %221 = vst.msk [vmem:[%s42 + $0x279] sm:$0xff] %vm27, %v157
    %222 = vst.msk [vmem:[%s42 + $0x289] sm:$0xff] %vm27, %v158
    %223 = vst.msk [vmem:[%s42 + $0x291] sm:$0xff] %vm27, %v159
    %224 = vst.msk [vmem:[%s42 + $0x2a1] sm:$0xff] %vm27, %v160
    %225 = vst.msk [vmem:[%s42 + $0x2a9] sm:$0xff] %vm27, %v161
    %226 = vst.msk [vmem:[%s42 + $0x2b9] sm:$0xff] %vm27, %v162
    %227 = vst.msk [vmem:[%s42 + $0x2c1] sm:$0xff] %vm27, %v163
    %228 = vst.msk [vmem:[%s42 + $0x2d1] sm:$0xff] %vm27, %v164
    %229 = vst.msk [vmem:[%s42 + $0x2d9] sm:$0xff] %vm27, %v165
    %230 = vst.msk [vmem:[%s42 + $0x2e9] sm:$0xff] %vm27, %v166
    %231 = vst.msk [vmem:[%s42 + $0x2f1] sm:$0xff] %vm27, %v167
    %232 = vst.msk [vmem:[%s42 + $0x301] sm:$0xff] %vm27, %v168
    %233 = vst.msk [vmem:[%s42 + $0x309] sm:$0xff] %vm27, %v169
    %234 = vst.msk [vmem:[%s42 + $0x319] sm:$0xff] %vm27, %v170
    %235 = vst.msk [vmem:[%s42 + $0x321] sm:$0xff] %vm27, %v171
    %v236 = vld [vmem:[#allocation2] sm:$0xff]
    %v237 = vld [vmem:[#allocation2 + $0x8] sm:$0xff]
    %v238 = vld [vmem:[#allocation2 + $0x18] sm:$0xff]
    %v239 = vld [vmem:[#allocation2 + $0x20] sm:$0xff]
    %v240 = vld [vmem:[#allocation2 + $0x30] sm:$0xff]
    %v241 = vld [vmem:[#allocation2 + $0x38] sm:$0xff]
    %v242 = vld [vmem:[#allocation2 + $0x48] sm:$0xff]
    %v243 = vld [vmem:[#allocation2 + $0x50] sm:$0xff]
    %v244 = vld [vmem:[#allocation2 + $0x60] sm:$0xff]
    %v245 = vld [vmem:[#allocation2 + $0x68] sm:$0xff]
    %v246 = vld [vmem:[#allocation2 + $0x78] sm:$0xff]
    %v247 = vld [vmem:[#allocation2 + $0x80] sm:$0xff]
    %v248 = vld [vmem:[#allocation2 + $0x90] sm:$0xff]
    %v249 = vld [vmem:[#allocation2 + $0x98] sm:$0xff]
    %v250 = vld [vmem:[#allocation2 + $0xa8] sm:$0xff]
    %v251 = vld [vmem:[#allocation2 + $0xb0] sm:$0xff]
    %v252 = vld [vmem:[#allocation2 + $0xc0] sm:$0xff]
    %v253 = vld [vmem:[#allocation2 + $0xc8] sm:$0xff]
    %v254 = vld [vmem:[#allocation2 + $0xd8] sm:$0xff]
    %v255 = vld [vmem:[#allocation2 + $0xe0] sm:$0xff]
    %v256 = vld [vmem:[#allocation2 + $0xf0] sm:$0xff]
    %v257 = vld [vmem:[#allocation2 + $0xf8] sm:$0xff]
    %v258 = vld [vmem:[#allocation2 + $0x108] sm:$0xff]
    %v259 = vld [vmem:[#allocation2 + $0x110] sm:$0xff]
    %v260 = vld [vmem:[#allocation2 + $0x120] sm:$0xff]
    %v261 = vld [vmem:[#allocation2 + $0x128] sm:$0xff]
    %v262 = vld [vmem:[#allocation2 + $0x138] sm:$0xff]
    %v263 = vld [vmem:[#allocation2 + $0x140] sm:$0xff]
    %v264 = vld [vmem:[#allocation2 + $0x150] sm:$0xff]
    %v265 = vld [vmem:[#allocation2 + $0x158] sm:$0xff]
    %v266 = vld [vmem:[#allocation2 + $0x168] sm:$0xff]
    %v267 = vld [vmem:[#allocation2 + $0x170] sm:$0xff]
    %v268 = vld [vmem:[#allocation2 + $0x1b0] sm:$0xff]
    %v269 = vld [vmem:[#allocation2 + $0x1b8] sm:$0xff]
    %v270 = vld [vmem:[#allocation2 + $0x1c8] sm:$0xff]
    %v271 = vld [vmem:[#allocation2 + $0x1d0] sm:$0xff]
    %v272 = vld [vmem:[#allocation2 + $0x1e0] sm:$0xff]
    %v273 = vld [vmem:[#allocation2 + $0x1e8] sm:$0xff]
    %v274 = vld [vmem:[#allocation2 + $0x1f8] sm:$0xff]
    %v275 = vld [vmem:[#allocation2 + $0x200] sm:$0xff]
    %v276 = vld [vmem:[#allocation2 + $0x210] sm:$0xff]
    %v277 = vld [vmem:[#allocation2 + $0x218] sm:$0xff]
    %v278 = vld [vmem:[#allocation2 + $0x228] sm:$0xff]
    %v279 = vld [vmem:[#allocation2 + $0x230] sm:$0xff]
    %v280 = vld [vmem:[#allocation2 + $0x240] sm:$0xff]
    %v281 = vld [vmem:[#allocation2 + $0x248] sm:$0xff]
    %v282 = vld [vmem:[#allocation2 + $0x258] sm:$0xff]
    %v283 = vld [vmem:[#allocation2 + $0x260] sm:$0xff]
    %v284 = vld [vmem:[#allocation2 + $0x270] sm:$0xff]
    %v285 = vld [vmem:[#allocation2 + $0x278] sm:$0xff]
    %v286 = vld [vmem:[#allocation2 + $0x288] sm:$0xff]
    %v287 = vld [vmem:[#allocation2 + $0x290] sm:$0xff]
    %v288 = vld [vmem:[#allocation2 + $0x2a0] sm:$0xff]
    %v289 = vld [vmem:[#allocation2 + $0x2a8] sm:$0xff]
    %v290 = vld [vmem:[#allocation2 + $0x2b8] sm:$0xff]
    %v291 = vld [vmem:[#allocation2 + $0x2c0] sm:$0xff]
    %v292 = vld [vmem:[#allocation2 + $0x2d0] sm:$0xff]
    %v293 = vld [vmem:[#allocation2 + $0x2d8] sm:$0xff]
    %v294 = vld [vmem:[#allocation2 + $0x2e8] sm:$0xff]
    %v295 = vld [vmem:[#allocation2 + $0x2f0] sm:$0xff]
    %v296 = vld [vmem:[#allocation2 + $0x300] sm:$0xff]
    %v297 = vld [vmem:[#allocation2 + $0x308] sm:$0xff]
    %v298 = vld [vmem:[#allocation2 + $0x318] sm:$0xff]
    %v299 = vld [vmem:[#allocation2 + $0x320] sm:$0xff]
    %v300 = vld [vmem:[#allocation2 + $0x1] sm:$0xff]
    %v301 = vld [vmem:[#allocation2 + $0x9] sm:$0xff]
    %v302 = vld [vmem:[#allocation2 + $0x19] sm:$0xff]
    %v303 = vld [vmem:[#allocation2 + $0x21] sm:$0xff]
    %v304 = vld [vmem:[#allocation2 + $0x31] sm:$0xff]
    %v305 = vld [vmem:[#allocation2 + $0x39] sm:$0xff]
    %v306 = vld [vmem:[#allocation2 + $0x49] sm:$0xff]
    %v307 = vld [vmem:[#allocation2 + $0x51] sm:$0xff]
    %v308 = vld [vmem:[#allocation2 + $0x61] sm:$0xff]
    %v309 = vld [vmem:[#allocation2 + $0x69] sm:$0xff]
    %v310 = vld [vmem:[#allocation2 + $0x79] sm:$0xff]
    %v311 = vld [vmem:[#allocation2 + $0x81] sm:$0xff]
    %v312 = vld [vmem:[#allocation2 + $0x91] sm:$0xff]
    %v313 = vld [vmem:[#allocation2 + $0x99] sm:$0xff]
    %v314 = vld [vmem:[#allocation2 + $0xa9] sm:$0xff]
    %v315 = vld [vmem:[#allocation2 + $0xb1] sm:$0xff]
    %v316 = vld [vmem:[#allocation2 + $0xc1] sm:$0xff]
    %v317 = vld [vmem:[#allocation2 + $0xc9] sm:$0xff]
    %v318 = vld [vmem:[#allocation2 + $0xd9] sm:$0xff]
    %v319 = vld [vmem:[#allocation2 + $0xe1] sm:$0xff]
    %v320 = vld [vmem:[#allocation2 + $0xf1] sm:$0xff]
    %v321 = vld [vmem:[#allocation2 + $0xf9] sm:$0xff]
    %v322 = vld [vmem:[#allocation2 + $0x109] sm:$0xff]
    %v323 = vld [vmem:[#allocation2 + $0x111] sm:$0xff]
    %v324 = vld [vmem:[#allocation2 + $0x121] sm:$0xff]
    %v325 = vld [vmem:[#allocation2 + $0x129] sm:$0xff]
    %v326 = vld [vmem:[#allocation2 + $0x139] sm:$0xff]
    %v327 = vld [vmem:[#allocation2 + $0x141] sm:$0xff]
    %v328 = vld [vmem:[#allocation2 + $0x151] sm:$0xff]
    %v329 = vld [vmem:[#allocation2 + $0x159] sm:$0xff]
    %v330 = vld [vmem:[#allocation2 + $0x169] sm:$0xff]
    %v331 = vld [vmem:[#allocation2 + $0x171] sm:$0xff]
    %v332 = vld [vmem:[#allocation2 + $0x1b1] sm:$0xff]
    %v333 = vld [vmem:[#allocation2 + $0x1b9] sm:$0xff]
    %v334 = vld [vmem:[#allocation2 + $0x1c9] sm:$0xff]
    %v335 = vld [vmem:[#allocation2 + $0x1d1] sm:$0xff]
    %v336 = vld [vmem:[#allocation2 + $0x1e1] sm:$0xff]
    %v337 = vld [vmem:[#allocation2 + $0x1e9] sm:$0xff]
    %v338 = vld [vmem:[#allocation2 + $0x1f9] sm:$0xff]
    %v339 = vld [vmem:[#allocation2 + $0x201] sm:$0xff]
    %v340 = vld [vmem:[#allocation2 + $0x211] sm:$0xff]
    %v341 = vld [vmem:[#allocation2 + $0x219] sm:$0xff]
    %v342 = vld [vmem:[#allocation2 + $0x229] sm:$0xff]
    %v343 = vld [vmem:[#allocation2 + $0x231] sm:$0xff]
    %v344 = vld [vmem:[#allocation2 + $0x241] sm:$0xff]
    %v345 = vld [vmem:[#allocation2 + $0x249] sm:$0xff]
    %v346 = vld [vmem:[#allocation2 + $0x259] sm:$0xff]
    %v347 = vld [vmem:[#allocation2 + $0x261] sm:$0xff]
    %v348 = vld [vmem:[#allocation2 + $0x271] sm:$0xff]
    %v349 = vld [vmem:[#allocation2 + $0x279] sm:$0xff]
    %v350 = vld [vmem:[#allocation2 + $0x289] sm:$0xff]
    %v351 = vld [vmem:[#allocation2 + $0x291] sm:$0xff]
    %v352 = vld [vmem:[#allocation2 + $0x2a1] sm:$0xff]
    %v353 = vld [vmem:[#allocation2 + $0x2a9] sm:$0xff]
    %v354 = vld [vmem:[#allocation2 + $0x2b9] sm:$0xff]
    %v355 = vld [vmem:[#allocation2 + $0x2c1] sm:$0xff]
    %v356 = vld [vmem:[#allocation2 + $0x2d1] sm:$0xff]
    %v357 = vld [vmem:[#allocation2 + $0x2d9] sm:$0xff]
    %v358 = vld [vmem:[#allocation2 + $0x2e9] sm:$0xff]
    %v359 = vld [vmem:[#allocation2 + $0x2f1] sm:$0xff]
    %v360 = vld [vmem:[#allocation2 + $0x301] sm:$0xff]
    %v361 = vld [vmem:[#allocation2 + $0x309] sm:$0xff]
    %v362 = vld [vmem:[#allocation2 + $0x319] sm:$0xff]
    %v363 = vld [vmem:[#allocation2 + $0x321] sm:$0xff]
    %v364 = vld [vmem:[#allocation2 + $0x2] sm:$0xff]
    %v365 = vld [vmem:[#allocation2 + $0xa] sm:$0xff]
    %v366 = vld [vmem:[#allocation2 + $0x1a] sm:$0xff]
    %v367 = vld [vmem:[#allocation2 + $0x22] sm:$0xff]
    %v368 = vld [vmem:[#allocation2 + $0x32] sm:$0xff]
    %v369 = vld [vmem:[#allocation2 + $0x3a] sm:$0xff]
    %v370 = vld [vmem:[#allocation2 + $0x4a] sm:$0xff]
    %v371 = vld [vmem:[#allocation2 + $0x52] sm:$0xff]
    %v372 = vld [vmem:[#allocation2 + $0x62] sm:$0xff]
    %v373 = vld [vmem:[#allocation2 + $0x6a] sm:$0xff]
    %v374 = vld [vmem:[#allocation2 + $0x7a] sm:$0xff]
    %v375 = vld [vmem:[#allocation2 + $0x82] sm:$0xff]
    %v376 = vld [vmem:[#allocation2 + $0x92] sm:$0xff]
    %v377 = vld [vmem:[#allocation2 + $0x9a] sm:$0xff]
    %v378 = vld [vmem:[#allocation2 + $0xaa] sm:$0xff]
    %v379 = vld [vmem:[#allocation2 + $0xb2] sm:$0xff]
    %v380 = vld [vmem:[#allocation2 + $0xc2] sm:$0xff]
    %v381 = vld [vmem:[#allocation2 + $0xca] sm:$0xff]
    %v382 = vld [vmem:[#allocation2 + $0xda] sm:$0xff]
    %v383 = vld [vmem:[#allocation2 + $0xe2] sm:$0xff]
    %v384 = vld [vmem:[#allocation2 + $0xf2] sm:$0xff]
    %v385 = vld [vmem:[#allocation2 + $0xfa] sm:$0xff]
    %v386 = vld [vmem:[#allocation2 + $0x10a] sm:$0xff]
    %v387 = vld [vmem:[#allocation2 + $0x112] sm:$0xff]
    %v388 = vld [vmem:[#allocation2 + $0x122] sm:$0xff]
    %v389 = vld [vmem:[#allocation2 + $0x12a] sm:$0xff]
    %v390 = vld [vmem:[#allocation2 + $0x13a] sm:$0xff]
    %v391 = vld [vmem:[#allocation2 + $0x142] sm:$0xff]
    %v392 = vld [vmem:[#allocation2 + $0x152] sm:$0xff]
    %v393 = vld [vmem:[#allocation2 + $0x15a] sm:$0xff]
    %v394 = vld [vmem:[#allocation2 + $0x16a] sm:$0xff]
    %v395 = vld [vmem:[#allocation2 + $0x172] sm:$0xff]
    %v396 = vld [vmem:[#allocation2 + $0x1b2] sm:$0xff]
    %v397 = vld [vmem:[#allocation2 + $0x1ba] sm:$0xff]
    %v398 = vld [vmem:[#allocation2 + $0x1ca] sm:$0xff]
    %v399 = vld [vmem:[#allocation2 + $0x1d2] sm:$0xff]
    %v400 = vld [vmem:[#allocation2 + $0x1e2] sm:$0xff]
    %v401 = vld [vmem:[#allocation2 + $0x1ea] sm:$0xff]
    %v402 = vld [vmem:[#allocation2 + $0x1fa] sm:$0xff]
    %v403 = vld [vmem:[#allocation2 + $0x202] sm:$0xff]
    %v404 = vld [vmem:[#allocation2 + $0x212] sm:$0xff]
    %v405 = vld [vmem:[#allocation2 + $0x21a] sm:$0xff]
    %v406 = vld [vmem:[#allocation2 + $0x22a] sm:$0xff]
    %v407 = vld [vmem:[#allocation2 + $0x232] sm:$0xff]
    %v408 = vld [vmem:[#allocation2 + $0x242] sm:$0xff]
    %v409 = vld [vmem:[#allocation2 + $0x24a] sm:$0xff]
    %v410 = vld [vmem:[#allocation2 + $0x25a] sm:$0xff]
    %v411 = vld [vmem:[#allocation2 + $0x262] sm:$0xff]
    %v412 = vld [vmem:[#allocation2 + $0x272] sm:$0xff]
    %v413 = vld [vmem:[#allocation2 + $0x27a] sm:$0xff]
    %v414 = vld [vmem:[#allocation2 + $0x28a] sm:$0xff]
    %v415 = vld [vmem:[#allocation2 + $0x292] sm:$0xff]
    %v416 = vld [vmem:[#allocation2 + $0x2a2] sm:$0xff]
    %v417 = vld [vmem:[#allocation2 + $0x2aa] sm:$0xff]
    %v418 = vld [vmem:[#allocation2 + $0x2ba] sm:$0xff]
    %v419 = vld [vmem:[#allocation2 + $0x2c2] sm:$0xff]
    %v420 = vld [vmem:[#allocation2 + $0x2d2] sm:$0xff]
    %v421 = vld [vmem:[#allocation2 + $0x2da] sm:$0xff]
    %v422 = vld [vmem:[#allocation2 + $0x2ea] sm:$0xff]
    %v423 = vld [vmem:[#allocation2 + $0x2f2] sm:$0xff]
    %v424 = vld [vmem:[#allocation2 + $0x302] sm:$0xff]
    %v425 = vld [vmem:[#allocation2 + $0x30a] sm:$0xff]
    %v426 = vld [vmem:[#allocation2 + $0x31a] sm:$0xff]
    %v427 = vld [vmem:[#allocation2 + $0x322] sm:$0xff]
    %v428 = vld [vmem:[%s42] sm:$0xff]
    %v429 = vld [vmem:[%s42 + $0x8] sm:$0xff]
    %v430 = vld [vmem:[%s42 + $0x18] sm:$0xff]
    %v431 = vld [vmem:[%s42 + $0x20] sm:$0xff]
    %v432 = vld [vmem:[%s42 + $0x30] sm:$0xff]
    %v433 = vld [vmem:[%s42 + $0x38] sm:$0xff]
    %v434 = vld [vmem:[%s42 + $0x48] sm:$0xff]
    %v435 = vld [vmem:[%s42 + $0x50] sm:$0xff]
    %v436 = vld [vmem:[%s42 + $0x60] sm:$0xff]
    %v437 = vld [vmem:[%s42 + $0x68] sm:$0xff]
    %v438 = vld [vmem:[%s42 + $0x78] sm:$0xff]
    %v439 = vld [vmem:[%s42 + $0x80] sm:$0xff]
    %v440 = vld [vmem:[%s42 + $0x90] sm:$0xff]
    %v441 = vld [vmem:[%s42 + $0x98] sm:$0xff]
    %v442 = vld [vmem:[%s42 + $0xa8] sm:$0xff]
    %v443 = vld [vmem:[%s42 + $0xb0] sm:$0xff]
    %v444 = vld [vmem:[%s42 + $0xc0] sm:$0xff]
    %v445 = vld [vmem:[%s42 + $0xc8] sm:$0xff]
    %v446 = vld [vmem:[%s42 + $0xd8] sm:$0xff]
    %v447 = vld [vmem:[%s42 + $0xe0] sm:$0xff]
    %v448 = vld [vmem:[%s42 + $0xf0] sm:$0xff]
    %v449 = vld [vmem:[%s42 + $0xf8] sm:$0xff]
    %v450 = vld [vmem:[%s42 + $0x108] sm:$0xff]
    %v451 = vld [vmem:[%s42 + $0x110] sm:$0xff]
    %v452 = vld [vmem:[%s42 + $0x120] sm:$0xff]
    %v453 = vld [vmem:[%s42 + $0x128] sm:$0xff]
    %v454 = vld [vmem:[%s42 + $0x138] sm:$0xff]
    %v455 = vld [vmem:[%s42 + $0x140] sm:$0xff]
    %v456 = vld [vmem:[%s42 + $0x150] sm:$0xff]
    %v457 = vld [vmem:[%s42 + $0x158] sm:$0xff]
    %v458 = vld [vmem:[%s42 + $0x168] sm:$0xff]
    %v459 = vld [vmem:[%s42 + $0x170] sm:$0xff]
    %v460 = vld [vmem:[%s42 + $0x1b0] sm:$0xff]
    %v461 = vld [vmem:[%s42 + $0x1b8] sm:$0xff]
    %v462 = vld [vmem:[%s42 + $0x1c8] sm:$0xff]
    %v463 = vld [vmem:[%s42 + $0x1d0] sm:$0xff]
    %v464 = vld [vmem:[%s42 + $0x1e0] sm:$0xff]
    %v465 = vld [vmem:[%s42 + $0x1e8] sm:$0xff]
    %v466 = vld [vmem:[%s42 + $0x1f8] sm:$0xff]
    %v467 = vld [vmem:[%s42 + $0x200] sm:$0xff]
    %v468 = vld [vmem:[%s42 + $0x210] sm:$0xff]
    %v469 = vld [vmem:[%s42 + $0x218] sm:$0xff]
    %v470 = vld [vmem:[%s42 + $0x228] sm:$0xff]
    %v471 = vld [vmem:[%s42 + $0x230] sm:$0xff]
    %v472 = vld [vmem:[%s42 + $0x240] sm:$0xff]
    %v473 = vld [vmem:[%s42 + $0x248] sm:$0xff]
    %v474 = vld [vmem:[%s42 + $0x258] sm:$0xff]
    %v475 = vld [vmem:[%s42 + $0x260] sm:$0xff]
    %v476 = vld [vmem:[%s42 + $0x270] sm:$0xff]
    %v477 = vld [vmem:[%s42 + $0x278] sm:$0xff]
    %v478 = vld [vmem:[%s42 + $0x288] sm:$0xff]
    %v479 = vld [vmem:[%s42 + $0x290] sm:$0xff]
    %v480 = vld [vmem:[%s42 + $0x2a0] sm:$0xff]
    %v481 = vld [vmem:[%s42 + $0x2a8] sm:$0xff]
    %v482 = vld [vmem:[%s42 + $0x2b8] sm:$0xff]
    %v483 = vld [vmem:[%s42 + $0x2c0] sm:$0xff]
    %v484 = vld [vmem:[%s42 + $0x2d0] sm:$0xff]
    %v485 = vld [vmem:[%s42 + $0x2d8] sm:$0xff]
    %v486 = vld [vmem:[%s42 + $0x2e8] sm:$0xff]
    %v487 = vld [vmem:[%s42 + $0x2f0] sm:$0xff]
    %v488 = vld [vmem:[%s42 + $0x300] sm:$0xff]
    %v489 = vld [vmem:[%s42 + $0x308] sm:$0xff]
    %v490 = vld [vmem:[%s42 + $0x318] sm:$0xff]
    %v491 = vld [vmem:[%s42 + $0x320] sm:$0xff]
    %v492 = vld [vmem:[%s42 + $0x1] sm:$0xff]
    %v493 = vld [vmem:[%s42 + $0x9] sm:$0xff]
    %v494 = vld [vmem:[%s42 + $0x19] sm:$0xff]
    %v495 = vld [vmem:[%s42 + $0x21] sm:$0xff]
    %v496 = vld [vmem:[%s42 + $0x31] sm:$0xff]
    %v497 = vld [vmem:[%s42 + $0x39] sm:$0xff]
    %v498 = vld [vmem:[%s42 + $0x49] sm:$0xff]
    %v499 = vld [vmem:[%s42 + $0x51] sm:$0xff]
    %v500 = vld [vmem:[%s42 + $0x61] sm:$0xff]
    %v501 = vld [vmem:[%s42 + $0x69] sm:$0xff]
    %v502 = vld [vmem:[%s42 + $0x79] sm:$0xff]
    %v503 = vld [vmem:[%s42 + $0x81] sm:$0xff]
    %v504 = vld [vmem:[%s42 + $0x91] sm:$0xff]
    %v505 = vld [vmem:[%s42 + $0x99] sm:$0xff]
    %v506 = vld [vmem:[%s42 + $0xa9] sm:$0xff]
    %v507 = vld [vmem:[%s42 + $0xb1] sm:$0xff]
    %v508 = vld [vmem:[%s42 + $0xc1] sm:$0xff]
    %v509 = vld [vmem:[%s42 + $0xc9] sm:$0xff]
    %v510 = vld [vmem:[%s42 + $0xd9] sm:$0xff]
    %v511 = vld [vmem:[%s42 + $0xe1] sm:$0xff]
    %v512 = vld [vmem:[%s42 + $0xf1] sm:$0xff]
    %v513 = vld [vmem:[%s42 + $0xf9] sm:$0xff]
    %v514 = vld [vmem:[%s42 + $0x109] sm:$0xff]
    %v515 = vld [vmem:[%s42 + $0x111] sm:$0xff]
    %v516 = vld [vmem:[%s42 + $0x121] sm:$0xff]
    %v517 = vld [vmem:[%s42 + $0x129] sm:$0xff]
    %v518 = vld [vmem:[%s42 + $0x139] sm:$0xff]
    %v519 = vld [vmem:[%s42 + $0x141] sm:$0xff]
    %v520 = vld [vmem:[%s42 + $0x151] sm:$0xff]
    %v521 = vld [vmem:[%s42 + $0x159] sm:$0xff]
    %v522 = vld [vmem:[%s42 + $0x169] sm:$0xff]
    %v523 = vld [vmem:[%s42 + $0x171] sm:$0xff]
    %v524 = vld [vmem:[%s42 + $0x1b1] sm:$0xff]
    %v525 = vld [vmem:[%s42 + $0x1b9] sm:$0xff]
    %v526 = vld [vmem:[%s42 + $0x1c9] sm:$0xff]
    %v527 = vld [vmem:[%s42 + $0x1d1] sm:$0xff]
    %v528 = vld [vmem:[%s42 + $0x1e1] sm:$0xff]
    %v529 = vld [vmem:[%s42 + $0x1e9] sm:$0xff]
    %v530 = vld [vmem:[%s42 + $0x1f9] sm:$0xff]
    %v531 = vld [vmem:[%s42 + $0x201] sm:$0xff]
    %v532 = vld [vmem:[%s42 + $0x211] sm:$0xff]
    %v533 = vld [vmem:[%s42 + $0x219] sm:$0xff]
    %v534 = vld [vmem:[%s42 + $0x229] sm:$0xff]
    %v535 = vld [vmem:[%s42 + $0x231] sm:$0xff]
    %v536 = vld [vmem:[%s42 + $0x241] sm:$0xff]
    %v537 = vld [vmem:[%s42 + $0x249] sm:$0xff]
    %v538 = vld [vmem:[%s42 + $0x259] sm:$0xff]
    %v539 = vld [vmem:[%s42 + $0x261] sm:$0xff]
    %v540 = vld [vmem:[%s42 + $0x271] sm:$0xff]
    %v541 = vld [vmem:[%s42 + $0x279] sm:$0xff]
    %v542 = vld [vmem:[%s42 + $0x289] sm:$0xff]
    %v543 = vld [vmem:[%s42 + $0x291] sm:$0xff]
    %v544 = vld [vmem:[%s42 + $0x2a1] sm:$0xff]
    %v545 = vld [vmem:[%s42 + $0x2a9] sm:$0xff]
    %v546 = vld [vmem:[%s42 + $0x2b9] sm:$0xff]
    %v547 = vld [vmem:[%s42 + $0x2c1] sm:$0xff]
    %v548 = vld [vmem:[%s42 + $0x2d1] sm:$0xff]
    %v549 = vld [vmem:[%s42 + $0x2d9] sm:$0xff]
    %v550 = vld [vmem:[%s42 + $0x2e9] sm:$0xff]
    %v551 = vld [vmem:[%s42 + $0x2f1] sm:$0xff]
    %v552 = vld [vmem:[%s42 + $0x301] sm:$0xff]
    %v553 = vld [vmem:[%s42 + $0x309] sm:$0xff]
    %v554 = vld [vmem:[%s42 + $0x319] sm:$0xff]
    %v555 = vld [vmem:[%s42 + $0x321] sm:$0xff]
    %v556 = vld [vmem:[%s42 + $0x2] sm:$0xff]
    %v557 = vld [vmem:[%s42 + $0xa] sm:$0xff]
    %v558 = vld [vmem:[%s42 + $0x1a] sm:$0xff]
    %v559 = vld [vmem:[%s42 + $0x22] sm:$0xff]
    %v560 = vld [vmem:[%s42 + $0x32] sm:$0xff]
    %v561 = vld [vmem:[%s42 + $0x3a] sm:$0xff]
    %v562 = vld [vmem:[%s42 + $0x4a] sm:$0xff]
    %v563 = vld [vmem:[%s42 + $0x52] sm:$0xff]
    %v564 = vld [vmem:[%s42 + $0x62] sm:$0xff]
    %v565 = vld [vmem:[%s42 + $0x6a] sm:$0xff]
    %v566 = vld [vmem:[%s42 + $0x7a] sm:$0xff]
    %v567 = vld [vmem:[%s42 + $0x82] sm:$0xff]
    %v568 = vld [vmem:[%s42 + $0x92] sm:$0xff]
    %v569 = vld [vmem:[%s42 + $0x9a] sm:$0xff]
    %v570 = vld [vmem:[%s42 + $0xaa] sm:$0xff]
    %v571 = vld [vmem:[%s42 + $0xb2] sm:$0xff]
    %v572 = vld [vmem:[%s42 + $0xc2] sm:$0xff]
    %v573 = vld [vmem:[%s42 + $0xca] sm:$0xff]
    %v574 = vld [vmem:[%s42 + $0xda] sm:$0xff]
    %v575 = vld [vmem:[%s42 + $0xe2] sm:$0xff]
    %v576 = vld [vmem:[%s42 + $0xf2] sm:$0xff]
    %v577 = vld [vmem:[%s42 + $0xfa] sm:$0xff]
    %v578 = vld [vmem:[%s42 + $0x10a] sm:$0xff]
    %v579 = vld [vmem:[%s42 + $0x112] sm:$0xff]
    %v580 = vld [vmem:[%s42 + $0x122] sm:$0xff]
    %v581 = vld [vmem:[%s42 + $0x12a] sm:$0xff]
    %v582 = vld [vmem:[%s42 + $0x13a] sm:$0xff]
    %v583 = vld [vmem:[%s42 + $0x142] sm:$0xff]
    %v584 = vld [vmem:[%s42 + $0x152] sm:$0xff]
    %v585 = vld [vmem:[%s42 + $0x15a] sm:$0xff]
    %v586 = vld [vmem:[%s42 + $0x16a] sm:$0xff]
    %v587 = vld [vmem:[%s42 + $0x172] sm:$0xff]
    %v588 = vld [vmem:[%s42 + $0x1b2] sm:$0xff]
    %v589 = vld [vmem:[%s42 + $0x1ba] sm:$0xff]
    %v590 = vld [vmem:[%s42 + $0x1ca] sm:$0xff]
    %v591 = vld [vmem:[%s42 + $0x1d2] sm:$0xff]
    %v592 = vld [vmem:[%s42 + $0x1e2] sm:$0xff]
    %v593 = vld [vmem:[%s42 + $0x1ea] sm:$0xff]
    %v594 = vld [vmem:[%s42 + $0x1fa] sm:$0xff]
    %v595 = vld [vmem:[%s42 + $0x202] sm:$0xff]
    %v596 = vld [vmem:[%s42 + $0x212] sm:$0xff]
    %v597 = vld [vmem:[%s42 + $0x21a] sm:$0xff]
    %v598 = vld [vmem:[%s42 + $0x22a] sm:$0xff]
    %v599 = vld [vmem:[%s42 + $0x232] sm:$0xff]
    %v600 = vld [vmem:[%s42 + $0x242] sm:$0xff]
    %v601 = vld [vmem:[%s42 + $0x24a] sm:$0xff]
    %v602 = vld [vmem:[%s42 + $0x25a] sm:$0xff]
    %v603 = vld [vmem:[%s42 + $0x262] sm:$0xff]
    %v604 = vld [vmem:[%s42 + $0x272] sm:$0xff]
    %v605 = vld [vmem:[%s42 + $0x27a] sm:$0xff]
    %v606 = vld [vmem:[%s42 + $0x28a] sm:$0xff]
    %v607 = vld [vmem:[%s42 + $0x292] sm:$0xff]
    %v608 = vld [vmem:[%s42 + $0x2a2] sm:$0xff]
    %v609 = vld [vmem:[%s42 + $0x2aa] sm:$0xff]
    %v610 = vld [vmem:[%s42 + $0x2ba] sm:$0xff]
    %v611 = vld [vmem:[%s42 + $0x2c2] sm:$0xff]
    %v612 = vld [vmem:[%s42 + $0x2d2] sm:$0xff]
    %v613 = vld [vmem:[%s42 + $0x2da] sm:$0xff]
    %v614 = vld [vmem:[%s42 + $0x2ea] sm:$0xff]
    %v615 = vld [vmem:[%s42 + $0x2f2] sm:$0xff]
    %v616 = vld [vmem:[%s42 + $0x302] sm:$0xff]
    %v617 = vld [vmem:[%s42 + $0x30a] sm:$0xff]
    %v618 = vld [vmem:[%s42 + $0x31a] sm:$0xff]
    %v619 = vld [vmem:[%s42 + $0x322] sm:$0xff]
    %s620 = scalar_lea.vmem [#allocation2], 48
    %v621 = vld [vmem:[%s620] sm:$0xff]
    %v622 = vld [vmem:[%s620 + $0x8] sm:$0xff]
    %v623 = vld [vmem:[%s620 + $0x18] sm:$0xff]
    %v624 = vld [vmem:[%s620 + $0x20] sm:$0xff]
    %v625 = vld [vmem:[%s620 + $0x30] sm:$0xff]
    %v626 = vld [vmem:[%s620 + $0x38] sm:$0xff]
    %v627 = vld [vmem:[%s620 + $0x48] sm:$0xff]
    %v628 = vld [vmem:[%s620 + $0x50] sm:$0xff]
    %v629 = vld [vmem:[%s620 + $0x60] sm:$0xff]
    %v630 = vld [vmem:[%s620 + $0x68] sm:$0xff]
    %v631 = vld [vmem:[%s620 + $0x78] sm:$0xff]
    %v632 = vld [vmem:[%s620 + $0x80] sm:$0xff]
    %v633 = vld [vmem:[%s620 + $0x90] sm:$0xff]
    %v634 = vld [vmem:[%s620 + $0x98] sm:$0xff]
    %v635 = vld [vmem:[%s620 + $0xa8] sm:$0xff]
    %v636 = vld [vmem:[%s620 + $0xb0] sm:$0xff]
    %v637 = vld [vmem:[%s620 + $0xc0] sm:$0xff]
    %v638 = vld [vmem:[%s620 + $0xc8] sm:$0xff]
    %v639 = vld [vmem:[%s620 + $0xd8] sm:$0xff]
    %v640 = vld [vmem:[%s620 + $0xe0] sm:$0xff]
    %v641 = vld [vmem:[%s620 + $0xf0] sm:$0xff]
    %v642 = vld [vmem:[%s620 + $0xf8] sm:$0xff]
    %v643 = vld [vmem:[%s620 + $0x108] sm:$0xff]
    %v644 = vld [vmem:[%s620 + $0x110] sm:$0xff]
    %v645 = vld [vmem:[%s620 + $0x120] sm:$0xff]
    %v646 = vld [vmem:[%s620 + $0x128] sm:$0xff]
    %v647 = vld [vmem:[%s620 + $0x138] sm:$0xff]
    %v648 = vld [vmem:[%s620 + $0x140] sm:$0xff]
    %v649 = vld [vmem:[%s620 + $0x150] sm:$0xff]
    %v650 = vld [vmem:[%s620 + $0x158] sm:$0xff]
    %v651 = vld [vmem:[%s620 + $0x168] sm:$0xff]
    %v652 = vld [vmem:[%s620 + $0x170] sm:$0xff]
    %v653 = vld [vmem:[%s620 + $0x1b0] sm:$0xff]
    %v654 = vld [vmem:[%s620 + $0x1b8] sm:$0xff]
    %v655 = vld [vmem:[%s620 + $0x1c8] sm:$0xff]
    %v656 = vld [vmem:[%s620 + $0x1d0] sm:$0xff]
    %v657 = vld [vmem:[%s620 + $0x1e0] sm:$0xff]
    %v658 = vld [vmem:[%s620 + $0x1e8] sm:$0xff]
    %v659 = vld [vmem:[%s620 + $0x1f8] sm:$0xff]
    %v660 = vld [vmem:[%s620 + $0x200] sm:$0xff]
    %v661 = vld [vmem:[%s620 + $0x210] sm:$0xff]
    %v662 = vld [vmem:[%s620 + $0x218] sm:$0xff]
    %v663 = vld [vmem:[%s620 + $0x228] sm:$0xff]
    %v664 = vld [vmem:[%s620 + $0x230] sm:$0xff]
    %v665 = vld [vmem:[%s620 + $0x240] sm:$0xff]
    %v666 = vld [vmem:[%s620 + $0x248] sm:$0xff]
    %v667 = vld [vmem:[%s620 + $0x258] sm:$0xff]
    %v668 = vld [vmem:[%s620 + $0x260] sm:$0xff]
    %v669 = vld [vmem:[%s620 + $0x270] sm:$0xff]
    %v670 = vld [vmem:[%s620 + $0x278] sm:$0xff]
    %v671 = vld [vmem:[%s620 + $0x288] sm:$0xff]
    %v672 = vld [vmem:[%s620 + $0x290] sm:$0xff]
    %v673 = vld [vmem:[%s620 + $0x2a0] sm:$0xff]
    %v674 = vld [vmem:[%s620 + $0x2a8] sm:$0xff]
    %v675 = vld [vmem:[%s620 + $0x2b8] sm:$0xff]
    %v676 = vld [vmem:[%s620 + $0x2c0] sm:$0xff]
    %v677 = vld [vmem:[%s620 + $0x2d0] sm:$0xff]
    %v678 = vld [vmem:[%s620 + $0x2d8] sm:$0xff]
    %v679 = vld [vmem:[%s620 + $0x2e8] sm:$0xff]
    %v680 = vld [vmem:[%s620 + $0x2f0] sm:$0xff]
    %v681 = vld [vmem:[%s620 + $0x300] sm:$0xff]
    %v682 = vld [vmem:[%s620 + $0x308] sm:$0xff]
    %v683 = vld [vmem:[%s620 + $0x318] sm:$0xff]
    %v684 = vld [vmem:[%s620 + $0x320] sm:$0xff]
    %v685 = vld [vmem:[%s620 + $0x1] sm:$0xff]
    %v686 = vld [vmem:[%s620 + $0x9] sm:$0xff]
    %v687 = vld [vmem:[%s620 + $0x19] sm:$0xff]
    %v688 = vld [vmem:[%s620 + $0x21] sm:$0xff]
    %v689 = vld [vmem:[%s620 + $0x31] sm:$0xff]
    %v690 = vld [vmem:[%s620 + $0x39] sm:$0xff]
    %v691 = vld [vmem:[%s620 + $0x49] sm:$0xff]
    %v692 = vld [vmem:[%s620 + $0x51] sm:$0xff]
    %v693 = vld [vmem:[%s620 + $0x61] sm:$0xff]
    %v694 = vld [vmem:[%s620 + $0x69] sm:$0xff]
    %v695 = vld [vmem:[%s620 + $0x79] sm:$0xff]
    %v696 = vld [vmem:[%s620 + $0x81] sm:$0xff]
    %v697 = vld [vmem:[%s620 + $0x91] sm:$0xff]
    %v698 = vld [vmem:[%s620 + $0x99] sm:$0xff]
    %v699 = vld [vmem:[%s620 + $0xa9] sm:$0xff]
    %v700 = vld [vmem:[%s620 + $0xb1] sm:$0xff]
    %v701 = vld [vmem:[%s620 + $0xc1] sm:$0xff]
    %v702 = vld [vmem:[%s620 + $0xc9] sm:$0xff]
    %v703 = vld [vmem:[%s620 + $0xd9] sm:$0xff]
    %v704 = vld [vmem:[%s620 + $0xe1] sm:$0xff]
    %v705 = vld [vmem:[%s620 + $0xf1] sm:$0xff]
    %v706 = vld [vmem:[%s620 + $0xf9] sm:$0xff]
    %v707 = vld [vmem:[%s620 + $0x109] sm:$0xff]
    %v708 = vld [vmem:[%s620 + $0x111] sm:$0xff]
    %v709 = vld [vmem:[%s620 + $0x121] sm:$0xff]
    %v710 = vld [vmem:[%s620 + $0x129] sm:$0xff]
    %v711 = vld [vmem:[%s620 + $0x139] sm:$0xff]
    %v712 = vld [vmem:[%s620 + $0x141] sm:$0xff]
    %v713 = vld [vmem:[%s620 + $0x151] sm:$0xff]
    %v714 = vld [vmem:[%s620 + $0x159] sm:$0xff]
    %v715 = vld [vmem:[%s620 + $0x169] sm:$0xff]
    %v716 = vld [vmem:[%s620 + $0x171] sm:$0xff]
    %v717 = vld [vmem:[%s620 + $0x1b1] sm:$0xff]
    %v718 = vld [vmem:[%s620 + $0x1b9] sm:$0xff]
    %v719 = vld [vmem:[%s620 + $0x1c9] sm:$0xff]
    %v720 = vld [vmem:[%s620 + $0x1d1] sm:$0xff]
    %v721 = vld [vmem:[%s620 + $0x1e1] sm:$0xff]
    %v722 = vld [vmem:[%s620 + $0x1e9] sm:$0xff]
    %v723 = vld [vmem:[%s620 + $0x1f9] sm:$0xff]
    %v724 = vld [vmem:[%s620 + $0x201] sm:$0xff]
    %v725 = vld [vmem:[%s620 + $0x211] sm:$0xff]
    %v726 = vld [vmem:[%s620 + $0x219] sm:$0xff]
    %v727 = vld [vmem:[%s620 + $0x229] sm:$0xff]
    %v728 = vld [vmem:[%s620 + $0x231] sm:$0xff]
    %v729 = vld [vmem:[%s620 + $0x241] sm:$0xff]
    %v730 = vld [vmem:[%s620 + $0x249] sm:$0xff]
    %v731 = vld [vmem:[%s620 + $0x259] sm:$0xff]
    %v732 = vld [vmem:[%s620 + $0x261] sm:$0xff]
    %v733 = vld [vmem:[%s620 + $0x271] sm:$0xff]
    %v734 = vld [vmem:[%s620 + $0x279] sm:$0xff]
    %v735 = vld [vmem:[%s620 + $0x289] sm:$0xff]
    %v736 = vld [vmem:[%s620 + $0x291] sm:$0xff]
    %v737 = vld [vmem:[%s620 + $0x2a1] sm:$0xff]
    %v738 = vld [vmem:[%s620 + $0x2a9] sm:$0xff]
    %v739 = vld [vmem:[%s620 + $0x2b9] sm:$0xff]
    %v740 = vld [vmem:[%s620 + $0x2c1] sm:$0xff]
    %v741 = vld [vmem:[%s620 + $0x2d1] sm:$0xff]
    %v742 = vld [vmem:[%s620 + $0x2d9] sm:$0xff]
    %v743 = vld [vmem:[%s620 + $0x2e9] sm:$0xff]
    %v744 = vld [vmem:[%s620 + $0x2f1] sm:$0xff]
    %v745 = vld [vmem:[%s620 + $0x301] sm:$0xff]
    %v746 = vld [vmem:[%s620 + $0x309] sm:$0xff]
    %v747 = vld [vmem:[%s620 + $0x319] sm:$0xff]
    %v748 = vld [vmem:[%s620 + $0x321] sm:$0xff]
    %v749 = vld [vmem:[%s620 + $0x2] sm:$0xff]
    %v750 = vld [vmem:[%s620 + $0xa] sm:$0xff]
    %v751 = vld [vmem:[%s620 + $0x1a] sm:$0xff]
    %v752 = vld [vmem:[%s620 + $0x22] sm:$0xff]
    %v753 = vld [vmem:[%s620 + $0x32] sm:$0xff]
    %v754 = vld [vmem:[%s620 + $0x3a] sm:$0xff]
    %v755 = vld [vmem:[%s620 + $0x4a] sm:$0xff]
    %v756 = vld [vmem:[%s620 + $0x52] sm:$0xff]
    %v757 = vld [vmem:[%s620 + $0x62] sm:$0xff]
    %v758 = vld [vmem:[%s620 + $0x6a] sm:$0xff]
    %v759 = vld [vmem:[%s620 + $0x7a] sm:$0xff]
    %v760 = vld [vmem:[%s620 + $0x82] sm:$0xff]
    %v761 = vld [vmem:[%s620 + $0x92] sm:$0xff]
    %v762 = vld [vmem:[%s620 + $0x9a] sm:$0xff]
    %v763 = vld [vmem:[%s620 + $0xaa] sm:$0xff]
    %v764 = vld [vmem:[%s620 + $0xb2] sm:$0xff]
    %v765 = vld [vmem:[%s620 + $0xc2] sm:$0xff]
    %v766 = vld [vmem:[%s620 + $0xca] sm:$0xff]
    %v767 = vld [vmem:[%s620 + $0xda] sm:$0xff]
    %v768 = vld [vmem:[%s620 + $0xe2] sm:$0xff]
    %v769 = vld [vmem:[%s620 + $0xf2] sm:$0xff]
    %v770 = vld [vmem:[%s620 + $0xfa] sm:$0xff]
    %v771 = vld [vmem:[%s620 + $0x10a] sm:$0xff]
    %v772 = vld [vmem:[%s620 + $0x112] sm:$0xff]
    %v773 = vld [vmem:[%s620 + $0x122] sm:$0xff]
    %v774 = vld [vmem:[%s620 + $0x12a] sm:$0xff]
    %v775 = vld [vmem:[%s620 + $0x13a] sm:$0xff]
    %v776 = vld [vmem:[%s620 + $0x142] sm:$0xff]
    %v777 = vld [vmem:[%s620 + $0x152] sm:$0xff]
    %v778 = vld [vmem:[%s620 + $0x15a] sm:$0xff]
    %v779 = vld [vmem:[%s620 + $0x16a] sm:$0xff]
    %v780 = vld [vmem:[%s620 + $0x172] sm:$0xff]
    %v781 = vld [vmem:[%s620 + $0x1b2] sm:$0xff]
    %v782 = vld [vmem:[%s620 + $0x1ba] sm:$0xff]
    %v783 = vld [vmem:[%s620 + $0x1ca] sm:$0xff]
    %v784 = vld [vmem:[%s620 + $0x1d2] sm:$0xff]
    %v785 = vld [vmem:[%s620 + $0x1e2] sm:$0xff]
    %v786 = vld [vmem:[%s620 + $0x1ea] sm:$0xff]
    %v787 = vld [vmem:[%s620 + $0x1fa] sm:$0xff]
    %v788 = vld [vmem:[%s620 + $0x202] sm:$0xff]
    %v789 = vld [vmem:[%s620 + $0x212] sm:$0xff]
    %v790 = vld [vmem:[%s620 + $0x21a] sm:$0xff]
    %v791 = vld [vmem:[%s620 + $0x22a] sm:$0xff]
    %v792 = vld [vmem:[%s620 + $0x232] sm:$0xff]
    %v793 = vld [vmem:[%s620 + $0x242] sm:$0xff]
    %v794 = vld [vmem:[%s620 + $0x24a] sm:$0xff]
    %v795 = vld [vmem:[%s620 + $0x25a] sm:$0xff]
    %v796 = vld [vmem:[%s620 + $0x262] sm:$0xff]
    %v797 = vld [vmem:[%s620 + $0x272] sm:$0xff]
    %v798 = vld [vmem:[%s620 + $0x27a] sm:$0xff]
    %v799 = vld [vmem:[%s620 + $0x28a] sm:$0xff]
    %v800 = vld [vmem:[%s620 + $0x292] sm:$0xff]
    %v801 = vld [vmem:[%s620 + $0x2a2] sm:$0xff]
    %v802 = vld [vmem:[%s620 + $0x2aa] sm:$0xff]
    %v803 = vld [vmem:[%s620 + $0x2ba] sm:$0xff]
    %v804 = vld [vmem:[%s620 + $0x2c2] sm:$0xff]
    %v805 = vld [vmem:[%s620 + $0x2d2] sm:$0xff]
    %v806 = vld [vmem:[%s620 + $0x2da] sm:$0xff]
    %v807 = vld [vmem:[%s620 + $0x2ea] sm:$0xff]
    %v808 = vld [vmem:[%s620 + $0x2f2] sm:$0xff]
    %v809 = vld [vmem:[%s620 + $0x302] sm:$0xff]
    %v810 = vld [vmem:[%s620 + $0x30a] sm:$0xff]
    %v811 = vld [vmem:[%s620 + $0x31a] sm:$0xff]
    %v812 = vld [vmem:[%s620 + $0x322] sm:$0xff]
    %877 = vrot.lane.b32.xlu0 %v300, 3
    %v878 = vpop.permute.xlu0 %877
    %879 = vrot.lane.b32.xlu0 %v301, 3
    %v880 = vpop.permute.xlu0 %879
    %881 = vrot.lane.b32.xlu0 %v302, 3
    %v882 = vpop.permute.xlu0 %881
    %883 = vrot.lane.b32.xlu0 %v303, 3
    %v884 = vpop.permute.xlu0 %883
    %885 = vrot.lane.b32.xlu0 %v304, 3
    %v886 = vpop.permute.xlu0 %885
    %887 = vrot.lane.b32.xlu0 %v305, 3
    %v888 = vpop.permute.xlu0 %887
    %889 = vrot.lane.b32.xlu0 %v306, 3
    %v890 = vpop.permute.xlu0 %889
    %891 = vrot.lane.b32.xlu0 %v307, 3
    %v892 = vpop.permute.xlu0 %891
    %893 = vrot.lane.b32.xlu0 %v308, 3
    %v894 = vpop.permute.xlu0 %893
    %895 = vrot.lane.b32.xlu0 %v309, 3
    %v896 = vpop.permute.xlu0 %895
    %897 = vrot.lane.b32.xlu0 %v310, 3
    %v898 = vpop.permute.xlu0 %897
    %899 = vrot.lane.b32.xlu0 %v311, 3
    %v900 = vpop.permute.xlu0 %899
    %901 = vrot.lane.b32.xlu0 %v312, 3
    %v902 = vpop.permute.xlu0 %901
    %903 = vrot.lane.b32.xlu0 %v313, 3
    %v904 = vpop.permute.xlu0 %903
    %905 = vrot.lane.b32.xlu0 %v314, 3
    %v906 = vpop.permute.xlu0 %905
    %907 = vrot.lane.b32.xlu0 %v315, 3
    %v908 = vpop.permute.xlu0 %907
    %909 = vrot.lane.b32.xlu0 %v316, 3
    %v910 = vpop.permute.xlu0 %909
    %911 = vrot.lane.b32.xlu0 %v317, 3
    %v912 = vpop.permute.xlu0 %911
    %913 = vrot.lane.b32.xlu0 %v318, 3
    %v914 = vpop.permute.xlu0 %913
    %915 = vrot.lane.b32.xlu0 %v319, 3
    %v916 = vpop.permute.xlu0 %915
    %917 = vrot.lane.b32.xlu0 %v320, 3
    %v918 = vpop.permute.xlu0 %917
    %919 = vrot.lane.b32.xlu0 %v321, 3
    %v920 = vpop.permute.xlu0 %919
    %921 = vrot.lane.b32.xlu0 %v322, 3
    %v922 = vpop.permute.xlu0 %921
    %923 = vrot.lane.b32.xlu0 %v323, 3
    %v924 = vpop.permute.xlu0 %923
    %925 = vrot.lane.b32.xlu0 %v324, 3
    %v926 = vpop.permute.xlu0 %925
    %927 = vrot.lane.b32.xlu0 %v325, 3
    %v928 = vpop.permute.xlu0 %927
    %929 = vrot.lane.b32.xlu0 %v326, 3
    %v930 = vpop.permute.xlu0 %929
    %931 = vrot.lane.b32.xlu0 %v327, 3
    %v932 = vpop.permute.xlu0 %931
    %933 = vrot.lane.b32.xlu0 %v328, 3
    %v934 = vpop.permute.xlu0 %933
    %935 = vrot.lane.b32.xlu0 %v329, 3
    %v936 = vpop.permute.xlu0 %935
    %937 = vrot.lane.b32.xlu0 %v330, 3
    %v938 = vpop.permute.xlu0 %937
    %939 = vrot.lane.b32.xlu0 %v331, 3
    %v940 = vpop.permute.xlu0 %939
    %941 = vrot.lane.b32.xlu0 %v332, 3
    %v942 = vpop.permute.xlu0 %941
    %943 = vrot.lane.b32.xlu0 %v333, 3
    %v944 = vpop.permute.xlu0 %943
    %945 = vrot.lane.b32.xlu0 %v334, 3
    %v946 = vpop.permute.xlu0 %945
    %947 = vrot.lane.b32.xlu0 %v335, 3
    %v948 = vpop.permute.xlu0 %947
    %949 = vrot.lane.b32.xlu0 %v336, 3
    %v950 = vpop.permute.xlu0 %949
    %951 = vrot.lane.b32.xlu0 %v337, 3
    %v952 = vpop.permute.xlu0 %951
    %953 = vrot.lane.b32.xlu0 %v338, 3
    %v954 = vpop.permute.xlu0 %953
    %955 = vrot.lane.b32.xlu0 %v339, 3
    %v956 = vpop.permute.xlu0 %955
    %957 = vrot.lane.b32.xlu0 %v340, 3
    %v958 = vpop.permute.xlu0 %957
    %959 = vrot.lane.b32.xlu0 %v341, 3
    %v960 = vpop.permute.xlu0 %959
    %961 = vrot.lane.b32.xlu0 %v342, 3
    %v962 = vpop.permute.xlu0 %961
    %963 = vrot.lane.b32.xlu0 %v343, 3
    %v964 = vpop.permute.xlu0 %963
    %965 = vrot.lane.b32.xlu0 %v344, 3
    %v966 = vpop.permute.xlu0 %965
    %967 = vrot.lane.b32.xlu0 %v345, 3
    %v968 = vpop.permute.xlu0 %967
    %969 = vrot.lane.b32.xlu0 %v346, 3
    %v970 = vpop.permute.xlu0 %969
    %971 = vrot.lane.b32.xlu0 %v347, 3
    %v972 = vpop.permute.xlu0 %971
    %973 = vrot.lane.b32.xlu0 %v348, 3
    %v974 = vpop.permute.xlu0 %973
    %975 = vrot.lane.b32.xlu0 %v349, 3
    %v976 = vpop.permute.xlu0 %975
    %977 = vrot.lane.b32.xlu0 %v350, 3
    %v978 = vpop.permute.xlu0 %977
    %979 = vrot.lane.b32.xlu0 %v351, 3
    %v980 = vpop.permute.xlu0 %979
    %981 = vrot.lane.b32.xlu0 %v352, 3
    %v982 = vpop.permute.xlu0 %981
    %983 = vrot.lane.b32.xlu0 %v353, 3
    %v984 = vpop.permute.xlu0 %983
    %985 = vrot.lane.b32.xlu0 %v354, 3
    %v986 = vpop.permute.xlu0 %985
    %987 = vrot.lane.b32.xlu0 %v355, 3
    %v988 = vpop.permute.xlu0 %987
    %989 = vrot.lane.b32.xlu0 %v356, 3
    %v990 = vpop.permute.xlu0 %989
    %991 = vrot.lane.b32.xlu0 %v357, 3
    %v992 = vpop.permute.xlu0 %991
    %993 = vrot.lane.b32.xlu0 %v358, 3
    %v994 = vpop.permute.xlu0 %993
    %995 = vrot.lane.b32.xlu0 %v359, 3
    %v996 = vpop.permute.xlu0 %995
    %997 = vrot.lane.b32.xlu0 %v360, 3
    %v998 = vpop.permute.xlu0 %997
    %999 = vrot.lane.b32.xlu0 %v361, 3
    %v1000 = vpop.permute.xlu0 %999
    %1001 = vrot.lane.b32.xlu0 %v362, 3
    %v1002 = vpop.permute.xlu0 %1001
    %1003 = vrot.lane.b32.xlu0 %v363, 3
    %v1004 = vpop.permute.xlu0 %1003
    %1133 = vrot.lane.b32.xlu0 %v364, 6
    %v1134 = vpop.permute.xlu0 %1133
    %1135 = vrot.lane.b32.xlu0 %v365, 6
    %v1136 = vpop.permute.xlu0 %1135
    %1137 = vrot.lane.b32.xlu0 %v366, 6
    %v1138 = vpop.permute.xlu0 %1137
    %1139 = vrot.lane.b32.xlu0 %v367, 6
    %v1140 = vpop.permute.xlu0 %1139
    %1141 = vrot.lane.b32.xlu0 %v368, 6
    %v1142 = vpop.permute.xlu0 %1141
    %1143 = vrot.lane.b32.xlu0 %v369, 6
    %v1144 = vpop.permute.xlu0 %1143
    %1145 = vrot.lane.b32.xlu0 %v370, 6
    %v1146 = vpop.permute.xlu0 %1145
    %1147 = vrot.lane.b32.xlu0 %v371, 6
    %v1148 = vpop.permute.xlu0 %1147
    %1149 = vrot.lane.b32.xlu0 %v372, 6
    %v1150 = vpop.permute.xlu0 %1149
    %1151 = vrot.lane.b32.xlu0 %v373, 6
    %v1152 = vpop.permute.xlu0 %1151
    %1153 = vrot.lane.b32.xlu0 %v374, 6
    %v1154 = vpop.permute.xlu0 %1153
    %1155 = vrot.lane.b32.xlu0 %v375, 6
    %v1156 = vpop.permute.xlu0 %1155
    %1157 = vrot.lane.b32.xlu0 %v376, 6
    %v1158 = vpop.permute.xlu0 %1157
    %1159 = vrot.lane.b32.xlu0 %v377, 6
    %v1160 = vpop.permute.xlu0 %1159
    %1161 = vrot.lane.b32.xlu0 %v378, 6
    %v1162 = vpop.permute.xlu0 %1161
    %1163 = vrot.lane.b32.xlu0 %v379, 6
    %v1164 = vpop.permute.xlu0 %1163
    %1165 = vrot.lane.b32.xlu0 %v380, 6
    %v1166 = vpop.permute.xlu0 %1165
    %1167 = vrot.lane.b32.xlu0 %v381, 6
    %v1168 = vpop.permute.xlu0 %1167
    %1169 = vrot.lane.b32.xlu0 %v382, 6
    %v1170 = vpop.permute.xlu0 %1169
    %1171 = vrot.lane.b32.xlu0 %v383, 6
    %v1172 = vpop.permute.xlu0 %1171
    %1173 = vrot.lane.b32.xlu0 %v384, 6
    %v1174 = vpop.permute.xlu0 %1173
    %1175 = vrot.lane.b32.xlu0 %v385, 6
    %v1176 = vpop.permute.xlu0 %1175
    %1177 = vrot.lane.b32.xlu0 %v386, 6
    %v1178 = vpop.permute.xlu0 %1177
    %1179 = vrot.lane.b32.xlu0 %v387, 6
    %v1180 = vpop.permute.xlu0 %1179
    %1181 = vrot.lane.b32.xlu0 %v388, 6
    %v1182 = vpop.permute.xlu0 %1181
    %1183 = vrot.lane.b32.xlu0 %v389, 6
    %v1184 = vpop.permute.xlu0 %1183
    %1185 = vrot.lane.b32.xlu0 %v390, 6
    %v1186 = vpop.permute.xlu0 %1185
    %1187 = vrot.lane.b32.xlu0 %v391, 6
    %v1188 = vpop.permute.xlu0 %1187
    %1189 = vrot.lane.b32.xlu0 %v392, 6
    %v1190 = vpop.permute.xlu0 %1189
    %1191 = vrot.lane.b32.xlu0 %v393, 6
    %v1192 = vpop.permute.xlu0 %1191
    %1193 = vrot.lane.b32.xlu0 %v394, 6
    %v1194 = vpop.permute.xlu0 %1193
    %1195 = vrot.lane.b32.xlu0 %v395, 6
    %v1196 = vpop.permute.xlu0 %1195
    %1197 = vrot.lane.b32.xlu0 %v396, 6
    %v1198 = vpop.permute.xlu0 %1197
    %1199 = vrot.lane.b32.xlu0 %v397, 6
    %v1200 = vpop.permute.xlu0 %1199
    %1201 = vrot.lane.b32.xlu0 %v398, 6
    %v1202 = vpop.permute.xlu0 %1201
    %1203 = vrot.lane.b32.xlu0 %v399, 6
    %v1204 = vpop.permute.xlu0 %1203
    %1205 = vrot.lane.b32.xlu0 %v400, 6
    %v1206 = vpop.permute.xlu0 %1205
    %1207 = vrot.lane.b32.xlu0 %v401, 6
    %v1208 = vpop.permute.xlu0 %1207
    %1209 = vrot.lane.b32.xlu0 %v402, 6
    %v1210 = vpop.permute.xlu0 %1209
    %1211 = vrot.lane.b32.xlu0 %v403, 6
    %v1212 = vpop.permute.xlu0 %1211
    %1213 = vrot.lane.b32.xlu0 %v404, 6
    %v1214 = vpop.permute.xlu0 %1213
    %1215 = vrot.lane.b32.xlu0 %v405, 6
    %v1216 = vpop.permute.xlu0 %1215
    %1217 = vrot.lane.b32.xlu0 %v406, 6
    %v1218 = vpop.permute.xlu0 %1217
    %1219 = vrot.lane.b32.xlu0 %v407, 6
    %v1220 = vpop.permute.xlu0 %1219
    %1221 = vrot.lane.b32.xlu0 %v408, 6
    %v1222 = vpop.permute.xlu0 %1221
    %1223 = vrot.lane.b32.xlu0 %v409, 6
    %v1224 = vpop.permute.xlu0 %1223
    %1225 = vrot.lane.b32.xlu0 %v410, 6
    %v1226 = vpop.permute.xlu0 %1225
    %1227 = vrot.lane.b32.xlu0 %v411, 6
    %v1228 = vpop.permute.xlu0 %1227
    %1229 = vrot.lane.b32.xlu0 %v412, 6
    %v1230 = vpop.permute.xlu0 %1229
    %1231 = vrot.lane.b32.xlu0 %v413, 6
    %v1232 = vpop.permute.xlu0 %1231
    %1233 = vrot.lane.b32.xlu0 %v414, 6
    %v1234 = vpop.permute.xlu0 %1233
    %1235 = vrot.lane.b32.xlu0 %v415, 6
    %v1236 = vpop.permute.xlu0 %1235
    %1237 = vrot.lane.b32.xlu0 %v416, 6
    %v1238 = vpop.permute.xlu0 %1237
    %1239 = vrot.lane.b32.xlu0 %v417, 6
    %v1240 = vpop.permute.xlu0 %1239
    %1241 = vrot.lane.b32.xlu0 %v418, 6
    %v1242 = vpop.permute.xlu0 %1241
    %1243 = vrot.lane.b32.xlu0 %v419, 6
    %v1244 = vpop.permute.xlu0 %1243
    %1245 = vrot.lane.b32.xlu0 %v420, 6
    %v1246 = vpop.permute.xlu0 %1245
    %1247 = vrot.lane.b32.xlu0 %v421, 6
    %v1248 = vpop.permute.xlu0 %1247
    %1249 = vrot.lane.b32.xlu0 %v422, 6
    %v1250 = vpop.permute.xlu0 %1249
    %1251 = vrot.lane.b32.xlu0 %v423, 6
    %v1252 = vpop.permute.xlu0 %1251
    %1253 = vrot.lane.b32.xlu0 %v424, 6
    %v1254 = vpop.permute.xlu0 %1253
    %1255 = vrot.lane.b32.xlu0 %v425, 6
    %v1256 = vpop.permute.xlu0 %1255
    %1257 = vrot.lane.b32.xlu0 %v426, 6
    %v1258 = vpop.permute.xlu0 %1257
    %1259 = vrot.lane.b32.xlu0 %v427, 6
    %v1260 = vpop.permute.xlu0 %1259
    %1389 = vrot.lane.b32.xlu0 %v428, 9
    %v1390 = vpop.permute.xlu0 %1389
    %1391 = vrot.lane.b32.xlu0 %v429, 9
    %v1392 = vpop.permute.xlu0 %1391
    %1393 = vrot.lane.b32.xlu0 %v430, 9
    %v1394 = vpop.permute.xlu0 %1393
    %1395 = vrot.lane.b32.xlu0 %v431, 9
    %v1396 = vpop.permute.xlu0 %1395
    %1397 = vrot.lane.b32.xlu0 %v432, 9
    %v1398 = vpop.permute.xlu0 %1397
    %1399 = vrot.lane.b32.xlu0 %v433, 9
    %v1400 = vpop.permute.xlu0 %1399
    %1401 = vrot.lane.b32.xlu0 %v434, 9
    %v1402 = vpop.permute.xlu0 %1401
    %1403 = vrot.lane.b32.xlu0 %v435, 9
    %v1404 = vpop.permute.xlu0 %1403
    %1405 = vrot.lane.b32.xlu0 %v436, 9
    %v1406 = vpop.permute.xlu0 %1405
    %1407 = vrot.lane.b32.xlu0 %v437, 9
    %v1408 = vpop.permute.xlu0 %1407
    %1409 = vrot.lane.b32.xlu0 %v438, 9
    %v1410 = vpop.permute.xlu0 %1409
    %1411 = vrot.lane.b32.xlu0 %v439, 9
    %v1412 = vpop.permute.xlu0 %1411
    %1413 = vrot.lane.b32.xlu0 %v440, 9
    %v1414 = vpop.permute.xlu0 %1413
    %1415 = vrot.lane.b32.xlu0 %v441, 9
    %v1416 = vpop.permute.xlu0 %1415
    %1417 = vrot.lane.b32.xlu0 %v442, 9
    %v1418 = vpop.permute.xlu0 %1417
    %1419 = vrot.lane.b32.xlu0 %v443, 9
    %v1420 = vpop.permute.xlu0 %1419
    %1421 = vrot.lane.b32.xlu0 %v444, 9
    %v1422 = vpop.permute.xlu0 %1421
    %1423 = vrot.lane.b32.xlu0 %v445, 9
    %v1424 = vpop.permute.xlu0 %1423
    %1425 = vrot.lane.b32.xlu0 %v446, 9
    %v1426 = vpop.permute.xlu0 %1425
    %1427 = vrot.lane.b32.xlu0 %v447, 9
    %v1428 = vpop.permute.xlu0 %1427
    %1429 = vrot.lane.b32.xlu0 %v448, 9
    %v1430 = vpop.permute.xlu0 %1429
    %1431 = vrot.lane.b32.xlu0 %v449, 9
    %v1432 = vpop.permute.xlu0 %1431
    %1433 = vrot.lane.b32.xlu0 %v450, 9
    %v1434 = vpop.permute.xlu0 %1433
    %1435 = vrot.lane.b32.xlu0 %v451, 9
    %v1436 = vpop.permute.xlu0 %1435
    %1437 = vrot.lane.b32.xlu0 %v452, 9
    %v1438 = vpop.permute.xlu0 %1437
    %1439 = vrot.lane.b32.xlu0 %v453, 9
    %v1440 = vpop.permute.xlu0 %1439
    %1441 = vrot.lane.b32.xlu0 %v454, 9
    %v1442 = vpop.permute.xlu0 %1441
    %1443 = vrot.lane.b32.xlu0 %v455, 9
    %v1444 = vpop.permute.xlu0 %1443
    %1445 = vrot.lane.b32.xlu0 %v456, 9
    %v1446 = vpop.permute.xlu0 %1445
    %1447 = vrot.lane.b32.xlu0 %v457, 9
    %v1448 = vpop.permute.xlu0 %1447
    %1449 = vrot.lane.b32.xlu0 %v458, 9
    %v1450 = vpop.permute.xlu0 %1449
    %1451 = vrot.lane.b32.xlu0 %v459, 9
    %v1452 = vpop.permute.xlu0 %1451
    %1453 = vrot.lane.b32.xlu0 %v460, 9
    %v1454 = vpop.permute.xlu0 %1453
    %1455 = vrot.lane.b32.xlu0 %v461, 9
    %v1456 = vpop.permute.xlu0 %1455
    %1457 = vrot.lane.b32.xlu0 %v462, 9
    %v1458 = vpop.permute.xlu0 %1457
    %1459 = vrot.lane.b32.xlu0 %v463, 9
    %v1460 = vpop.permute.xlu0 %1459
    %1461 = vrot.lane.b32.xlu0 %v464, 9
    %v1462 = vpop.permute.xlu0 %1461
    %1463 = vrot.lane.b32.xlu0 %v465, 9
    %v1464 = vpop.permute.xlu0 %1463
    %1465 = vrot.lane.b32.xlu0 %v466, 9
    %v1466 = vpop.permute.xlu0 %1465
    %1467 = vrot.lane.b32.xlu0 %v467, 9
    %v1468 = vpop.permute.xlu0 %1467
    %1469 = vrot.lane.b32.xlu0 %v468, 9
    %v1470 = vpop.permute.xlu0 %1469
    %1471 = vrot.lane.b32.xlu0 %v469, 9
    %v1472 = vpop.permute.xlu0 %1471
    %1473 = vrot.lane.b32.xlu0 %v470, 9
    %v1474 = vpop.permute.xlu0 %1473
    %1475 = vrot.lane.b32.xlu0 %v471, 9
    %v1476 = vpop.permute.xlu0 %1475
    %1477 = vrot.lane.b32.xlu0 %v472, 9
    %v1478 = vpop.permute.xlu0 %1477
    %1479 = vrot.lane.b32.xlu0 %v473, 9
    %v1480 = vpop.permute.xlu0 %1479
    %1481 = vrot.lane.b32.xlu0 %v474, 9
    %v1482 = vpop.permute.xlu0 %1481
    %1483 = vrot.lane.b32.xlu0 %v475, 9
    %v1484 = vpop.permute.xlu0 %1483
    %1485 = vrot.lane.b32.xlu0 %v476, 9
    %v1486 = vpop.permute.xlu0 %1485
    %1487 = vrot.lane.b32.xlu0 %v477, 9
    %v1488 = vpop.permute.xlu0 %1487
    %1489 = vrot.lane.b32.xlu0 %v478, 9
    %v1490 = vpop.permute.xlu0 %1489
    %1491 = vrot.lane.b32.xlu0 %v479, 9
    %v1492 = vpop.permute.xlu0 %1491
    %1493 = vrot.lane.b32.xlu0 %v480, 9
    %v1494 = vpop.permute.xlu0 %1493
    %1495 = vrot.lane.b32.xlu0 %v481, 9
    %v1496 = vpop.permute.xlu0 %1495
    %1497 = vrot.lane.b32.xlu0 %v482, 9
    %v1498 = vpop.permute.xlu0 %1497
    %1499 = vrot.lane.b32.xlu0 %v483, 9
    %v1500 = vpop.permute.xlu0 %1499
    %1501 = vrot.lane.b32.xlu0 %v484, 9
    %v1502 = vpop.permute.xlu0 %1501
    %1503 = vrot.lane.b32.xlu0 %v485, 9
    %v1504 = vpop.permute.xlu0 %1503
    %1505 = vrot.lane.b32.xlu0 %v486, 9
    %v1506 = vpop.permute.xlu0 %1505
    %1507 = vrot.lane.b32.xlu0 %v487, 9
    %v1508 = vpop.permute.xlu0 %1507
    %1509 = vrot.lane.b32.xlu0 %v488, 9
    %v1510 = vpop.permute.xlu0 %1509
    %1511 = vrot.lane.b32.xlu0 %v489, 9
    %v1512 = vpop.permute.xlu0 %1511
    %1513 = vrot.lane.b32.xlu0 %v490, 9
    %v1514 = vpop.permute.xlu0 %1513
    %1515 = vrot.lane.b32.xlu0 %v491, 9
    %v1516 = vpop.permute.xlu0 %1515
    %1645 = vrot.lane.b32.xlu0 %v492, 12
    %v1646 = vpop.permute.xlu0 %1645
    %1647 = vrot.lane.b32.xlu0 %v493, 12
    %v1648 = vpop.permute.xlu0 %1647
    %1649 = vrot.lane.b32.xlu0 %v494, 12
    %v1650 = vpop.permute.xlu0 %1649
    %1651 = vrot.lane.b32.xlu0 %v495, 12
    %v1652 = vpop.permute.xlu0 %1651
    %1653 = vrot.lane.b32.xlu0 %v496, 12
    %v1654 = vpop.permute.xlu0 %1653
    %1655 = vrot.lane.b32.xlu0 %v497, 12
    %v1656 = vpop.permute.xlu0 %1655
    %1657 = vrot.lane.b32.xlu0 %v498, 12
    %v1658 = vpop.permute.xlu0 %1657
    %1659 = vrot.lane.b32.xlu0 %v499, 12
    %v1660 = vpop.permute.xlu0 %1659
    %1661 = vrot.lane.b32.xlu0 %v500, 12
    %v1662 = vpop.permute.xlu0 %1661
    %1663 = vrot.lane.b32.xlu0 %v501, 12
    %v1664 = vpop.permute.xlu0 %1663
    %1665 = vrot.lane.b32.xlu0 %v502, 12
    %v1666 = vpop.permute.xlu0 %1665
    %1667 = vrot.lane.b32.xlu0 %v503, 12
    %v1668 = vpop.permute.xlu0 %1667
    %1669 = vrot.lane.b32.xlu0 %v504, 12
    %v1670 = vpop.permute.xlu0 %1669
    %1671 = vrot.lane.b32.xlu0 %v505, 12
    %v1672 = vpop.permute.xlu0 %1671
    %1673 = vrot.lane.b32.xlu0 %v506, 12
    %v1674 = vpop.permute.xlu0 %1673
    %1675 = vrot.lane.b32.xlu0 %v507, 12
    %v1676 = vpop.permute.xlu0 %1675
    %1677 = vrot.lane.b32.xlu0 %v508, 12
    %v1678 = vpop.permute.xlu0 %1677
    %1679 = vrot.lane.b32.xlu0 %v509, 12
    %v1680 = vpop.permute.xlu0 %1679
    %1681 = vrot.lane.b32.xlu0 %v510, 12
    %v1682 = vpop.permute.xlu0 %1681
    %1683 = vrot.lane.b32.xlu0 %v511, 12
    %v1684 = vpop.permute.xlu0 %1683
    %1685 = vrot.lane.b32.xlu0 %v512, 12
    %v1686 = vpop.permute.xlu0 %1685
    %1687 = vrot.lane.b32.xlu0 %v513, 12
    %v1688 = vpop.permute.xlu0 %1687
    %1689 = vrot.lane.b32.xlu0 %v514, 12
    %v1690 = vpop.permute.xlu0 %1689
    %1691 = vrot.lane.b32.xlu0 %v515, 12
    %v1692 = vpop.permute.xlu0 %1691
    %1693 = vrot.lane.b32.xlu0 %v516, 12
    %v1694 = vpop.permute.xlu0 %1693
    %1695 = vrot.lane.b32.xlu0 %v517, 12
    %v1696 = vpop.permute.xlu0 %1695
    %1697 = vrot.lane.b32.xlu0 %v518, 12
    %v1698 = vpop.permute.xlu0 %1697
    %1699 = vrot.lane.b32.xlu0 %v519, 12
    %v1700 = vpop.permute.xlu0 %1699
    %1701 = vrot.lane.b32.xlu0 %v520, 12
    %v1702 = vpop.permute.xlu0 %1701
    %1703 = vrot.lane.b32.xlu0 %v521, 12
    %v1704 = vpop.permute.xlu0 %1703
    %1705 = vrot.lane.b32.xlu0 %v522, 12
    %v1706 = vpop.permute.xlu0 %1705
    %1707 = vrot.lane.b32.xlu0 %v523, 12
    %v1708 = vpop.permute.xlu0 %1707
    %1709 = vrot.lane.b32.xlu0 %v524, 12
    %v1710 = vpop.permute.xlu0 %1709
    %1711 = vrot.lane.b32.xlu0 %v525, 12
    %v1712 = vpop.permute.xlu0 %1711
    %1713 = vrot.lane.b32.xlu0 %v526, 12
    %v1714 = vpop.permute.xlu0 %1713
    %1715 = vrot.lane.b32.xlu0 %v527, 12
    %v1716 = vpop.permute.xlu0 %1715
    %1717 = vrot.lane.b32.xlu0 %v528, 12
    %v1718 = vpop.permute.xlu0 %1717
    %1719 = vrot.lane.b32.xlu0 %v529, 12
    %v1720 = vpop.permute.xlu0 %1719
    %1721 = vrot.lane.b32.xlu0 %v530, 12
    %v1722 = vpop.permute.xlu0 %1721
    %1723 = vrot.lane.b32.xlu0 %v531, 12
    %v1724 = vpop.permute.xlu0 %1723
    %1725 = vrot.lane.b32.xlu0 %v532, 12
    %v1726 = vpop.permute.xlu0 %1725
    %1727 = vrot.lane.b32.xlu0 %v533, 12
    %v1728 = vpop.permute.xlu0 %1727
    %1729 = vrot.lane.b32.xlu0 %v534, 12
    %v1730 = vpop.permute.xlu0 %1729
    %1731 = vrot.lane.b32.xlu0 %v535, 12
    %v1732 = vpop.permute.xlu0 %1731
    %1733 = vrot.lane.b32.xlu0 %v536, 12
    %v1734 = vpop.permute.xlu0 %1733
    %1735 = vrot.lane.b32.xlu0 %v537, 12
    %v1736 = vpop.permute.xlu0 %1735
    %1737 = vrot.lane.b32.xlu0 %v538, 12
    %v1738 = vpop.permute.xlu0 %1737
    %1739 = vrot.lane.b32.xlu0 %v539, 12
    %v1740 = vpop.permute.xlu0 %1739
    %1741 = vrot.lane.b32.xlu0 %v540, 12
    %v1742 = vpop.permute.xlu0 %1741
    %1743 = vrot.lane.b32.xlu0 %v541, 12
    %v1744 = vpop.permute.xlu0 %1743
    %1745 = vrot.lane.b32.xlu0 %v542, 12
    %v1746 = vpop.permute.xlu0 %1745
    %1747 = vrot.lane.b32.xlu0 %v543, 12
    %v1748 = vpop.permute.xlu0 %1747
    %1749 = vrot.lane.b32.xlu0 %v544, 12
    %v1750 = vpop.permute.xlu0 %1749
    %1751 = vrot.lane.b32.xlu0 %v545, 12
    %v1752 = vpop.permute.xlu0 %1751
    %1753 = vrot.lane.b32.xlu0 %v546, 12
    %v1754 = vpop.permute.xlu0 %1753
    %1755 = vrot.lane.b32.xlu0 %v547, 12
    %v1756 = vpop.permute.xlu0 %1755
    %1757 = vrot.lane.b32.xlu0 %v548, 12
    %v1758 = vpop.permute.xlu0 %1757
    %1759 = vrot.lane.b32.xlu0 %v549, 12
    %v1760 = vpop.permute.xlu0 %1759
    %1761 = vrot.lane.b32.xlu0 %v550, 12
    %v1762 = vpop.permute.xlu0 %1761
    %1763 = vrot.lane.b32.xlu0 %v551, 12
    %v1764 = vpop.permute.xlu0 %1763
    %1765 = vrot.lane.b32.xlu0 %v552, 12
    %v1766 = vpop.permute.xlu0 %1765
    %1767 = vrot.lane.b32.xlu0 %v553, 12
    %v1768 = vpop.permute.xlu0 %1767
    %1769 = vrot.lane.b32.xlu0 %v554, 12
    %v1770 = vpop.permute.xlu0 %1769
    %1771 = vrot.lane.b32.xlu0 %v555, 12
    %v1772 = vpop.permute.xlu0 %1771
    %1901 = vrot.lane.b32.xlu0 %v556, 15
    %v1902 = vpop.permute.xlu0 %1901
    %1903 = vrot.lane.b32.xlu0 %v557, 15
    %v1904 = vpop.permute.xlu0 %1903
    %1905 = vrot.lane.b32.xlu0 %v558, 15
    %v1906 = vpop.permute.xlu0 %1905
    %1907 = vrot.lane.b32.xlu0 %v559, 15
    %v1908 = vpop.permute.xlu0 %1907
    %1909 = vrot.lane.b32.xlu0 %v560, 15
    %v1910 = vpop.permute.xlu0 %1909
    %1911 = vrot.lane.b32.xlu0 %v561, 15
    %v1912 = vpop.permute.xlu0 %1911
    %1913 = vrot.lane.b32.xlu0 %v562, 15
    %v1914 = vpop.permute.xlu0 %1913
    %1915 = vrot.lane.b32.xlu0 %v563, 15
    %v1916 = vpop.permute.xlu0 %1915
    %1917 = vrot.lane.b32.xlu0 %v564, 15
    %v1918 = vpop.permute.xlu0 %1917
    %1919 = vrot.lane.b32.xlu0 %v565, 15
    %v1920 = vpop.permute.xlu0 %1919
    %1921 = vrot.lane.b32.xlu0 %v566, 15
    %v1922 = vpop.permute.xlu0 %1921
    %1923 = vrot.lane.b32.xlu0 %v567, 15
    %v1924 = vpop.permute.xlu0 %1923
    %1925 = vrot.lane.b32.xlu0 %v568, 15
    %v1926 = vpop.permute.xlu0 %1925
    %1927 = vrot.lane.b32.xlu0 %v569, 15
    %v1928 = vpop.permute.xlu0 %1927
    %1929 = vrot.lane.b32.xlu0 %v570, 15
    %v1930 = vpop.permute.xlu0 %1929
    %1931 = vrot.lane.b32.xlu0 %v571, 15
    %v1932 = vpop.permute.xlu0 %1931
    %1933 = vrot.lane.b32.xlu0 %v572, 15
    %v1934 = vpop.permute.xlu0 %1933
    %1935 = vrot.lane.b32.xlu0 %v573, 15
    %v1936 = vpop.permute.xlu0 %1935
    %1937 = vrot.lane.b32.xlu0 %v574, 15
    %v1938 = vpop.permute.xlu0 %1937
    %1939 = vrot.lane.b32.xlu0 %v575, 15
    %v1940 = vpop.permute.xlu0 %1939
    %1941 = vrot.lane.b32.xlu0 %v576, 15
    %v1942 = vpop.permute.xlu0 %1941
    %1943 = vrot.lane.b32.xlu0 %v577, 15
    %v1944 = vpop.permute.xlu0 %1943
    %1945 = vrot.lane.b32.xlu0 %v578, 15
    %v1946 = vpop.permute.xlu0 %1945
    %1947 = vrot.lane.b32.xlu0 %v579, 15
    %v1948 = vpop.permute.xlu0 %1947
    %1949 = vrot.lane.b32.xlu0 %v580, 15
    %v1950 = vpop.permute.xlu0 %1949
    %1951 = vrot.lane.b32.xlu0 %v581, 15
    %v1952 = vpop.permute.xlu0 %1951
    %1953 = vrot.lane.b32.xlu0 %v582, 15
    %v1954 = vpop.permute.xlu0 %1953
    %1955 = vrot.lane.b32.xlu0 %v583, 15
    %v1956 = vpop.permute.xlu0 %1955
    %1957 = vrot.lane.b32.xlu0 %v584, 15
    %v1958 = vpop.permute.xlu0 %1957
    %1959 = vrot.lane.b32.xlu0 %v585, 15
    %v1960 = vpop.permute.xlu0 %1959
    %1961 = vrot.lane.b32.xlu0 %v586, 15
    %v1962 = vpop.permute.xlu0 %1961
    %1963 = vrot.lane.b32.xlu0 %v587, 15
    %v1964 = vpop.permute.xlu0 %1963
    %1965 = vrot.lane.b32.xlu0 %v588, 15
    %v1966 = vpop.permute.xlu0 %1965
    %1967 = vrot.lane.b32.xlu0 %v589, 15
    %v1968 = vpop.permute.xlu0 %1967
    %1969 = vrot.lane.b32.xlu0 %v590, 15
    %v1970 = vpop.permute.xlu0 %1969
    %1971 = vrot.lane.b32.xlu0 %v591, 15
    %v1972 = vpop.permute.xlu0 %1971
    %1973 = vrot.lane.b32.xlu0 %v592, 15
    %v1974 = vpop.permute.xlu0 %1973
    %1975 = vrot.lane.b32.xlu0 %v593, 15
    %v1976 = vpop.permute.xlu0 %1975
    %1977 = vrot.lane.b32.xlu0 %v594, 15
    %v1978 = vpop.permute.xlu0 %1977
    %1979 = vrot.lane.b32.xlu0 %v595, 15
    %v1980 = vpop.permute.xlu0 %1979
    %1981 = vrot.lane.b32.xlu0 %v596, 15
    %v1982 = vpop.permute.xlu0 %1981
    %1983 = vrot.lane.b32.xlu0 %v597, 15
    %v1984 = vpop.permute.xlu0 %1983
    %1985 = vrot.lane.b32.xlu0 %v598, 15
    %v1986 = vpop.permute.xlu0 %1985
    %1987 = vrot.lane.b32.xlu0 %v599, 15
    %v1988 = vpop.permute.xlu0 %1987
    %1989 = vrot.lane.b32.xlu0 %v600, 15
    %v1990 = vpop.permute.xlu0 %1989
    %1991 = vrot.lane.b32.xlu0 %v601, 15
    %v1992 = vpop.permute.xlu0 %1991
    %1993 = vrot.lane.b32.xlu0 %v602, 15
    %v1994 = vpop.permute.xlu0 %1993
    %1995 = vrot.lane.b32.xlu0 %v603, 15
    %v1996 = vpop.permute.xlu0 %1995
    %1997 = vrot.lane.b32.xlu0 %v604, 15
    %v1998 = vpop.permute.xlu0 %1997
    %1999 = vrot.lane.b32.xlu0 %v605, 15
    %v2000 = vpop.permute.xlu0 %1999
    %2001 = vrot.lane.b32.xlu0 %v606, 15
    %v2002 = vpop.permute.xlu0 %2001
    %2003 = vrot.lane.b32.xlu0 %v607, 15
    %v2004 = vpop.permute.xlu0 %2003
    %2005 = vrot.lane.b32.xlu0 %v608, 15
    %v2006 = vpop.permute.xlu0 %2005
    %2007 = vrot.lane.b32.xlu0 %v609, 15
    %v2008 = vpop.permute.xlu0 %2007
    %2009 = vrot.lane.b32.xlu0 %v610, 15
    %v2010 = vpop.permute.xlu0 %2009
    %2011 = vrot.lane.b32.xlu0 %v611, 15
    %v2012 = vpop.permute.xlu0 %2011
    %2013 = vrot.lane.b32.xlu0 %v612, 15
    %v2014 = vpop.permute.xlu0 %2013
    %2015 = vrot.lane.b32.xlu0 %v613, 15
    %v2016 = vpop.permute.xlu0 %2015
    %2017 = vrot.lane.b32.xlu0 %v614, 15
    %v2018 = vpop.permute.xlu0 %2017
    %2019 = vrot.lane.b32.xlu0 %v615, 15
    %v2020 = vpop.permute.xlu0 %2019
    %2021 = vrot.lane.b32.xlu0 %v616, 15
    %v2022 = vpop.permute.xlu0 %2021
    %2023 = vrot.lane.b32.xlu0 %v617, 15
    %v2024 = vpop.permute.xlu0 %2023
    %2025 = vrot.lane.b32.xlu0 %v618, 15
    %v2026 = vpop.permute.xlu0 %2025
    %2027 = vrot.lane.b32.xlu0 %v619, 15
    %v2028 = vpop.permute.xlu0 %2027
    %2157 = vrot.lane.b32.xlu0 %v621, 18
    %v2158 = vpop.permute.xlu0 %2157
    %2159 = vrot.lane.b32.xlu0 %v622, 18
    %v2160 = vpop.permute.xlu0 %2159
    %2161 = vrot.lane.b32.xlu0 %v623, 18
    %v2162 = vpop.permute.xlu0 %2161
    %2163 = vrot.lane.b32.xlu0 %v624, 18
    %v2164 = vpop.permute.xlu0 %2163
    %2165 = vrot.lane.b32.xlu0 %v625, 18
    %v2166 = vpop.permute.xlu0 %2165
    %2167 = vrot.lane.b32.xlu0 %v626, 18
    %v2168 = vpop.permute.xlu0 %2167
    %2169 = vrot.lane.b32.xlu0 %v627, 18
    %v2170 = vpop.permute.xlu0 %2169
    %2171 = vrot.lane.b32.xlu0 %v628, 18
    %v2172 = vpop.permute.xlu0 %2171
    %2173 = vrot.lane.b32.xlu0 %v629, 18
    %v2174 = vpop.permute.xlu0 %2173
    %2175 = vrot.lane.b32.xlu0 %v630, 18
    %v2176 = vpop.permute.xlu0 %2175
    %2177 = vrot.lane.b32.xlu0 %v631, 18
    %v2178 = vpop.permute.xlu0 %2177
    %2179 = vrot.lane.b32.xlu0 %v632, 18
    %v2180 = vpop.permute.xlu0 %2179
    %2181 = vrot.lane.b32.xlu0 %v633, 18
    %v2182 = vpop.permute.xlu0 %2181
    %2183 = vrot.lane.b32.xlu0 %v634, 18
    %v2184 = vpop.permute.xlu0 %2183
    %2185 = vrot.lane.b32.xlu0 %v635, 18
    %v2186 = vpop.permute.xlu0 %2185
    %2187 = vrot.lane.b32.xlu0 %v636, 18
    %v2188 = vpop.permute.xlu0 %2187
    %2189 = vrot.lane.b32.xlu0 %v637, 18
    %v2190 = vpop.permute.xlu0 %2189
    %2191 = vrot.lane.b32.xlu0 %v638, 18
    %v2192 = vpop.permute.xlu0 %2191
    %2193 = vrot.lane.b32.xlu0 %v639, 18
    %v2194 = vpop.permute.xlu0 %2193
    %2195 = vrot.lane.b32.xlu0 %v640, 18
    %v2196 = vpop.permute.xlu0 %2195
    %2197 = vrot.lane.b32.xlu0 %v641, 18
    %v2198 = vpop.permute.xlu0 %2197
    %2199 = vrot.lane.b32.xlu0 %v642, 18
    %v2200 = vpop.permute.xlu0 %2199
    %2201 = vrot.lane.b32.xlu0 %v643, 18
    %v2202 = vpop.permute.xlu0 %2201
    %2203 = vrot.lane.b32.xlu0 %v644, 18
    %v2204 = vpop.permute.xlu0 %2203
    %2205 = vrot.lane.b32.xlu0 %v645, 18
    %v2206 = vpop.permute.xlu0 %2205
    %2207 = vrot.lane.b32.xlu0 %v646, 18
    %v2208 = vpop.permute.xlu0 %2207
    %2209 = vrot.lane.b32.xlu0 %v647, 18
    %v2210 = vpop.permute.xlu0 %2209
    %2211 = vrot.lane.b32.xlu0 %v648, 18
    %v2212 = vpop.permute.xlu0 %2211
    %2213 = vrot.lane.b32.xlu0 %v649, 18
    %v2214 = vpop.permute.xlu0 %2213
    %2215 = vrot.lane.b32.xlu0 %v650, 18
    %v2216 = vpop.permute.xlu0 %2215
    %2217 = vrot.lane.b32.xlu0 %v651, 18
    %v2218 = vpop.permute.xlu0 %2217
    %2219 = vrot.lane.b32.xlu0 %v652, 18
    %v2220 = vpop.permute.xlu0 %2219
    %2221 = vrot.lane.b32.xlu0 %v653, 18
    %v2222 = vpop.permute.xlu0 %2221
    %2223 = vrot.lane.b32.xlu0 %v654, 18
    %v2224 = vpop.permute.xlu0 %2223
    %2225 = vrot.lane.b32.xlu0 %v655, 18
    %v2226 = vpop.permute.xlu0 %2225
    %2227 = vrot.lane.b32.xlu0 %v656, 18
    %v2228 = vpop.permute.xlu0 %2227
    %2229 = vrot.lane.b32.xlu0 %v657, 18
    %v2230 = vpop.permute.xlu0 %2229
    %2231 = vrot.lane.b32.xlu0 %v658, 18
    %v2232 = vpop.permute.xlu0 %2231
    %2233 = vrot.lane.b32.xlu0 %v659, 18
    %v2234 = vpop.permute.xlu0 %2233
    %2235 = vrot.lane.b32.xlu0 %v660, 18
    %v2236 = vpop.permute.xlu0 %2235
    %2237 = vrot.lane.b32.xlu0 %v661, 18
    %v2238 = vpop.permute.xlu0 %2237
    %2239 = vrot.lane.b32.xlu0 %v662, 18
    %v2240 = vpop.permute.xlu0 %2239
    %2241 = vrot.lane.b32.xlu0 %v663, 18
    %v2242 = vpop.permute.xlu0 %2241
    %2243 = vrot.lane.b32.xlu0 %v664, 18
    %v2244 = vpop.permute.xlu0 %2243
    %2245 = vrot.lane.b32.xlu0 %v665, 18
    %v2246 = vpop.permute.xlu0 %2245
    %2247 = vrot.lane.b32.xlu0 %v666, 18
    %v2248 = vpop.permute.xlu0 %2247
    %2249 = vrot.lane.b32.xlu0 %v667, 18
    %v2250 = vpop.permute.xlu0 %2249
    %2251 = vrot.lane.b32.xlu0 %v668, 18
    %v2252 = vpop.permute.xlu0 %2251
    %2253 = vrot.lane.b32.xlu0 %v669, 18
    %v2254 = vpop.permute.xlu0 %2253
    %2255 = vrot.lane.b32.xlu0 %v670, 18
    %v2256 = vpop.permute.xlu0 %2255
    %2257 = vrot.lane.b32.xlu0 %v671, 18
    %v2258 = vpop.permute.xlu0 %2257
    %2259 = vrot.lane.b32.xlu0 %v672, 18
    %v2260 = vpop.permute.xlu0 %2259
    %2261 = vrot.lane.b32.xlu0 %v673, 18
    %v2262 = vpop.permute.xlu0 %2261
    %2263 = vrot.lane.b32.xlu0 %v674, 18
    %v2264 = vpop.permute.xlu0 %2263
    %2265 = vrot.lane.b32.xlu0 %v675, 18
    %v2266 = vpop.permute.xlu0 %2265
    %2267 = vrot.lane.b32.xlu0 %v676, 18
    %v2268 = vpop.permute.xlu0 %2267
    %2269 = vrot.lane.b32.xlu0 %v677, 18
    %v2270 = vpop.permute.xlu0 %2269
    %2271 = vrot.lane.b32.xlu0 %v678, 18
    %v2272 = vpop.permute.xlu0 %2271
    %2273 = vrot.lane.b32.xlu0 %v679, 18
    %v2274 = vpop.permute.xlu0 %2273
    %2275 = vrot.lane.b32.xlu0 %v680, 18
    %v2276 = vpop.permute.xlu0 %2275
    %2277 = vrot.lane.b32.xlu0 %v681, 18
    %v2278 = vpop.permute.xlu0 %2277
    %2279 = vrot.lane.b32.xlu0 %v682, 18
    %v2280 = vpop.permute.xlu0 %2279
    %2281 = vrot.lane.b32.xlu0 %v683, 18
    %v2282 = vpop.permute.xlu0 %2281
    %2283 = vrot.lane.b32.xlu0 %v684, 18
    %v2284 = vpop.permute.xlu0 %2283
    %2413 = vrot.lane.b32.xlu0 %v685, 21
    %v2414 = vpop.permute.xlu0 %2413
    %2415 = vrot.lane.b32.xlu0 %v686, 21
    %v2416 = vpop.permute.xlu0 %2415
    %2417 = vrot.lane.b32.xlu0 %v687, 21
    %v2418 = vpop.permute.xlu0 %2417
    %2419 = vrot.lane.b32.xlu0 %v688, 21
    %v2420 = vpop.permute.xlu0 %2419
    %2421 = vrot.lane.b32.xlu0 %v689, 21
    %v2422 = vpop.permute.xlu0 %2421
    %2423 = vrot.lane.b32.xlu0 %v690, 21
    %v2424 = vpop.permute.xlu0 %2423
    %2425 = vrot.lane.b32.xlu0 %v691, 21
    %v2426 = vpop.permute.xlu0 %2425
    %2427 = vrot.lane.b32.xlu0 %v692, 21
    %v2428 = vpop.permute.xlu0 %2427
    %2429 = vrot.lane.b32.xlu0 %v693, 21
    %v2430 = vpop.permute.xlu0 %2429
    %2431 = vrot.lane.b32.xlu0 %v694, 21
    %v2432 = vpop.permute.xlu0 %2431
    %2433 = vrot.lane.b32.xlu0 %v695, 21
    %v2434 = vpop.permute.xlu0 %2433
    %2435 = vrot.lane.b32.xlu0 %v696, 21
    %v2436 = vpop.permute.xlu0 %2435
    %2437 = vrot.lane.b32.xlu0 %v697, 21
    %v2438 = vpop.permute.xlu0 %2437
    %2439 = vrot.lane.b32.xlu0 %v698, 21
    %v2440 = vpop.permute.xlu0 %2439
    %2441 = vrot.lane.b32.xlu0 %v699, 21
    %v2442 = vpop.permute.xlu0 %2441
    %2443 = vrot.lane.b32.xlu0 %v700, 21
    %v2444 = vpop.permute.xlu0 %2443
    %2445 = vrot.lane.b32.xlu0 %v701, 21
    %v2446 = vpop.permute.xlu0 %2445
    %2447 = vrot.lane.b32.xlu0 %v702, 21
    %v2448 = vpop.permute.xlu0 %2447
    %2449 = vrot.lane.b32.xlu0 %v703, 21
    %v2450 = vpop.permute.xlu0 %2449
    %2451 = vrot.lane.b32.xlu0 %v704, 21
    %v2452 = vpop.permute.xlu0 %2451
    %2453 = vrot.lane.b32.xlu0 %v705, 21
    %v2454 = vpop.permute.xlu0 %2453
    %2455 = vrot.lane.b32.xlu0 %v706, 21
    %v2456 = vpop.permute.xlu0 %2455
    %2457 = vrot.lane.b32.xlu0 %v707, 21
    %v2458 = vpop.permute.xlu0 %2457
    %2459 = vrot.lane.b32.xlu0 %v708, 21
    %v2460 = vpop.permute.xlu0 %2459
    %2461 = vrot.lane.b32.xlu0 %v709, 21
    %v2462 = vpop.permute.xlu0 %2461
    %2463 = vrot.lane.b32.xlu0 %v710, 21
    %v2464 = vpop.permute.xlu0 %2463
    %2465 = vrot.lane.b32.xlu0 %v711, 21
    %v2466 = vpop.permute.xlu0 %2465
    %2467 = vrot.lane.b32.xlu0 %v712, 21
    %v2468 = vpop.permute.xlu0 %2467
    %2469 = vrot.lane.b32.xlu0 %v713, 21
    %v2470 = vpop.permute.xlu0 %2469
    %2471 = vrot.lane.b32.xlu0 %v714, 21
    %v2472 = vpop.permute.xlu0 %2471
    %2473 = vrot.lane.b32.xlu0 %v715, 21
    %v2474 = vpop.permute.xlu0 %2473
    %2475 = vrot.lane.b32.xlu0 %v716, 21
    %v2476 = vpop.permute.xlu0 %2475
    %2477 = vrot.lane.b32.xlu0 %v717, 21
    %v2478 = vpop.permute.xlu0 %2477
    %2479 = vrot.lane.b32.xlu0 %v718, 21
    %v2480 = vpop.permute.xlu0 %2479
    %2481 = vrot.lane.b32.xlu0 %v719, 21
    %v2482 = vpop.permute.xlu0 %2481
    %2483 = vrot.lane.b32.xlu0 %v720, 21
    %v2484 = vpop.permute.xlu0 %2483
    %2485 = vrot.lane.b32.xlu0 %v721, 21
    %v2486 = vpop.permute.xlu0 %2485
    %2487 = vrot.lane.b32.xlu0 %v722, 21
    %v2488 = vpop.permute.xlu0 %2487
    %2489 = vrot.lane.b32.xlu0 %v723, 21
    %v2490 = vpop.permute.xlu0 %2489
    %2491 = vrot.lane.b32.xlu0 %v724, 21
    %v2492 = vpop.permute.xlu0 %2491
    %2493 = vrot.lane.b32.xlu0 %v725, 21
    %v2494 = vpop.permute.xlu0 %2493
    %2495 = vrot.lane.b32.xlu0 %v726, 21
    %v2496 = vpop.permute.xlu0 %2495
    %2497 = vrot.lane.b32.xlu0 %v727, 21
    %v2498 = vpop.permute.xlu0 %2497
    %2499 = vrot.lane.b32.xlu0 %v728, 21
    %v2500 = vpop.permute.xlu0 %2499
    %2501 = vrot.lane.b32.xlu0 %v729, 21
    %v2502 = vpop.permute.xlu0 %2501
    %2503 = vrot.lane.b32.xlu0 %v730, 21
    %v2504 = vpop.permute.xlu0 %2503
    %2505 = vrot.lane.b32.xlu0 %v731, 21
    %v2506 = vpop.permute.xlu0 %2505
    %2507 = vrot.lane.b32.xlu0 %v732, 21
    %v2508 = vpop.permute.xlu0 %2507
    %2509 = vrot.lane.b32.xlu0 %v733, 21
    %v2510 = vpop.permute.xlu0 %2509
    %2511 = vrot.lane.b32.xlu0 %v734, 21
    %v2512 = vpop.permute.xlu0 %2511
    %2513 = vrot.lane.b32.xlu0 %v735, 21
    %v2514 = vpop.permute.xlu0 %2513
    %2515 = vrot.lane.b32.xlu0 %v736, 21
    %v2516 = vpop.permute.xlu0 %2515
    %2517 = vrot.lane.b32.xlu0 %v737, 21
    %v2518 = vpop.permute.xlu0 %2517
    %2519 = vrot.lane.b32.xlu0 %v738, 21
    %v2520 = vpop.permute.xlu0 %2519
    %2521 = vrot.lane.b32.xlu0 %v739, 21
    %v2522 = vpop.permute.xlu0 %2521
    %2523 = vrot.lane.b32.xlu0 %v740, 21
    %v2524 = vpop.permute.xlu0 %2523
    %2525 = vrot.lane.b32.xlu0 %v741, 21
    %v2526 = vpop.permute.xlu0 %2525
    %2527 = vrot.lane.b32.xlu0 %v742, 21
    %v2528 = vpop.permute.xlu0 %2527
    %2529 = vrot.lane.b32.xlu0 %v743, 21
    %v2530 = vpop.permute.xlu0 %2529
    %2531 = vrot.lane.b32.xlu0 %v744, 21
    %v2532 = vpop.permute.xlu0 %2531
    %2533 = vrot.lane.b32.xlu0 %v745, 21
    %v2534 = vpop.permute.xlu0 %2533
    %2535 = vrot.lane.b32.xlu0 %v746, 21
    %v2536 = vpop.permute.xlu0 %2535
    %2537 = vrot.lane.b32.xlu0 %v747, 21
    %v2538 = vpop.permute.xlu0 %2537
    %2539 = vrot.lane.b32.xlu0 %v748, 21
    %v2540 = vpop.permute.xlu0 %2539
    %2669 = vrot.lane.b32.xlu0 %v749, 24
    %v2670 = vpop.permute.xlu0 %2669
    %2671 = vrot.lane.b32.xlu0 %v750, 24
    %v2672 = vpop.permute.xlu0 %2671
    %2673 = vrot.lane.b32.xlu0 %v751, 24
    %v2674 = vpop.permute.xlu0 %2673
    %2675 = vrot.lane.b32.xlu0 %v752, 24
    %v2676 = vpop.permute.xlu0 %2675
    %2677 = vrot.lane.b32.xlu0 %v753, 24
    %v2678 = vpop.permute.xlu0 %2677
    %2679 = vrot.lane.b32.xlu0 %v754, 24
    %v2680 = vpop.permute.xlu0 %2679
    %2681 = vrot.lane.b32.xlu0 %v755, 24
    %v2682 = vpop.permute.xlu0 %2681
    %2683 = vrot.lane.b32.xlu0 %v756, 24
    %v2684 = vpop.permute.xlu0 %2683
    %2685 = vrot.lane.b32.xlu0 %v757, 24
    %v2686 = vpop.permute.xlu0 %2685
    %2687 = vrot.lane.b32.xlu0 %v758, 24
    %v2688 = vpop.permute.xlu0 %2687
    %2689 = vrot.lane.b32.xlu0 %v759, 24
    %v2690 = vpop.permute.xlu0 %2689
    %2691 = vrot.lane.b32.xlu0 %v760, 24
    %v2692 = vpop.permute.xlu0 %2691
    %2693 = vrot.lane.b32.xlu0 %v761, 24
    %v2694 = vpop.permute.xlu0 %2693
    %2695 = vrot.lane.b32.xlu0 %v762, 24
    %v2696 = vpop.permute.xlu0 %2695
    %2697 = vrot.lane.b32.xlu0 %v763, 24
    %v2698 = vpop.permute.xlu0 %2697
    %2699 = vrot.lane.b32.xlu0 %v764, 24
    %v2700 = vpop.permute.xlu0 %2699
    %2701 = vrot.lane.b32.xlu0 %v765, 24
    %v2702 = vpop.permute.xlu0 %2701
    %2703 = vrot.lane.b32.xlu0 %v766, 24
    %v2704 = vpop.permute.xlu0 %2703
    %2705 = vrot.lane.b32.xlu0 %v767, 24
    %v2706 = vpop.permute.xlu0 %2705
    %2707 = vrot.lane.b32.xlu0 %v768, 24
    %v2708 = vpop.permute.xlu0 %2707
    %2709 = vrot.lane.b32.xlu0 %v769, 24
    %v2710 = vpop.permute.xlu0 %2709
    %2711 = vrot.lane.b32.xlu0 %v770, 24
    %v2712 = vpop.permute.xlu0 %2711
    %2713 = vrot.lane.b32.xlu0 %v771, 24
    %v2714 = vpop.permute.xlu0 %2713
    %2715 = vrot.lane.b32.xlu0 %v772, 24
    %v2716 = vpop.permute.xlu0 %2715
    %2717 = vrot.lane.b32.xlu0 %v773, 24
    %v2718 = vpop.permute.xlu0 %2717
    %2719 = vrot.lane.b32.xlu0 %v774, 24
    %v2720 = vpop.permute.xlu0 %2719
    %2721 = vrot.lane.b32.xlu0 %v775, 24
    %v2722 = vpop.permute.xlu0 %2721
    %2723 = vrot.lane.b32.xlu0 %v776, 24
    %v2724 = vpop.permute.xlu0 %2723
    %2725 = vrot.lane.b32.xlu0 %v777, 24
    %v2726 = vpop.permute.xlu0 %2725
    %2727 = vrot.lane.b32.xlu0 %v778, 24
    %v2728 = vpop.permute.xlu0 %2727
    %2729 = vrot.lane.b32.xlu0 %v779, 24
    %v2730 = vpop.permute.xlu0 %2729
    %2731 = vrot.lane.b32.xlu0 %v780, 24
    %v2732 = vpop.permute.xlu0 %2731
    %2733 = vrot.lane.b32.xlu0 %v781, 24
    %v2734 = vpop.permute.xlu0 %2733
    %2735 = vrot.lane.b32.xlu0 %v782, 24
    %v2736 = vpop.permute.xlu0 %2735
    %2737 = vrot.lane.b32.xlu0 %v783, 24
    %v2738 = vpop.permute.xlu0 %2737
    %2739 = vrot.lane.b32.xlu0 %v784, 24
    %v2740 = vpop.permute.xlu0 %2739
    %2741 = vrot.lane.b32.xlu0 %v785, 24
    %v2742 = vpop.permute.xlu0 %2741
    %2743 = vrot.lane.b32.xlu0 %v786, 24
    %v2744 = vpop.permute.xlu0 %2743
    %2745 = vrot.lane.b32.xlu0 %v787, 24
    %v2746 = vpop.permute.xlu0 %2745
    %2747 = vrot.lane.b32.xlu0 %v788, 24
    %v2748 = vpop.permute.xlu0 %2747
    %2749 = vrot.lane.b32.xlu0 %v789, 24
    %v2750 = vpop.permute.xlu0 %2749
    %2751 = vrot.lane.b32.xlu0 %v790, 24
    %v2752 = vpop.permute.xlu0 %2751
    %2753 = vrot.lane.b32.xlu0 %v791, 24
    %v2754 = vpop.permute.xlu0 %2753
    %2755 = vrot.lane.b32.xlu0 %v792, 24
    %v2756 = vpop.permute.xlu0 %2755
    %2757 = vrot.lane.b32.xlu0 %v793, 24
    %v2758 = vpop.permute.xlu0 %2757
    %2759 = vrot.lane.b32.xlu0 %v794, 24
    %v2760 = vpop.permute.xlu0 %2759
    %2761 = vrot.lane.b32.xlu0 %v795, 24
    %v2762 = vpop.permute.xlu0 %2761
    %2763 = vrot.lane.b32.xlu0 %v796, 24
    %v2764 = vpop.permute.xlu0 %2763
    %2765 = vrot.lane.b32.xlu0 %v797, 24
    %v2766 = vpop.permute.xlu0 %2765
    %2767 = vrot.lane.b32.xlu0 %v798, 24
    %v2768 = vpop.permute.xlu0 %2767
    %2769 = vrot.lane.b32.xlu0 %v799, 24
    %v2770 = vpop.permute.xlu0 %2769
    %2771 = vrot.lane.b32.xlu0 %v800, 24
    %v2772 = vpop.permute.xlu0 %2771
    %2773 = vrot.lane.b32.xlu0 %v801, 24
    %v2774 = vpop.permute.xlu0 %2773
    %2775 = vrot.lane.b32.xlu0 %v802, 24
    %v2776 = vpop.permute.xlu0 %2775
    %2777 = vrot.lane.b32.xlu0 %v803, 24
    %v2778 = vpop.permute.xlu0 %2777
    %2779 = vrot.lane.b32.xlu0 %v804, 24
    %v2780 = vpop.permute.xlu0 %2779
    %2781 = vrot.lane.b32.xlu0 %v805, 24
    %v2782 = vpop.permute.xlu0 %2781
    %2783 = vrot.lane.b32.xlu0 %v806, 24
    %v2784 = vpop.permute.xlu0 %2783
    %2785 = vrot.lane.b32.xlu0 %v807, 24
    %v2786 = vpop.permute.xlu0 %2785
    %2787 = vrot.lane.b32.xlu0 %v808, 24
    %v2788 = vpop.permute.xlu0 %2787
    %2789 = vrot.lane.b32.xlu0 %v809, 24
    %v2790 = vpop.permute.xlu0 %2789
    %2791 = vrot.lane.b32.xlu0 %v810, 24
    %v2792 = vpop.permute.xlu0 %2791
    %2793 = vrot.lane.b32.xlu0 %v811, 24
    %v2794 = vpop.permute.xlu0 %2793
    %2795 = vrot.lane.b32.xlu0 %v812, 24
    %v2796 = vpop.permute.xlu0 %2795
    %v2861 = vsel %vm27, %v236, %v878
    %v2862 = vsel %vm27, %v237, %v880
    %v2863 = vsel %vm27, %v238, %v882
    %v2864 = vsel %vm27, %v239, %v884
    %v2865 = vsel %vm27, %v240, %v886
    %v2866 = vsel %vm27, %v241, %v888
    %v2867 = vsel %vm27, %v242, %v890
    %v2868 = vsel %vm27, %v243, %v892
    %v2869 = vsel %vm27, %v244, %v894
    %v2870 = vsel %vm27, %v245, %v896
    %v2871 = vsel %vm27, %v246, %v898
    %v2872 = vsel %vm27, %v247, %v900
    %v2873 = vsel %vm27, %v248, %v902
    %v2874 = vsel %vm27, %v249, %v904
    %v2875 = vsel %vm27, %v250, %v906
    %v2876 = vsel %vm27, %v251, %v908
    %v2877 = vsel %vm27, %v252, %v910
    %v2878 = vsel %vm27, %v253, %v912
    %v2879 = vsel %vm27, %v254, %v914
    %v2880 = vsel %vm27, %v255, %v916
    %v2881 = vsel %vm27, %v256, %v918
    %v2882 = vsel %vm27, %v257, %v920
    %v2883 = vsel %vm27, %v258, %v922
    %v2884 = vsel %vm27, %v259, %v924
    %v2885 = vsel %vm27, %v260, %v926
    %v2886 = vsel %vm27, %v261, %v928
    %v2887 = vsel %vm27, %v262, %v930
    %v2888 = vsel %vm27, %v263, %v932
    %v2889 = vsel %vm27, %v264, %v934
    %v2890 = vsel %vm27, %v265, %v936
    %v2891 = vsel %vm27, %v266, %v938
    %v2892 = vsel %vm27, %v267, %v940
    %v2893 = vsel %vm27, %v268, %v942
    %v2894 = vsel %vm27, %v269, %v944
    %v2895 = vsel %vm27, %v270, %v946
    %v2896 = vsel %vm27, %v271, %v948
    %v2897 = vsel %vm27, %v272, %v950
    %v2898 = vsel %vm27, %v273, %v952
    %v2899 = vsel %vm27, %v274, %v954
    %v2900 = vsel %vm27, %v275, %v956
    %v2901 = vsel %vm27, %v276, %v958
    %v2902 = vsel %vm27, %v277, %v960
    %v2903 = vsel %vm27, %v278, %v962
    %v2904 = vsel %vm27, %v279, %v964
    %v2905 = vsel %vm27, %v280, %v966
    %v2906 = vsel %vm27, %v281, %v968
    %v2907 = vsel %vm27, %v282, %v970
    %v2908 = vsel %vm27, %v283, %v972
    %v2909 = vsel %vm27, %v284, %v974
    %v2910 = vsel %vm27, %v285, %v976
    %v2911 = vsel %vm27, %v286, %v978
    %v2912 = vsel %vm27, %v287, %v980
    %v2913 = vsel %vm27, %v288, %v982
    %v2914 = vsel %vm27, %v289, %v984
    %v2915 = vsel %vm27, %v290, %v986
    %v2916 = vsel %vm27, %v291, %v988
    %v2917 = vsel %vm27, %v292, %v990
    %v2918 = vsel %vm27, %v293, %v992
    %v2919 = vsel %vm27, %v294, %v994
    %v2920 = vsel %vm27, %v295, %v996
    %v2921 = vsel %vm27, %v296, %v998
    %v2922 = vsel %vm27, %v297, %v1000
    %v2923 = vsel %vm27, %v298, %v1002
    %v2924 = vsel %vm27, %v299, %v1004
    %vm2925 = vcmask 48128
    %v2926 = vsel %vm2925, %v2861, %v1134
    %v2927 = vsel %vm2925, %v2862, %v1136
    %v2928 = vsel %vm2925, %v2863, %v1138
    %v2929 = vsel %vm2925, %v2864, %v1140
    %v2930 = vsel %vm2925, %v2865, %v1142
    %v2931 = vsel %vm2925, %v2866, %v1144
    %v2932 = vsel %vm2925, %v2867, %v1146
    %v2933 = vsel %vm2925, %v2868, %v1148
    %v2934 = vsel %vm2925, %v2869, %v1150
    %v2935 = vsel %vm2925, %v2870, %v1152
    %v2936 = vsel %vm2925, %v2871, %v1154
    %v2937 = vsel %vm2925, %v2872, %v1156
    %v2938 = vsel %vm2925, %v2873, %v1158
    %v2939 = vsel %vm2925, %v2874, %v1160
    %v2940 = vsel %vm2925, %v2875, %v1162
    %v2941 = vsel %vm2925, %v2876, %v1164
    %v2942 = vsel %vm2925, %v2877, %v1166
    %v2943 = vsel %vm2925, %v2878, %v1168
    %v2944 = vsel %vm2925, %v2879, %v1170
    %v2945 = vsel %vm2925, %v2880, %v1172
    %v2946 = vsel %vm2925, %v2881, %v1174
    %v2947 = vsel %vm2925, %v2882, %v1176
    %v2948 = vsel %vm2925, %v2883, %v1178
    %v2949 = vsel %vm2925, %v2884, %v1180
    %v2950 = vsel %vm2925, %v2885, %v1182
    %v2951 = vsel %vm2925, %v2886, %v1184
    %v2952 = vsel %vm2925, %v2887, %v1186
    %v2953 = vsel %vm2925, %v2888, %v1188
    %v2954 = vsel %vm2925, %v2889, %v1190
    %v2955 = vsel %vm2925, %v2890, %v1192
    %v2956 = vsel %vm2925, %v2891, %v1194
    %v2957 = vsel %vm2925, %v2892, %v1196
    %v2958 = vsel %vm2925, %v2893, %v1198
    %v2959 = vsel %vm2925, %v2894, %v1200
    %v2960 = vsel %vm2925, %v2895, %v1202
    %v2961 = vsel %vm2925, %v2896, %v1204
    %v2962 = vsel %vm2925, %v2897, %v1206
    %v2963 = vsel %vm2925, %v2898, %v1208
    %v2964 = vsel %vm2925, %v2899, %v1210
    %v2965 = vsel %vm2925, %v2900, %v1212
    %v2966 = vsel %vm2925, %v2901, %v1214
    %v2967 = vsel %vm2925, %v2902, %v1216
    %v2968 = vsel %vm2925, %v2903, %v1218
    %v2969 = vsel %vm2925, %v2904, %v1220
    %v2970 = vsel %vm2925, %v2905, %v1222
    %v2971 = vsel %vm2925, %v2906, %v1224
    %v2972 = vsel %vm2925, %v2907, %v1226
    %v2973 = vsel %vm2925, %v2908, %v1228
    %v2974 = vsel %vm2925, %v2909, %v1230
    %v2975 = vsel %vm2925, %v2910, %v1232
    %v2976 = vsel %vm2925, %v2911, %v1234
    %v2977 = vsel %vm2925, %v2912, %v1236
    %v2978 = vsel %vm2925, %v2913, %v1238
    %v2979 = vsel %vm2925, %v2914, %v1240
    %v2980 = vsel %vm2925, %v2915, %v1242
    %v2981 = vsel %vm2925, %v2916, %v1244
    %v2982 = vsel %vm2925, %v2917, %v1246
    %v2983 = vsel %vm2925, %v2918, %v1248
    %v2984 = vsel %vm2925, %v2919, %v1250
    %v2985 = vsel %vm2925, %v2920, %v1252
    %v2986 = vsel %vm2925, %v2921, %v1254
    %v2987 = vsel %vm2925, %v2922, %v1256
    %v2988 = vsel %vm2925, %v2923, %v1258
    %v2989 = vsel %vm2925, %v2924, %v1260
    %vm2990 = vcmask 72704
    %v2991 = vsel %vm2990, %v2926, %v1390
    %v2992 = vsel %vm2990, %v2927, %v1392
    %v2993 = vsel %vm2990, %v2928, %v1394
    %v2994 = vsel %vm2990, %v2929, %v1396
    %v2995 = vsel %vm2990, %v2930, %v1398
    %v2996 = vsel %vm2990, %v2931, %v1400
    %v2997 = vsel %vm2990, %v2932, %v1402
    %v2998 = vsel %vm2990, %v2933, %v1404
    %v2999 = vsel %vm2990, %v2934, %v1406
    %v3000 = vsel %vm2990, %v2935, %v1408
    %v3001 = vsel %vm2990, %v2936, %v1410
    %v3002 = vsel %vm2990, %v2937, %v1412
    %v3003 = vsel %vm2990, %v2938, %v1414
    %v3004 = vsel %vm2990, %v2939, %v1416
    %v3005 = vsel %vm2990, %v2940, %v1418
    %v3006 = vsel %vm2990, %v2941, %v1420
    %v3007 = vsel %vm2990, %v2942, %v1422
    %v3008 = vsel %vm2990, %v2943, %v1424
    %v3009 = vsel %vm2990, %v2944, %v1426
    %v3010 = vsel %vm2990, %v2945, %v1428
    %v3011 = vsel %vm2990, %v2946, %v1430
    %v3012 = vsel %vm2990, %v2947, %v1432
    %v3013 = vsel %vm2990, %v2948, %v1434
    %v3014 = vsel %vm2990, %v2949, %v1436
    %v3015 = vsel %vm2990, %v2950, %v1438
    %v3016 = vsel %vm2990, %v2951, %v1440
    %v3017 = vsel %vm2990, %v2952, %v1442
    %v3018 = vsel %vm2990, %v2953, %v1444
    %v3019 = vsel %vm2990, %v2954, %v1446
    %v3020 = vsel %vm2990, %v2955, %v1448
    %v3021 = vsel %vm2990, %v2956, %v1450
    %v3022 = vsel %vm2990, %v2957, %v1452
    %v3023 = vsel %vm2990, %v2958, %v1454
    %v3024 = vsel %vm2990, %v2959, %v1456
    %v3025 = vsel %vm2990, %v2960, %v1458
    %v3026 = vsel %vm2990, %v2961, %v1460
    %v3027 = vsel %vm2990, %v2962, %v1462
    %v3028 = vsel %vm2990, %v2963, %v1464
    %v3029 = vsel %vm2990, %v2964, %v1466
    %v3030 = vsel %vm2990, %v2965, %v1468
    %v3031 = vsel %vm2990, %v2966, %v1470
    %v3032 = vsel %vm2990, %v2967, %v1472
    %v3033 = vsel %vm2990, %v2968, %v1474
    %v3034 = vsel %vm2990, %v2969, %v1476
    %v3035 = vsel %vm2990, %v2970, %v1478
    %v3036 = vsel %vm2990, %v2971, %v1480
    %v3037 = vsel %vm2990, %v2972, %v1482
    %v3038 = vsel %vm2990, %v2973, %v1484
    %v3039 = vsel %vm2990, %v2974, %v1486
    %v3040 = vsel %vm2990, %v2975, %v1488
    %v3041 = vsel %vm2990, %v2976, %v1490
    %v3042 = vsel %vm2990, %v2977, %v1492
    %v3043 = vsel %vm2990, %v2978, %v1494
    %v3044 = vsel %vm2990, %v2979, %v1496
    %v3045 = vsel %vm2990, %v2980, %v1498
    %v3046 = vsel %vm2990, %v2981, %v1500
    %v3047 = vsel %vm2990, %v2982, %v1502
    %v3048 = vsel %vm2990, %v2983, %v1504
    %v3049 = vsel %vm2990, %v2984, %v1506
    %v3050 = vsel %vm2990, %v2985, %v1508
    %v3051 = vsel %vm2990, %v2986, %v1510
    %v3052 = vsel %vm2990, %v2987, %v1512
    %v3053 = vsel %vm2990, %v2988, %v1514
    %v3054 = vsel %vm2990, %v2989, %v1516
    %vm3055 = vcmask 97280
    %v3056 = vsel %vm3055, %v2991, %v1646
    %v3057 = vsel %vm3055, %v2992, %v1648
    %v3058 = vsel %vm3055, %v2993, %v1650
    %v3059 = vsel %vm3055, %v2994, %v1652
    %v3060 = vsel %vm3055, %v2995, %v1654
    %v3061 = vsel %vm3055, %v2996, %v1656
    %v3062 = vsel %vm3055, %v2997, %v1658
    %v3063 = vsel %vm3055, %v2998, %v1660
    %v3064 = vsel %vm3055, %v2999, %v1662
    %v3065 = vsel %vm3055, %v3000, %v1664
    %v3066 = vsel %vm3055, %v3001, %v1666
    %v3067 = vsel %vm3055, %v3002, %v1668
    %v3068 = vsel %vm3055, %v3003, %v1670
    %v3069 = vsel %vm3055, %v3004, %v1672
    %v3070 = vsel %vm3055, %v3005, %v1674
    %v3071 = vsel %vm3055, %v3006, %v1676
    %v3072 = vsel %vm3055, %v3007, %v1678
    %v3073 = vsel %vm3055, %v3008, %v1680
    %v3074 = vsel %vm3055, %v3009, %v1682
    %v3075 = vsel %vm3055, %v3010, %v1684
    %v3076 = vsel %vm3055, %v3011, %v1686
    %v3077 = vsel %vm3055, %v3012, %v1688
    %v3078 = vsel %vm3055, %v3013, %v1690
    %v3079 = vsel %vm3055, %v3014, %v1692
    %v3080 = vsel %vm3055, %v3015, %v1694
    %v3081 = vsel %vm3055, %v3016, %v1696
    %v3082 = vsel %vm3055, %v3017, %v1698
    %v3083 = vsel %vm3055, %v3018, %v1700
    %v3084 = vsel %vm3055, %v3019, %v1702
    %v3085 = vsel %vm3055, %v3020, %v1704
    %v3086 = vsel %vm3055, %v3021, %v1706
    %v3087 = vsel %vm3055, %v3022, %v1708
    %v3088 = vsel %vm3055, %v3023, %v1710
    %v3089 = vsel %vm3055, %v3024, %v1712
    %v3090 = vsel %vm3055, %v3025, %v1714
    %v3091 = vsel %vm3055, %v3026, %v1716
    %v3092 = vsel %vm3055, %v3027, %v1718
    %v3093 = vsel %vm3055, %v3028, %v1720
    %v3094 = vsel %vm3055, %v3029, %v1722
    %v3095 = vsel %vm3055, %v3030, %v1724
    %v3096 = vsel %vm3055, %v3031, %v1726
    %v3097 = vsel %vm3055, %v3032, %v1728
    %v3098 = vsel %vm3055, %v3033, %v1730
    %v3099 = vsel %vm3055, %v3034, %v1732
    %v3100 = vsel %vm3055, %v3035, %v1734
    %v3101 = vsel %vm3055, %v3036, %v1736
    %v3102 = vsel %vm3055, %v3037, %v1738
    %v3103 = vsel %vm3055, %v3038, %v1740
    %v3104 = vsel %vm3055, %v3039, %v1742
    %v3105 = vsel %vm3055, %v3040, %v1744
    %v3106 = vsel %vm3055, %v3041, %v1746
    %v3107 = vsel %vm3055, %v3042, %v1748
    %v3108 = vsel %vm3055, %v3043, %v1750
    %v3109 = vsel %vm3055, %v3044, %v1752
    %v3110 = vsel %vm3055, %v3045, %v1754
    %v3111 = vsel %vm3055, %v3046, %v1756
    %v3112 = vsel %vm3055, %v3047, %v1758
    %v3113 = vsel %vm3055, %v3048, %v1760
    %v3114 = vsel %vm3055, %v3049, %v1762
    %v3115 = vsel %vm3055, %v3050, %v1764
    %v3116 = vsel %vm3055, %v3051, %v1766
    %v3117 = vsel %vm3055, %v3052, %v1768
    %v3118 = vsel %vm3055, %v3053, %v1770
    %v3119 = vsel %vm3055, %v3054, %v1772
    %vm3120 = vcmask 121856
    %v3121 = vsel %vm3120, %v3056, %v1902
    %v3122 = vsel %vm3120, %v3057, %v1904
    %v3123 = vsel %vm3120, %v3058, %v1906
    %v3124 = vsel %vm3120, %v3059, %v1908
    %v3125 = vsel %vm3120, %v3060, %v1910
    %v3126 = vsel %vm3120, %v3061, %v1912
    %v3127 = vsel %vm3120, %v3062, %v1914
    %v3128 = vsel %vm3120, %v3063, %v1916
    %v3129 = vsel %vm3120, %v3064, %v1918
    %v3130 = vsel %vm3120, %v3065, %v1920
    %v3131 = vsel %vm3120, %v3066, %v1922
    %v3132 = vsel %vm3120, %v3067, %v1924
    %v3133 = vsel %vm3120, %v3068, %v1926
    %v3134 = vsel %vm3120, %v3069, %v1928
    %v3135 = vsel %vm3120, %v3070, %v1930
    %v3136 = vsel %vm3120, %v3071, %v1932
    %v3137 = vsel %vm3120, %v3072, %v1934
    %v3138 = vsel %vm3120, %v3073, %v1936
    %v3139 = vsel %vm3120, %v3074, %v1938
    %v3140 = vsel %vm3120, %v3075, %v1940
    %v3141 = vsel %vm3120, %v3076, %v1942
    %v3142 = vsel %vm3120, %v3077, %v1944
    %v3143 = vsel %vm3120, %v3078, %v1946
    %v3144 = vsel %vm3120, %v3079, %v1948
    %v3145 = vsel %vm3120, %v3080, %v1950
    %v3146 = vsel %vm3120, %v3081, %v1952
    %v3147 = vsel %vm3120, %v3082, %v1954
    %v3148 = vsel %vm3120, %v3083, %v1956
    %v3149 = vsel %vm3120, %v3084, %v1958
    %v3150 = vsel %vm3120, %v3085, %v1960
    %v3151 = vsel %vm3120, %v3086, %v1962
    %v3152 = vsel %vm3120, %v3087, %v1964
    %v3153 = vsel %vm3120, %v3088, %v1966
    %v3154 = vsel %vm3120, %v3089, %v1968
    %v3155 = vsel %vm3120, %v3090, %v1970
    %v3156 = vsel %vm3120, %v3091, %v1972
    %v3157 = vsel %vm3120, %v3092, %v1974
    %v3158 = vsel %vm3120, %v3093, %v1976
    %v3159 = vsel %vm3120, %v3094, %v1978
    %v3160 = vsel %vm3120, %v3095, %v1980
    %v3161 = vsel %vm3120, %v3096, %v1982
    %v3162 = vsel %vm3120, %v3097, %v1984
    %v3163 = vsel %vm3120, %v3098, %v1986
    %v3164 = vsel %vm3120, %v3099, %v1988
    %v3165 = vsel %vm3120, %v3100, %v1990
    %v3166 = vsel %vm3120, %v3101, %v1992
    %v3167 = vsel %vm3120, %v3102, %v1994
    %v3168 = vsel %vm3120, %v3103, %v1996
    %v3169 = vsel %vm3120, %v3104, %v1998
    %v3170 = vsel %vm3120, %v3105, %v2000
    %v3171 = vsel %vm3120, %v3106, %v2002
    %v3172 = vsel %vm3120, %v3107, %v2004
    %v3173 = vsel %vm3120, %v3108, %v2006
    %v3174 = vsel %vm3120, %v3109, %v2008
    %v3175 = vsel %vm3120, %v3110, %v2010
    %v3176 = vsel %vm3120, %v3111, %v2012
    %v3177 = vsel %vm3120, %v3112, %v2014
    %v3178 = vsel %vm3120, %v3113, %v2016
    %v3179 = vsel %vm3120, %v3114, %v2018
    %v3180 = vsel %vm3120, %v3115, %v2020
    %v3181 = vsel %vm3120, %v3116, %v2022
    %v3182 = vsel %vm3120, %v3117, %v2024
    %v3183 = vsel %vm3120, %v3118, %v2026
    %v3184 = vsel %vm3120, %v3119, %v2028
    %vm3185 = vcmask 146432
    %v3186 = vsel %vm3185, %v3121, %v2158
    %v3187 = vsel %vm3185, %v3122, %v2160
    %v3188 = vsel %vm3185, %v3123, %v2162
    %v3189 = vsel %vm3185, %v3124, %v2164
    %v3190 = vsel %vm3185, %v3125, %v2166
    %v3191 = vsel %vm3185, %v3126, %v2168
    %v3192 = vsel %vm3185, %v3127, %v2170
    %v3193 = vsel %vm3185, %v3128, %v2172
    %v3194 = vsel %vm3185, %v3129, %v2174
    %v3195 = vsel %vm3185, %v3130, %v2176
    %v3196 = vsel %vm3185, %v3131, %v2178
    %v3197 = vsel %vm3185, %v3132, %v2180
    %v3198 = vsel %vm3185, %v3133, %v2182
    %v3199 = vsel %vm3185, %v3134, %v2184
    %v3200 = vsel %vm3185, %v3135, %v2186
    %v3201 = vsel %vm3185, %v3136, %v2188
    %v3202 = vsel %vm3185, %v3137, %v2190
    %v3203 = vsel %vm3185, %v3138, %v2192
    %v3204 = vsel %vm3185, %v3139, %v2194
    %v3205 = vsel %vm3185, %v3140, %v2196
    %v3206 = vsel %vm3185, %v3141, %v2198
    %v3207 = vsel %vm3185, %v3142, %v2200
    %v3208 = vsel %vm3185, %v3143, %v2202
    %v3209 = vsel %vm3185, %v3144, %v2204
    %v3210 = vsel %vm3185, %v3145, %v2206
    %v3211 = vsel %vm3185, %v3146, %v2208
    %v3212 = vsel %vm3185, %v3147, %v2210
    %v3213 = vsel %vm3185, %v3148, %v2212
    %v3214 = vsel %vm3185, %v3149, %v2214
    %v3215 = vsel %vm3185, %v3150, %v2216
    %v3216 = vsel %vm3185, %v3151, %v2218
    %v3217 = vsel %vm3185, %v3152, %v2220
    %v3218 = vsel %vm3185, %v3153, %v2222
    %v3219 = vsel %vm3185, %v3154, %v2224
    %v3220 = vsel %vm3185, %v3155, %v2226
    %v3221 = vsel %vm3185, %v3156, %v2228
    %v3222 = vsel %vm3185, %v3157, %v2230
    %v3223 = vsel %vm3185, %v3158, %v2232
    %v3224 = vsel %vm3185, %v3159, %v2234
    %v3225 = vsel %vm3185, %v3160, %v2236
    %v3226 = vsel %vm3185, %v3161, %v2238
    %v3227 = vsel %vm3185, %v3162, %v2240
    %v3228 = vsel %vm3185, %v3163, %v2242
    %v3229 = vsel %vm3185, %v3164, %v2244
    %v3230 = vsel %vm3185, %v3165, %v2246
    %v3231 = vsel %vm3185, %v3166, %v2248
    %v3232 = vsel %vm3185, %v3167, %v2250
    %v3233 = vsel %vm3185, %v3168, %v2252
    %v3234 = vsel %vm3185, %v3169, %v2254
    %v3235 = vsel %vm3185, %v3170, %v2256
    %v3236 = vsel %vm3185, %v3171, %v2258
    %v3237 = vsel %vm3185, %v3172, %v2260
    %v3238 = vsel %vm3185, %v3173, %v2262
    %v3239 = vsel %vm3185, %v3174, %v2264
    %v3240 = vsel %vm3185, %v3175, %v2266
    %v3241 = vsel %vm3185, %v3176, %v2268
    %v3242 = vsel %vm3185, %v3177, %v2270
    %v3243 = vsel %vm3185, %v3178, %v2272
    %v3244 = vsel %vm3185, %v3179, %v2274
    %v3245 = vsel %vm3185, %v3180, %v2276
    %v3246 = vsel %vm3185, %v3181, %v2278
    %v3247 = vsel %vm3185, %v3182, %v2280
    %v3248 = vsel %vm3185, %v3183, %v2282
    %v3249 = vsel %vm3185, %v3184, %v2284
    %vm3250 = vcmask 171008
    %v3251 = vsel %vm3250, %v3186, %v2414
    %v3252 = vsel %vm3250, %v3187, %v2416
    %v3253 = vsel %vm3250, %v3188, %v2418
    %v3254 = vsel %vm3250, %v3189, %v2420
    %v3255 = vsel %vm3250, %v3190, %v2422
    %v3256 = vsel %vm3250, %v3191, %v2424
    %v3257 = vsel %vm3250, %v3192, %v2426
    %v3258 = vsel %vm3250, %v3193, %v2428
    %v3259 = vsel %vm3250, %v3194, %v2430
    %v3260 = vsel %vm3250, %v3195, %v2432
    %v3261 = vsel %vm3250, %v3196, %v2434
    %v3262 = vsel %vm3250, %v3197, %v2436
    %v3263 = vsel %vm3250, %v3198, %v2438
    %v3264 = vsel %vm3250, %v3199, %v2440
    %v3265 = vsel %vm3250, %v3200, %v2442
    %v3266 = vsel %vm3250, %v3201, %v2444
    %v3267 = vsel %vm3250, %v3202, %v2446
    %v3268 = vsel %vm3250, %v3203, %v2448
    %v3269 = vsel %vm3250, %v3204, %v2450
    %v3270 = vsel %vm3250, %v3205, %v2452
    %v3271 = vsel %vm3250, %v3206, %v2454
    %v3272 = vsel %vm3250, %v3207, %v2456
    %v3273 = vsel %vm3250, %v3208, %v2458
    %v3274 = vsel %vm3250, %v3209, %v2460
    %v3275 = vsel %vm3250, %v3210, %v2462
    %v3276 = vsel %vm3250, %v3211, %v2464
    %v3277 = vsel %vm3250, %v3212, %v2466
    %v3278 = vsel %vm3250, %v3213, %v2468
    %v3279 = vsel %vm3250, %v3214, %v2470
    %v3280 = vsel %vm3250, %v3215, %v2472
    %v3281 = vsel %vm3250, %v3216, %v2474
    %v3282 = vsel %vm3250, %v3217, %v2476
    %v3283 = vsel %vm3250, %v3218, %v2478
    %v3284 = vsel %vm3250, %v3219, %v2480
    %v3285 = vsel %vm3250, %v3220, %v2482
    %v3286 = vsel %vm3250, %v3221, %v2484
    %v3287 = vsel %vm3250, %v3222, %v2486
    %v3288 = vsel %vm3250, %v3223, %v2488
    %v3289 = vsel %vm3250, %v3224, %v2490
    %v3290 = vsel %vm3250, %v3225, %v2492
    %v3291 = vsel %vm3250, %v3226, %v2494
    %v3292 = vsel %vm3250, %v3227, %v2496
    %v3293 = vsel %vm3250, %v3228, %v2498
    %v3294 = vsel %vm3250, %v3229, %v2500
    %v3295 = vsel %vm3250, %v3230, %v2502
    %v3296 = vsel %vm3250, %v3231, %v2504
    %v3297 = vsel %vm3250, %v3232, %v2506
    %v3298 = vsel %vm3250, %v3233, %v2508
    %v3299 = vsel %vm3250, %v3234, %v2510
    %v3300 = vsel %vm3250, %v3235, %v2512
    %v3301 = vsel %vm3250, %v3236, %v2514
    %v3302 = vsel %vm3250, %v3237, %v2516
    %v3303 = vsel %vm3250, %v3238, %v2518
    %v3304 = vsel %vm3250, %v3239, %v2520
    %v3305 = vsel %vm3250, %v3240, %v2522
    %v3306 = vsel %vm3250, %v3241, %v2524
    %v3307 = vsel %vm3250, %v3242, %v2526
    %v3308 = vsel %vm3250, %v3243, %v2528
    %v3309 = vsel %vm3250, %v3244, %v2530
    %v3310 = vsel %vm3250, %v3245, %v2532
    %v3311 = vsel %vm3250, %v3246, %v2534
    %v3312 = vsel %vm3250, %v3247, %v2536
    %v3313 = vsel %vm3250, %v3248, %v2538
    %v3314 = vsel %vm3250, %v3249, %v2540
    %vm3315 = vcmask 195584
    %v3316 = vsel %vm3315, %v3251, %v2670
    %v3317 = vsel %vm3315, %v3252, %v2672
    %v3318 = vsel %vm3315, %v3253, %v2674
    %v3319 = vsel %vm3315, %v3254, %v2676
    %v3320 = vsel %vm3315, %v3255, %v2678
    %v3321 = vsel %vm3315, %v3256, %v2680
    %v3322 = vsel %vm3315, %v3257, %v2682
    %v3323 = vsel %vm3315, %v3258, %v2684
    %v3324 = vsel %vm3315, %v3259, %v2686
    %v3325 = vsel %vm3315, %v3260, %v2688
    %v3326 = vsel %vm3315, %v3261, %v2690
    %v3327 = vsel %vm3315, %v3262, %v2692
    %v3328 = vsel %vm3315, %v3263, %v2694
    %v3329 = vsel %vm3315, %v3264, %v2696
    %v3330 = vsel %vm3315, %v3265, %v2698
    %v3331 = vsel %vm3315, %v3266, %v2700
    %v3332 = vsel %vm3315, %v3267, %v2702
    %v3333 = vsel %vm3315, %v3268, %v2704
    %v3334 = vsel %vm3315, %v3269, %v2706
    %v3335 = vsel %vm3315, %v3270, %v2708
    %v3336 = vsel %vm3315, %v3271, %v2710
    %v3337 = vsel %vm3315, %v3272, %v2712
    %v3338 = vsel %vm3315, %v3273, %v2714
    %v3339 = vsel %vm3315, %v3274, %v2716
    %v3340 = vsel %vm3315, %v3275, %v2718
    %v3341 = vsel %vm3315, %v3276, %v2720
    %v3342 = vsel %vm3315, %v3277, %v2722
    %v3343 = vsel %vm3315, %v3278, %v2724
    %v3344 = vsel %vm3315, %v3279, %v2726
    %v3345 = vsel %vm3315, %v3280, %v2728
    %v3346 = vsel %vm3315, %v3281, %v2730
    %v3347 = vsel %vm3315, %v3282, %v2732
    %v3348 = vsel %vm3315, %v3283, %v2734
    %v3349 = vsel %vm3315, %v3284, %v2736
    %v3350 = vsel %vm3315, %v3285, %v2738
    %v3351 = vsel %vm3315, %v3286, %v2740
    %v3352 = vsel %vm3315, %v3287, %v2742
    %v3353 = vsel %vm3315, %v3288, %v2744
    %v3354 = vsel %vm3315, %v3289, %v2746
    %v3355 = vsel %vm3315, %v3290, %v2748
    %v3356 = vsel %vm3315, %v3291, %v2750
    %v3357 = vsel %vm3315, %v3292, %v2752
    %v3358 = vsel %vm3315, %v3293, %v2754
    %v3359 = vsel %vm3315, %v3294, %v2756
    %v3360 = vsel %vm3315, %v3295, %v2758
    %v3361 = vsel %vm3315, %v3296, %v2760
    %v3362 = vsel %vm3315, %v3297, %v2762
    %v3363 = vsel %vm3315, %v3298, %v2764
    %v3364 = vsel %vm3315, %v3299, %v2766
    %v3365 = vsel %vm3315, %v3300, %v2768
    %v3366 = vsel %vm3315, %v3301, %v2770
    %v3367 = vsel %vm3315, %v3302, %v2772
    %v3368 = vsel %vm3315, %v3303, %v2774
    %v3369 = vsel %vm3315, %v3304, %v2776
    %v3370 = vsel %vm3315, %v3305, %v2778
    %v3371 = vsel %vm3315, %v3306, %v2780
    %v3372 = vsel %vm3315, %v3307, %v2782
    %v3373 = vsel %vm3315, %v3308, %v2784
    %v3374 = vsel %vm3315, %v3309, %v2786
    %v3375 = vsel %vm3315, %v3310, %v2788
    %v3376 = vsel %vm3315, %v3311, %v2790
    %v3377 = vsel %vm3315, %v3312, %v2792
    %v3378 = vsel %vm3315, %v3313, %v2794
    %v3379 = vsel %vm3315, %v3314, %v2796
    %v3380 = vld [vmem:[%s1] sm:$0xff]
    %v3381 = vld [vmem:[%s1 + $0x8] sm:$0xff]
    %v3382 = vld [vmem:[%s1 + $0x10] sm:$0xff]
    %v3383 = vld [vmem:[%s1 + $0x18] sm:$0x7]
    %v3384 = vld [vmem:[%s2] sm:$0x1]
    %v3386 = vlaneseq
    %v3387 = vshrl.u32 %v3386, 7
    %v3388 = vsub.s32 0, %v3387
    %v3389 = vrot.slane %v3384, %v3388
    %vm3391 = vcmask 220160
    %v3393 = vsel %vm3391, %v3316, 0
    %v3396 = vsel %vm3391, %v3317, 0
    %v3399 = vsel %vm3391, %v3318, 0
    %v3402 = vsel %vm3391, %v3319, 0
    %v3405 = vsel %vm3391, %v3320, 0
    %v3408 = vsel %vm3391, %v3321, 0
    %v3411 = vsel %vm3391, %v3322, 0
    %v3414 = vsel %vm3391, %v3323, 0
    %v3417 = vsel %vm3391, %v3324, 0
    %v3420 = vsel %vm3391, %v3325, 0
    %v3423 = vsel %vm3391, %v3326, 0
    %v3426 = vsel %vm3391, %v3327, 0
    %v3429 = vsel %vm3391, %v3328, 0
    %v3432 = vsel %vm3391, %v3329, 0
    %v3435 = vsel %vm3391, %v3330, 0
    %v3438 = vsel %vm3391, %v3331, 0
    %v3441 = vsel %vm3391, %v3332, 0
    %v3444 = vsel %vm3391, %v3333, 0
    %v3447 = vsel %vm3391, %v3334, 0
    %v3450 = vsel %vm3391, %v3335, 0
    %v3453 = vsel %vm3391, %v3336, 0
    %v3456 = vsel %vm3391, %v3337, 0
    %v3459 = vsel %vm3391, %v3338, 0
    %v3462 = vsel %vm3391, %v3339, 0
    %v3465 = vsel %vm3391, %v3340, 0
    %v3468 = vsel %vm3391, %v3341, 0
    %v3471 = vsel %vm3391, %v3342, 0
    %v3474 = vsel %vm3391, %v3343, 0
    %v3477 = vsel %vm3391, %v3344, 0
    %v3480 = vsel %vm3391, %v3345, 0
    %v3483 = vsel %vm3391, %v3346, 0
    %v3486 = vsel %vm3391, %v3347, 0
    %v3489 = vsel %vm3391, %v3348, 0
    %v3492 = vsel %vm3391, %v3349, 0
    %v3495 = vsel %vm3391, %v3350, 0
    %v3498 = vsel %vm3391, %v3351, 0
    %v3501 = vsel %vm3391, %v3352, 0
    %v3504 = vsel %vm3391, %v3353, 0
    %v3507 = vsel %vm3391, %v3354, 0
    %v3510 = vsel %vm3391, %v3355, 0
    %v3513 = vsel %vm3391, %v3356, 0
    %v3516 = vsel %vm3391, %v3357, 0
    %v3519 = vsel %vm3391, %v3358, 0
    %v3522 = vsel %vm3391, %v3359, 0
    %v3525 = vsel %vm3391, %v3360, 0
    %v3528 = vsel %vm3391, %v3361, 0
    %v3531 = vsel %vm3391, %v3362, 0
    %v3534 = vsel %vm3391, %v3363, 0
    %v3537 = vsel %vm3391, %v3364, 0
    %v3540 = vsel %vm3391, %v3365, 0
    %v3543 = vsel %vm3391, %v3366, 0
    %v3546 = vsel %vm3391, %v3367, 0
    %v3549 = vsel %vm3391, %v3368, 0
    %v3552 = vsel %vm3391, %v3369, 0
    %v3555 = vsel %vm3391, %v3370, 0
    %v3558 = vsel %vm3391, %v3371, 0
    %v3561 = vsel %vm3391, %v3372, 0
    %v3564 = vsel %vm3391, %v3373, 0
    %v3567 = vsel %vm3391, %v3374, 0
    %v3570 = vsel %vm3391, %v3375, 0
    %v3573 = vsel %vm3391, %v3376, 0
    %v3576 = vsel %vm3391, %v3377, 0
    %v3579 = vsel %vm3391, %v3378, 0
    %v3582 = vsel %vm3391, %v3379, 0
    %vm3584 = vcmask 1042432
    %v3586 = vsel %vm3584, %v3383, 0
    %3588 = vmatprep.subr.mxu0 0.0
    %3589 = vmatpush1.msra.mxu0 0.0
    %3590 = vmatprep.subr.mxu0 0.0
    %3591 = vmatpush1.msra.mxu0 0.0
    %3592 = vmatprep.subr.mxu0 0.0
    %3593 = vmatpush1.msra.mxu0 0.0
    %3594 = vmatprep.subr.mxu0 0.0
    %3595 = vmatpush1.msra.mxu0 0.0
    %3596 = vmatprep.subr.mxu0 0.0
    %3597 = vmatpush1.msra.mxu0 0.0
    %3598 = vmatprep.subr.mxu0 0.0
    %3599 = vmatpush1.msra.mxu0 0.0
    %3600 = vmatprep.subr.mxu0 0.0
    %3601 = vmatpush1.msra.mxu0 0.0
    %3602 = vmatprep.subr.mxu0 0.0
    %3603 = vmatpush1.msra.mxu0 0.0
    %3604 = vmatprep.subr.mxu0 0.0
    %3605 = vmatpush1.msra.mxu0 0.0
    %3606 = vmatprep.subr.mxu0 0.0
    %3607 = vmatpush1.msra.mxu0 0.0
    %3608 = vmatprep.subr.mxu0 0.0
    %3609 = vmatpush1.msra.mxu0 0.0
    %3610 = vmatprep.subr.mxu0 0.0
    %3611 = vmatpush1.msra.mxu0 0.0
    %3612 = vmatprep.subr.mxu0 0.0
    %3613 = vmatpush1.msra.mxu0 %v3586
    %3614 = vmatprep.subr.mxu0 0.0
    %3615 = vmatpush1.msra.mxu0 %v3382
    %3616 = vmatprep.subr.mxu0 0.0
    %3617 = vmatpush1.msra.mxu0 %v3381
    %3618 = vmatprep.subr.mxu0 0.0
    %3619 = vmatpush1.msra.mxu0 %v3380
    %3620 = vmatprep.subr.mxu0 0.0
    %3621 = vmatpush2.msra.mxu0 0.0
    %3622 = vmatprep.subr.mxu0 0.0
    %3623 = vmatpush2.msra.mxu0 0.0
    %3624 = vmatprep.subr.mxu0 0.0
    %3625 = vmatpush2.msra.mxu0 0.0
    %3626 = vmatprep.subr.mxu0 0.0
    %3627 = vmatpush2.msra.mxu0 0.0
    %3628 = vmatprep.subr.mxu0 0.0
    %3629 = vmatpush2.msra.mxu0 0.0
    %3630 = vmatprep.subr.mxu0 0.0
    %3631 = vmatpush2.msra.mxu0 0.0
    %3632 = vmatprep.subr.mxu0 0.0
    %3633 = vmatpush2.msra.mxu0 0.0
    %3634 = vmatprep.subr.mxu0 0.0
    %3635 = vmatpush2.msra.mxu0 0.0
    %3636 = vmatprep.subr.mxu0 0.0
    %3637 = vmatpush2.msra.mxu0 0.0
    %3638 = vmatprep.subr.mxu0 0.0
    %3639 = vmatpush2.msra.mxu0 0.0
    %3640 = vmatprep.subr.mxu0 0.0
    %3641 = vmatpush2.msra.mxu0 0.0
    %3642 = vmatprep.subr.mxu0 0.0
    %3643 = vmatpush2.msra.mxu0 0.0
    %3644 = vmatprep.subr.mxu0 0.0
    %3645 = vmatpush2.msra.mxu0 0.0
    %3646 = vmatprep.subr.mxu0 0.0
    %3647 = vmatpush2.msra.mxu0 0.0
    %3648 = vmatprep.subr.mxu0 0.0
    %3649 = vmatpush2.msra.mxu0 0.0
    %3650 = vmatprep.subr.mxu0 0.0
    %3651 = vmatpush2.msra.mxu0 0.0
    %3652 = vmatprep.mubr.f32.mxu0 0.0
    %3653 = vmatmul.mubr.f32.gmra.mxu0 %v3393
    %v3654 = vpop.f32.mrf.mxu0
    %v3655 = vadd.f32 %v3389, %v3654
    %v3656 = vpop.f32.mrf.mxu0
    %3657 = vmatprep.mubr.f32.mxu0 0.0
    %3658 = vmatmul.mubr.f32.gmra.mxu0 %v3396
    %v3659 = vpop.f32.mrf.mxu0
    %v3660 = vadd.f32 %v3389, %v3659
    %v3661 = vpop.f32.mrf.mxu0
    %3662 = vmatprep.mubr.f32.mxu0 0.0
    %3663 = vmatmul.mubr.f32.gmra.mxu0 %v3399
    %v3664 = vpop.f32.mrf.mxu0
    %v3665 = vadd.f32 %v3389, %v3664
    %v3666 = vpop.f32.mrf.mxu0
    %3667 = vmatprep.mubr.f32.mxu0 0.0
    %3668 = vmatmul.mubr.f32.gmra.mxu0 %v3402
    %v3669 = vpop.f32.mrf.mxu0
    %v3670 = vadd.f32 %v3389, %v3669
    %v3671 = vpop.f32.mrf.mxu0
    %3672 = vmatprep.mubr.f32.mxu0 0.0
    %3673 = vmatmul.mubr.f32.gmra.mxu0 %v3405
    %v3674 = vpop.f32.mrf.mxu0
    %v3675 = vadd.f32 %v3389, %v3674
    %v3676 = vpop.f32.mrf.mxu0
    %3677 = vmatprep.mubr.f32.mxu0 0.0
    %3678 = vmatmul.mubr.f32.gmra.mxu0 %v3408
    %v3679 = vpop.f32.mrf.mxu0
    %v3680 = vadd.f32 %v3389, %v3679
    %v3681 = vpop.f32.mrf.mxu0
    %3682 = vmatprep.mubr.f32.mxu0 0.0
    %3683 = vmatmul.mubr.f32.gmra.mxu0 %v3411
    %v3684 = vpop.f32.mrf.mxu0
    %v3685 = vadd.f32 %v3389, %v3684
    %v3686 = vpop.f32.mrf.mxu0
    %3687 = vmatprep.mubr.f32.mxu0 0.0
    %3688 = vmatmul.mubr.f32.gmra.mxu0 %v3414
    %v3689 = vpop.f32.mrf.mxu0
    %v3690 = vadd.f32 %v3389, %v3689
    %v3691 = vpop.f32.mrf.mxu0
    %3692 = vmatprep.mubr.f32.mxu0 0.0
    %3693 = vmatmul.mubr.f32.gmra.mxu0 %v3417
    %v3694 = vpop.f32.mrf.mxu0
    %v3695 = vadd.f32 %v3389, %v3694
    %v3696 = vpop.f32.mrf.mxu0
    %3697 = vmatprep.mubr.f32.mxu0 0.0
    %3698 = vmatmul.mubr.f32.gmra.mxu0 %v3420
    %v3699 = vpop.f32.mrf.mxu0
    %v3700 = vadd.f32 %v3389, %v3699
    %v3701 = vpop.f32.mrf.mxu0
    %3702 = vmatprep.mubr.f32.mxu0 0.0
    %3703 = vmatmul.mubr.f32.gmra.mxu0 %v3423
    %v3704 = vpop.f32.mrf.mxu0
    %v3705 = vadd.f32 %v3389, %v3704
    %v3706 = vpop.f32.mrf.mxu0
    %3707 = vmatprep.mubr.f32.mxu0 0.0
    %3708 = vmatmul.mubr.f32.gmra.mxu0 %v3426
    %v3709 = vpop.f32.mrf.mxu0
    %v3710 = vadd.f32 %v3389, %v3709
    %v3711 = vpop.f32.mrf.mxu0
    %3712 = vmatprep.mubr.f32.mxu0 0.0
    %3713 = vmatmul.mubr.f32.gmra.mxu0 %v3429
    %v3714 = vpop.f32.mrf.mxu0
    %v3715 = vadd.f32 %v3389, %v3714
    %v3716 = vpop.f32.mrf.mxu0
    %3717 = vmatprep.mubr.f32.mxu0 0.0
    %3718 = vmatmul.mubr.f32.gmra.mxu0 %v3432
    %v3719 = vpop.f32.mrf.mxu0
    %v3720 = vadd.f32 %v3389, %v3719
    %v3721 = vpop.f32.mrf.mxu0
    %3722 = vmatprep.mubr.f32.mxu0 0.0
    %3723 = vmatmul.mubr.f32.gmra.mxu0 %v3435
    %v3724 = vpop.f32.mrf.mxu0
    %v3725 = vadd.f32 %v3389, %v3724
    %v3726 = vpop.f32.mrf.mxu0
    %3727 = vmatprep.mubr.f32.mxu0 0.0
    %3728 = vmatmul.mubr.f32.gmra.mxu0 %v3438
    %v3729 = vpop.f32.mrf.mxu0
    %v3730 = vadd.f32 %v3389, %v3729
    %v3731 = vpop.f32.mrf.mxu0
    %3732 = vmatprep.mubr.f32.mxu0 0.0
    %3733 = vmatmul.mubr.f32.gmra.mxu0 %v3441
    %v3734 = vpop.f32.mrf.mxu0
    %v3735 = vadd.f32 %v3389, %v3734
    %v3736 = vpop.f32.mrf.mxu0
    %3737 = vmatprep.mubr.f32.mxu0 0.0
    %3738 = vmatmul.mubr.f32.gmra.mxu0 %v3444
    %v3739 = vpop.f32.mrf.mxu0
    %v3740 = vadd.f32 %v3389, %v3739
    %v3741 = vpop.f32.mrf.mxu0
    %3742 = vmatprep.mubr.f32.mxu0 0.0
    %3743 = vmatmul.mubr.f32.gmra.mxu0 %v3447
    %v3744 = vpop.f32.mrf.mxu0
    %v3745 = vadd.f32 %v3389, %v3744
    %v3746 = vpop.f32.mrf.mxu0
    %3747 = vmatprep.mubr.f32.mxu0 0.0
    %3748 = vmatmul.mubr.f32.gmra.mxu0 %v3450
    %v3749 = vpop.f32.mrf.mxu0
    %v3750 = vadd.f32 %v3389, %v3749
    %v3751 = vpop.f32.mrf.mxu0
    %3752 = vmatprep.mubr.f32.mxu0 0.0
    %3753 = vmatmul.mubr.f32.gmra.mxu0 %v3453
    %v3754 = vpop.f32.mrf.mxu0
    %v3755 = vadd.f32 %v3389, %v3754
    %v3756 = vpop.f32.mrf.mxu0
    %3757 = vmatprep.mubr.f32.mxu0 0.0
    %3758 = vmatmul.mubr.f32.gmra.mxu0 %v3456
    %v3759 = vpop.f32.mrf.mxu0
    %v3760 = vadd.f32 %v3389, %v3759
    %v3761 = vpop.f32.mrf.mxu0
    %3762 = vmatprep.mubr.f32.mxu0 0.0
    %3763 = vmatmul.mubr.f32.gmra.mxu0 %v3459
    %v3764 = vpop.f32.mrf.mxu0
    %v3765 = vadd.f32 %v3389, %v3764
    %v3766 = vpop.f32.mrf.mxu0
    %3767 = vmatprep.mubr.f32.mxu0 0.0
    %3768 = vmatmul.mubr.f32.gmra.mxu0 %v3462
    %v3769 = vpop.f32.mrf.mxu0
    %v3770 = vadd.f32 %v3389, %v3769
    %v3771 = vpop.f32.mrf.mxu0
    %3772 = vmatprep.mubr.f32.mxu0 0.0
    %3773 = vmatmul.mubr.f32.gmra.mxu0 %v3465
    %v3774 = vpop.f32.mrf.mxu0
    %v3775 = vadd.f32 %v3389, %v3774
    %v3776 = vpop.f32.mrf.mxu0
    %3777 = vmatprep.mubr.f32.mxu0 0.0
    %3778 = vmatmul.mubr.f32.gmra.mxu0 %v3468
    %v3779 = vpop.f32.mrf.mxu0
    %v3780 = vadd.f32 %v3389, %v3779
    %v3781 = vpop.f32.mrf.mxu0
    %3782 = vmatprep.mubr.f32.mxu0 0.0
    %3783 = vmatmul.mubr.f32.gmra.mxu0 %v3471
    %v3784 = vpop.f32.mrf.mxu0
    %v3785 = vadd.f32 %v3389, %v3784
    %v3786 = vpop.f32.mrf.mxu0
    %3787 = vmatprep.mubr.f32.mxu0 0.0
    %3788 = vmatmul.mubr.f32.gmra.mxu0 %v3474
    %v3789 = vpop.f32.mrf.mxu0
    %v3790 = vadd.f32 %v3389, %v3789
    %v3791 = vpop.f32.mrf.mxu0
    %3792 = vmatprep.mubr.f32.mxu0 0.0
    %3793 = vmatmul.mubr.f32.gmra.mxu0 %v3477
    %v3794 = vpop.f32.mrf.mxu0
    %v3795 = vadd.f32 %v3389, %v3794
    %v3796 = vpop.f32.mrf.mxu0
    %3797 = vmatprep.mubr.f32.mxu0 0.0
    %3798 = vmatmul.mubr.f32.gmra.mxu0 %v3480
    %v3799 = vpop.f32.mrf.mxu0
    %v3800 = vadd.f32 %v3389, %v3799
    %v3801 = vpop.f32.mrf.mxu0
    %3802 = vmatprep.mubr.f32.mxu0 0.0
    %3803 = vmatmul.mubr.f32.gmra.mxu0 %v3483
    %v3804 = vpop.f32.mrf.mxu0
    %v3805 = vadd.f32 %v3389, %v3804
    %v3806 = vpop.f32.mrf.mxu0
    %3807 = vmatprep.mubr.f32.mxu0 0.0
    %3808 = vmatmul.mubr.f32.gmra.mxu0 %v3486
    %v3809 = vpop.f32.mrf.mxu0
    %v3810 = vadd.f32 %v3389, %v3809
    %v3811 = vpop.f32.mrf.mxu0
    %3812 = vmatprep.mubr.f32.mxu0 0.0
    %3813 = vmatmul.mubr.f32.gmra.mxu0 %v3489
    %v3814 = vpop.f32.mrf.mxu0
    %v3815 = vadd.f32 %v3389, %v3814
    %v3816 = vpop.f32.mrf.mxu0
    %3817 = vmatprep.mubr.f32.mxu0 0.0
    %3818 = vmatmul.mubr.f32.gmra.mxu0 %v3492
    %v3819 = vpop.f32.mrf.mxu0
    %v3820 = vadd.f32 %v3389, %v3819
    %v3821 = vpop.f32.mrf.mxu0
    %3822 = vmatprep.mubr.f32.mxu0 0.0
    %3823 = vmatmul.mubr.f32.gmra.mxu0 %v3495
    %v3824 = vpop.f32.mrf.mxu0
    %v3825 = vadd.f32 %v3389, %v3824
    %v3826 = vpop.f32.mrf.mxu0
    %3827 = vmatprep.mubr.f32.mxu0 0.0
    %3828 = vmatmul.mubr.f32.gmra.mxu0 %v3498
    %v3829 = vpop.f32.mrf.mxu0
    %v3830 = vadd.f32 %v3389, %v3829
    %v3831 = vpop.f32.mrf.mxu0
    %3832 = vmatprep.mubr.f32.mxu0 0.0
    %3833 = vmatmul.mubr.f32.gmra.mxu0 %v3501
    %v3834 = vpop.f32.mrf.mxu0
    %v3835 = vadd.f32 %v3389, %v3834
    %v3836 = vpop.f32.mrf.mxu0
    %3837 = vmatprep.mubr.f32.mxu0 0.0
    %3838 = vmatmul.mubr.f32.gmra.mxu0 %v3504
    %v3839 = vpop.f32.mrf.mxu0
    %v3840 = vadd.f32 %v3389, %v3839
    %v3841 = vpop.f32.mrf.mxu0
    %3842 = vmatprep.mubr.f32.mxu0 0.0
    %3843 = vmatmul.mubr.f32.gmra.mxu0 %v3507
    %v3844 = vpop.f32.mrf.mxu0
    %v3845 = vadd.f32 %v3389, %v3844
    %v3846 = vpop.f32.mrf.mxu0
    %3847 = vmatprep.mubr.f32.mxu0 0.0
    %3848 = vmatmul.mubr.f32.gmra.mxu0 %v3510
    %v3849 = vpop.f32.mrf.mxu0
    %v3850 = vadd.f32 %v3389, %v3849
    %v3851 = vpop.f32.mrf.mxu0
    %3852 = vmatprep.mubr.f32.mxu0 0.0
    %3853 = vmatmul.mubr.f32.gmra.mxu0 %v3513
    %v3854 = vpop.f32.mrf.mxu0
    %v3855 = vadd.f32 %v3389, %v3854
    %v3856 = vpop.f32.mrf.mxu0
    %3857 = vmatprep.mubr.f32.mxu0 0.0
    %3858 = vmatmul.mubr.f32.gmra.mxu0 %v3516
    %v3859 = vpop.f32.mrf.mxu0
    %v3860 = vadd.f32 %v3389, %v3859
    %v3861 = vpop.f32.mrf.mxu0
    %3862 = vmatprep.mubr.f32.mxu0 0.0
    %3863 = vmatmul.mubr.f32.gmra.mxu0 %v3519
    %v3864 = vpop.f32.mrf.mxu0
    %v3865 = vadd.f32 %v3389, %v3864
    %v3866 = vpop.f32.mrf.mxu0
    %3867 = vmatprep.mubr.f32.mxu0 0.0
    %3868 = vmatmul.mubr.f32.gmra.mxu0 %v3522
    %v3869 = vpop.f32.mrf.mxu0
    %v3870 = vadd.f32 %v3389, %v3869
    %v3871 = vpop.f32.mrf.mxu0
    %3872 = vmatprep.mubr.f32.mxu0 0.0
    %3873 = vmatmul.mubr.f32.gmra.mxu0 %v3525
    %v3874 = vpop.f32.mrf.mxu0
    %v3875 = vadd.f32 %v3389, %v3874
    %v3876 = vpop.f32.mrf.mxu0
    %3877 = vmatprep.mubr.f32.mxu0 0.0
    %3878 = vmatmul.mubr.f32.gmra.mxu0 %v3528
    %v3879 = vpop.f32.mrf.mxu0
    %v3880 = vadd.f32 %v3389, %v3879
    %v3881 = vpop.f32.mrf.mxu0
    %3882 = vmatprep.mubr.f32.mxu0 0.0
    %3883 = vmatmul.mubr.f32.gmra.mxu0 %v3531
    %v3884 = vpop.f32.mrf.mxu0
    %v3885 = vadd.f32 %v3389, %v3884
    %v3886 = vpop.f32.mrf.mxu0
    %3887 = vmatprep.mubr.f32.mxu0 0.0
    %3888 = vmatmul.mubr.f32.gmra.mxu0 %v3534
    %v3889 = vpop.f32.mrf.mxu0
    %v3890 = vadd.f32 %v3389, %v3889
    %v3891 = vpop.f32.mrf.mxu0
    %3892 = vmatprep.mubr.f32.mxu0 0.0
    %3893 = vmatmul.mubr.f32.gmra.mxu0 %v3537
    %v3894 = vpop.f32.mrf.mxu0
    %v3895 = vadd.f32 %v3389, %v3894
    %v3896 = vpop.f32.mrf.mxu0
    %3897 = vmatprep.mubr.f32.mxu0 0.0
    %3898 = vmatmul.mubr.f32.gmra.mxu0 %v3540
    %v3899 = vpop.f32.mrf.mxu0
    %v3900 = vadd.f32 %v3389, %v3899
    %v3901 = vpop.f32.mrf.mxu0
    %3902 = vmatprep.mubr.f32.mxu0 0.0
    %3903 = vmatmul.mubr.f32.gmra.mxu0 %v3543
    %v3904 = vpop.f32.mrf.mxu0
    %v3905 = vadd.f32 %v3389, %v3904
    %v3906 = vpop.f32.mrf.mxu0
    %3907 = vmatprep.mubr.f32.mxu0 0.0
    %3908 = vmatmul.mubr.f32.gmra.mxu0 %v3546
    %v3909 = vpop.f32.mrf.mxu0
    %v3910 = vadd.f32 %v3389, %v3909
    %v3911 = vpop.f32.mrf.mxu0
    %3912 = vmatprep.mubr.f32.mxu0 0.0
    %3913 = vmatmul.mubr.f32.gmra.mxu0 %v3549
    %v3914 = vpop.f32.mrf.mxu0
    %v3915 = vadd.f32 %v3389, %v3914
    %v3916 = vpop.f32.mrf.mxu0
    %3917 = vmatprep.mubr.f32.mxu0 0.0
    %3918 = vmatmul.mubr.f32.gmra.mxu0 %v3552
    %v3919 = vpop.f32.mrf.mxu0
    %v3920 = vadd.f32 %v3389, %v3919
    %v3921 = vpop.f32.mrf.mxu0
    %3922 = vmatprep.mubr.f32.mxu0 0.0
    %3923 = vmatmul.mubr.f32.gmra.mxu0 %v3555
    %v3924 = vpop.f32.mrf.mxu0
    %v3925 = vadd.f32 %v3389, %v3924
    %v3926 = vpop.f32.mrf.mxu0
    %3927 = vmatprep.mubr.f32.mxu0 0.0
    %3928 = vmatmul.mubr.f32.gmra.mxu0 %v3558
    %v3929 = vpop.f32.mrf.mxu0
    %v3930 = vadd.f32 %v3389, %v3929
    %v3931 = vpop.f32.mrf.mxu0
    %3932 = vmatprep.mubr.f32.mxu0 0.0
    %3933 = vmatmul.mubr.f32.gmra.mxu0 %v3561
    %v3934 = vpop.f32.mrf.mxu0
    %v3935 = vadd.f32 %v3389, %v3934
    %v3936 = vpop.f32.mrf.mxu0
    %3937 = vmatprep.mubr.f32.mxu0 0.0
    %3938 = vmatmul.mubr.f32.gmra.mxu0 %v3564
    %v3939 = vpop.f32.mrf.mxu0
    %v3940 = vadd.f32 %v3389, %v3939
    %v3941 = vpop.f32.mrf.mxu0
    %3942 = vmatprep.mubr.f32.mxu0 0.0
    %3943 = vmatmul.mubr.f32.gmra.mxu0 %v3567
    %v3944 = vpop.f32.mrf.mxu0
    %v3945 = vadd.f32 %v3389, %v3944
    %v3946 = vpop.f32.mrf.mxu0
    %3947 = vmatprep.mubr.f32.mxu0 0.0
    %3948 = vmatmul.mubr.f32.gmra.mxu0 %v3570
    %v3949 = vpop.f32.mrf.mxu0
    %v3950 = vadd.f32 %v3389, %v3949
    %v3951 = vpop.f32.mrf.mxu0
    %3952 = vmatprep.mubr.f32.mxu0 0.0
    %3953 = vmatmul.mubr.f32.gmra.mxu0 %v3573
    %v3954 = vpop.f32.mrf.mxu0
    %v3955 = vadd.f32 %v3389, %v3954
    %v3956 = vpop.f32.mrf.mxu0
    %3957 = vmatprep.mubr.f32.mxu0 0.0
    %3958 = vmatmul.mubr.f32.gmra.mxu0 %v3576
    %v3959 = vpop.f32.mrf.mxu0
    %v3960 = vadd.f32 %v3389, %v3959
    %v3961 = vpop.f32.mrf.mxu0
    %3962 = vmatprep.mubr.f32.mxu0 0.0
    %3963 = vmatmul.mubr.f32.gmra.mxu0 %v3579
    %v3964 = vpop.f32.mrf.mxu0
    %v3965 = vadd.f32 %v3389, %v3964
    %v3966 = vpop.f32.mrf.mxu0
    %3967 = vmatprep.mubr.f32.mxu0 0.0
    %3968 = vmatmul.mubr.f32.gmra.mxu0 %v3582
    %v3969 = vpop.f32.mrf.mxu0
    %v3970 = vadd.f32 %v3389, %v3969
    %v3971 = vpop.f32.mrf.mxu0
    %3972 = vdwg.mxu0
    %v4037 = vcombine.high %v3655, %v3655
    %v4039 = vunpack.c.l.s4 1983009808
    %v4040 = vunpack.c.0.s8 %v4039
    %v4041 = vlaneseq
    %v4042 = vshrl.u32 %v4041, 7
    %v4043 = vsub.s32 %v4040, %v4042
    %v4044 = vrot.slane %v3655, %v4043
    %v4046 = vunpack.c.l.s4 1983009808
    %v4047 = vunpack.c.0.s8 %v4046
    %v4048 = vlaneseq
    %v4049 = vshrl.u32 %v4048, 7
    %v4050 = vsub.s32 %v4047, %v4049
    %v4051 = vrot.slane %v4037, %v4050
    %v4052 = vcombine.high %v4044, %v4044
    %v4053 = vcombine.high %v4051, %v4051
    %v4054 = vcombine.high %v3660, %v3660
    %v4056 = vunpack.c.l.s4 1983009808
    %v4057 = vunpack.c.0.s8 %v4056
    %v4058 = vlaneseq
    %v4059 = vshrl.u32 %v4058, 7
    %v4060 = vsub.s32 %v4057, %v4059
    %v4061 = vrot.slane %v3660, %v4060
    %v4063 = vunpack.c.l.s4 1983009808
    %v4064 = vunpack.c.0.s8 %v4063
    %v4065 = vlaneseq
    %v4066 = vshrl.u32 %v4065, 7
    %v4067 = vsub.s32 %v4064, %v4066
    %v4068 = vrot.slane %v4054, %v4067
    %v4069 = vcombine.high %v4061, %v4061
    %v4070 = vcombine.high %v4068, %v4068
    %v4071 = vcombine.high %v3665, %v3665
    %v4073 = vunpack.c.l.s4 1983009808
    %v4074 = vunpack.c.0.s8 %v4073
    %v4075 = vlaneseq
    %v4076 = vshrl.u32 %v4075, 7
    %v4077 = vsub.s32 %v4074, %v4076
    %v4078 = vrot.slane %v3665, %v4077
    %v4080 = vunpack.c.l.s4 1983009808
    %v4081 = vunpack.c.0.s8 %v4080
    %v4082 = vlaneseq
    %v4083 = vshrl.u32 %v4082, 7
    %v4084 = vsub.s32 %v4081, %v4083
    %v4085 = vrot.slane %v4071, %v4084
    %v4086 = vcombine.high %v4078, %v4078
    %v4087 = vcombine.high %v4085, %v4085
    %v4088 = vcombine.high %v3670, %v3670
    %v4090 = vunpack.c.l.s4 1983009808
    %v4091 = vunpack.c.0.s8 %v4090
    %v4092 = vlaneseq
    %v4093 = vshrl.u32 %v4092, 7
    %v4094 = vsub.s32 %v4091, %v4093
    %v4095 = vrot.slane %v3670, %v4094
    %v4097 = vunpack.c.l.s4 1983009808
    %v4098 = vunpack.c.0.s8 %v4097
    %v4099 = vlaneseq
    %v4100 = vshrl.u32 %v4099, 7
    %v4101 = vsub.s32 %v4098, %v4100
    %v4102 = vrot.slane %v4088, %v4101
    %v4103 = vcombine.high %v4095, %v4095
    %v4104 = vcombine.high %v4102, %v4102
    %v4105 = vcombine.high %v3675, %v3675
    %v4107 = vunpack.c.l.s4 1983009808
    %v4108 = vunpack.c.0.s8 %v4107
    %v4109 = vlaneseq
    %v4110 = vshrl.u32 %v4109, 7
    %v4111 = vsub.s32 %v4108, %v4110
    %v4112 = vrot.slane %v3675, %v4111
    %v4114 = vunpack.c.l.s4 1983009808
    %v4115 = vunpack.c.0.s8 %v4114
    %v4116 = vlaneseq
    %v4117 = vshrl.u32 %v4116, 7
    %v4118 = vsub.s32 %v4115, %v4117
    %v4119 = vrot.slane %v4105, %v4118
    %v4120 = vcombine.high %v4112, %v4112
    %v4121 = vcombine.high %v4119, %v4119
    %v4122 = vcombine.high %v3680, %v3680
    %v4124 = vunpack.c.l.s4 1983009808
    %v4125 = vunpack.c.0.s8 %v4124
    %v4126 = vlaneseq
    %v4127 = vshrl.u32 %v4126, 7
    %v4128 = vsub.s32 %v4125, %v4127
    %v4129 = vrot.slane %v3680, %v4128
    %v4131 = vunpack.c.l.s4 1983009808
    %v4132 = vunpack.c.0.s8 %v4131
    %v4133 = vlaneseq
    %v4134 = vshrl.u32 %v4133, 7
    %v4135 = vsub.s32 %v4132, %v4134
    %v4136 = vrot.slane %v4122, %v4135
    %v4137 = vcombine.high %v4129, %v4129
    %v4138 = vcombine.high %v4136, %v4136
    %v4139 = vcombine.high %v3685, %v3685
    %v4141 = vunpack.c.l.s4 1983009808
    %v4142 = vunpack.c.0.s8 %v4141
    %v4143 = vlaneseq
    %v4144 = vshrl.u32 %v4143, 7
    %v4145 = vsub.s32 %v4142, %v4144
    %v4146 = vrot.slane %v3685, %v4145
    %v4148 = vunpack.c.l.s4 1983009808
    %v4149 = vunpack.c.0.s8 %v4148
    %v4150 = vlaneseq
    %v4151 = vshrl.u32 %v4150, 7
    %v4152 = vsub.s32 %v4149, %v4151
    %v4153 = vrot.slane %v4139, %v4152
    %v4154 = vcombine.high %v4146, %v4146
    %v4155 = vcombine.high %v4153, %v4153
    %v4156 = vcombine.high %v3690, %v3690
    %v4158 = vunpack.c.l.s4 1983009808
    %v4159 = vunpack.c.0.s8 %v4158
    %v4160 = vlaneseq
    %v4161 = vshrl.u32 %v4160, 7
    %v4162 = vsub.s32 %v4159, %v4161
    %v4163 = vrot.slane %v3690, %v4162
    %v4165 = vunpack.c.l.s4 1983009808
    %v4166 = vunpack.c.0.s8 %v4165
    %v4167 = vlaneseq
    %v4168 = vshrl.u32 %v4167, 7
    %v4169 = vsub.s32 %v4166, %v4168
    %v4170 = vrot.slane %v4156, %v4169
    %v4171 = vcombine.high %v4163, %v4163
    %v4172 = vcombine.high %v4170, %v4170
    %v4173 = vcombine.high %v3695, %v3695
    %v4175 = vunpack.c.l.s4 1983009808
    %v4176 = vunpack.c.0.s8 %v4175
    %v4177 = vlaneseq
    %v4178 = vshrl.u32 %v4177, 7
    %v4179 = vsub.s32 %v4176, %v4178
    %v4180 = vrot.slane %v3695, %v4179
    %v4182 = vunpack.c.l.s4 1983009808
    %v4183 = vunpack.c.0.s8 %v4182
    %v4184 = vlaneseq
    %v4185 = vshrl.u32 %v4184, 7
    %v4186 = vsub.s32 %v4183, %v4185
    %v4187 = vrot.slane %v4173, %v4186
    %v4188 = vcombine.high %v4180, %v4180
    %v4189 = vcombine.high %v4187, %v4187
    %v4190 = vcombine.high %v3700, %v3700
    %v4192 = vunpack.c.l.s4 1983009808
    %v4193 = vunpack.c.0.s8 %v4192
    %v4194 = vlaneseq
    %v4195 = vshrl.u32 %v4194, 7
    %v4196 = vsub.s32 %v4193, %v4195
    %v4197 = vrot.slane %v3700, %v4196
    %v4199 = vunpack.c.l.s4 1983009808
    %v4200 = vunpack.c.0.s8 %v4199
    %v4201 = vlaneseq
    %v4202 = vshrl.u32 %v4201, 7
    %v4203 = vsub.s32 %v4200, %v4202
    %v4204 = vrot.slane %v4190, %v4203
    %v4205 = vcombine.high %v4197, %v4197
    %v4206 = vcombine.high %v4204, %v4204
    %v4207 = vcombine.high %v3705, %v3705
    %v4209 = vunpack.c.l.s4 1983009808
    %v4210 = vunpack.c.0.s8 %v4209
    %v4211 = vlaneseq
    %v4212 = vshrl.u32 %v4211, 7
    %v4213 = vsub.s32 %v4210, %v4212
    %v4214 = vrot.slane %v3705, %v4213
    %v4216 = vunpack.c.l.s4 1983009808
    %v4217 = vunpack.c.0.s8 %v4216
    %v4218 = vlaneseq
    %v4219 = vshrl.u32 %v4218, 7
    %v4220 = vsub.s32 %v4217, %v4219
    %v4221 = vrot.slane %v4207, %v4220
    %v4222 = vcombine.high %v4214, %v4214
    %v4223 = vcombine.high %v4221, %v4221
    %v4224 = vcombine.high %v3710, %v3710
    %v4226 = vunpack.c.l.s4 1983009808
    %v4227 = vunpack.c.0.s8 %v4226
    %v4228 = vlaneseq
    %v4229 = vshrl.u32 %v4228, 7
    %v4230 = vsub.s32 %v4227, %v4229
    %v4231 = vrot.slane %v3710, %v4230
    %v4233 = vunpack.c.l.s4 1983009808
    %v4234 = vunpack.c.0.s8 %v4233
    %v4235 = vlaneseq
    %v4236 = vshrl.u32 %v4235, 7
    %v4237 = vsub.s32 %v4234, %v4236
    %v4238 = vrot.slane %v4224, %v4237
    %v4239 = vcombine.high %v4231, %v4231
    %v4240 = vcombine.high %v4238, %v4238
    %v4241 = vcombine.high %v3715, %v3715
    %v4243 = vunpack.c.l.s4 1983009808
    %v4244 = vunpack.c.0.s8 %v4243
    %v4245 = vlaneseq
    %v4246 = vshrl.u32 %v4245, 7
    %v4247 = vsub.s32 %v4244, %v4246
    %v4248 = vrot.slane %v3715, %v4247
    %v4250 = vunpack.c.l.s4 1983009808
    %v4251 = vunpack.c.0.s8 %v4250
    %v4252 = vlaneseq
    %v4253 = vshrl.u32 %v4252, 7
    %v4254 = vsub.s32 %v4251, %v4253
    %v4255 = vrot.slane %v4241, %v4254
    %v4256 = vcombine.high %v4248, %v4248
    %v4257 = vcombine.high %v4255, %v4255
    %v4258 = vcombine.high %v3720, %v3720
    %v4260 = vunpack.c.l.s4 1983009808
    %v4261 = vunpack.c.0.s8 %v4260
    %v4262 = vlaneseq
    %v4263 = vshrl.u32 %v4262, 7
    %v4264 = vsub.s32 %v4261, %v4263
    %v4265 = vrot.slane %v3720, %v4264
    %v4267 = vunpack.c.l.s4 1983009808
    %v4268 = vunpack.c.0.s8 %v4267
    %v4269 = vlaneseq
    %v4270 = vshrl.u32 %v4269, 7
    %v4271 = vsub.s32 %v4268, %v4270
    %v4272 = vrot.slane %v4258, %v4271
    %v4273 = vcombine.high %v4265, %v4265
    %v4274 = vcombine.high %v4272, %v4272
    %v4275 = vcombine.high %v3725, %v3725
    %v4277 = vunpack.c.l.s4 1983009808
    %v4278 = vunpack.c.0.s8 %v4277
    %v4279 = vlaneseq
    %v4280 = vshrl.u32 %v4279, 7
    %v4281 = vsub.s32 %v4278, %v4280
    %v4282 = vrot.slane %v3725, %v4281
    %v4284 = vunpack.c.l.s4 1983009808
    %v4285 = vunpack.c.0.s8 %v4284
    %v4286 = vlaneseq
    %v4287 = vshrl.u32 %v4286, 7
    %v4288 = vsub.s32 %v4285, %v4287
    %v4289 = vrot.slane %v4275, %v4288
    %v4290 = vcombine.high %v4282, %v4282
    %v4291 = vcombine.high %v4289, %v4289
    %v4292 = vcombine.high %v3730, %v3730
    %v4294 = vunpack.c.l.s4 1983009808
    %v4295 = vunpack.c.0.s8 %v4294
    %v4296 = vlaneseq
    %v4297 = vshrl.u32 %v4296, 7
    %v4298 = vsub.s32 %v4295, %v4297
    %v4299 = vrot.slane %v3730, %v4298
    %v4301 = vunpack.c.l.s4 1983009808
    %v4302 = vunpack.c.0.s8 %v4301
    %v4303 = vlaneseq
    %v4304 = vshrl.u32 %v4303, 7
    %v4305 = vsub.s32 %v4302, %v4304
    %v4306 = vrot.slane %v4292, %v4305
    %v4307 = vcombine.high %v4299, %v4299
    %v4308 = vcombine.high %v4306, %v4306
    %v4309 = vcombine.high %v3735, %v3735
    %v4311 = vunpack.c.l.s4 1983009808
    %v4312 = vunpack.c.0.s8 %v4311
    %v4313 = vlaneseq
    %v4314 = vshrl.u32 %v4313, 7
    %v4315 = vsub.s32 %v4312, %v4314
    %v4316 = vrot.slane %v3735, %v4315
    %v4318 = vunpack.c.l.s4 1983009808
    %v4319 = vunpack.c.0.s8 %v4318
    %v4320 = vlaneseq
    %v4321 = vshrl.u32 %v4320, 7
    %v4322 = vsub.s32 %v4319, %v4321
    %v4323 = vrot.slane %v4309, %v4322
    %v4324 = vcombine.high %v4316, %v4316
    %v4325 = vcombine.high %v4323, %v4323
    %v4326 = vcombine.high %v3740, %v3740
    %v4328 = vunpack.c.l.s4 1983009808
    %v4329 = vunpack.c.0.s8 %v4328
    %v4330 = vlaneseq
    %v4331 = vshrl.u32 %v4330, 7
    %v4332 = vsub.s32 %v4329, %v4331
    %v4333 = vrot.slane %v3740, %v4332
    %v4335 = vunpack.c.l.s4 1983009808
    %v4336 = vunpack.c.0.s8 %v4335
    %v4337 = vlaneseq
    %v4338 = vshrl.u32 %v4337, 7
    %v4339 = vsub.s32 %v4336, %v4338
    %v4340 = vrot.slane %v4326, %v4339
    %v4341 = vcombine.high %v4333, %v4333
    %v4342 = vcombine.high %v4340, %v4340
    %v4343 = vcombine.high %v3745, %v3745
    %v4345 = vunpack.c.l.s4 1983009808
    %v4346 = vunpack.c.0.s8 %v4345
    %v4347 = vlaneseq
    %v4348 = vshrl.u32 %v4347, 7
    %v4349 = vsub.s32 %v4346, %v4348
    %v4350 = vrot.slane %v3745, %v4349
    %v4352 = vunpack.c.l.s4 1983009808
    %v4353 = vunpack.c.0.s8 %v4352
    %v4354 = vlaneseq
    %v4355 = vshrl.u32 %v4354, 7
    %v4356 = vsub.s32 %v4353, %v4355
    %v4357 = vrot.slane %v4343, %v4356
    %v4358 = vcombine.high %v4350, %v4350
    %v4359 = vcombine.high %v4357, %v4357
    %v4360 = vcombine.high %v3750, %v3750
    %v4362 = vunpack.c.l.s4 1983009808
    %v4363 = vunpack.c.0.s8 %v4362
    %v4364 = vlaneseq
    %v4365 = vshrl.u32 %v4364, 7
    %v4366 = vsub.s32 %v4363, %v4365
    %v4367 = vrot.slane %v3750, %v4366
    %v4369 = vunpack.c.l.s4 1983009808
    %v4370 = vunpack.c.0.s8 %v4369
    %v4371 = vlaneseq
    %v4372 = vshrl.u32 %v4371, 7
    %v4373 = vsub.s32 %v4370, %v4372
    %v4374 = vrot.slane %v4360, %v4373
    %v4375 = vcombine.high %v4367, %v4367
    %v4376 = vcombine.high %v4374, %v4374
    %v4377 = vcombine.high %v3755, %v3755
    %v4379 = vunpack.c.l.s4 1983009808
    %v4380 = vunpack.c.0.s8 %v4379
    %v4381 = vlaneseq
    %v4382 = vshrl.u32 %v4381, 7
    %v4383 = vsub.s32 %v4380, %v4382
    %v4384 = vrot.slane %v3755, %v4383
    %v4386 = vunpack.c.l.s4 1983009808
    %v4387 = vunpack.c.0.s8 %v4386
    %v4388 = vlaneseq
    %v4389 = vshrl.u32 %v4388, 7
    %v4390 = vsub.s32 %v4387, %v4389
    %v4391 = vrot.slane %v4377, %v4390
    %v4392 = vcombine.high %v4384, %v4384
    %v4393 = vcombine.high %v4391, %v4391
    %v4394 = vcombine.high %v3760, %v3760
    %v4396 = vunpack.c.l.s4 1983009808
    %v4397 = vunpack.c.0.s8 %v4396
    %v4398 = vlaneseq
    %v4399 = vshrl.u32 %v4398, 7
    %v4400 = vsub.s32 %v4397, %v4399
    %v4401 = vrot.slane %v3760, %v4400
    %v4403 = vunpack.c.l.s4 1983009808
    %v4404 = vunpack.c.0.s8 %v4403
    %v4405 = vlaneseq
    %v4406 = vshrl.u32 %v4405, 7
    %v4407 = vsub.s32 %v4404, %v4406
    %v4408 = vrot.slane %v4394, %v4407
    %v4409 = vcombine.high %v4401, %v4401
    %v4410 = vcombine.high %v4408, %v4408
    %v4411 = vcombine.high %v3765, %v3765
    %v4413 = vunpack.c.l.s4 1983009808
    %v4414 = vunpack.c.0.s8 %v4413
    %v4415 = vlaneseq
    %v4416 = vshrl.u32 %v4415, 7
    %v4417 = vsub.s32 %v4414, %v4416
    %v4418 = vrot.slane %v3765, %v4417
    %v4420 = vunpack.c.l.s4 1983009808
    %v4421 = vunpack.c.0.s8 %v4420
    %v4422 = vlaneseq
    %v4423 = vshrl.u32 %v4422, 7
    %v4424 = vsub.s32 %v4421, %v4423
    %v4425 = vrot.slane %v4411, %v4424
    %v4426 = vcombine.high %v4418, %v4418
    %v4427 = vcombine.high %v4425, %v4425
    %v4428 = vcombine.high %v3770, %v3770
    %v4430 = vunpack.c.l.s4 1983009808
    %v4431 = vunpack.c.0.s8 %v4430
    %v4432 = vlaneseq
    %v4433 = vshrl.u32 %v4432, 7
    %v4434 = vsub.s32 %v4431, %v4433
    %v4435 = vrot.slane %v3770, %v4434
    %v4437 = vunpack.c.l.s4 1983009808
    %v4438 = vunpack.c.0.s8 %v4437
    %v4439 = vlaneseq
    %v4440 = vshrl.u32 %v4439, 7
    %v4441 = vsub.s32 %v4438, %v4440
    %v4442 = vrot.slane %v4428, %v4441
    %v4443 = vcombine.high %v4435, %v4435
    %v4444 = vcombine.high %v4442, %v4442
    %v4445 = vcombine.high %v3775, %v3775
    %v4447 = vunpack.c.l.s4 1983009808
    %v4448 = vunpack.c.0.s8 %v4447
    %v4449 = vlaneseq
    %v4450 = vshrl.u32 %v4449, 7
    %v4451 = vsub.s32 %v4448, %v4450
    %v4452 = vrot.slane %v3775, %v4451
    %v4454 = vunpack.c.l.s4 1983009808
    %v4455 = vunpack.c.0.s8 %v4454
    %v4456 = vlaneseq
    %v4457 = vshrl.u32 %v4456, 7
    %v4458 = vsub.s32 %v4455, %v4457
    %v4459 = vrot.slane %v4445, %v4458
    %v4460 = vcombine.high %v4452, %v4452
    %v4461 = vcombine.high %v4459, %v4459
    %v4462 = vcombine.high %v3780, %v3780
    %v4464 = vunpack.c.l.s4 1983009808
    %v4465 = vunpack.c.0.s8 %v4464
    %v4466 = vlaneseq
    %v4467 = vshrl.u32 %v4466, 7
    %v4468 = vsub.s32 %v4465, %v4467
    %v4469 = vrot.slane %v3780, %v4468
    %v4471 = vunpack.c.l.s4 1983009808
    %v4472 = vunpack.c.0.s8 %v4471
    %v4473 = vlaneseq
    %v4474 = vshrl.u32 %v4473, 7
    %v4475 = vsub.s32 %v4472, %v4474
    %v4476 = vrot.slane %v4462, %v4475
    %v4477 = vcombine.high %v4469, %v4469
    %v4478 = vcombine.high %v4476, %v4476
    %v4479 = vcombine.high %v3785, %v3785
    %v4481 = vunpack.c.l.s4 1983009808
    %v4482 = vunpack.c.0.s8 %v4481
    %v4483 = vlaneseq
    %v4484 = vshrl.u32 %v4483, 7
    %v4485 = vsub.s32 %v4482, %v4484
    %v4486 = vrot.slane %v3785, %v4485
    %v4488 = vunpack.c.l.s4 1983009808
    %v4489 = vunpack.c.0.s8 %v4488
    %v4490 = vlaneseq
    %v4491 = vshrl.u32 %v4490, 7
    %v4492 = vsub.s32 %v4489, %v4491
    %v4493 = vrot.slane %v4479, %v4492
    %v4494 = vcombine.high %v4486, %v4486
    %v4495 = vcombine.high %v4493, %v4493
    %v4496 = vcombine.high %v3790, %v3790
    %v4498 = vunpack.c.l.s4 1983009808
    %v4499 = vunpack.c.0.s8 %v4498
    %v4500 = vlaneseq
    %v4501 = vshrl.u32 %v4500, 7
    %v4502 = vsub.s32 %v4499, %v4501
    %v4503 = vrot.slane %v3790, %v4502
    %v4505 = vunpack.c.l.s4 1983009808
    %v4506 = vunpack.c.0.s8 %v4505
    %v4507 = vlaneseq
    %v4508 = vshrl.u32 %v4507, 7
    %v4509 = vsub.s32 %v4506, %v4508
    %v4510 = vrot.slane %v4496, %v4509
    %v4511 = vcombine.high %v4503, %v4503
    %v4512 = vcombine.high %v4510, %v4510
    %v4513 = vcombine.high %v3795, %v3795
    %v4515 = vunpack.c.l.s4 1983009808
    %v4516 = vunpack.c.0.s8 %v4515
    %v4517 = vlaneseq
    %v4518 = vshrl.u32 %v4517, 7
    %v4519 = vsub.s32 %v4516, %v4518
    %v4520 = vrot.slane %v3795, %v4519
    %v4522 = vunpack.c.l.s4 1983009808
    %v4523 = vunpack.c.0.s8 %v4522
    %v4524 = vlaneseq
    %v4525 = vshrl.u32 %v4524, 7
    %v4526 = vsub.s32 %v4523, %v4525
    %v4527 = vrot.slane %v4513, %v4526
    %v4528 = vcombine.high %v4520, %v4520
    %v4529 = vcombine.high %v4527, %v4527
    %v4530 = vcombine.high %v3800, %v3800
    %v4532 = vunpack.c.l.s4 1983009808
    %v4533 = vunpack.c.0.s8 %v4532
    %v4534 = vlaneseq
    %v4535 = vshrl.u32 %v4534, 7
    %v4536 = vsub.s32 %v4533, %v4535
    %v4537 = vrot.slane %v3800, %v4536
    %v4539 = vunpack.c.l.s4 1983009808
    %v4540 = vunpack.c.0.s8 %v4539
    %v4541 = vlaneseq
    %v4542 = vshrl.u32 %v4541, 7
    %v4543 = vsub.s32 %v4540, %v4542
    %v4544 = vrot.slane %v4530, %v4543
    %v4545 = vcombine.high %v4537, %v4537
    %v4546 = vcombine.high %v4544, %v4544
    %v4547 = vcombine.high %v3805, %v3805
    %v4549 = vunpack.c.l.s4 1983009808
    %v4550 = vunpack.c.0.s8 %v4549
    %v4551 = vlaneseq
    %v4552 = vshrl.u32 %v4551, 7
    %v4553 = vsub.s32 %v4550, %v4552
    %v4554 = vrot.slane %v3805, %v4553
    %v4556 = vunpack.c.l.s4 1983009808
    %v4557 = vunpack.c.0.s8 %v4556
    %v4558 = vlaneseq
    %v4559 = vshrl.u32 %v4558, 7
    %v4560 = vsub.s32 %v4557, %v4559
    %v4561 = vrot.slane %v4547, %v4560
    %v4562 = vcombine.high %v4554, %v4554
    %v4563 = vcombine.high %v4561, %v4561
    %v4564 = vcombine.high %v3810, %v3810
    %v4566 = vunpack.c.l.s4 1983009808
    %v4567 = vunpack.c.0.s8 %v4566
    %v4568 = vlaneseq
    %v4569 = vshrl.u32 %v4568, 7
    %v4570 = vsub.s32 %v4567, %v4569
    %v4571 = vrot.slane %v3810, %v4570
    %v4573 = vunpack.c.l.s4 1983009808
    %v4574 = vunpack.c.0.s8 %v4573
    %v4575 = vlaneseq
    %v4576 = vshrl.u32 %v4575, 7
    %v4577 = vsub.s32 %v4574, %v4576
    %v4578 = vrot.slane %v4564, %v4577
    %v4579 = vcombine.high %v4571, %v4571
    %v4580 = vcombine.high %v4578, %v4578
    %v4581 = vcombine.high %v3815, %v3815
    %v4583 = vunpack.c.l.s4 1983009808
    %v4584 = vunpack.c.0.s8 %v4583
    %v4585 = vlaneseq
    %v4586 = vshrl.u32 %v4585, 7
    %v4587 = vsub.s32 %v4584, %v4586
    %v4588 = vrot.slane %v3815, %v4587
    %v4590 = vunpack.c.l.s4 1983009808
    %v4591 = vunpack.c.0.s8 %v4590
    %v4592 = vlaneseq
    %v4593 = vshrl.u32 %v4592, 7
    %v4594 = vsub.s32 %v4591, %v4593
    %v4595 = vrot.slane %v4581, %v4594
    %v4596 = vcombine.high %v4588, %v4588
    %v4597 = vcombine.high %v4595, %v4595
    %v4598 = vcombine.high %v3820, %v3820
    %v4600 = vunpack.c.l.s4 1983009808
    %v4601 = vunpack.c.0.s8 %v4600
    %v4602 = vlaneseq
    %v4603 = vshrl.u32 %v4602, 7
    %v4604 = vsub.s32 %v4601, %v4603
    %v4605 = vrot.slane %v3820, %v4604
    %v4607 = vunpack.c.l.s4 1983009808
    %v4608 = vunpack.c.0.s8 %v4607
    %v4609 = vlaneseq
    %v4610 = vshrl.u32 %v4609, 7
    %v4611 = vsub.s32 %v4608, %v4610
    %v4612 = vrot.slane %v4598, %v4611
    %v4613 = vcombine.high %v4605, %v4605
    %v4614 = vcombine.high %v4612, %v4612
    %v4615 = vcombine.high %v3825, %v3825
    %v4617 = vunpack.c.l.s4 1983009808
    %v4618 = vunpack.c.0.s8 %v4617
    %v4619 = vlaneseq
    %v4620 = vshrl.u32 %v4619, 7
    %v4621 = vsub.s32 %v4618, %v4620
    %v4622 = vrot.slane %v3825, %v4621
    %v4624 = vunpack.c.l.s4 1983009808
    %v4625 = vunpack.c.0.s8 %v4624
    %v4626 = vlaneseq
    %v4627 = vshrl.u32 %v4626, 7
    %v4628 = vsub.s32 %v4625, %v4627
    %v4629 = vrot.slane %v4615, %v4628
    %v4630 = vcombine.high %v4622, %v4622
    %v4631 = vcombine.high %v4629, %v4629
    %v4632 = vcombine.high %v3830, %v3830
    %v4634 = vunpack.c.l.s4 1983009808
    %v4635 = vunpack.c.0.s8 %v4634
    %v4636 = vlaneseq
    %v4637 = vshrl.u32 %v4636, 7
    %v4638 = vsub.s32 %v4635, %v4637
    %v4639 = vrot.slane %v3830, %v4638
    %v4641 = vunpack.c.l.s4 1983009808
    %v4642 = vunpack.c.0.s8 %v4641
    %v4643 = vlaneseq
    %v4644 = vshrl.u32 %v4643, 7
    %v4645 = vsub.s32 %v4642, %v4644
    %v4646 = vrot.slane %v4632, %v4645
    %v4647 = vcombine.high %v4639, %v4639
    %v4648 = vcombine.high %v4646, %v4646
    %v4649 = vcombine.high %v3835, %v3835
    %v4651 = vunpack.c.l.s4 1983009808
    %v4652 = vunpack.c.0.s8 %v4651
    %v4653 = vlaneseq
    %v4654 = vshrl.u32 %v4653, 7
    %v4655 = vsub.s32 %v4652, %v4654
    %v4656 = vrot.slane %v3835, %v4655
    %v4658 = vunpack.c.l.s4 1983009808
    %v4659 = vunpack.c.0.s8 %v4658
    %v4660 = vlaneseq
    %v4661 = vshrl.u32 %v4660, 7
    %v4662 = vsub.s32 %v4659, %v4661
    %v4663 = vrot.slane %v4649, %v4662
    %v4664 = vcombine.high %v4656, %v4656
    %v4665 = vcombine.high %v4663, %v4663
    %v4666 = vcombine.high %v3840, %v3840
    %v4668 = vunpack.c.l.s4 1983009808
    %v4669 = vunpack.c.0.s8 %v4668
    %v4670 = vlaneseq
    %v4671 = vshrl.u32 %v4670, 7
    %v4672 = vsub.s32 %v4669, %v4671
    %v4673 = vrot.slane %v3840, %v4672
    %v4675 = vunpack.c.l.s4 1983009808
    %v4676 = vunpack.c.0.s8 %v4675
    %v4677 = vlaneseq
    %v4678 = vshrl.u32 %v4677, 7
    %v4679 = vsub.s32 %v4676, %v4678
    %v4680 = vrot.slane %v4666, %v4679
    %v4681 = vcombine.high %v4673, %v4673
    %v4682 = vcombine.high %v4680, %v4680
    %v4683 = vcombine.high %v3845, %v3845
    %v4685 = vunpack.c.l.s4 1983009808
    %v4686 = vunpack.c.0.s8 %v4685
    %v4687 = vlaneseq
    %v4688 = vshrl.u32 %v4687, 7
    %v4689 = vsub.s32 %v4686, %v4688
    %v4690 = vrot.slane %v3845, %v4689
    %v4692 = vunpack.c.l.s4 1983009808
    %v4693 = vunpack.c.0.s8 %v4692
    %v4694 = vlaneseq
    %v4695 = vshrl.u32 %v4694, 7
    %v4696 = vsub.s32 %v4693, %v4695
    %v4697 = vrot.slane %v4683, %v4696
    %v4698 = vcombine.high %v4690, %v4690
    %v4699 = vcombine.high %v4697, %v4697
    %v4700 = vcombine.high %v3850, %v3850
    %v4702 = vunpack.c.l.s4 1983009808
    %v4703 = vunpack.c.0.s8 %v4702
    %v4704 = vlaneseq
    %v4705 = vshrl.u32 %v4704, 7
    %v4706 = vsub.s32 %v4703, %v4705
    %v4707 = vrot.slane %v3850, %v4706
    %v4709 = vunpack.c.l.s4 1983009808
    %v4710 = vunpack.c.0.s8 %v4709
    %v4711 = vlaneseq
    %v4712 = vshrl.u32 %v4711, 7
    %v4713 = vsub.s32 %v4710, %v4712
    %v4714 = vrot.slane %v4700, %v4713
    %v4715 = vcombine.high %v4707, %v4707
    %v4716 = vcombine.high %v4714, %v4714
    %v4717 = vcombine.high %v3855, %v3855
    %v4719 = vunpack.c.l.s4 1983009808
    %v4720 = vunpack.c.0.s8 %v4719
    %v4721 = vlaneseq
    %v4722 = vshrl.u32 %v4721, 7
    %v4723 = vsub.s32 %v4720, %v4722
    %v4724 = vrot.slane %v3855, %v4723
    %v4726 = vunpack.c.l.s4 1983009808
    %v4727 = vunpack.c.0.s8 %v4726
    %v4728 = vlaneseq
    %v4729 = vshrl.u32 %v4728, 7
    %v4730 = vsub.s32 %v4727, %v4729
    %v4731 = vrot.slane %v4717, %v4730
    %v4732 = vcombine.high %v4724, %v4724
    %v4733 = vcombine.high %v4731, %v4731
    %v4734 = vcombine.high %v3860, %v3860
    %v4736 = vunpack.c.l.s4 1983009808
    %v4737 = vunpack.c.0.s8 %v4736
    %v4738 = vlaneseq
    %v4739 = vshrl.u32 %v4738, 7
    %v4740 = vsub.s32 %v4737, %v4739
    %v4741 = vrot.slane %v3860, %v4740
    %v4743 = vunpack.c.l.s4 1983009808
    %v4744 = vunpack.c.0.s8 %v4743
    %v4745 = vlaneseq
    %v4746 = vshrl.u32 %v4745, 7
    %v4747 = vsub.s32 %v4744, %v4746
    %v4748 = vrot.slane %v4734, %v4747
    %v4749 = vcombine.high %v4741, %v4741
    %v4750 = vcombine.high %v4748, %v4748
    %v4751 = vcombine.high %v3865, %v3865
    %v4753 = vunpack.c.l.s4 1983009808
    %v4754 = vunpack.c.0.s8 %v4753
    %v4755 = vlaneseq
    %v4756 = vshrl.u32 %v4755, 7
    %v4757 = vsub.s32 %v4754, %v4756
    %v4758 = vrot.slane %v3865, %v4757
    %v4760 = vunpack.c.l.s4 1983009808
    %v4761 = vunpack.c.0.s8 %v4760
    %v4762 = vlaneseq
    %v4763 = vshrl.u32 %v4762, 7
    %v4764 = vsub.s32 %v4761, %v4763
    %v4765 = vrot.slane %v4751, %v4764
    %v4766 = vcombine.high %v4758, %v4758
    %v4767 = vcombine.high %v4765, %v4765
    %v4768 = vcombine.high %v3870, %v3870
    %v4770 = vunpack.c.l.s4 1983009808
    %v4771 = vunpack.c.0.s8 %v4770
    %v4772 = vlaneseq
    %v4773 = vshrl.u32 %v4772, 7
    %v4774 = vsub.s32 %v4771, %v4773
    %v4775 = vrot.slane %v3870, %v4774
    %v4777 = vunpack.c.l.s4 1983009808
    %v4778 = vunpack.c.0.s8 %v4777
    %v4779 = vlaneseq
    %v4780 = vshrl.u32 %v4779, 7
    %v4781 = vsub.s32 %v4778, %v4780
    %v4782 = vrot.slane %v4768, %v4781
    %v4783 = vcombine.high %v4775, %v4775
    %v4784 = vcombine.high %v4782, %v4782
    %v4785 = vcombine.high %v3875, %v3875
    %v4787 = vunpack.c.l.s4 1983009808
    %v4788 = vunpack.c.0.s8 %v4787
    %v4789 = vlaneseq
    %v4790 = vshrl.u32 %v4789, 7
    %v4791 = vsub.s32 %v4788, %v4790
    %v4792 = vrot.slane %v3875, %v4791
    %v4794 = vunpack.c.l.s4 1983009808
    %v4795 = vunpack.c.0.s8 %v4794
    %v4796 = vlaneseq
    %v4797 = vshrl.u32 %v4796, 7
    %v4798 = vsub.s32 %v4795, %v4797
    %v4799 = vrot.slane %v4785, %v4798
    %v4800 = vcombine.high %v4792, %v4792
    %v4801 = vcombine.high %v4799, %v4799
    %v4802 = vcombine.high %v3880, %v3880
    %v4804 = vunpack.c.l.s4 1983009808
    %v4805 = vunpack.c.0.s8 %v4804
    %v4806 = vlaneseq
    %v4807 = vshrl.u32 %v4806, 7
    %v4808 = vsub.s32 %v4805, %v4807
    %v4809 = vrot.slane %v3880, %v4808
    %v4811 = vunpack.c.l.s4 1983009808
    %v4812 = vunpack.c.0.s8 %v4811
    %v4813 = vlaneseq
    %v4814 = vshrl.u32 %v4813, 7
    %v4815 = vsub.s32 %v4812, %v4814
    %v4816 = vrot.slane %v4802, %v4815
    %v4817 = vcombine.high %v4809, %v4809
    %v4818 = vcombine.high %v4816, %v4816
    %v4819 = vcombine.high %v3885, %v3885
    %v4821 = vunpack.c.l.s4 1983009808
    %v4822 = vunpack.c.0.s8 %v4821
    %v4823 = vlaneseq
    %v4824 = vshrl.u32 %v4823, 7
    %v4825 = vsub.s32 %v4822, %v4824
    %v4826 = vrot.slane %v3885, %v4825
    %v4828 = vunpack.c.l.s4 1983009808
    %v4829 = vunpack.c.0.s8 %v4828
    %v4830 = vlaneseq
    %v4831 = vshrl.u32 %v4830, 7
    %v4832 = vsub.s32 %v4829, %v4831
    %v4833 = vrot.slane %v4819, %v4832
    %v4834 = vcombine.high %v4826, %v4826
    %v4835 = vcombine.high %v4833, %v4833
    %v4836 = vcombine.high %v3890, %v3890
    %v4838 = vunpack.c.l.s4 1983009808
    %v4839 = vunpack.c.0.s8 %v4838
    %v4840 = vlaneseq
    %v4841 = vshrl.u32 %v4840, 7
    %v4842 = vsub.s32 %v4839, %v4841
    %v4843 = vrot.slane %v3890, %v4842
    %v4845 = vunpack.c.l.s4 1983009808
    %v4846 = vunpack.c.0.s8 %v4845
    %v4847 = vlaneseq
    %v4848 = vshrl.u32 %v4847, 7
    %v4849 = vsub.s32 %v4846, %v4848
    %v4850 = vrot.slane %v4836, %v4849
    %v4851 = vcombine.high %v4843, %v4843
    %v4852 = vcombine.high %v4850, %v4850
    %v4853 = vcombine.high %v3895, %v3895
    %v4855 = vunpack.c.l.s4 1983009808
    %v4856 = vunpack.c.0.s8 %v4855
    %v4857 = vlaneseq
    %v4858 = vshrl.u32 %v4857, 7
    %v4859 = vsub.s32 %v4856, %v4858
    %v4860 = vrot.slane %v3895, %v4859
    %v4862 = vunpack.c.l.s4 1983009808
    %v4863 = vunpack.c.0.s8 %v4862
    %v4864 = vlaneseq
    %v4865 = vshrl.u32 %v4864, 7
    %v4866 = vsub.s32 %v4863, %v4865
    %v4867 = vrot.slane %v4853, %v4866
    %v4868 = vcombine.high %v4860, %v4860
    %v4869 = vcombine.high %v4867, %v4867
    %v4870 = vcombine.high %v3900, %v3900
    %v4872 = vunpack.c.l.s4 1983009808
    %v4873 = vunpack.c.0.s8 %v4872
    %v4874 = vlaneseq
    %v4875 = vshrl.u32 %v4874, 7
    %v4876 = vsub.s32 %v4873, %v4875
    %v4877 = vrot.slane %v3900, %v4876
    %v4879 = vunpack.c.l.s4 1983009808
    %v4880 = vunpack.c.0.s8 %v4879
    %v4881 = vlaneseq
    %v4882 = vshrl.u32 %v4881, 7
    %v4883 = vsub.s32 %v4880, %v4882
    %v4884 = vrot.slane %v4870, %v4883
    %v4885 = vcombine.high %v4877, %v4877
    %v4886 = vcombine.high %v4884, %v4884
    %v4887 = vcombine.high %v3905, %v3905
    %v4889 = vunpack.c.l.s4 1983009808
    %v4890 = vunpack.c.0.s8 %v4889
    %v4891 = vlaneseq
    %v4892 = vshrl.u32 %v4891, 7
    %v4893 = vsub.s32 %v4890, %v4892
    %v4894 = vrot.slane %v3905, %v4893
    %v4896 = vunpack.c.l.s4 1983009808
    %v4897 = vunpack.c.0.s8 %v4896
    %v4898 = vlaneseq
    %v4899 = vshrl.u32 %v4898, 7
    %v4900 = vsub.s32 %v4897, %v4899
    %v4901 = vrot.slane %v4887, %v4900
    %v4902 = vcombine.high %v4894, %v4894
    %v4903 = vcombine.high %v4901, %v4901
    %v4904 = vcombine.high %v3910, %v3910
    %v4906 = vunpack.c.l.s4 1983009808
    %v4907 = vunpack.c.0.s8 %v4906
    %v4908 = vlaneseq
    %v4909 = vshrl.u32 %v4908, 7
    %v4910 = vsub.s32 %v4907, %v4909
    %v4911 = vrot.slane %v3910, %v4910
    %v4913 = vunpack.c.l.s4 1983009808
    %v4914 = vunpack.c.0.s8 %v4913
    %v4915 = vlaneseq
    %v4916 = vshrl.u32 %v4915, 7
    %v4917 = vsub.s32 %v4914, %v4916
    %v4918 = vrot.slane %v4904, %v4917
    %v4919 = vcombine.high %v4911, %v4911
    %v4920 = vcombine.high %v4918, %v4918
    %v4921 = vcombine.high %v3915, %v3915
    %v4923 = vunpack.c.l.s4 1983009808
    %v4924 = vunpack.c.0.s8 %v4923
    %v4925 = vlaneseq
    %v4926 = vshrl.u32 %v4925, 7
    %v4927 = vsub.s32 %v4924, %v4926
    %v4928 = vrot.slane %v3915, %v4927
    %v4930 = vunpack.c.l.s4 1983009808
    %v4931 = vunpack.c.0.s8 %v4930
    %v4932 = vlaneseq
    %v4933 = vshrl.u32 %v4932, 7
    %v4934 = vsub.s32 %v4931, %v4933
    %v4935 = vrot.slane %v4921, %v4934
    %v4936 = vcombine.high %v4928, %v4928
    %v4937 = vcombine.high %v4935, %v4935
    %v4938 = vcombine.high %v3920, %v3920
    %v4940 = vunpack.c.l.s4 1983009808
    %v4941 = vunpack.c.0.s8 %v4940
    %v4942 = vlaneseq
    %v4943 = vshrl.u32 %v4942, 7
    %v4944 = vsub.s32 %v4941, %v4943
    %v4945 = vrot.slane %v3920, %v4944
    %v4947 = vunpack.c.l.s4 1983009808
    %v4948 = vunpack.c.0.s8 %v4947
    %v4949 = vlaneseq
    %v4950 = vshrl.u32 %v4949, 7
    %v4951 = vsub.s32 %v4948, %v4950
    %v4952 = vrot.slane %v4938, %v4951
    %v4953 = vcombine.high %v4945, %v4945
    %v4954 = vcombine.high %v4952, %v4952
    %v4955 = vcombine.high %v3925, %v3925
    %v4957 = vunpack.c.l.s4 1983009808
    %v4958 = vunpack.c.0.s8 %v4957
    %v4959 = vlaneseq
    %v4960 = vshrl.u32 %v4959, 7
    %v4961 = vsub.s32 %v4958, %v4960
    %v4962 = vrot.slane %v3925, %v4961
    %v4964 = vunpack.c.l.s4 1983009808
    %v4965 = vunpack.c.0.s8 %v4964
    %v4966 = vlaneseq
    %v4967 = vshrl.u32 %v4966, 7
    %v4968 = vsub.s32 %v4965, %v4967
    %v4969 = vrot.slane %v4955, %v4968
    %v4970 = vcombine.high %v4962, %v4962
    %v4971 = vcombine.high %v4969, %v4969
    %v4972 = vcombine.high %v3930, %v3930
    %v4974 = vunpack.c.l.s4 1983009808
    %v4975 = vunpack.c.0.s8 %v4974
    %v4976 = vlaneseq
    %v4977 = vshrl.u32 %v4976, 7
    %v4978 = vsub.s32 %v4975, %v4977
    %v4979 = vrot.slane %v3930, %v4978
    %v4981 = vunpack.c.l.s4 1983009808
    %v4982 = vunpack.c.0.s8 %v4981
    %v4983 = vlaneseq
    %v4984 = vshrl.u32 %v4983, 7
    %v4985 = vsub.s32 %v4982, %v4984
    %v4986 = vrot.slane %v4972, %v4985
    %v4987 = vcombine.high %v4979, %v4979
    %v4988 = vcombine.high %v4986, %v4986
    %v4989 = vcombine.high %v3935, %v3935
    %v4991 = vunpack.c.l.s4 1983009808
    %v4992 = vunpack.c.0.s8 %v4991
    %v4993 = vlaneseq
    %v4994 = vshrl.u32 %v4993, 7
    %v4995 = vsub.s32 %v4992, %v4994
    %v4996 = vrot.slane %v3935, %v4995
    %v4998 = vunpack.c.l.s4 1983009808
    %v4999 = vunpack.c.0.s8 %v4998
    %v5000 = vlaneseq
    %v5001 = vshrl.u32 %v5000, 7
    %v5002 = vsub.s32 %v4999, %v5001
    %v5003 = vrot.slane %v4989, %v5002
    %v5004 = vcombine.high %v4996, %v4996
    %v5005 = vcombine.high %v5003, %v5003
    %v5006 = vcombine.high %v3940, %v3940
    %v5008 = vunpack.c.l.s4 1983009808
    %v5009 = vunpack.c.0.s8 %v5008
    %v5010 = vlaneseq
    %v5011 = vshrl.u32 %v5010, 7
    %v5012 = vsub.s32 %v5009, %v5011
    %v5013 = vrot.slane %v3940, %v5012
    %v5015 = vunpack.c.l.s4 1983009808
    %v5016 = vunpack.c.0.s8 %v5015
    %v5017 = vlaneseq
    %v5018 = vshrl.u32 %v5017, 7
    %v5019 = vsub.s32 %v5016, %v5018
    %v5020 = vrot.slane %v5006, %v5019
    %v5021 = vcombine.high %v5013, %v5013
    %v5022 = vcombine.high %v5020, %v5020
    %v5023 = vcombine.high %v3945, %v3945
    %v5025 = vunpack.c.l.s4 1983009808
    %v5026 = vunpack.c.0.s8 %v5025
    %v5027 = vlaneseq
    %v5028 = vshrl.u32 %v5027, 7
    %v5029 = vsub.s32 %v5026, %v5028
    %v5030 = vrot.slane %v3945, %v5029
    %v5032 = vunpack.c.l.s4 1983009808
    %v5033 = vunpack.c.0.s8 %v5032
    %v5034 = vlaneseq
    %v5035 = vshrl.u32 %v5034, 7
    %v5036 = vsub.s32 %v5033, %v5035
    %v5037 = vrot.slane %v5023, %v5036
    %v5038 = vcombine.high %v5030, %v5030
    %v5039 = vcombine.high %v5037, %v5037
    %v5040 = vcombine.high %v3950, %v3950
    %v5042 = vunpack.c.l.s4 1983009808
    %v5043 = vunpack.c.0.s8 %v5042
    %v5044 = vlaneseq
    %v5045 = vshrl.u32 %v5044, 7
    %v5046 = vsub.s32 %v5043, %v5045
    %v5047 = vrot.slane %v3950, %v5046
    %v5049 = vunpack.c.l.s4 1983009808
    %v5050 = vunpack.c.0.s8 %v5049
    %v5051 = vlaneseq
    %v5052 = vshrl.u32 %v5051, 7
    %v5053 = vsub.s32 %v5050, %v5052
    %v5054 = vrot.slane %v5040, %v5053
    %v5055 = vcombine.high %v5047, %v5047
    %v5056 = vcombine.high %v5054, %v5054
    %v5057 = vcombine.high %v3955, %v3955
    %v5059 = vunpack.c.l.s4 1983009808
    %v5060 = vunpack.c.0.s8 %v5059
    %v5061 = vlaneseq
    %v5062 = vshrl.u32 %v5061, 7
    %v5063 = vsub.s32 %v5060, %v5062
    %v5064 = vrot.slane %v3955, %v5063
    %v5066 = vunpack.c.l.s4 1983009808
    %v5067 = vunpack.c.0.s8 %v5066
    %v5068 = vlaneseq
    %v5069 = vshrl.u32 %v5068, 7
    %v5070 = vsub.s32 %v5067, %v5069
    %v5071 = vrot.slane %v5057, %v5070
    %v5072 = vcombine.high %v5064, %v5064
    %v5073 = vcombine.high %v5071, %v5071
    %v5074 = vcombine.high %v3960, %v3960
    %v5076 = vunpack.c.l.s4 1983009808
    %v5077 = vunpack.c.0.s8 %v5076
    %v5078 = vlaneseq
    %v5079 = vshrl.u32 %v5078, 7
    %v5080 = vsub.s32 %v5077, %v5079
    %v5081 = vrot.slane %v3960, %v5080
    %v5083 = vunpack.c.l.s4 1983009808
    %v5084 = vunpack.c.0.s8 %v5083
    %v5085 = vlaneseq
    %v5086 = vshrl.u32 %v5085, 7
    %v5087 = vsub.s32 %v5084, %v5086
    %v5088 = vrot.slane %v5074, %v5087
    %v5089 = vcombine.high %v5081, %v5081
    %v5090 = vcombine.high %v5088, %v5088
    %v5091 = vcombine.high %v3965, %v3965
    %v5093 = vunpack.c.l.s4 1983009808
    %v5094 = vunpack.c.0.s8 %v5093
    %v5095 = vlaneseq
    %v5096 = vshrl.u32 %v5095, 7
    %v5097 = vsub.s32 %v5094, %v5096
    %v5098 = vrot.slane %v3965, %v5097
    %v5100 = vunpack.c.l.s4 1983009808
    %v5101 = vunpack.c.0.s8 %v5100
    %v5102 = vlaneseq
    %v5103 = vshrl.u32 %v5102, 7
    %v5104 = vsub.s32 %v5101, %v5103
    %v5105 = vrot.slane %v5091, %v5104
    %v5106 = vcombine.high %v5098, %v5098
    %v5107 = vcombine.high %v5105, %v5105
    %v5108 = vcombine.high %v3970, %v3970
    %v5110 = vunpack.c.l.s4 1983009808
    %v5111 = vunpack.c.0.s8 %v5110
    %v5112 = vlaneseq
    %v5113 = vshrl.u32 %v5112, 7
    %v5114 = vsub.s32 %v5111, %v5113
    %v5115 = vrot.slane %v3970, %v5114
    %v5117 = vunpack.c.l.s4 1983009808
    %v5118 = vunpack.c.0.s8 %v5117
    %v5119 = vlaneseq
    %v5120 = vshrl.u32 %v5119, 7
    %v5121 = vsub.s32 %v5118, %v5120
    %v5122 = vrot.slane %v5108, %v5121
    %v5123 = vcombine.high %v5115, %v5115
    %v5124 = vcombine.high %v5122, %v5122
    %v5381 = vrot.slane %v4044, 7
    %v5382 = vrot.slane %v5381, 2
    %v5383 = vrot.slane %v4052, 7
    %v5384 = vrot.slane %v5383, 2
    %v5385 = vrot.slane %v4051, 7
    %v5386 = vrot.slane %v5385, 2
    %v5387 = vrot.slane %v4053, 7
    %v5388 = vrot.slane %v5387, 2
    %v5389 = vrot.slane %v4061, 7
    %v5390 = vrot.slane %v5389, 2
    %v5391 = vrot.slane %v4069, 7
    %v5392 = vrot.slane %v5391, 2
    %v5393 = vrot.slane %v4068, 7
    %v5394 = vrot.slane %v5393, 2
    %v5395 = vrot.slane %v4070, 7
    %v5396 = vrot.slane %v5395, 2
    %v5397 = vrot.slane %v4112, 7
    %v5398 = vrot.slane %v5397, 2
    %v5399 = vrot.slane %v4120, 7
    %v5400 = vrot.slane %v5399, 2
    %v5401 = vrot.slane %v4119, 7
    %v5402 = vrot.slane %v5401, 2
    %v5403 = vrot.slane %v4121, 7
    %v5404 = vrot.slane %v5403, 2
    %v5405 = vrot.slane %v4129, 7
    %v5406 = vrot.slane %v5405, 2
    %v5407 = vrot.slane %v4137, 7
    %v5408 = vrot.slane %v5407, 2
    %v5409 = vrot.slane %v4136, 7
    %v5410 = vrot.slane %v5409, 2
    %v5411 = vrot.slane %v4138, 7
    %v5412 = vrot.slane %v5411, 2
    %v5413 = vrot.slane %v4180, 7
    %v5414 = vrot.slane %v5413, 2
    %v5415 = vrot.slane %v4188, 7
    %v5416 = vrot.slane %v5415, 2
    %v5417 = vrot.slane %v4187, 7
    %v5418 = vrot.slane %v5417, 2
    %v5419 = vrot.slane %v4189, 7
    %v5420 = vrot.slane %v5419, 2
    %v5421 = vrot.slane %v4197, 7
    %v5422 = vrot.slane %v5421, 2
    %v5423 = vrot.slane %v4205, 7
    %v5424 = vrot.slane %v5423, 2
    %v5425 = vrot.slane %v4204, 7
    %v5426 = vrot.slane %v5425, 2
    %v5427 = vrot.slane %v4206, 7
    %v5428 = vrot.slane %v5427, 2
    %v5429 = vrot.slane %v4248, 7
    %v5430 = vrot.slane %v5429, 2
    %v5431 = vrot.slane %v4256, 7
    %v5432 = vrot.slane %v5431, 2
    %v5433 = vrot.slane %v4255, 7
    %v5434 = vrot.slane %v5433, 2
    %v5435 = vrot.slane %v4257, 7
    %v5436 = vrot.slane %v5435, 2
    %v5437 = vrot.slane %v4265, 7
    %v5438 = vrot.slane %v5437, 2
    %v5439 = vrot.slane %v4273, 7
    %v5440 = vrot.slane %v5439, 2
    %v5441 = vrot.slane %v4272, 7
    %v5442 = vrot.slane %v5441, 2
    %v5443 = vrot.slane %v4274, 7
    %v5444 = vrot.slane %v5443, 2
    %v5445 = vrot.slane %v4316, 7
    %v5446 = vrot.slane %v5445, 2
    %v5447 = vrot.slane %v4324, 7
    %v5448 = vrot.slane %v5447, 2
    %v5449 = vrot.slane %v4323, 7
    %v5450 = vrot.slane %v5449, 2
    %v5451 = vrot.slane %v4325, 7
    %v5452 = vrot.slane %v5451, 2
    %v5453 = vrot.slane %v4333, 7
    %v5454 = vrot.slane %v5453, 2
    %v5455 = vrot.slane %v4341, 7
    %v5456 = vrot.slane %v5455, 2
    %v5457 = vrot.slane %v4340, 7
    %v5458 = vrot.slane %v5457, 2
    %v5459 = vrot.slane %v4342, 7
    %v5460 = vrot.slane %v5459, 2
    %v5461 = vrot.slane %v4384, 7
    %v5462 = vrot.slane %v5461, 2
    %v5463 = vrot.slane %v4392, 7
    %v5464 = vrot.slane %v5463, 2
    %v5465 = vrot.slane %v4391, 7
    %v5466 = vrot.slane %v5465, 2
    %v5467 = vrot.slane %v4393, 7
    %v5468 = vrot.slane %v5467, 2
    %v5469 = vrot.slane %v4401, 7
    %v5470 = vrot.slane %v5469, 2
    %v5471 = vrot.slane %v4409, 7
    %v5472 = vrot.slane %v5471, 2
    %v5473 = vrot.slane %v4408, 7
    %v5474 = vrot.slane %v5473, 2
    %v5475 = vrot.slane %v4410, 7
    %v5476 = vrot.slane %v5475, 2
    %v5477 = vrot.slane %v4452, 7
    %v5478 = vrot.slane %v5477, 2
    %v5479 = vrot.slane %v4460, 7
    %v5480 = vrot.slane %v5479, 2
    %v5481 = vrot.slane %v4459, 7
    %v5482 = vrot.slane %v5481, 2
    %v5483 = vrot.slane %v4461, 7
    %v5484 = vrot.slane %v5483, 2
    %v5485 = vrot.slane %v4469, 7
    %v5486 = vrot.slane %v5485, 2
    %v5487 = vrot.slane %v4477, 7
    %v5488 = vrot.slane %v5487, 2
    %v5489 = vrot.slane %v4476, 7
    %v5490 = vrot.slane %v5489, 2
    %v5491 = vrot.slane %v4478, 7
    %v5492 = vrot.slane %v5491, 2
    %v5493 = vrot.slane %v4520, 7
    %v5494 = vrot.slane %v5493, 2
    %v5495 = vrot.slane %v4528, 7
    %v5496 = vrot.slane %v5495, 2
    %v5497 = vrot.slane %v4527, 7
    %v5498 = vrot.slane %v5497, 2
    %v5499 = vrot.slane %v4529, 7
    %v5500 = vrot.slane %v5499, 2
    %v5501 = vrot.slane %v4537, 7
    %v5502 = vrot.slane %v5501, 2
    %v5503 = vrot.slane %v4545, 7
    %v5504 = vrot.slane %v5503, 2
    %v5505 = vrot.slane %v4544, 7
    %v5506 = vrot.slane %v5505, 2
    %v5507 = vrot.slane %v4546, 7
    %v5508 = vrot.slane %v5507, 2
    %v5509 = vrot.slane %v4588, 7
    %v5510 = vrot.slane %v5509, 2
    %v5511 = vrot.slane %v4596, 7
    %v5512 = vrot.slane %v5511, 2
    %v5513 = vrot.slane %v4595, 7
    %v5514 = vrot.slane %v5513, 2
    %v5515 = vrot.slane %v4597, 7
    %v5516 = vrot.slane %v5515, 2
    %v5517 = vrot.slane %v4605, 7
    %v5518 = vrot.slane %v5517, 2
    %v5519 = vrot.slane %v4613, 7
    %v5520 = vrot.slane %v5519, 2
    %v5521 = vrot.slane %v4612, 7
    %v5522 = vrot.slane %v5521, 2
    %v5523 = vrot.slane %v4614, 7
    %v5524 = vrot.slane %v5523, 2
    %v5525 = vrot.slane %v4656, 7
    %v5526 = vrot.slane %v5525, 2
    %v5527 = vrot.slane %v4664, 7
    %v5528 = vrot.slane %v5527, 2
    %v5529 = vrot.slane %v4663, 7
    %v5530 = vrot.slane %v5529, 2
    %v5531 = vrot.slane %v4665, 7
    %v5532 = vrot.slane %v5531, 2
    %v5533 = vrot.slane %v4673, 7
    %v5534 = vrot.slane %v5533, 2
    %v5535 = vrot.slane %v4681, 7
    %v5536 = vrot.slane %v5535, 2
    %v5537 = vrot.slane %v4680, 7
    %v5538 = vrot.slane %v5537, 2
    %v5539 = vrot.slane %v4682, 7
    %v5540 = vrot.slane %v5539, 2
    %v5541 = vrot.slane %v4724, 7
    %v5542 = vrot.slane %v5541, 2
    %v5543 = vrot.slane %v4732, 7
    %v5544 = vrot.slane %v5543, 2
    %v5545 = vrot.slane %v4731, 7
    %v5546 = vrot.slane %v5545, 2
    %v5547 = vrot.slane %v4733, 7
    %v5548 = vrot.slane %v5547, 2
    %v5549 = vrot.slane %v4741, 7
    %v5550 = vrot.slane %v5549, 2
    %v5551 = vrot.slane %v4749, 7
    %v5552 = vrot.slane %v5551, 2
    %v5553 = vrot.slane %v4748, 7
    %v5554 = vrot.slane %v5553, 2
    %v5555 = vrot.slane %v4750, 7
    %v5556 = vrot.slane %v5555, 2
    %v5557 = vrot.slane %v4792, 7
    %v5558 = vrot.slane %v5557, 2
    %v5559 = vrot.slane %v4800, 7
    %v5560 = vrot.slane %v5559, 2
    %v5561 = vrot.slane %v4799, 7
    %v5562 = vrot.slane %v5561, 2
    %v5563 = vrot.slane %v4801, 7
    %v5564 = vrot.slane %v5563, 2
    %v5565 = vrot.slane %v4809, 7
    %v5566 = vrot.slane %v5565, 2
    %v5567 = vrot.slane %v4817, 7
    %v5568 = vrot.slane %v5567, 2
    %v5569 = vrot.slane %v4816, 7
    %v5570 = vrot.slane %v5569, 2
    %v5571 = vrot.slane %v4818, 7
    %v5572 = vrot.slane %v5571, 2
    %v5573 = vrot.slane %v4860, 7
    %v5574 = vrot.slane %v5573, 2
    %v5575 = vrot.slane %v4868, 7
    %v5576 = vrot.slane %v5575, 2
    %v5577 = vrot.slane %v4867, 7
    %v5578 = vrot.slane %v5577, 2
    %v5579 = vrot.slane %v4869, 7
    %v5580 = vrot.slane %v5579, 2
    %v5581 = vrot.slane %v4877, 7
    %v5582 = vrot.slane %v5581, 2
    %v5583 = vrot.slane %v4885, 7
    %v5584 = vrot.slane %v5583, 2
    %v5585 = vrot.slane %v4884, 7
    %v5586 = vrot.slane %v5585, 2
    %v5587 = vrot.slane %v4886, 7
    %v5588 = vrot.slane %v5587, 2
    %v5589 = vrot.slane %v4928, 7
    %v5590 = vrot.slane %v5589, 2
    %v5591 = vrot.slane %v4936, 7
    %v5592 = vrot.slane %v5591, 2
    %v5593 = vrot.slane %v4935, 7
    %v5594 = vrot.slane %v5593, 2
    %v5595 = vrot.slane %v4937, 7
    %v5596 = vrot.slane %v5595, 2
    %v5597 = vrot.slane %v4945, 7
    %v5598 = vrot.slane %v5597, 2
    %v5599 = vrot.slane %v4953, 7
    %v5600 = vrot.slane %v5599, 2
    %v5601 = vrot.slane %v4952, 7
    %v5602 = vrot.slane %v5601, 2
    %v5603 = vrot.slane %v4954, 7
    %v5604 = vrot.slane %v5603, 2
    %v5605 = vrot.slane %v4996, 7
    %v5606 = vrot.slane %v5605, 2
    %v5607 = vrot.slane %v5004, 7
    %v5608 = vrot.slane %v5607, 2
    %v5609 = vrot.slane %v5003, 7
    %v5610 = vrot.slane %v5609, 2
    %v5611 = vrot.slane %v5005, 7
    %v5612 = vrot.slane %v5611, 2
    %v5613 = vrot.slane %v5013, 7
    %v5614 = vrot.slane %v5613, 2
    %v5615 = vrot.slane %v5021, 7
    %v5616 = vrot.slane %v5615, 2
    %v5617 = vrot.slane %v5020, 7
    %v5618 = vrot.slane %v5617, 2
    %v5619 = vrot.slane %v5022, 7
    %v5620 = vrot.slane %v5619, 2
    %v5621 = vrot.slane %v5064, 7
    %v5622 = vrot.slane %v5621, 2
    %v5623 = vrot.slane %v5072, 7
    %v5624 = vrot.slane %v5623, 2
    %v5625 = vrot.slane %v5071, 7
    %v5626 = vrot.slane %v5625, 2
    %v5627 = vrot.slane %v5073, 7
    %v5628 = vrot.slane %v5627, 2
    %v5629 = vrot.slane %v5081, 7
    %v5630 = vrot.slane %v5629, 2
    %v5631 = vrot.slane %v5089, 7
    %v5632 = vrot.slane %v5631, 2
    %v5633 = vrot.slane %v5088, 7
    %v5634 = vrot.slane %v5633, 2
    %v5635 = vrot.slane %v5090, 7
    %v5636 = vrot.slane %v5635, 2
    %v5765 = vadd.f32 %v4044, %v5382
    %v5766 = vadd.f32 %v4052, %v5384
    %v5767 = vadd.f32 %v4051, %v5386
    %v5768 = vadd.f32 %v4053, %v5388
    %v5769 = vadd.f32 %v4061, %v5390
    %v5770 = vadd.f32 %v4069, %v5392
    %v5771 = vadd.f32 %v4068, %v5394
    %v5772 = vadd.f32 %v4070, %v5396
    %v5773 = vadd.f32 %v4112, %v5398
    %v5774 = vadd.f32 %v4120, %v5400
    %v5775 = vadd.f32 %v4119, %v5402
    %v5776 = vadd.f32 %v4121, %v5404
    %v5777 = vadd.f32 %v4129, %v5406
    %v5778 = vadd.f32 %v4137, %v5408
    %v5779 = vadd.f32 %v4136, %v5410
    %v5780 = vadd.f32 %v4138, %v5412
    %v5781 = vadd.f32 %v4180, %v5414
    %v5782 = vadd.f32 %v4188, %v5416
    %v5783 = vadd.f32 %v4187, %v5418
    %v5784 = vadd.f32 %v4189, %v5420
    %v5785 = vadd.f32 %v4197, %v5422
    %v5786 = vadd.f32 %v4205, %v5424
    %v5787 = vadd.f32 %v4204, %v5426
    %v5788 = vadd.f32 %v4206, %v5428
    %v5789 = vadd.f32 %v4248, %v5430
    %v5790 = vadd.f32 %v4256, %v5432
    %v5791 = vadd.f32 %v4255, %v5434
    %v5792 = vadd.f32 %v4257, %v5436
    %v5793 = vadd.f32 %v4265, %v5438
    %v5794 = vadd.f32 %v4273, %v5440
    %v5795 = vadd.f32 %v4272, %v5442
    %v5796 = vadd.f32 %v4274, %v5444
    %v5797 = vadd.f32 %v4316, %v5446
    %v5798 = vadd.f32 %v4324, %v5448
    %v5799 = vadd.f32 %v4323, %v5450
    %v5800 = vadd.f32 %v4325, %v5452
    %v5801 = vadd.f32 %v4333, %v5454
    %v5802 = vadd.f32 %v4341, %v5456
    %v5803 = vadd.f32 %v4340, %v5458
    %v5804 = vadd.f32 %v4342, %v5460
    %v5805 = vadd.f32 %v4384, %v5462
    %v5806 = vadd.f32 %v4392, %v5464
    %v5807 = vadd.f32 %v4391, %v5466
    %v5808 = vadd.f32 %v4393, %v5468
    %v5809 = vadd.f32 %v4401, %v5470
    %v5810 = vadd.f32 %v4409, %v5472
    %v5811 = vadd.f32 %v4408, %v5474
    %v5812 = vadd.f32 %v4410, %v5476
    %v5813 = vadd.f32 %v4452, %v5478
    %v5814 = vadd.f32 %v4460, %v5480
    %v5815 = vadd.f32 %v4459, %v5482
    %v5816 = vadd.f32 %v4461, %v5484
    %v5817 = vadd.f32 %v4469, %v5486
    %v5818 = vadd.f32 %v4477, %v5488
    %v5819 = vadd.f32 %v4476, %v5490
    %v5820 = vadd.f32 %v4478, %v5492
    %v5821 = vadd.f32 %v4520, %v5494
    %v5822 = vadd.f32 %v4528, %v5496
    %v5823 = vadd.f32 %v4527, %v5498
    %v5824 = vadd.f32 %v4529, %v5500
    %v5825 = vadd.f32 %v4537, %v5502
    %v5826 = vadd.f32 %v4545, %v5504
    %v5827 = vadd.f32 %v4544, %v5506
    %v5828 = vadd.f32 %v4546, %v5508
    %v5829 = vadd.f32 %v4588, %v5510
    %v5830 = vadd.f32 %v4596, %v5512
    %v5831 = vadd.f32 %v4595, %v5514
    %v5832 = vadd.f32 %v4597, %v5516
    %v5833 = vadd.f32 %v4605, %v5518
    %v5834 = vadd.f32 %v4613, %v5520
    %v5835 = vadd.f32 %v4612, %v5522
    %v5836 = vadd.f32 %v4614, %v5524
    %v5837 = vadd.f32 %v4656, %v5526
    %v5838 = vadd.f32 %v4664, %v5528
    %v5839 = vadd.f32 %v4663, %v5530
    %v5840 = vadd.f32 %v4665, %v5532
    %v5841 = vadd.f32 %v4673, %v5534
    %v5842 = vadd.f32 %v4681, %v5536
    %v5843 = vadd.f32 %v4680, %v5538
    %v5844 = vadd.f32 %v4682, %v5540
    %v5845 = vadd.f32 %v4724, %v5542
    %v5846 = vadd.f32 %v4732, %v5544
    %v5847 = vadd.f32 %v4731, %v5546
    %v5848 = vadd.f32 %v4733, %v5548
    %v5849 = vadd.f32 %v4741, %v5550
    %v5850 = vadd.f32 %v4749, %v5552
    %v5851 = vadd.f32 %v4748, %v5554
    %v5852 = vadd.f32 %v4750, %v5556
    %v5853 = vadd.f32 %v4792, %v5558
    %v5854 = vadd.f32 %v4800, %v5560
    %v5855 = vadd.f32 %v4799, %v5562
    %v5856 = vadd.f32 %v4801, %v5564
    %v5857 = vadd.f32 %v4809, %v5566
    %v5858 = vadd.f32 %v4817, %v5568
    %v5859 = vadd.f32 %v4816, %v5570
    %v5860 = vadd.f32 %v4818, %v5572
    %v5861 = vadd.f32 %v4860, %v5574
    %v5862 = vadd.f32 %v4868, %v5576
    %v5863 = vadd.f32 %v4867, %v5578
    %v5864 = vadd.f32 %v4869, %v5580
    %v5865 = vadd.f32 %v4877, %v5582
    %v5866 = vadd.f32 %v4885, %v5584
    %v5867 = vadd.f32 %v4884, %v5586
    %v5868 = vadd.f32 %v4886, %v5588
    %v5869 = vadd.f32 %v4928, %v5590
    %v5870 = vadd.f32 %v4936, %v5592
    %v5871 = vadd.f32 %v4935, %v5594
    %v5872 = vadd.f32 %v4937, %v5596
    %v5873 = vadd.f32 %v4945, %v5598
    %v5874 = vadd.f32 %v4953, %v5600
    %v5875 = vadd.f32 %v4952, %v5602
    %v5876 = vadd.f32 %v4954, %v5604
    %v5877 = vadd.f32 %v4996, %v5606
    %v5878 = vadd.f32 %v5004, %v5608
    %v5879 = vadd.f32 %v5003, %v5610
    %v5880 = vadd.f32 %v5005, %v5612
    %v5881 = vadd.f32 %v5013, %v5614
    %v5882 = vadd.f32 %v5021, %v5616
    %v5883 = vadd.f32 %v5020, %v5618
    %v5884 = vadd.f32 %v5022, %v5620
    %v5885 = vadd.f32 %v5064, %v5622
    %v5886 = vadd.f32 %v5072, %v5624
    %v5887 = vadd.f32 %v5071, %v5626
    %v5888 = vadd.f32 %v5073, %v5628
    %v5889 = vadd.f32 %v5081, %v5630
    %v5890 = vadd.f32 %v5089, %v5632
    %v5891 = vadd.f32 %v5088, %v5634
    %v5892 = vadd.f32 %v5090, %v5636
    %v5893 = vadd.f32 %v5765, %v4078
    %v5894 = vadd.f32 %v5766, %v4086
    %v5895 = vadd.f32 %v5767, %v4085
    %v5896 = vadd.f32 %v5768, %v4087
    %v5897 = vadd.f32 %v5769, %v4095
    %v5898 = vadd.f32 %v5770, %v4103
    %v5899 = vadd.f32 %v5771, %v4102
    %v5900 = vadd.f32 %v5772, %v4104
    %v5901 = vadd.f32 %v5773, %v4146
    %v5902 = vadd.f32 %v5774, %v4154
    %v5903 = vadd.f32 %v5775, %v4153
    %v5904 = vadd.f32 %v5776, %v4155
    %v5905 = vadd.f32 %v5777, %v4163
    %v5906 = vadd.f32 %v5778, %v4171
    %v5907 = vadd.f32 %v5779, %v4170
    %v5908 = vadd.f32 %v5780, %v4172
    %v5909 = vadd.f32 %v5781, %v4214
    %v5910 = vadd.f32 %v5782, %v4222
    %v5911 = vadd.f32 %v5783, %v4221
    %v5912 = vadd.f32 %v5784, %v4223
    %v5913 = vadd.f32 %v5785, %v4231
    %v5914 = vadd.f32 %v5786, %v4239
    %v5915 = vadd.f32 %v5787, %v4238
    %v5916 = vadd.f32 %v5788, %v4240
    %v5917 = vadd.f32 %v5789, %v4282
    %v5918 = vadd.f32 %v5790, %v4290
    %v5919 = vadd.f32 %v5791, %v4289
    %v5920 = vadd.f32 %v5792, %v4291
    %v5921 = vadd.f32 %v5793, %v4299
    %v5922 = vadd.f32 %v5794, %v4307
    %v5923 = vadd.f32 %v5795, %v4306
    %v5924 = vadd.f32 %v5796, %v4308
    %v5925 = vadd.f32 %v5797, %v4350
    %v5926 = vadd.f32 %v5798, %v4358
    %v5927 = vadd.f32 %v5799, %v4357
    %v5928 = vadd.f32 %v5800, %v4359
    %v5929 = vadd.f32 %v5801, %v4367
    %v5930 = vadd.f32 %v5802, %v4375
    %v5931 = vadd.f32 %v5803, %v4374
    %v5932 = vadd.f32 %v5804, %v4376
    %v5933 = vadd.f32 %v5805, %v4418
    %v5934 = vadd.f32 %v5806, %v4426
    %v5935 = vadd.f32 %v5807, %v4425
    %v5936 = vadd.f32 %v5808, %v4427
    %v5937 = vadd.f32 %v5809, %v4435
    %v5938 = vadd.f32 %v5810, %v4443
    %v5939 = vadd.f32 %v5811, %v4442
    %v5940 = vadd.f32 %v5812, %v4444
    %v5941 = vadd.f32 %v5813, %v4486
    %v5942 = vadd.f32 %v5814, %v4494
    %v5943 = vadd.f32 %v5815, %v4493
    %v5944 = vadd.f32 %v5816, %v4495
    %v5945 = vadd.f32 %v5817, %v4503
    %v5946 = vadd.f32 %v5818, %v4511
    %v5947 = vadd.f32 %v5819, %v4510
    %v5948 = vadd.f32 %v5820, %v4512
    %v5949 = vadd.f32 %v5821, %v4554
    %v5950 = vadd.f32 %v5822, %v4562
    %v5951 = vadd.f32 %v5823, %v4561
    %v5952 = vadd.f32 %v5824, %v4563
    %v5953 = vadd.f32 %v5825, %v4571
    %v5954 = vadd.f32 %v5826, %v4579
    %v5955 = vadd.f32 %v5827, %v4578
    %v5956 = vadd.f32 %v5828, %v4580
    %v5957 = vadd.f32 %v5829, %v4622
    %v5958 = vadd.f32 %v5830, %v4630
    %v5959 = vadd.f32 %v5831, %v4629
    %v5960 = vadd.f32 %v5832, %v4631
    %v5961 = vadd.f32 %v5833, %v4639
    %v5962 = vadd.f32 %v5834, %v4647
    %v5963 = vadd.f32 %v5835, %v4646
    %v5964 = vadd.f32 %v5836, %v4648
    %v5965 = vadd.f32 %v5837, %v4690
    %v5966 = vadd.f32 %v5838, %v4698
    %v5967 = vadd.f32 %v5839, %v4697
    %v5968 = vadd.f32 %v5840, %v4699
    %v5969 = vadd.f32 %v5841, %v4707
    %v5970 = vadd.f32 %v5842, %v4715
    %v5971 = vadd.f32 %v5843, %v4714
    %v5972 = vadd.f32 %v5844, %v4716
    %v5973 = vadd.f32 %v5845, %v4758
    %v5974 = vadd.f32 %v5846, %v4766
    %v5975 = vadd.f32 %v5847, %v4765
    %v5976 = vadd.f32 %v5848, %v4767
    %v5977 = vadd.f32 %v5849, %v4775
    %v5978 = vadd.f32 %v5850, %v4783
    %v5979 = vadd.f32 %v5851, %v4782
    %v5980 = vadd.f32 %v5852, %v4784
    %v5981 = vadd.f32 %v5853, %v4826
    %v5982 = vadd.f32 %v5854, %v4834
    %v5983 = vadd.f32 %v5855, %v4833
    %v5984 = vadd.f32 %v5856, %v4835
    %v5985 = vadd.f32 %v5857, %v4843
    %v5986 = vadd.f32 %v5858, %v4851
    %v5987 = vadd.f32 %v5859, %v4850
    %v5988 = vadd.f32 %v5860, %v4852
    %v5989 = vadd.f32 %v5861, %v4894
    %v5990 = vadd.f32 %v5862, %v4902
    %v5991 = vadd.f32 %v5863, %v4901
    %v5992 = vadd.f32 %v5864, %v4903
    %v5993 = vadd.f32 %v5865, %v4911
    %v5994 = vadd.f32 %v5866, %v4919
    %v5995 = vadd.f32 %v5867, %v4918
    %v5996 = vadd.f32 %v5868, %v4920
    %v5997 = vadd.f32 %v5869, %v4962
    %v5998 = vadd.f32 %v5870, %v4970
    %v5999 = vadd.f32 %v5871, %v4969
    %v6000 = vadd.f32 %v5872, %v4971
    %v6001 = vadd.f32 %v5873, %v4979
    %v6002 = vadd.f32 %v5874, %v4987
    %v6003 = vadd.f32 %v5875, %v4986
    %v6004 = vadd.f32 %v5876, %v4988
    %v6005 = vadd.f32 %v5877, %v5030
    %v6006 = vadd.f32 %v5878, %v5038
    %v6007 = vadd.f32 %v5879, %v5037
    %v6008 = vadd.f32 %v5880, %v5039
    %v6009 = vadd.f32 %v5881, %v5047
    %v6010 = vadd.f32 %v5882, %v5055
    %v6011 = vadd.f32 %v5883, %v5054
    %v6012 = vadd.f32 %v5884, %v5056
    %v6013 = vadd.f32 %v5885, %v5098
    %v6014 = vadd.f32 %v5886, %v5106
    %v6015 = vadd.f32 %v5887, %v5105
    %v6016 = vadd.f32 %v5888, %v5107
    %v6017 = vadd.f32 %v5889, %v5115
    %v6018 = vadd.f32 %v5890, %v5123
    %v6019 = vadd.f32 %v5891, %v5122
    %v6020 = vadd.f32 %v5892, %v5124
    %v6021 = vrot.slane %v4078, 7
    %v6022 = vrot.slane %v6021, 2
    %v6023 = vrot.slane %v4086, 7
    %v6024 = vrot.slane %v6023, 2
    %v6025 = vrot.slane %v4085, 7
    %v6026 = vrot.slane %v6025, 2
    %v6027 = vrot.slane %v4087, 7
    %v6028 = vrot.slane %v6027, 2
    %v6029 = vrot.slane %v4095, 7
    %v6030 = vrot.slane %v6029, 2
    %v6031 = vrot.slane %v4103, 7
    %v6032 = vrot.slane %v6031, 2
    %v6033 = vrot.slane %v4102, 7
    %v6034 = vrot.slane %v6033, 2
    %v6035 = vrot.slane %v4104, 7
    %v6036 = vrot.slane %v6035, 2
    %v6037 = vrot.slane %v4146, 7
    %v6038 = vrot.slane %v6037, 2
    %v6039 = vrot.slane %v4154, 7
    %v6040 = vrot.slane %v6039, 2
    %v6041 = vrot.slane %v4153, 7
    %v6042 = vrot.slane %v6041, 2
    %v6043 = vrot.slane %v4155, 7
    %v6044 = vrot.slane %v6043, 2
    %v6045 = vrot.slane %v4163, 7
    %v6046 = vrot.slane %v6045, 2
    %v6047 = vrot.slane %v4171, 7
    %v6048 = vrot.slane %v6047, 2
    %v6049 = vrot.slane %v4170, 7
    %v6050 = vrot.slane %v6049, 2
    %v6051 = vrot.slane %v4172, 7
    %v6052 = vrot.slane %v6051, 2
    %v6053 = vrot.slane %v4214, 7
    %v6054 = vrot.slane %v6053, 2
    %v6055 = vrot.slane %v4222, 7
    %v6056 = vrot.slane %v6055, 2
    %v6057 = vrot.slane %v4221, 7
    %v6058 = vrot.slane %v6057, 2
    %v6059 = vrot.slane %v4223, 7
    %v6060 = vrot.slane %v6059, 2
    %v6061 = vrot.slane %v4231, 7
    %v6062 = vrot.slane %v6061, 2
    %v6063 = vrot.slane %v4239, 7
    %v6064 = vrot.slane %v6063, 2
    %v6065 = vrot.slane %v4238, 7
    %v6066 = vrot.slane %v6065, 2
    %v6067 = vrot.slane %v4240, 7
    %v6068 = vrot.slane %v6067, 2
    %v6069 = vrot.slane %v4282, 7
    %v6070 = vrot.slane %v6069, 2
    %v6071 = vrot.slane %v4290, 7
    %v6072 = vrot.slane %v6071, 2
    %v6073 = vrot.slane %v4289, 7
    %v6074 = vrot.slane %v6073, 2
    %v6075 = vrot.slane %v4291, 7
    %v6076 = vrot.slane %v6075, 2
    %v6077 = vrot.slane %v4299, 7
    %v6078 = vrot.slane %v6077, 2
    %v6079 = vrot.slane %v4307, 7
    %v6080 = vrot.slane %v6079, 2
    %v6081 = vrot.slane %v4306, 7
    %v6082 = vrot.slane %v6081, 2
    %v6083 = vrot.slane %v4308, 7
    %v6084 = vrot.slane %v6083, 2
    %v6085 = vrot.slane %v4350, 7
    %v6086 = vrot.slane %v6085, 2
    %v6087 = vrot.slane %v4358, 7
    %v6088 = vrot.slane %v6087, 2
    %v6089 = vrot.slane %v4357, 7
    %v6090 = vrot.slane %v6089, 2
    %v6091 = vrot.slane %v4359, 7
    %v6092 = vrot.slane %v6091, 2
    %v6093 = vrot.slane %v4367, 7
    %v6094 = vrot.slane %v6093, 2
    %v6095 = vrot.slane %v4375, 7
    %v6096 = vrot.slane %v6095, 2
    %v6097 = vrot.slane %v4374, 7
    %v6098 = vrot.slane %v6097, 2
    %v6099 = vrot.slane %v4376, 7
    %v6100 = vrot.slane %v6099, 2
    %v6101 = vrot.slane %v4418, 7
    %v6102 = vrot.slane %v6101, 2
    %v6103 = vrot.slane %v4426, 7
    %v6104 = vrot.slane %v6103, 2
    %v6105 = vrot.slane %v4425, 7
    %v6106 = vrot.slane %v6105, 2
    %v6107 = vrot.slane %v4427, 7
    %v6108 = vrot.slane %v6107, 2
    %v6109 = vrot.slane %v4435, 7
    %v6110 = vrot.slane %v6109, 2
    %v6111 = vrot.slane %v4443, 7
    %v6112 = vrot.slane %v6111, 2
    %v6113 = vrot.slane %v4442, 7
    %v6114 = vrot.slane %v6113, 2
    %v6115 = vrot.slane %v4444, 7
    %v6116 = vrot.slane %v6115, 2
    %v6117 = vrot.slane %v4486, 7
    %v6118 = vrot.slane %v6117, 2
    %v6119 = vrot.slane %v4494, 7
    %v6120 = vrot.slane %v6119, 2
    %v6121 = vrot.slane %v4493, 7
    %v6122 = vrot.slane %v6121, 2
    %v6123 = vrot.slane %v4495, 7
    %v6124 = vrot.slane %v6123, 2
    %v6125 = vrot.slane %v4503, 7
    %v6126 = vrot.slane %v6125, 2
    %v6127 = vrot.slane %v4511, 7
    %v6128 = vrot.slane %v6127, 2
    %v6129 = vrot.slane %v4510, 7
    %v6130 = vrot.slane %v6129, 2
    %v6131 = vrot.slane %v4512, 7
    %v6132 = vrot.slane %v6131, 2
    %v6133 = vrot.slane %v4554, 7
    %v6134 = vrot.slane %v6133, 2
    %v6135 = vrot.slane %v4562, 7
    %v6136 = vrot.slane %v6135, 2
    %v6137 = vrot.slane %v4561, 7
    %v6138 = vrot.slane %v6137, 2
    %v6139 = vrot.slane %v4563, 7
    %v6140 = vrot.slane %v6139, 2
    %v6141 = vrot.slane %v4571, 7
    %v6142 = vrot.slane %v6141, 2
    %v6143 = vrot.slane %v4579, 7
    %v6144 = vrot.slane %v6143, 2
    %v6145 = vrot.slane %v4578, 7
    %v6146 = vrot.slane %v6145, 2
    %v6147 = vrot.slane %v4580, 7
    %v6148 = vrot.slane %v6147, 2
    %v6149 = vrot.slane %v4622, 7
    %v6150 = vrot.slane %v6149, 2
    %v6151 = vrot.slane %v4630, 7
    %v6152 = vrot.slane %v6151, 2
    %v6153 = vrot.slane %v4629, 7
    %v6154 = vrot.slane %v6153, 2
    %v6155 = vrot.slane %v4631, 7
    %v6156 = vrot.slane %v6155, 2
    %v6157 = vrot.slane %v4639, 7
    %v6158 = vrot.slane %v6157, 2
    %v6159 = vrot.slane %v4647, 7
    %v6160 = vrot.slane %v6159, 2
    %v6161 = vrot.slane %v4646, 7
    %v6162 = vrot.slane %v6161, 2
    %v6163 = vrot.slane %v4648, 7
    %v6164 = vrot.slane %v6163, 2
    %v6165 = vrot.slane %v4690, 7
    %v6166 = vrot.slane %v6165, 2
    %v6167 = vrot.slane %v4698, 7
    %v6168 = vrot.slane %v6167, 2
    %v6169 = vrot.slane %v4697, 7
    %v6170 = vrot.slane %v6169, 2
    %v6171 = vrot.slane %v4699, 7
    %v6172 = vrot.slane %v6171, 2
    %v6173 = vrot.slane %v4707, 7
    %v6174 = vrot.slane %v6173, 2
    %v6175 = vrot.slane %v4715, 7
    %v6176 = vrot.slane %v6175, 2
    %v6177 = vrot.slane %v4714, 7
    %v6178 = vrot.slane %v6177, 2
    %v6179 = vrot.slane %v4716, 7
    %v6180 = vrot.slane %v6179, 2
    %v6181 = vrot.slane %v4758, 7
    %v6182 = vrot.slane %v6181, 2
    %v6183 = vrot.slane %v4766, 7
    %v6184 = vrot.slane %v6183, 2
    %v6185 = vrot.slane %v4765, 7
    %v6186 = vrot.slane %v6185, 2
    %v6187 = vrot.slane %v4767, 7
    %v6188 = vrot.slane %v6187, 2
    %v6189 = vrot.slane %v4775, 7
    %v6190 = vrot.slane %v6189, 2
    %v6191 = vrot.slane %v4783, 7
    %v6192 = vrot.slane %v6191, 2
    %v6193 = vrot.slane %v4782, 7
    %v6194 = vrot.slane %v6193, 2
    %v6195 = vrot.slane %v4784, 7
    %v6196 = vrot.slane %v6195, 2
    %v6197 = vrot.slane %v4826, 7
    %v6198 = vrot.slane %v6197, 2
    %v6199 = vrot.slane %v4834, 7
    %v6200 = vrot.slane %v6199, 2
    %v6201 = vrot.slane %v4833, 7
    %v6202 = vrot.slane %v6201, 2
    %v6203 = vrot.slane %v4835, 7
    %v6204 = vrot.slane %v6203, 2
    %v6205 = vrot.slane %v4843, 7
    %v6206 = vrot.slane %v6205, 2
    %v6207 = vrot.slane %v4851, 7
    %v6208 = vrot.slane %v6207, 2
    %v6209 = vrot.slane %v4850, 7
    %v6210 = vrot.slane %v6209, 2
    %v6211 = vrot.slane %v4852, 7
    %v6212 = vrot.slane %v6211, 2
    %v6213 = vrot.slane %v4894, 7
    %v6214 = vrot.slane %v6213, 2
    %v6215 = vrot.slane %v4902, 7
    %v6216 = vrot.slane %v6215, 2
    %v6217 = vrot.slane %v4901, 7
    %v6218 = vrot.slane %v6217, 2
    %v6219 = vrot.slane %v4903, 7
    %v6220 = vrot.slane %v6219, 2
    %v6221 = vrot.slane %v4911, 7
    %v6222 = vrot.slane %v6221, 2
    %v6223 = vrot.slane %v4919, 7
    %v6224 = vrot.slane %v6223, 2
    %v6225 = vrot.slane %v4918, 7
    %v6226 = vrot.slane %v6225, 2
    %v6227 = vrot.slane %v4920, 7
    %v6228 = vrot.slane %v6227, 2
    %v6229 = vrot.slane %v4962, 7
    %v6230 = vrot.slane %v6229, 2
    %v6231 = vrot.slane %v4970, 7
    %v6232 = vrot.slane %v6231, 2
    %v6233 = vrot.slane %v4969, 7
    %v6234 = vrot.slane %v6233, 2
    %v6235 = vrot.slane %v4971, 7
    %v6236 = vrot.slane %v6235, 2
    %v6237 = vrot.slane %v4979, 7
    %v6238 = vrot.slane %v6237, 2
    %v6239 = vrot.slane %v4987, 7
    %v6240 = vrot.slane %v6239, 2
    %v6241 = vrot.slane %v4986, 7
    %v6242 = vrot.slane %v6241, 2
    %v6243 = vrot.slane %v4988, 7
    %v6244 = vrot.slane %v6243, 2
    %v6245 = vrot.slane %v5030, 7
    %v6246 = vrot.slane %v6245, 2
    %v6247 = vrot.slane %v5038, 7
    %v6248 = vrot.slane %v6247, 2
    %v6249 = vrot.slane %v5037, 7
    %v6250 = vrot.slane %v6249, 2
    %v6251 = vrot.slane %v5039, 7
    %v6252 = vrot.slane %v6251, 2
    %v6253 = vrot.slane %v5047, 7
    %v6254 = vrot.slane %v6253, 2
    %v6255 = vrot.slane %v5055, 7
    %v6256 = vrot.slane %v6255, 2
    %v6257 = vrot.slane %v5054, 7
    %v6258 = vrot.slane %v6257, 2
    %v6259 = vrot.slane %v5056, 7
    %v6260 = vrot.slane %v6259, 2
    %v6261 = vrot.slane %v5098, 7
    %v6262 = vrot.slane %v6261, 2
    %v6263 = vrot.slane %v5106, 7
    %v6264 = vrot.slane %v6263, 2
    %v6265 = vrot.slane %v5105, 7
    %v6266 = vrot.slane %v6265, 2
    %v6267 = vrot.slane %v5107, 7
    %v6268 = vrot.slane %v6267, 2
    %v6269 = vrot.slane %v5115, 7
    %v6270 = vrot.slane %v6269, 2
    %v6271 = vrot.slane %v5123, 7
    %v6272 = vrot.slane %v6271, 2
    %v6273 = vrot.slane %v5122, 7
    %v6274 = vrot.slane %v6273, 2
    %v6275 = vrot.slane %v5124, 7
    %v6276 = vrot.slane %v6275, 2
    %v6405 = vadd.f32 %v5893, %v6022
    %v6406 = vadd.f32 %v5894, %v6024
    %v6407 = vadd.f32 %v5895, %v6026
    %v6408 = vadd.f32 %v5896, %v6028
    %v6409 = vadd.f32 %v5897, %v6030
    %v6410 = vadd.f32 %v5898, %v6032
    %v6411 = vadd.f32 %v5899, %v6034
    %v6412 = vadd.f32 %v5900, %v6036
    %v6413 = vadd.f32 %v5901, %v6038
    %v6414 = vadd.f32 %v5902, %v6040
    %v6415 = vadd.f32 %v5903, %v6042
    %v6416 = vadd.f32 %v5904, %v6044
    %v6417 = vadd.f32 %v5905, %v6046
    %v6418 = vadd.f32 %v5906, %v6048
    %v6419 = vadd.f32 %v5907, %v6050
    %v6420 = vadd.f32 %v5908, %v6052
    %v6421 = vadd.f32 %v5909, %v6054
    %v6422 = vadd.f32 %v5910, %v6056
    %v6423 = vadd.f32 %v5911, %v6058
    %v6424 = vadd.f32 %v5912, %v6060
    %v6425 = vadd.f32 %v5913, %v6062
    %v6426 = vadd.f32 %v5914, %v6064
    %v6427 = vadd.f32 %v5915, %v6066
    %v6428 = vadd.f32 %v5916, %v6068
    %v6429 = vadd.f32 %v5917, %v6070
    %v6430 = vadd.f32 %v5918, %v6072
    %v6431 = vadd.f32 %v5919, %v6074
    %v6432 = vadd.f32 %v5920, %v6076
    %v6433 = vadd.f32 %v5921, %v6078
    %v6434 = vadd.f32 %v5922, %v6080
    %v6435 = vadd.f32 %v5923, %v6082
    %v6436 = vadd.f32 %v5924, %v6084
    %v6437 = vadd.f32 %v5925, %v6086
    %v6438 = vadd.f32 %v5926, %v6088
    %v6439 = vadd.f32 %v5927, %v6090
    %v6440 = vadd.f32 %v5928, %v6092
    %v6441 = vadd.f32 %v5929, %v6094
    %v6442 = vadd.f32 %v5930, %v6096
    %v6443 = vadd.f32 %v5931, %v6098
    %v6444 = vadd.f32 %v5932, %v6100
    %v6445 = vadd.f32 %v5933, %v6102
    %v6446 = vadd.f32 %v5934, %v6104
    %v6447 = vadd.f32 %v5935, %v6106
    %v6448 = vadd.f32 %v5936, %v6108
    %v6449 = vadd.f32 %v5937, %v6110
    %v6450 = vadd.f32 %v5938, %v6112
    %v6451 = vadd.f32 %v5939, %v6114
    %v6452 = vadd.f32 %v5940, %v6116
    %v6453 = vadd.f32 %v5941, %v6118
    %v6454 = vadd.f32 %v5942, %v6120
    %v6455 = vadd.f32 %v5943, %v6122
    %v6456 = vadd.f32 %v5944, %v6124
    %v6457 = vadd.f32 %v5945, %v6126
    %v6458 = vadd.f32 %v5946, %v6128
    %v6459 = vadd.f32 %v5947, %v6130
    %v6460 = vadd.f32 %v5948, %v6132
    %v6461 = vadd.f32 %v5949, %v6134
    %v6462 = vadd.f32 %v5950, %v6136
    %v6463 = vadd.f32 %v5951, %v6138
    %v6464 = vadd.f32 %v5952, %v6140
    %v6465 = vadd.f32 %v5953, %v6142
    %v6466 = vadd.f32 %v5954, %v6144
    %v6467 = vadd.f32 %v5955, %v6146
    %v6468 = vadd.f32 %v5956, %v6148
    %v6469 = vadd.f32 %v5957, %v6150
    %v6470 = vadd.f32 %v5958, %v6152
    %v6471 = vadd.f32 %v5959, %v6154
    %v6472 = vadd.f32 %v5960, %v6156
    %v6473 = vadd.f32 %v5961, %v6158
    %v6474 = vadd.f32 %v5962, %v6160
    %v6475 = vadd.f32 %v5963, %v6162
    %v6476 = vadd.f32 %v5964, %v6164
    %v6477 = vadd.f32 %v5965, %v6166
    %v6478 = vadd.f32 %v5966, %v6168
    %v6479 = vadd.f32 %v5967, %v6170
    %v6480 = vadd.f32 %v5968, %v6172
    %v6481 = vadd.f32 %v5969, %v6174
    %v6482 = vadd.f32 %v5970, %v6176
    %v6483 = vadd.f32 %v5971, %v6178
    %v6484 = vadd.f32 %v5972, %v6180
    %v6485 = vadd.f32 %v5973, %v6182
    %v6486 = vadd.f32 %v5974, %v6184
    %v6487 = vadd.f32 %v5975, %v6186
    %v6488 = vadd.f32 %v5976, %v6188
    %v6489 = vadd.f32 %v5977, %v6190
    %v6490 = vadd.f32 %v5978, %v6192
    %v6491 = vadd.f32 %v5979, %v6194
    %v6492 = vadd.f32 %v5980, %v6196
    %v6493 = vadd.f32 %v5981, %v6198
    %v6494 = vadd.f32 %v5982, %v6200
    %v6495 = vadd.f32 %v5983, %v6202
    %v6496 = vadd.f32 %v5984, %v6204
    %v6497 = vadd.f32 %v5985, %v6206
    %v6498 = vadd.f32 %v5986, %v6208
    %v6499 = vadd.f32 %v5987, %v6210
    %v6500 = vadd.f32 %v5988, %v6212
    %v6501 = vadd.f32 %v5989, %v6214
    %v6502 = vadd.f32 %v5990, %v6216
    %v6503 = vadd.f32 %v5991, %v6218
    %v6504 = vadd.f32 %v5992, %v6220
    %v6505 = vadd.f32 %v5993, %v6222
    %v6506 = vadd.f32 %v5994, %v6224
    %v6507 = vadd.f32 %v5995, %v6226
    %v6508 = vadd.f32 %v5996, %v6228
    %v6509 = vadd.f32 %v5997, %v6230
    %v6510 = vadd.f32 %v5998, %v6232
    %v6511 = vadd.f32 %v5999, %v6234
    %v6512 = vadd.f32 %v6000, %v6236
    %v6513 = vadd.f32 %v6001, %v6238
    %v6514 = vadd.f32 %v6002, %v6240
    %v6515 = vadd.f32 %v6003, %v6242
    %v6516 = vadd.f32 %v6004, %v6244
    %v6517 = vadd.f32 %v6005, %v6246
    %v6518 = vadd.f32 %v6006, %v6248
    %v6519 = vadd.f32 %v6007, %v6250
    %v6520 = vadd.f32 %v6008, %v6252
    %v6521 = vadd.f32 %v6009, %v6254
    %v6522 = vadd.f32 %v6010, %v6256
    %v6523 = vadd.f32 %v6011, %v6258
    %v6524 = vadd.f32 %v6012, %v6260
    %v6525 = vadd.f32 %v6013, %v6262
    %v6526 = vadd.f32 %v6014, %v6264
    %v6527 = vadd.f32 %v6015, %v6266
    %v6528 = vadd.f32 %v6016, %v6268
    %v6529 = vadd.f32 %v6017, %v6270
    %v6530 = vadd.f32 %v6018, %v6272
    %v6531 = vadd.f32 %v6019, %v6274
    %v6532 = vadd.f32 %v6020, %v6276
    %v6533 = vmul.f32 %v6405, 0.25
    %v6534 = vmul.f32 %v6406, 0.25
    %v6535 = vmul.f32 %v6407, 0.25
    %v6536 = vmul.f32 %v6408, 0.25
    %v6537 = vmul.f32 %v6409, 0.25
    %v6538 = vmul.f32 %v6410, 0.25
    %v6539 = vmul.f32 %v6411, 0.25
    %v6540 = vmul.f32 %v6412, 0.25
    %v6541 = vmul.f32 %v6413, 0.25
    %v6542 = vmul.f32 %v6414, 0.25
    %v6543 = vmul.f32 %v6415, 0.25
    %v6544 = vmul.f32 %v6416, 0.25
    %v6545 = vmul.f32 %v6417, 0.25
    %v6546 = vmul.f32 %v6418, 0.25
    %v6547 = vmul.f32 %v6419, 0.25
    %v6548 = vmul.f32 %v6420, 0.25
    %v6549 = vmul.f32 %v6421, 0.25
    %v6550 = vmul.f32 %v6422, 0.25
    %v6551 = vmul.f32 %v6423, 0.25
    %v6552 = vmul.f32 %v6424, 0.25
    %v6553 = vmul.f32 %v6425, 0.25
    %v6554 = vmul.f32 %v6426, 0.25
    %v6555 = vmul.f32 %v6427, 0.25
    %v6556 = vmul.f32 %v6428, 0.25
    %v6557 = vmul.f32 %v6429, 0.25
    %v6558 = vmul.f32 %v6430, 0.25
    %v6559 = vmul.f32 %v6431, 0.25
    %v6560 = vmul.f32 %v6432, 0.25
    %v6561 = vmul.f32 %v6433, 0.25
    %v6562 = vmul.f32 %v6434, 0.25
    %v6563 = vmul.f32 %v6435, 0.25
    %v6564 = vmul.f32 %v6436, 0.25
    %v6565 = vmul.f32 %v6437, 0.25
    %v6566 = vmul.f32 %v6438, 0.25
    %v6567 = vmul.f32 %v6439, 0.25
    %v6568 = vmul.f32 %v6440, 0.25
    %v6569 = vmul.f32 %v6441, 0.25
    %v6570 = vmul.f32 %v6442, 0.25
    %v6571 = vmul.f32 %v6443, 0.25
    %v6572 = vmul.f32 %v6444, 0.25
    %v6573 = vmul.f32 %v6445, 0.25
    %v6574 = vmul.f32 %v6446, 0.25
    %v6575 = vmul.f32 %v6447, 0.25
    %v6576 = vmul.f32 %v6448, 0.25
    %v6577 = vmul.f32 %v6449, 0.25
    %v6578 = vmul.f32 %v6450, 0.25
    %v6579 = vmul.f32 %v6451, 0.25
    %v6580 = vmul.f32 %v6452, 0.25
    %v6581 = vmul.f32 %v6453, 0.25
    %v6582 = vmul.f32 %v6454, 0.25
    %v6583 = vmul.f32 %v6455, 0.25
    %v6584 = vmul.f32 %v6456, 0.25
    %v6585 = vmul.f32 %v6457, 0.25
    %v6586 = vmul.f32 %v6458, 0.25
    %v6587 = vmul.f32 %v6459, 0.25
    %v6588 = vmul.f32 %v6460, 0.25
    %v6589 = vmul.f32 %v6461, 0.25
    %v6590 = vmul.f32 %v6462, 0.25
    %v6591 = vmul.f32 %v6463, 0.25
    %v6592 = vmul.f32 %v6464, 0.25
    %v6593 = vmul.f32 %v6465, 0.25
    %v6594 = vmul.f32 %v6466, 0.25
    %v6595 = vmul.f32 %v6467, 0.25
    %v6596 = vmul.f32 %v6468, 0.25
    %v6597 = vmul.f32 %v6469, 0.25
    %v6598 = vmul.f32 %v6470, 0.25
    %v6599 = vmul.f32 %v6471, 0.25
    %v6600 = vmul.f32 %v6472, 0.25
    %v6601 = vmul.f32 %v6473, 0.25
    %v6602 = vmul.f32 %v6474, 0.25
    %v6603 = vmul.f32 %v6475, 0.25
    %v6604 = vmul.f32 %v6476, 0.25
    %v6605 = vmul.f32 %v6477, 0.25
    %v6606 = vmul.f32 %v6478, 0.25
    %v6607 = vmul.f32 %v6479, 0.25
    %v6608 = vmul.f32 %v6480, 0.25
    %v6609 = vmul.f32 %v6481, 0.25
    %v6610 = vmul.f32 %v6482, 0.25
    %v6611 = vmul.f32 %v6483, 0.25
    %v6612 = vmul.f32 %v6484, 0.25
    %v6613 = vmul.f32 %v6485, 0.25
    %v6614 = vmul.f32 %v6486, 0.25
    %v6615 = vmul.f32 %v6487, 0.25
    %v6616 = vmul.f32 %v6488, 0.25
    %v6617 = vmul.f32 %v6489, 0.25
    %v6618 = vmul.f32 %v6490, 0.25
    %v6619 = vmul.f32 %v6491, 0.25
    %v6620 = vmul.f32 %v6492, 0.25
    %v6621 = vmul.f32 %v6493, 0.25
    %v6622 = vmul.f32 %v6494, 0.25
    %v6623 = vmul.f32 %v6495, 0.25
    %v6624 = vmul.f32 %v6496, 0.25
    %v6625 = vmul.f32 %v6497, 0.25
    %v6626 = vmul.f32 %v6498, 0.25
    %v6627 = vmul.f32 %v6499, 0.25
    %v6628 = vmul.f32 %v6500, 0.25
    %v6629 = vmul.f32 %v6501, 0.25
    %v6630 = vmul.f32 %v6502, 0.25
    %v6631 = vmul.f32 %v6503, 0.25
    %v6632 = vmul.f32 %v6504, 0.25
    %v6633 = vmul.f32 %v6505, 0.25
    %v6634 = vmul.f32 %v6506, 0.25
    %v6635 = vmul.f32 %v6507, 0.25
    %v6636 = vmul.f32 %v6508, 0.25
    %v6637 = vmul.f32 %v6509, 0.25
    %v6638 = vmul.f32 %v6510, 0.25
    %v6639 = vmul.f32 %v6511, 0.25
    %v6640 = vmul.f32 %v6512, 0.25
    %v6641 = vmul.f32 %v6513, 0.25
    %v6642 = vmul.f32 %v6514, 0.25
    %v6643 = vmul.f32 %v6515, 0.25
    %v6644 = vmul.f32 %v6516, 0.25
    %v6645 = vmul.f32 %v6517, 0.25
    %v6646 = vmul.f32 %v6518, 0.25
    %v6647 = vmul.f32 %v6519, 0.25
    %v6648 = vmul.f32 %v6520, 0.25
    %v6649 = vmul.f32 %v6521, 0.25
    %v6650 = vmul.f32 %v6522, 0.25
    %v6651 = vmul.f32 %v6523, 0.25
    %v6652 = vmul.f32 %v6524, 0.25
    %v6653 = vmul.f32 %v6525, 0.25
    %v6654 = vmul.f32 %v6526, 0.25
    %v6655 = vmul.f32 %v6527, 0.25
    %v6656 = vmul.f32 %v6528, 0.25
    %v6657 = vmul.f32 %v6529, 0.25
    %v6658 = vmul.f32 %v6530, 0.25
    %v6659 = vmul.f32 %v6531, 0.25
    %v6660 = vmul.f32 %v6532, 0.25
    %v6661 = vmax.f32 %v6533, 0.0
    %v6662 = vmax.f32 %v6534, 0.0
    %v6663 = vmax.f32 %v6535, 0.0
    %v6664 = vmax.f32 %v6536, 0.0
    %v6665 = vmax.f32 %v6537, 0.0
    %v6666 = vmax.f32 %v6538, 0.0
    %v6667 = vmax.f32 %v6539, 0.0
    %v6668 = vmax.f32 %v6540, 0.0
    %v6669 = vmax.f32 %v6541, 0.0
    %v6670 = vmax.f32 %v6542, 0.0
    %v6671 = vmax.f32 %v6543, 0.0
    %v6672 = vmax.f32 %v6544, 0.0
    %v6673 = vmax.f32 %v6545, 0.0
    %v6674 = vmax.f32 %v6546, 0.0
    %v6675 = vmax.f32 %v6547, 0.0
    %v6676 = vmax.f32 %v6548, 0.0
    %v6677 = vmax.f32 %v6549, 0.0
    %v6678 = vmax.f32 %v6550, 0.0
    %v6679 = vmax.f32 %v6551, 0.0
    %v6680 = vmax.f32 %v6552, 0.0
    %v6681 = vmax.f32 %v6553, 0.0
    %v6682 = vmax.f32 %v6554, 0.0
    %v6683 = vmax.f32 %v6555, 0.0
    %v6684 = vmax.f32 %v6556, 0.0
    %v6685 = vmax.f32 %v6557, 0.0
    %v6686 = vmax.f32 %v6558, 0.0
    %v6687 = vmax.f32 %v6559, 0.0
    %v6688 = vmax.f32 %v6560, 0.0
    %v6689 = vmax.f32 %v6561, 0.0
    %v6690 = vmax.f32 %v6562, 0.0
    %v6691 = vmax.f32 %v6563, 0.0
    %v6692 = vmax.f32 %v6564, 0.0
    %v6693 = vmax.f32 %v6565, 0.0
    %v6694 = vmax.f32 %v6566, 0.0
    %v6695 = vmax.f32 %v6567, 0.0
    %v6696 = vmax.f32 %v6568, 0.0
    %v6697 = vmax.f32 %v6569, 0.0
    %v6698 = vmax.f32 %v6570, 0.0
    %v6699 = vmax.f32 %v6571, 0.0
    %v6700 = vmax.f32 %v6572, 0.0
    %v6701 = vmax.f32 %v6573, 0.0
    %v6702 = vmax.f32 %v6574, 0.0
    %v6703 = vmax.f32 %v6575, 0.0
    %v6704 = vmax.f32 %v6576, 0.0
    %v6705 = vmax.f32 %v6577, 0.0
    %v6706 = vmax.f32 %v6578, 0.0
    %v6707 = vmax.f32 %v6579, 0.0
    %v6708 = vmax.f32 %v6580, 0.0
    %v6709 = vmax.f32 %v6581, 0.0
    %v6710 = vmax.f32 %v6582, 0.0
    %v6711 = vmax.f32 %v6583, 0.0
    %v6712 = vmax.f32 %v6584, 0.0
    %v6713 = vmax.f32 %v6585, 0.0
    %v6714 = vmax.f32 %v6586, 0.0
    %v6715 = vmax.f32 %v6587, 0.0
    %v6716 = vmax.f32 %v6588, 0.0
    %v6717 = vmax.f32 %v6589, 0.0
    %v6718 = vmax.f32 %v6590, 0.0
    %v6719 = vmax.f32 %v6591, 0.0
    %v6720 = vmax.f32 %v6592, 0.0
    %v6721 = vmax.f32 %v6593, 0.0
    %v6722 = vmax.f32 %v6594, 0.0
    %v6723 = vmax.f32 %v6595, 0.0
    %v6724 = vmax.f32 %v6596, 0.0
    %v6725 = vmax.f32 %v6597, 0.0
    %v6726 = vmax.f32 %v6598, 0.0
    %v6727 = vmax.f32 %v6599, 0.0
    %v6728 = vmax.f32 %v6600, 0.0
    %v6729 = vmax.f32 %v6601, 0.0
    %v6730 = vmax.f32 %v6602, 0.0
    %v6731 = vmax.f32 %v6603, 0.0
    %v6732 = vmax.f32 %v6604, 0.0
    %v6733 = vmax.f32 %v6605, 0.0
    %v6734 = vmax.f32 %v6606, 0.0
    %v6735 = vmax.f32 %v6607, 0.0
    %v6736 = vmax.f32 %v6608, 0.0
    %v6737 = vmax.f32 %v6609, 0.0
    %v6738 = vmax.f32 %v6610, 0.0
    %v6739 = vmax.f32 %v6611, 0.0
    %v6740 = vmax.f32 %v6612, 0.0
    %v6741 = vmax.f32 %v6613, 0.0
    %v6742 = vmax.f32 %v6614, 0.0
    %v6743 = vmax.f32 %v6615, 0.0
    %v6744 = vmax.f32 %v6616, 0.0
    %v6745 = vmax.f32 %v6617, 0.0
    %v6746 = vmax.f32 %v6618, 0.0
    %v6747 = vmax.f32 %v6619, 0.0
    %v6748 = vmax.f32 %v6620, 0.0
    %v6749 = vmax.f32 %v6621, 0.0
    %v6750 = vmax.f32 %v6622, 0.0
    %v6751 = vmax.f32 %v6623, 0.0
    %v6752 = vmax.f32 %v6624, 0.0
    %v6753 = vmax.f32 %v6625, 0.0
    %v6754 = vmax.f32 %v6626, 0.0
    %v6755 = vmax.f32 %v6627, 0.0
    %v6756 = vmax.f32 %v6628, 0.0
    %v6757 = vmax.f32 %v6629, 0.0
    %v6758 = vmax.f32 %v6630, 0.0
    %v6759 = vmax.f32 %v6631, 0.0
    %v6760 = vmax.f32 %v6632, 0.0
    %v6761 = vmax.f32 %v6633, 0.0
    %v6762 = vmax.f32 %v6634, 0.0
    %v6763 = vmax.f32 %v6635, 0.0
    %v6764 = vmax.f32 %v6636, 0.0
    %v6765 = vmax.f32 %v6637, 0.0
    %v6766 = vmax.f32 %v6638, 0.0
    %v6767 = vmax.f32 %v6639, 0.0
    %v6768 = vmax.f32 %v6640, 0.0
    %v6769 = vmax.f32 %v6641, 0.0
    %v6770 = vmax.f32 %v6642, 0.0
    %v6771 = vmax.f32 %v6643, 0.0
    %v6772 = vmax.f32 %v6644, 0.0
    %v6773 = vmax.f32 %v6645, 0.0
    %v6774 = vmax.f32 %v6646, 0.0
    %v6775 = vmax.f32 %v6647, 0.0
    %v6776 = vmax.f32 %v6648, 0.0
    %v6777 = vmax.f32 %v6649, 0.0
    %v6778 = vmax.f32 %v6650, 0.0
    %v6779 = vmax.f32 %v6651, 0.0
    %v6780 = vmax.f32 %v6652, 0.0
    %v6781 = vmax.f32 %v6653, 0.0
    %v6782 = vmax.f32 %v6654, 0.0
    %v6783 = vmax.f32 %v6655, 0.0
    %v6784 = vmax.f32 %v6656, 0.0
    %v6785 = vmax.f32 %v6657, 0.0
    %v6786 = vmax.f32 %v6658, 0.0
    %v6787 = vmax.f32 %v6659, 0.0
    %v6788 = vmax.f32 %v6660, 0.0
    %v6789 = vmin.f32 %v6661, 6.0
    %v6790 = vmin.f32 %v6662, 6.0
    %v6791 = vmin.f32 %v6663, 6.0
    %v6792 = vmin.f32 %v6664, 6.0
    %v6793 = vmin.f32 %v6665, 6.0
    %v6794 = vmin.f32 %v6666, 6.0
    %v6795 = vmin.f32 %v6667, 6.0
    %v6796 = vmin.f32 %v6668, 6.0
    %v6797 = vmin.f32 %v6669, 6.0
    %v6798 = vmin.f32 %v6670, 6.0
    %v6799 = vmin.f32 %v6671, 6.0
    %v6800 = vmin.f32 %v6672, 6.0
    %v6801 = vmin.f32 %v6673, 6.0
    %v6802 = vmin.f32 %v6674, 6.0
    %v6803 = vmin.f32 %v6675, 6.0
    %v6804 = vmin.f32 %v6676, 6.0
    %v6805 = vmin.f32 %v6677, 6.0
    %v6806 = vmin.f32 %v6678, 6.0
    %v6807 = vmin.f32 %v6679, 6.0
    %v6808 = vmin.f32 %v6680, 6.0
    %v6809 = vmin.f32 %v6681, 6.0
    %v6810 = vmin.f32 %v6682, 6.0
    %v6811 = vmin.f32 %v6683, 6.0
    %v6812 = vmin.f32 %v6684, 6.0
    %v6813 = vmin.f32 %v6685, 6.0
    %v6814 = vmin.f32 %v6686, 6.0
    %v6815 = vmin.f32 %v6687, 6.0
    %v6816 = vmin.f32 %v6688, 6.0
    %v6817 = vmin.f32 %v6689, 6.0
    %v6818 = vmin.f32 %v6690, 6.0
    %v6819 = vmin.f32 %v6691, 6.0
    %v6820 = vmin.f32 %v6692, 6.0
    %v6821 = vmin.f32 %v6693, 6.0
    %v6822 = vmin.f32 %v6694, 6.0
    %v6823 = vmin.f32 %v6695, 6.0
    %v6824 = vmin.f32 %v6696, 6.0
    %v6825 = vmin.f32 %v6697, 6.0
    %v6826 = vmin.f32 %v6698, 6.0
    %v6827 = vmin.f32 %v6699, 6.0
    %v6828 = vmin.f32 %v6700, 6.0
    %v6829 = vmin.f32 %v6701, 6.0
    %v6830 = vmin.f32 %v6702, 6.0
    %v6831 = vmin.f32 %v6703, 6.0
    %v6832 = vmin.f32 %v6704, 6.0
    %v6833 = vmin.f32 %v6705, 6.0
    %v6834 = vmin.f32 %v6706, 6.0
    %v6835 = vmin.f32 %v6707, 6.0
    %v6836 = vmin.f32 %v6708, 6.0
    %v6837 = vmin.f32 %v6709, 6.0
    %v6838 = vmin.f32 %v6710, 6.0
    %v6839 = vmin.f32 %v6711, 6.0
    %v6840 = vmin.f32 %v6712, 6.0
    %v6841 = vmin.f32 %v6713, 6.0
    %v6842 = vmin.f32 %v6714, 6.0
    %v6843 = vmin.f32 %v6715, 6.0
    %v6844 = vmin.f32 %v6716, 6.0
    %v6845 = vmin.f32 %v6717, 6.0
    %v6846 = vmin.f32 %v6718, 6.0
    %v6847 = vmin.f32 %v6719, 6.0
    %v6848 = vmin.f32 %v6720, 6.0
    %v6849 = vmin.f32 %v6721, 6.0
    %v6850 = vmin.f32 %v6722, 6.0
    %v6851 = vmin.f32 %v6723, 6.0
    %v6852 = vmin.f32 %v6724, 6.0
    %v6853 = vmin.f32 %v6725, 6.0
    %v6854 = vmin.f32 %v6726, 6.0
    %v6855 = vmin.f32 %v6727, 6.0
    %v6856 = vmin.f32 %v6728, 6.0
    %v6857 = vmin.f32 %v6729, 6.0
    %v6858 = vmin.f32 %v6730, 6.0
    %v6859 = vmin.f32 %v6731, 6.0
    %v6860 = vmin.f32 %v6732, 6.0
    %v6861 = vmin.f32 %v6733, 6.0
    %v6862 = vmin.f32 %v6734, 6.0
    %v6863 = vmin.f32 %v6735, 6.0
    %v6864 = vmin.f32 %v6736, 6.0
    %v6865 = vmin.f32 %v6737, 6.0
    %v6866 = vmin.f32 %v6738, 6.0
    %v6867 = vmin.f32 %v6739, 6.0
    %v6868 = vmin.f32 %v6740, 6.0
    %v6869 = vmin.f32 %v6741, 6.0
    %v6870 = vmin.f32 %v6742, 6.0
    %v6871 = vmin.f32 %v6743, 6.0
    %v6872 = vmin.f32 %v6744, 6.0
    %v6873 = vmin.f32 %v6745, 6.0
    %v6874 = vmin.f32 %v6746, 6.0
    %v6875 = vmin.f32 %v6747, 6.0
    %v6876 = vmin.f32 %v6748, 6.0
    %v6877 = vmin.f32 %v6749, 6.0
    %v6878 = vmin.f32 %v6750, 6.0
    %v6879 = vmin.f32 %v6751, 6.0
    %v6880 = vmin.f32 %v6752, 6.0
    %v6881 = vmin.f32 %v6753, 6.0
    %v6882 = vmin.f32 %v6754, 6.0
    %v6883 = vmin.f32 %v6755, 6.0
    %v6884 = vmin.f32 %v6756, 6.0
    %v6885 = vmin.f32 %v6757, 6.0
    %v6886 = vmin.f32 %v6758, 6.0
    %v6887 = vmin.f32 %v6759, 6.0
    %v6888 = vmin.f32 %v6760, 6.0
    %v6889 = vmin.f32 %v6761, 6.0
    %v6890 = vmin.f32 %v6762, 6.0
    %v6891 = vmin.f32 %v6763, 6.0
    %v6892 = vmin.f32 %v6764, 6.0
    %v6893 = vmin.f32 %v6765, 6.0
    %v6894 = vmin.f32 %v6766, 6.0
    %v6895 = vmin.f32 %v6767, 6.0
    %v6896 = vmin.f32 %v6768, 6.0
    %v6897 = vmin.f32 %v6769, 6.0
    %v6898 = vmin.f32 %v6770, 6.0
    %v6899 = vmin.f32 %v6771, 6.0
    %v6900 = vmin.f32 %v6772, 6.0
    %v6901 = vmin.f32 %v6773, 6.0
    %v6902 = vmin.f32 %v6774, 6.0
    %v6903 = vmin.f32 %v6775, 6.0
    %v6904 = vmin.f32 %v6776, 6.0
    %v6905 = vmin.f32 %v6777, 6.0
    %v6906 = vmin.f32 %v6778, 6.0
    %v6907 = vmin.f32 %v6779, 6.0
    %v6908 = vmin.f32 %v6780, 6.0
    %v6909 = vmin.f32 %v6781, 6.0
    %v6910 = vmin.f32 %v6782, 6.0
    %v6911 = vmin.f32 %v6783, 6.0
    %v6912 = vmin.f32 %v6784, 6.0
    %v6913 = vmin.f32 %v6785, 6.0
    %v6914 = vmin.f32 %v6786, 6.0
    %v6915 = vmin.f32 %v6787, 6.0
    %v6916 = vmin.f32 %v6788, 6.0
    %vm6917 = vcmask 261120
    %6918 = vst.msk [vmem:[#allocation3] sm:$0xff] %vm6917, 0.0
    %vm6919 = vcmask 257024
    %6920 = vst.msk [vmem:[#allocation3 + $0x8] sm:$0xf] %vm6919, 0.0
    %6921 = vst.msk [vmem:[#allocation3 + $0x10] sm:$0xff] %vm6917, 0.0
    %6922 = vst.msk [vmem:[#allocation3 + $0x18] sm:$0xf] %vm6919, 0.0
    %6923 = vst.msk [vmem:[#allocation3 + $0xc0] sm:$0xff] %vm6917, 0.0
    %6924 = vst.msk [vmem:[#allocation3 + $0xc8] sm:$0xf] %vm6919, 0.0
    %6925 = vst.msk [vmem:[#allocation3 + $0xd0] sm:$0xff] %vm6917, 0.0
    %6926 = vst.msk [vmem:[#allocation3 + $0xd8] sm:$0xf] %vm6919, 0.0
    %s6927 = scalar_lea.vmem [#allocation3], 160
    %6928 = vst.msk [vmem:[%s6927] sm:$0xff] %vm6917, 0.0
    %6929 = vst.msk [vmem:[%s6927 + $0x8] sm:$0xf] %vm6919, 0.0
    %6930 = vst.msk [vmem:[%s6927 + $0x10] sm:$0xff] %vm6917, 0.0
    %6931 = vst.msk [vmem:[%s6927 + $0x18] sm:$0xf] %vm6919, 0.0
    %6932 = vst.msk [vmem:[%s6927 + $0xc0] sm:$0xff] %vm6917, 0.0
    %6933 = vst.msk [vmem:[%s6927 + $0xc8] sm:$0xf] %vm6919, 0.0
    %6934 = vst.msk [vmem:[%s6927 + $0xd0] sm:$0xff] %vm6917, 0.0
    %6935 = vst.msk [vmem:[%s6927 + $0xd8] sm:$0xf] %vm6919, 0.0
    %s6936 = scalar_lea.vmem [#allocation3], 32
    %vm6937 = vcmask 254976
    %6938 = vst.msk [vmem:[%s6936] sm:$0x3] %vm6937, 0.0
    %6939 = vst.msk [vmem:[%s6936 + $0x10] sm:$0x3] %vm6937, 0.0
    %6940 = vst.msk [vmem:[%s6936 + $0x20] sm:$0x3] %vm6937, 0.0
    %6941 = vst.msk [vmem:[%s6936 + $0x30] sm:$0x3] %vm6937, 0.0
    %6942 = vst.msk [vmem:[%s6936 + $0x40] sm:$0x3] %vm6937, 0.0
    %6943 = vst.msk [vmem:[%s6936 + $0x50] sm:$0x3] %vm6937, 0.0
    %6944 = vst.msk [vmem:[%s6936 + $0x60] sm:$0x3] %vm6937, 0.0
    %6945 = vst.msk [vmem:[%s6936 + $0x70] sm:$0x3] %vm6937, 0.0
    %6946 = vst.msk [vmem:[%s6936 + $0xc0] sm:$0x3] %vm6937, 0.0
    %6947 = vst.msk [vmem:[%s6936 + $0xd0] sm:$0x3] %vm6937, 0.0
    %6948 = vst.msk [vmem:[%s6936 + $0xe0] sm:$0x3] %vm6937, 0.0
    %6949 = vst.msk [vmem:[%s6936 + $0xf0] sm:$0x3] %vm6937, 0.0
    %6950 = vst.msk [vmem:[%s6936 + $0x100] sm:$0x3] %vm6937, 0.0
    %6951 = vst.msk [vmem:[%s6936 + $0x110] sm:$0x3] %vm6937, 0.0
    %6952 = vst.msk [vmem:[%s6936 + $0x120] sm:$0x3] %vm6937, 0.0
    %6953 = vst.msk [vmem:[%s6936 + $0x130] sm:$0x3] %vm6937, 0.0
    %6954 = vst.msk [vmem:[%s6936 + $0xa] sm:$0x3] %vm6937, 0.0
    %6955 = vst.msk [vmem:[%s6936 + $0x1a] sm:$0x3] %vm6937, 0.0
    %6956 = vst.msk [vmem:[%s6936 + $0x2a] sm:$0x3] %vm6937, 0.0
    %6957 = vst.msk [vmem:[%s6936 + $0x3a] sm:$0x3] %vm6937, 0.0
    %6958 = vst.msk [vmem:[%s6936 + $0x4a] sm:$0x3] %vm6937, 0.0
    %6959 = vst.msk [vmem:[%s6936 + $0x5a] sm:$0x3] %vm6937, 0.0
    %6960 = vst.msk [vmem:[%s6936 + $0x6a] sm:$0x3] %vm6937, 0.0
    %6961 = vst.msk [vmem:[%s6936 + $0x7a] sm:$0x3] %vm6937, 0.0
    %6962 = vst.msk [vmem:[%s6936 + $0xca] sm:$0x3] %vm6937, 0.0
    %6963 = vst.msk [vmem:[%s6936 + $0xda] sm:$0x3] %vm6937, 0.0
    %6964 = vst.msk [vmem:[%s6936 + $0xea] sm:$0x3] %vm6937, 0.0
    %6965 = vst.msk [vmem:[%s6936 + $0xfa] sm:$0x3] %vm6937, 0.0
    %6966 = vst.msk [vmem:[%s6936 + $0x10a] sm:$0x3] %vm6937, 0.0
    %6967 = vst.msk [vmem:[%s6936 + $0x11a] sm:$0x3] %vm6937, 0.0
    %6968 = vst.msk [vmem:[%s6936 + $0x12a] sm:$0x3] %vm6937, 0.0
    %6969 = vst.msk [vmem:[%s6936 + $0x13a] sm:$0x3] %vm6937, 0.0
    %v7098 = vlaneseq
    %v7099 = vshrl.u32 %v7098, 7
    %v7100 = vsub.s32 0, %v7099
    %v7101 = vrot.slane %v6789, %v7100
    %v7102 = vlaneseq
    %v7103 = vshrl.u32 %v7102, 7
    %v7104 = vsub.s32 0, %v7103
    %v7105 = vrot.slane %v6790, %v7104
    %v7106 = vlaneseq
    %v7107 = vshrl.u32 %v7106, 7
    %v7108 = vsub.s32 0, %v7107
    %v7109 = vrot.slane %v6791, %v7108
    %v7110 = vlaneseq
    %v7111 = vshrl.u32 %v7110, 7
    %v7112 = vsub.s32 0, %v7111
    %v7113 = vrot.slane %v6792, %v7112
    %v7114 = vlaneseq
    %v7115 = vshrl.u32 %v7114, 7
    %v7116 = vsub.s32 0, %v7115
    %v7117 = vrot.slane %v6793, %v7116
    %v7118 = vlaneseq
    %v7119 = vshrl.u32 %v7118, 7
    %v7120 = vsub.s32 0, %v7119
    %v7121 = vrot.slane %v6794, %v7120
    %v7122 = vlaneseq
    %v7123 = vshrl.u32 %v7122, 7
    %v7124 = vsub.s32 0, %v7123
    %v7125 = vrot.slane %v6795, %v7124
    %v7126 = vlaneseq
    %v7127 = vshrl.u32 %v7126, 7
    %v7128 = vsub.s32 0, %v7127
    %v7129 = vrot.slane %v6796, %v7128
    %v7130 = vlaneseq
    %v7131 = vshrl.u32 %v7130, 7
    %v7132 = vsub.s32 0, %v7131
    %v7133 = vrot.slane %v6797, %v7132
    %v7134 = vlaneseq
    %v7135 = vshrl.u32 %v7134, 7
    %v7136 = vsub.s32 0, %v7135
    %v7137 = vrot.slane %v6798, %v7136
    %v7138 = vlaneseq
    %v7139 = vshrl.u32 %v7138, 7
    %v7140 = vsub.s32 0, %v7139
    %v7141 = vrot.slane %v6799, %v7140
    %v7142 = vlaneseq
    %v7143 = vshrl.u32 %v7142, 7
    %v7144 = vsub.s32 0, %v7143
    %v7145 = vrot.slane %v6800, %v7144
    %v7146 = vlaneseq
    %v7147 = vshrl.u32 %v7146, 7
    %v7148 = vsub.s32 0, %v7147
    %v7149 = vrot.slane %v6801, %v7148
    %v7150 = vlaneseq
    %v7151 = vshrl.u32 %v7150, 7
    %v7152 = vsub.s32 0, %v7151
    %v7153 = vrot.slane %v6802, %v7152
    %v7154 = vlaneseq
    %v7155 = vshrl.u32 %v7154, 7
    %v7156 = vsub.s32 0, %v7155
    %v7157 = vrot.slane %v6803, %v7156
    %v7158 = vlaneseq
    %v7159 = vshrl.u32 %v7158, 7
    %v7160 = vsub.s32 0, %v7159
    %v7161 = vrot.slane %v6804, %v7160
    %v7162 = vlaneseq
    %v7163 = vshrl.u32 %v7162, 7
    %v7164 = vsub.s32 0, %v7163
    %v7165 = vrot.slane %v6805, %v7164
    %v7166 = vlaneseq
    %v7167 = vshrl.u32 %v7166, 7
    %v7168 = vsub.s32 0, %v7167
    %v7169 = vrot.slane %v6806, %v7168
    %v7170 = vlaneseq
    %v7171 = vshrl.u32 %v7170, 7
    %v7172 = vsub.s32 0, %v7171
    %v7173 = vrot.slane %v6807, %v7172
    %v7174 = vlaneseq
    %v7175 = vshrl.u32 %v7174, 7
    %v7176 = vsub.s32 0, %v7175
    %v7177 = vrot.slane %v6808, %v7176
    %v7178 = vlaneseq
    %v7179 = vshrl.u32 %v7178, 7
    %v7180 = vsub.s32 0, %v7179
    %v7181 = vrot.slane %v6809, %v7180
    %v7182 = vlaneseq
    %v7183 = vshrl.u32 %v7182, 7
    %v7184 = vsub.s32 0, %v7183
    %v7185 = vrot.slane %v6810, %v7184
    %v7186 = vlaneseq
    %v7187 = vshrl.u32 %v7186, 7
    %v7188 = vsub.s32 0, %v7187
    %v7189 = vrot.slane %v6811, %v7188
    %v7190 = vlaneseq
    %v7191 = vshrl.u32 %v7190, 7
    %v7192 = vsub.s32 0, %v7191
    %v7193 = vrot.slane %v6812, %v7192
    %v7194 = vlaneseq
    %v7195 = vshrl.u32 %v7194, 7
    %v7196 = vsub.s32 0, %v7195
    %v7197 = vrot.slane %v6813, %v7196
    %v7198 = vlaneseq
    %v7199 = vshrl.u32 %v7198, 7
    %v7200 = vsub.s32 0, %v7199
    %v7201 = vrot.slane %v6814, %v7200
    %v7202 = vlaneseq
    %v7203 = vshrl.u32 %v7202, 7
    %v7204 = vsub.s32 0, %v7203
    %v7205 = vrot.slane %v6815, %v7204
    %v7206 = vlaneseq
    %v7207 = vshrl.u32 %v7206, 7
    %v7208 = vsub.s32 0, %v7207
    %v7209 = vrot.slane %v6816, %v7208
    %v7210 = vlaneseq
    %v7211 = vshrl.u32 %v7210, 7
    %v7212 = vsub.s32 0, %v7211
    %v7213 = vrot.slane %v6817, %v7212
    %v7214 = vlaneseq
    %v7215 = vshrl.u32 %v7214, 7
    %v7216 = vsub.s32 0, %v7215
    %v7217 = vrot.slane %v6818, %v7216
    %v7218 = vlaneseq
    %v7219 = vshrl.u32 %v7218, 7
    %v7220 = vsub.s32 0, %v7219
    %v7221 = vrot.slane %v6819, %v7220
    %v7222 = vlaneseq
    %v7223 = vshrl.u32 %v7222, 7
    %v7224 = vsub.s32 0, %v7223
    %v7225 = vrot.slane %v6820, %v7224
    %v7226 = vlaneseq
    %v7227 = vshrl.u32 %v7226, 7
    %v7228 = vsub.s32 0, %v7227
    %v7229 = vrot.slane %v6821, %v7228
    %v7230 = vlaneseq
    %v7231 = vshrl.u32 %v7230, 7
    %v7232 = vsub.s32 0, %v7231
    %v7233 = vrot.slane %v6822, %v7232
    %v7234 = vlaneseq
    %v7235 = vshrl.u32 %v7234, 7
    %v7236 = vsub.s32 0, %v7235
    %v7237 = vrot.slane %v6823, %v7236
    %v7238 = vlaneseq
    %v7239 = vshrl.u32 %v7238, 7
    %v7240 = vsub.s32 0, %v7239
    %v7241 = vrot.slane %v6824, %v7240
    %v7242 = vlaneseq
    %v7243 = vshrl.u32 %v7242, 7
    %v7244 = vsub.s32 0, %v7243
    %v7245 = vrot.slane %v6825, %v7244
    %v7246 = vlaneseq
    %v7247 = vshrl.u32 %v7246, 7
    %v7248 = vsub.s32 0, %v7247
    %v7249 = vrot.slane %v6826, %v7248
    %v7250 = vlaneseq
    %v7251 = vshrl.u32 %v7250, 7
    %v7252 = vsub.s32 0, %v7251
    %v7253 = vrot.slane %v6827, %v7252
    %v7254 = vlaneseq
    %v7255 = vshrl.u32 %v7254, 7
    %v7256 = vsub.s32 0, %v7255
    %v7257 = vrot.slane %v6828, %v7256
    %v7258 = vlaneseq
    %v7259 = vshrl.u32 %v7258, 7
    %v7260 = vsub.s32 0, %v7259
    %v7261 = vrot.slane %v6829, %v7260
    %v7262 = vlaneseq
    %v7263 = vshrl.u32 %v7262, 7
    %v7264 = vsub.s32 0, %v7263
    %v7265 = vrot.slane %v6830, %v7264
    %v7266 = vlaneseq
    %v7267 = vshrl.u32 %v7266, 7
    %v7268 = vsub.s32 0, %v7267
    %v7269 = vrot.slane %v6831, %v7268
    %v7270 = vlaneseq
    %v7271 = vshrl.u32 %v7270, 7
    %v7272 = vsub.s32 0, %v7271
    %v7273 = vrot.slane %v6832, %v7272
    %v7274 = vlaneseq
    %v7275 = vshrl.u32 %v7274, 7
    %v7276 = vsub.s32 0, %v7275
    %v7277 = vrot.slane %v6833, %v7276
    %v7278 = vlaneseq
    %v7279 = vshrl.u32 %v7278, 7
    %v7280 = vsub.s32 0, %v7279
    %v7281 = vrot.slane %v6834, %v7280
    %v7282 = vlaneseq
    %v7283 = vshrl.u32 %v7282, 7
    %v7284 = vsub.s32 0, %v7283
    %v7285 = vrot.slane %v6835, %v7284
    %v7286 = vlaneseq
    %v7287 = vshrl.u32 %v7286, 7
    %v7288 = vsub.s32 0, %v7287
    %v7289 = vrot.slane %v6836, %v7288
    %v7290 = vlaneseq
    %v7291 = vshrl.u32 %v7290, 7
    %v7292 = vsub.s32 0, %v7291
    %v7293 = vrot.slane %v6837, %v7292
    %v7294 = vlaneseq
    %v7295 = vshrl.u32 %v7294, 7
    %v7296 = vsub.s32 0, %v7295
    %v7297 = vrot.slane %v6838, %v7296
    %v7298 = vlaneseq
    %v7299 = vshrl.u32 %v7298, 7
    %v7300 = vsub.s32 0, %v7299
    %v7301 = vrot.slane %v6839, %v7300
    %v7302 = vlaneseq
    %v7303 = vshrl.u32 %v7302, 7
    %v7304 = vsub.s32 0, %v7303
    %v7305 = vrot.slane %v6840, %v7304
    %v7306 = vlaneseq
    %v7307 = vshrl.u32 %v7306, 7
    %v7308 = vsub.s32 0, %v7307
    %v7309 = vrot.slane %v6841, %v7308
    %v7310 = vlaneseq
    %v7311 = vshrl.u32 %v7310, 7
    %v7312 = vsub.s32 0, %v7311
    %v7313 = vrot.slane %v6842, %v7312
    %v7314 = vlaneseq
    %v7315 = vshrl.u32 %v7314, 7
    %v7316 = vsub.s32 0, %v7315
    %v7317 = vrot.slane %v6843, %v7316
    %v7318 = vlaneseq
    %v7319 = vshrl.u32 %v7318, 7
    %v7320 = vsub.s32 0, %v7319
    %v7321 = vrot.slane %v6844, %v7320
    %v7322 = vlaneseq
    %v7323 = vshrl.u32 %v7322, 7
    %v7324 = vsub.s32 0, %v7323
    %v7325 = vrot.slane %v6845, %v7324
    %v7326 = vlaneseq
    %v7327 = vshrl.u32 %v7326, 7
    %v7328 = vsub.s32 0, %v7327
    %v7329 = vrot.slane %v6846, %v7328
    %v7330 = vlaneseq
    %v7331 = vshrl.u32 %v7330, 7
    %v7332 = vsub.s32 0, %v7331
    %v7333 = vrot.slane %v6847, %v7332
    %v7334 = vlaneseq
    %v7335 = vshrl.u32 %v7334, 7
    %v7336 = vsub.s32 0, %v7335
    %v7337 = vrot.slane %v6848, %v7336
    %v7338 = vlaneseq
    %v7339 = vshrl.u32 %v7338, 7
    %v7340 = vsub.s32 0, %v7339
    %v7341 = vrot.slane %v6849, %v7340
    %v7342 = vlaneseq
    %v7343 = vshrl.u32 %v7342, 7
    %v7344 = vsub.s32 0, %v7343
    %v7345 = vrot.slane %v6850, %v7344
    %v7346 = vlaneseq
    %v7347 = vshrl.u32 %v7346, 7
    %v7348 = vsub.s32 0, %v7347
    %v7349 = vrot.slane %v6851, %v7348
    %v7350 = vlaneseq
    %v7351 = vshrl.u32 %v7350, 7
    %v7352 = vsub.s32 0, %v7351
    %v7353 = vrot.slane %v6852, %v7352
    %v7354 = vlaneseq
    %v7355 = vshrl.u32 %v7354, 7
    %v7356 = vsub.s32 0, %v7355
    %v7357 = vrot.slane %v6853, %v7356
    %v7358 = vlaneseq
    %v7359 = vshrl.u32 %v7358, 7
    %v7360 = vsub.s32 0, %v7359
    %v7361 = vrot.slane %v6854, %v7360
    %v7362 = vlaneseq
    %v7363 = vshrl.u32 %v7362, 7
    %v7364 = vsub.s32 0, %v7363
    %v7365 = vrot.slane %v6855, %v7364
    %v7366 = vlaneseq
    %v7367 = vshrl.u32 %v7366, 7
    %v7368 = vsub.s32 0, %v7367
    %v7369 = vrot.slane %v6856, %v7368
    %v7370 = vlaneseq
    %v7371 = vshrl.u32 %v7370, 7
    %v7372 = vsub.s32 0, %v7371
    %v7373 = vrot.slane %v6857, %v7372
    %v7374 = vlaneseq
    %v7375 = vshrl.u32 %v7374, 7
    %v7376 = vsub.s32 0, %v7375
    %v7377 = vrot.slane %v6858, %v7376
    %v7378 = vlaneseq
    %v7379 = vshrl.u32 %v7378, 7
    %v7380 = vsub.s32 0, %v7379
    %v7381 = vrot.slane %v6859, %v7380
    %v7382 = vlaneseq
    %v7383 = vshrl.u32 %v7382, 7
    %v7384 = vsub.s32 0, %v7383
    %v7385 = vrot.slane %v6860, %v7384
    %v7386 = vlaneseq
    %v7387 = vshrl.u32 %v7386, 7
    %v7388 = vsub.s32 0, %v7387
    %v7389 = vrot.slane %v6861, %v7388
    %v7390 = vlaneseq
    %v7391 = vshrl.u32 %v7390, 7
    %v7392 = vsub.s32 0, %v7391
    %v7393 = vrot.slane %v6862, %v7392
    %v7394 = vlaneseq
    %v7395 = vshrl.u32 %v7394, 7
    %v7396 = vsub.s32 0, %v7395
    %v7397 = vrot.slane %v6863, %v7396
    %v7398 = vlaneseq
    %v7399 = vshrl.u32 %v7398, 7
    %v7400 = vsub.s32 0, %v7399
    %v7401 = vrot.slane %v6864, %v7400
    %v7402 = vlaneseq
    %v7403 = vshrl.u32 %v7402, 7
    %v7404 = vsub.s32 0, %v7403
    %v7405 = vrot.slane %v6865, %v7404
    %v7406 = vlaneseq
    %v7407 = vshrl.u32 %v7406, 7
    %v7408 = vsub.s32 0, %v7407
    %v7409 = vrot.slane %v6866, %v7408
    %v7410 = vlaneseq
    %v7411 = vshrl.u32 %v7410, 7
    %v7412 = vsub.s32 0, %v7411
    %v7413 = vrot.slane %v6867, %v7412
    %v7414 = vlaneseq
    %v7415 = vshrl.u32 %v7414, 7
    %v7416 = vsub.s32 0, %v7415
    %v7417 = vrot.slane %v6868, %v7416
    %v7418 = vlaneseq
    %v7419 = vshrl.u32 %v7418, 7
    %v7420 = vsub.s32 0, %v7419
    %v7421 = vrot.slane %v6869, %v7420
    %v7422 = vlaneseq
    %v7423 = vshrl.u32 %v7422, 7
    %v7424 = vsub.s32 0, %v7423
    %v7425 = vrot.slane %v6870, %v7424
    %v7426 = vlaneseq
    %v7427 = vshrl.u32 %v7426, 7
    %v7428 = vsub.s32 0, %v7427
    %v7429 = vrot.slane %v6871, %v7428
    %v7430 = vlaneseq
    %v7431 = vshrl.u32 %v7430, 7
    %v7432 = vsub.s32 0, %v7431
    %v7433 = vrot.slane %v6872, %v7432
    %v7434 = vlaneseq
    %v7435 = vshrl.u32 %v7434, 7
    %v7436 = vsub.s32 0, %v7435
    %v7437 = vrot.slane %v6873, %v7436
    %v7438 = vlaneseq
    %v7439 = vshrl.u32 %v7438, 7
    %v7440 = vsub.s32 0, %v7439
    %v7441 = vrot.slane %v6874, %v7440
    %v7442 = vlaneseq
    %v7443 = vshrl.u32 %v7442, 7
    %v7444 = vsub.s32 0, %v7443
    %v7445 = vrot.slane %v6875, %v7444
    %v7446 = vlaneseq
    %v7447 = vshrl.u32 %v7446, 7
    %v7448 = vsub.s32 0, %v7447
    %v7449 = vrot.slane %v6876, %v7448
    %v7450 = vlaneseq
    %v7451 = vshrl.u32 %v7450, 7
    %v7452 = vsub.s32 0, %v7451
    %v7453 = vrot.slane %v6877, %v7452
    %v7454 = vlaneseq
    %v7455 = vshrl.u32 %v7454, 7
    %v7456 = vsub.s32 0, %v7455
    %v7457 = vrot.slane %v6878, %v7456
    %v7458 = vlaneseq
    %v7459 = vshrl.u32 %v7458, 7
    %v7460 = vsub.s32 0, %v7459
    %v7461 = vrot.slane %v6879, %v7460
    %v7462 = vlaneseq
    %v7463 = vshrl.u32 %v7462, 7
    %v7464 = vsub.s32 0, %v7463
    %v7465 = vrot.slane %v6880, %v7464
    %v7466 = vlaneseq
    %v7467 = vshrl.u32 %v7466, 7
    %v7468 = vsub.s32 0, %v7467
    %v7469 = vrot.slane %v6881, %v7468
    %v7470 = vlaneseq
    %v7471 = vshrl.u32 %v7470, 7
    %v7472 = vsub.s32 0, %v7471
    %v7473 = vrot.slane %v6882, %v7472
    %v7474 = vlaneseq
    %v7475 = vshrl.u32 %v7474, 7
    %v7476 = vsub.s32 0, %v7475
    %v7477 = vrot.slane %v6883, %v7476
    %v7478 = vlaneseq
    %v7479 = vshrl.u32 %v7478, 7
    %v7480 = vsub.s32 0, %v7479
    %v7481 = vrot.slane %v6884, %v7480
    %v7482 = vlaneseq
    %v7483 = vshrl.u32 %v7482, 7
    %v7484 = vsub.s32 0, %v7483
    %v7485 = vrot.slane %v6885, %v7484
    %v7486 = vlaneseq
    %v7487 = vshrl.u32 %v7486, 7
    %v7488 = vsub.s32 0, %v7487
    %v7489 = vrot.slane %v6886, %v7488
    %v7490 = vlaneseq
    %v7491 = vshrl.u32 %v7490, 7
    %v7492 = vsub.s32 0, %v7491
    %v7493 = vrot.slane %v6887, %v7492
    %v7494 = vlaneseq
    %v7495 = vshrl.u32 %v7494, 7
    %v7496 = vsub.s32 0, %v7495
    %v7497 = vrot.slane %v6888, %v7496
    %v7498 = vlaneseq
    %v7499 = vshrl.u32 %v7498, 7
    %v7500 = vsub.s32 0, %v7499
    %v7501 = vrot.slane %v6889, %v7500
    %v7502 = vlaneseq
    %v7503 = vshrl.u32 %v7502, 7
    %v7504 = vsub.s32 0, %v7503
    %v7505 = vrot.slane %v6890, %v7504
    %v7506 = vlaneseq
    %v7507 = vshrl.u32 %v7506, 7
    %v7508 = vsub.s32 0, %v7507
    %v7509 = vrot.slane %v6891, %v7508
    %v7510 = vlaneseq
    %v7511 = vshrl.u32 %v7510, 7
    %v7512 = vsub.s32 0, %v7511
    %v7513 = vrot.slane %v6892, %v7512
    %v7514 = vlaneseq
    %v7515 = vshrl.u32 %v7514, 7
    %v7516 = vsub.s32 0, %v7515
    %v7517 = vrot.slane %v6893, %v7516
    %v7518 = vlaneseq
    %v7519 = vshrl.u32 %v7518, 7
    %v7520 = vsub.s32 0, %v7519
    %v7521 = vrot.slane %v6894, %v7520
    %v7522 = vlaneseq
    %v7523 = vshrl.u32 %v7522, 7
    %v7524 = vsub.s32 0, %v7523
    %v7525 = vrot.slane %v6895, %v7524
    %v7526 = vlaneseq
    %v7527 = vshrl.u32 %v7526, 7
    %v7528 = vsub.s32 0, %v7527
    %v7529 = vrot.slane %v6896, %v7528
    %v7530 = vlaneseq
    %v7531 = vshrl.u32 %v7530, 7
    %v7532 = vsub.s32 0, %v7531
    %v7533 = vrot.slane %v6897, %v7532
    %v7534 = vlaneseq
    %v7535 = vshrl.u32 %v7534, 7
    %v7536 = vsub.s32 0, %v7535
    %v7537 = vrot.slane %v6898, %v7536
    %v7538 = vlaneseq
    %v7539 = vshrl.u32 %v7538, 7
    %v7540 = vsub.s32 0, %v7539
    %v7541 = vrot.slane %v6899, %v7540
    %v7542 = vlaneseq
    %v7543 = vshrl.u32 %v7542, 7
    %v7544 = vsub.s32 0, %v7543
    %v7545 = vrot.slane %v6900, %v7544
    %v7546 = vlaneseq
    %v7547 = vshrl.u32 %v7546, 7
    %v7548 = vsub.s32 0, %v7547
    %v7549 = vrot.slane %v6901, %v7548
    %v7550 = vlaneseq
    %v7551 = vshrl.u32 %v7550, 7
    %v7552 = vsub.s32 0, %v7551
    %v7553 = vrot.slane %v6902, %v7552
    %v7554 = vlaneseq
    %v7555 = vshrl.u32 %v7554, 7
    %v7556 = vsub.s32 0, %v7555
    %v7557 = vrot.slane %v6903, %v7556
    %v7558 = vlaneseq
    %v7559 = vshrl.u32 %v7558, 7
    %v7560 = vsub.s32 0, %v7559
    %v7561 = vrot.slane %v6904, %v7560
    %v7562 = vlaneseq
    %v7563 = vshrl.u32 %v7562, 7
    %v7564 = vsub.s32 0, %v7563
    %v7565 = vrot.slane %v6905, %v7564
    %v7566 = vlaneseq
    %v7567 = vshrl.u32 %v7566, 7
    %v7568 = vsub.s32 0, %v7567
    %v7569 = vrot.slane %v6906, %v7568
    %v7570 = vlaneseq
    %v7571 = vshrl.u32 %v7570, 7
    %v7572 = vsub.s32 0, %v7571
    %v7573 = vrot.slane %v6907, %v7572
    %v7574 = vlaneseq
    %v7575 = vshrl.u32 %v7574, 7
    %v7576 = vsub.s32 0, %v7575
    %v7577 = vrot.slane %v6908, %v7576
    %v7578 = vlaneseq
    %v7579 = vshrl.u32 %v7578, 7
    %v7580 = vsub.s32 0, %v7579
    %v7581 = vrot.slane %v6909, %v7580
    %v7582 = vlaneseq
    %v7583 = vshrl.u32 %v7582, 7
    %v7584 = vsub.s32 0, %v7583
    %v7585 = vrot.slane %v6910, %v7584
    %v7586 = vlaneseq
    %v7587 = vshrl.u32 %v7586, 7
    %v7588 = vsub.s32 0, %v7587
    %v7589 = vrot.slane %v6911, %v7588
    %v7590 = vlaneseq
    %v7591 = vshrl.u32 %v7590, 7
    %v7592 = vsub.s32 0, %v7591
    %v7593 = vrot.slane %v6912, %v7592
    %v7594 = vlaneseq
    %v7595 = vshrl.u32 %v7594, 7
    %v7596 = vsub.s32 0, %v7595
    %v7597 = vrot.slane %v6913, %v7596
    %v7598 = vlaneseq
    %v7599 = vshrl.u32 %v7598, 7
    %v7600 = vsub.s32 0, %v7599
    %v7601 = vrot.slane %v6914, %v7600
    %v7602 = vlaneseq
    %v7603 = vshrl.u32 %v7602, 7
    %v7604 = vsub.s32 0, %v7603
    %v7605 = vrot.slane %v6915, %v7604
    %v7606 = vlaneseq
    %v7607 = vshrl.u32 %v7606, 7
    %v7608 = vsub.s32 0, %v7607
    %v7609 = vrot.slane %v6916, %v7608
    %vm7610 = vcmask 1041409
    %v7611 = vsel %vm7610, %v7105, %v7101
    %vm7612 = vcmask 1042434
    %v7613 = vsel %vm7612, %v7109, %v7611
    %vm7614 = vcmask 1043459
    %v7615 = vsel %vm7614, %v7113, %v7613
    %vm7616 = vcmask 1044484
    %v7617 = vsel %vm7616, %v7117, %v7615
    %vm7618 = vcmask 1045509
    %v7619 = vsel %vm7618, %v7121, %v7617
    %vm7620 = vcmask 1046534
    %v7621 = vsel %vm7620, %v7125, %v7619
    %vm7622 = vcmask 1047559
    %v7623 = vsel %vm7622, %v7129, %v7621
    %v7624 = vsel %vm7610, %v7137, %v7133
    %v7625 = vsel %vm7612, %v7141, %v7624
    %v7626 = vsel %vm7614, %v7145, %v7625
    %v7627 = vsel %vm7616, %v7149, %v7626
    %v7628 = vsel %vm7618, %v7153, %v7627
    %v7629 = vsel %vm7620, %v7157, %v7628
    %v7630 = vsel %vm7622, %v7161, %v7629
    %v7631 = vsel %vm7610, %v7169, %v7165
    %v7632 = vsel %vm7612, %v7173, %v7631
    %v7633 = vsel %vm7614, %v7177, %v7632
    %v7634 = vsel %vm7616, %v7181, %v7633
    %v7635 = vsel %vm7618, %v7185, %v7634
    %v7636 = vsel %vm7620, %v7189, %v7635
    %v7637 = vsel %vm7622, %v7193, %v7636
    %v7638 = vsel %vm7610, %v7201, %v7197
    %v7639 = vsel %vm7612, %v7205, %v7638
    %v7640 = vsel %vm7614, %v7209, %v7639
    %v7641 = vsel %vm7616, %v7213, %v7640
    %v7642 = vsel %vm7618, %v7217, %v7641
    %v7643 = vsel %vm7620, %v7221, %v7642
    %v7644 = vsel %vm7622, %v7225, %v7643
    %v7645 = vsel %vm7610, %v7233, %v7229
    %v7646 = vsel %vm7612, %v7237, %v7645
    %v7647 = vsel %vm7614, %v7241, %v7646
    %v7648 = vsel %vm7616, %v7245, %v7647
    %v7649 = vsel %vm7618, %v7249, %v7648
    %v7650 = vsel %vm7620, %v7253, %v7649
    %v7651 = vsel %vm7622, %v7257, %v7650
    %v7652 = vsel %vm7610, %v7265, %v7261
    %v7653 = vsel %vm7612, %v7269, %v7652
    %v7654 = vsel %vm7614, %v7273, %v7653
    %v7655 = vsel %vm7616, %v7277, %v7654
    %v7656 = vsel %vm7618, %v7281, %v7655
    %v7657 = vsel %vm7620, %v7285, %v7656
    %v7658 = vsel %vm7622, %v7289, %v7657
    %v7659 = vsel %vm7610, %v7297, %v7293
    %v7660 = vsel %vm7612, %v7301, %v7659
    %v7661 = vsel %vm7614, %v7305, %v7660
    %v7662 = vsel %vm7616, %v7309, %v7661
    %v7663 = vsel %vm7618, %v7313, %v7662
    %v7664 = vsel %vm7620, %v7317, %v7663
    %v7665 = vsel %vm7622, %v7321, %v7664
    %v7666 = vsel %vm7610, %v7329, %v7325
    %v7667 = vsel %vm7612, %v7333, %v7666
    %v7668 = vsel %vm7614, %v7337, %v7667
    %v7669 = vsel %vm7616, %v7341, %v7668
    %v7670 = vsel %vm7618, %v7345, %v7669
    %v7671 = vsel %vm7620, %v7349, %v7670
    %v7672 = vsel %vm7622, %v7353, %v7671
    %v7673 = vsel %vm7610, %v7361, %v7357
    %v7674 = vsel %vm7612, %v7365, %v7673
    %v7675 = vsel %vm7614, %v7369, %v7674
    %v7676 = vsel %vm7616, %v7373, %v7675
    %v7677 = vsel %vm7618, %v7377, %v7676
    %v7678 = vsel %vm7620, %v7381, %v7677
    %v7679 = vsel %vm7622, %v7385, %v7678
    %v7680 = vsel %vm7610, %v7393, %v7389
    %v7681 = vsel %vm7612, %v7397, %v7680
    %v7682 = vsel %vm7614, %v7401, %v7681
    %v7683 = vsel %vm7616, %v7405, %v7682
    %v7684 = vsel %vm7618, %v7409, %v7683
    %v7685 = vsel %vm7620, %v7413, %v7684
    %v7686 = vsel %vm7622, %v7417, %v7685
    %v7687 = vsel %vm7610, %v7425, %v7421
    %v7688 = vsel %vm7612, %v7429, %v7687
    %v7689 = vsel %vm7614, %v7433, %v7688
    %v7690 = vsel %vm7616, %v7437, %v7689
    %v7691 = vsel %vm7618, %v7441, %v7690
    %v7692 = vsel %vm7620, %v7445, %v7691
    %v7693 = vsel %vm7622, %v7449, %v7692
    %v7694 = vsel %vm7610, %v7457, %v7453
    %v7695 = vsel %vm7612, %v7461, %v7694
    %v7696 = vsel %vm7614, %v7465, %v7695
    %v7697 = vsel %vm7616, %v7469, %v7696
    %v7698 = vsel %vm7618, %v7473, %v7697
    %v7699 = vsel %vm7620, %v7477, %v7698
    %v7700 = vsel %vm7622, %v7481, %v7699
    %v7701 = vsel %vm7610, %v7489, %v7485
    %v7702 = vsel %vm7612, %v7493, %v7701
    %v7703 = vsel %vm7614, %v7497, %v7702
    %v7704 = vsel %vm7616, %v7501, %v7703
    %v7705 = vsel %vm7618, %v7505, %v7704
    %v7706 = vsel %vm7620, %v7509, %v7705
    %v7707 = vsel %vm7622, %v7513, %v7706
    %v7708 = vsel %vm7610, %v7521, %v7517
    %v7709 = vsel %vm7612, %v7525, %v7708
    %v7710 = vsel %vm7614, %v7529, %v7709
    %v7711 = vsel %vm7616, %v7533, %v7710
    %v7712 = vsel %vm7618, %v7537, %v7711
    %v7713 = vsel %vm7620, %v7541, %v7712
    %v7714 = vsel %vm7622, %v7545, %v7713
    %v7715 = vsel %vm7610, %v7553, %v7549
    %v7716 = vsel %vm7612, %v7557, %v7715
    %v7717 = vsel %vm7614, %v7561, %v7716
    %v7718 = vsel %vm7616, %v7565, %v7717
    %v7719 = vsel %vm7618, %v7569, %v7718
    %v7720 = vsel %vm7620, %v7573, %v7719
    %v7721 = vsel %vm7622, %v7577, %v7720
    %v7722 = vsel %vm7610, %v7585, %v7581
    %v7723 = vsel %vm7612, %v7589, %v7722
    %v7724 = vsel %vm7614, %v7593, %v7723
    %v7725 = vsel %vm7616, %v7597, %v7724
    %v7726 = vsel %vm7618, %v7601, %v7725
    %v7727 = vsel %vm7620, %v7605, %v7726
    %v7728 = vsel %vm7622, %v7609, %v7727
    %7745 = vst.msk [vmem:[%s6936 + $0x2] sm:$0xff] %vm6917, %v7623
    %7746 = vst.msk [vmem:[%s6936 + $0x12] sm:$0xff] %vm6917, %v7630
    %7747 = vst.msk [vmem:[%s6936 + $0x22] sm:$0xff] %vm6917, %v7637
    %7748 = vst.msk [vmem:[%s6936 + $0x32] sm:$0xff] %vm6917, %v7644
    %7749 = vst.msk [vmem:[%s6936 + $0x42] sm:$0xff] %vm6917, %v7651
    %7750 = vst.msk [vmem:[%s6936 + $0x52] sm:$0xff] %vm6917, %v7658
    %7751 = vst.msk [vmem:[%s6936 + $0x62] sm:$0xff] %vm6917, %v7665
    %7752 = vst.msk [vmem:[%s6936 + $0x72] sm:$0xff] %vm6917, %v7672
    %7753 = vst.msk [vmem:[%s6936 + $0xc2] sm:$0xff] %vm6917, %v7679
    %7754 = vst.msk [vmem:[%s6936 + $0xd2] sm:$0xff] %vm6917, %v7686
    %7755 = vst.msk [vmem:[%s6936 + $0xe2] sm:$0xff] %vm6917, %v7693
    %7756 = vst.msk [vmem:[%s6936 + $0xf2] sm:$0xff] %vm6917, %v7700
    %7757 = vst.msk [vmem:[%s6936 + $0x102] sm:$0xff] %vm6917, %v7707
    %7758 = vst.msk [vmem:[%s6936 + $0x112] sm:$0xff] %vm6917, %v7714
    %7759 = vst.msk [vmem:[%s6936 + $0x122] sm:$0xff] %vm6917, %v7721
    %7760 = vst.msk [vmem:[%s6936 + $0x132] sm:$0xff] %vm6917, %v7728
    %v7761 = vld [vmem:[#allocation3] sm:$0xff]
    %v7762 = vld [vmem:[#allocation3 + $0x10] sm:$0xff]
    %v7763 = vld [vmem:[#allocation3 + $0x20] sm:$0xff]
    %v7764 = vld [vmem:[#allocation3 + $0x30] sm:$0xff]
    %v7765 = vld [vmem:[#allocation3 + $0x40] sm:$0xff]
    %v7766 = vld [vmem:[#allocation3 + $0x50] sm:$0xff]
    %v7767 = vld [vmem:[#allocation3 + $0x60] sm:$0xff]
    %v7768 = vld [vmem:[#allocation3 + $0x70] sm:$0xff]
    %v7769 = vld [vmem:[#allocation3 + $0xc0] sm:$0xff]
    %v7770 = vld [vmem:[#allocation3 + $0xd0] sm:$0xff]
    %v7771 = vld [vmem:[#allocation3 + $0xe0] sm:$0xff]
    %v7772 = vld [vmem:[#allocation3 + $0xf0] sm:$0xff]
    %v7773 = vld [vmem:[#allocation3 + $0x100] sm:$0xff]
    %v7774 = vld [vmem:[#allocation3 + $0x110] sm:$0xff]
    %v7775 = vld [vmem:[#allocation3 + $0x120] sm:$0xff]
    %v7776 = vld [vmem:[#allocation3 + $0x130] sm:$0xff]
    %v7777 = vld [vmem:[#allocation3 + $0x1] sm:$0xff]
    %v7778 = vld [vmem:[#allocation3 + $0x11] sm:$0xff]
    %v7779 = vld [vmem:[#allocation3 + $0x21] sm:$0xff]
    %v7780 = vld [vmem:[#allocation3 + $0x31] sm:$0xff]
    %v7781 = vld [vmem:[#allocation3 + $0x41] sm:$0xff]
    %v7782 = vld [vmem:[#allocation3 + $0x51] sm:$0xff]
    %v7783 = vld [vmem:[#allocation3 + $0x61] sm:$0xff]
    %v7784 = vld [vmem:[#allocation3 + $0x71] sm:$0xff]
    %v7785 = vld [vmem:[#allocation3 + $0xc1] sm:$0xff]
    %v7786 = vld [vmem:[#allocation3 + $0xd1] sm:$0xff]
    %v7787 = vld [vmem:[#allocation3 + $0xe1] sm:$0xff]
    %v7788 = vld [vmem:[#allocation3 + $0xf1] sm:$0xff]
    %v7789 = vld [vmem:[#allocation3 + $0x101] sm:$0xff]
    %v7790 = vld [vmem:[#allocation3 + $0x111] sm:$0xff]
    %v7791 = vld [vmem:[#allocation3 + $0x121] sm:$0xff]
    %v7792 = vld [vmem:[#allocation3 + $0x131] sm:$0xff]
    %v7793 = vld [vmem:[#allocation3 + $0x2] sm:$0xff]
    %v7794 = vld [vmem:[#allocation3 + $0x12] sm:$0xff]
    %v7795 = vld [vmem:[#allocation3 + $0x22] sm:$0xff]
    %v7796 = vld [vmem:[#allocation3 + $0x32] sm:$0xff]
    %v7797 = vld [vmem:[#allocation3 + $0x42] sm:$0xff]
    %v7798 = vld [vmem:[#allocation3 + $0x52] sm:$0xff]
    %v7799 = vld [vmem:[#allocation3 + $0x62] sm:$0xff]
    %v7800 = vld [vmem:[#allocation3 + $0x72] sm:$0xff]
    %v7801 = vld [vmem:[#allocation3 + $0xc2] sm:$0xff]
    %v7802 = vld [vmem:[#allocation3 + $0xd2] sm:$0xff]
    %v7803 = vld [vmem:[#allocation3 + $0xe2] sm:$0xff]
    %v7804 = vld [vmem:[#allocation3 + $0xf2] sm:$0xff]
    %v7805 = vld [vmem:[#allocation3 + $0x102] sm:$0xff]
    %v7806 = vld [vmem:[#allocation3 + $0x112] sm:$0xff]
    %v7807 = vld [vmem:[#allocation3 + $0x122] sm:$0xff]
    %v7808 = vld [vmem:[#allocation3 + $0x132] sm:$0xff]
    %v7809 = vld [vmem:[#allocation3 + $0x3] sm:$0xff]
    %v7810 = vld [vmem:[#allocation3 + $0x13] sm:$0xff]
    %v7811 = vld [vmem:[#allocation3 + $0x23] sm:$0xff]
    %v7812 = vld [vmem:[#allocation3 + $0x33] sm:$0xff]
    %v7813 = vld [vmem:[#allocation3 + $0x43] sm:$0xff]
    %v7814 = vld [vmem:[#allocation3 + $0x53] sm:$0xff]
    %v7815 = vld [vmem:[#allocation3 + $0x63] sm:$0xff]
    %v7816 = vld [vmem:[#allocation3 + $0x73] sm:$0xff]
    %v7817 = vld [vmem:[#allocation3 + $0xc3] sm:$0xff]
    %v7818 = vld [vmem:[#allocation3 + $0xd3] sm:$0xff]
    %v7819 = vld [vmem:[#allocation3 + $0xe3] sm:$0xff]
    %v7820 = vld [vmem:[#allocation3 + $0xf3] sm:$0xff]
    %v7821 = vld [vmem:[#allocation3 + $0x103] sm:$0xff]
    %v7822 = vld [vmem:[#allocation3 + $0x113] sm:$0xff]
    %v7823 = vld [vmem:[#allocation3 + $0x123] sm:$0xff]
    %v7824 = vld [vmem:[#allocation3 + $0x133] sm:$0xff]
    %v7825 = vld [vmem:[#allocation3 + $0x4] sm:$0xff]
    %v7826 = vld [vmem:[#allocation3 + $0x14] sm:$0xff]
    %v7827 = vld [vmem:[#allocation3 + $0x24] sm:$0xff]
    %v7828 = vld [vmem:[#allocation3 + $0x34] sm:$0xff]
    %v7829 = vld [vmem:[#allocation3 + $0x44] sm:$0xff]
    %v7830 = vld [vmem:[#allocation3 + $0x54] sm:$0xff]
    %v7831 = vld [vmem:[#allocation3 + $0x64] sm:$0xff]
    %v7832 = vld [vmem:[#allocation3 + $0x74] sm:$0xff]
    %v7833 = vld [vmem:[#allocation3 + $0xc4] sm:$0xff]
    %v7834 = vld [vmem:[#allocation3 + $0xd4] sm:$0xff]
    %v7835 = vld [vmem:[#allocation3 + $0xe4] sm:$0xff]
    %v7836 = vld [vmem:[#allocation3 + $0xf4] sm:$0xff]
    %v7837 = vld [vmem:[#allocation3 + $0x104] sm:$0xff]
    %v7838 = vld [vmem:[#allocation3 + $0x114] sm:$0xff]
    %v7839 = vld [vmem:[#allocation3 + $0x124] sm:$0xff]
    %v7840 = vld [vmem:[#allocation3 + $0x134] sm:$0xff]
    %s7841 = scalar_lea.vmem [#allocation3], 16
    %v7842 = vld [vmem:[%s7841] sm:$0xff]
    %v7843 = vld [vmem:[%s7841 + $0x10] sm:$0xff]
    %v7844 = vld [vmem:[%s7841 + $0x20] sm:$0xff]
    %v7845 = vld [vmem:[%s7841 + $0x30] sm:$0xff]
    %v7846 = vld [vmem:[%s7841 + $0x40] sm:$0xff]
    %v7847 = vld [vmem:[%s7841 + $0x50] sm:$0xff]
    %v7848 = vld [vmem:[%s7841 + $0x60] sm:$0xff]
    %v7849 = vld [vmem:[%s7841 + $0x70] sm:$0xff]
    %v7850 = vld [vmem:[%s7841 + $0xc0] sm:$0xff]
    %v7851 = vld [vmem:[%s7841 + $0xd0] sm:$0xff]
    %v7852 = vld [vmem:[%s7841 + $0xe0] sm:$0xff]
    %v7853 = vld [vmem:[%s7841 + $0xf0] sm:$0xff]
    %v7854 = vld [vmem:[%s7841 + $0x100] sm:$0xff]
    %v7855 = vld [vmem:[%s7841 + $0x110] sm:$0xff]
    %v7856 = vld [vmem:[%s7841 + $0x120] sm:$0xff]
    %v7857 = vld [vmem:[%s7841 + $0x130] sm:$0xff]
    %v7858 = vld [vmem:[%s7841 + $0x1] sm:$0xff]
    %v7859 = vld [vmem:[%s7841 + $0x11] sm:$0xff]
    %v7860 = vld [vmem:[%s7841 + $0x21] sm:$0xff]
    %v7861 = vld [vmem:[%s7841 + $0x31] sm:$0xff]
    %v7862 = vld [vmem:[%s7841 + $0x41] sm:$0xff]
    %v7863 = vld [vmem:[%s7841 + $0x51] sm:$0xff]
    %v7864 = vld [vmem:[%s7841 + $0x61] sm:$0xff]
    %v7865 = vld [vmem:[%s7841 + $0x71] sm:$0xff]
    %v7866 = vld [vmem:[%s7841 + $0xc1] sm:$0xff]
    %v7867 = vld [vmem:[%s7841 + $0xd1] sm:$0xff]
    %v7868 = vld [vmem:[%s7841 + $0xe1] sm:$0xff]
    %v7869 = vld [vmem:[%s7841 + $0xf1] sm:$0xff]
    %v7870 = vld [vmem:[%s7841 + $0x101] sm:$0xff]
    %v7871 = vld [vmem:[%s7841 + $0x111] sm:$0xff]
    %v7872 = vld [vmem:[%s7841 + $0x121] sm:$0xff]
    %v7873 = vld [vmem:[%s7841 + $0x131] sm:$0xff]
    %v7874 = vld [vmem:[%s7841 + $0x2] sm:$0xff]
    %v7875 = vld [vmem:[%s7841 + $0x12] sm:$0xff]
    %v7876 = vld [vmem:[%s7841 + $0x22] sm:$0xff]
    %v7877 = vld [vmem:[%s7841 + $0x32] sm:$0xff]
    %v7878 = vld [vmem:[%s7841 + $0x42] sm:$0xff]
    %v7879 = vld [vmem:[%s7841 + $0x52] sm:$0xff]
    %v7880 = vld [vmem:[%s7841 + $0x62] sm:$0xff]
    %v7881 = vld [vmem:[%s7841 + $0x72] sm:$0xff]
    %v7882 = vld [vmem:[%s7841 + $0xc2] sm:$0xff]
    %v7883 = vld [vmem:[%s7841 + $0xd2] sm:$0xff]
    %v7884 = vld [vmem:[%s7841 + $0xe2] sm:$0xff]
    %v7885 = vld [vmem:[%s7841 + $0xf2] sm:$0xff]
    %v7886 = vld [vmem:[%s7841 + $0x102] sm:$0xff]
    %v7887 = vld [vmem:[%s7841 + $0x112] sm:$0xff]
    %v7888 = vld [vmem:[%s7841 + $0x122] sm:$0xff]
    %v7889 = vld [vmem:[%s7841 + $0x132] sm:$0xff]
    %v7890 = vld [vmem:[%s7841 + $0x3] sm:$0xff]
    %v7891 = vld [vmem:[%s7841 + $0x13] sm:$0xff]
    %v7892 = vld [vmem:[%s7841 + $0x23] sm:$0xff]
    %v7893 = vld [vmem:[%s7841 + $0x33] sm:$0xff]
    %v7894 = vld [vmem:[%s7841 + $0x43] sm:$0xff]
    %v7895 = vld [vmem:[%s7841 + $0x53] sm:$0xff]
    %v7896 = vld [vmem:[%s7841 + $0x63] sm:$0xff]
    %v7897 = vld [vmem:[%s7841 + $0x73] sm:$0xff]
    %v7898 = vld [vmem:[%s7841 + $0xc3] sm:$0xff]
    %v7899 = vld [vmem:[%s7841 + $0xd3] sm:$0xff]
    %v7900 = vld [vmem:[%s7841 + $0xe3] sm:$0xff]
    %v7901 = vld [vmem:[%s7841 + $0xf3] sm:$0xff]
    %v7902 = vld [vmem:[%s7841 + $0x103] sm:$0xff]
    %v7903 = vld [vmem:[%s7841 + $0x113] sm:$0xff]
    %v7904 = vld [vmem:[%s7841 + $0x123] sm:$0xff]
    %v7905 = vld [vmem:[%s7841 + $0x133] sm:$0xff]
    %v7906 = vld [vmem:[%s7841 + $0x4] sm:$0xff]
    %v7907 = vld [vmem:[%s7841 + $0x14] sm:$0xff]
    %v7908 = vld [vmem:[%s7841 + $0x24] sm:$0xff]
    %v7909 = vld [vmem:[%s7841 + $0x34] sm:$0xff]
    %v7910 = vld [vmem:[%s7841 + $0x44] sm:$0xff]
    %v7911 = vld [vmem:[%s7841 + $0x54] sm:$0xff]
    %v7912 = vld [vmem:[%s7841 + $0x64] sm:$0xff]
    %v7913 = vld [vmem:[%s7841 + $0x74] sm:$0xff]
    %v7914 = vld [vmem:[%s7841 + $0xc4] sm:$0xff]
    %v7915 = vld [vmem:[%s7841 + $0xd4] sm:$0xff]
    %v7916 = vld [vmem:[%s7841 + $0xe4] sm:$0xff]
    %v7917 = vld [vmem:[%s7841 + $0xf4] sm:$0xff]
    %v7918 = vld [vmem:[%s7841 + $0x104] sm:$0xff]
    %v7919 = vld [vmem:[%s7841 + $0x114] sm:$0xff]
    %v7920 = vld [vmem:[%s7841 + $0x124] sm:$0xff]
    %v7921 = vld [vmem:[%s7841 + $0x134] sm:$0xff]
    %v7922 = vld [vmem:[%s6936] sm:$0xff]
    %v7923 = vld [vmem:[%s6936 + $0x10] sm:$0xff]
    %v7924 = vld [vmem:[%s6936 + $0x20] sm:$0xff]
    %v7925 = vld [vmem:[%s6936 + $0x30] sm:$0xff]
    %v7926 = vld [vmem:[%s6936 + $0x40] sm:$0xff]
    %v7927 = vld [vmem:[%s6936 + $0x50] sm:$0xff]
    %v7928 = vld [vmem:[%s6936 + $0x60] sm:$0xff]
    %v7929 = vld [vmem:[%s6936 + $0x70] sm:$0xff]
    %v7930 = vld [vmem:[%s6936 + $0xc0] sm:$0xff]
    %v7931 = vld [vmem:[%s6936 + $0xd0] sm:$0xff]
    %v7932 = vld [vmem:[%s6936 + $0xe0] sm:$0xff]
    %v7933 = vld [vmem:[%s6936 + $0xf0] sm:$0xff]
    %v7934 = vld [vmem:[%s6936 + $0x100] sm:$0xff]
    %v7935 = vld [vmem:[%s6936 + $0x110] sm:$0xff]
    %v7936 = vld [vmem:[%s6936 + $0x120] sm:$0xff]
    %v7937 = vld [vmem:[%s6936 + $0x130] sm:$0xff]
    %v7938 = vld [vmem:[%s6936 + $0x1] sm:$0xff]
    %v7939 = vld [vmem:[%s6936 + $0x11] sm:$0xff]
    %v7940 = vld [vmem:[%s6936 + $0x21] sm:$0xff]
    %v7941 = vld [vmem:[%s6936 + $0x31] sm:$0xff]
    %v7942 = vld [vmem:[%s6936 + $0x41] sm:$0xff]
    %v7943 = vld [vmem:[%s6936 + $0x51] sm:$0xff]
    %v7944 = vld [vmem:[%s6936 + $0x61] sm:$0xff]
    %v7945 = vld [vmem:[%s6936 + $0x71] sm:$0xff]
    %v7946 = vld [vmem:[%s6936 + $0xc1] sm:$0xff]
    %v7947 = vld [vmem:[%s6936 + $0xd1] sm:$0xff]
    %v7948 = vld [vmem:[%s6936 + $0xe1] sm:$0xff]
    %v7949 = vld [vmem:[%s6936 + $0xf1] sm:$0xff]
    %v7950 = vld [vmem:[%s6936 + $0x101] sm:$0xff]
    %v7951 = vld [vmem:[%s6936 + $0x111] sm:$0xff]
    %v7952 = vld [vmem:[%s6936 + $0x121] sm:$0xff]
    %v7953 = vld [vmem:[%s6936 + $0x131] sm:$0xff]
    %v7954 = vld [vmem:[%s6936 + $0x2] sm:$0xff]
    %v7955 = vld [vmem:[%s6936 + $0x12] sm:$0xff]
    %v7956 = vld [vmem:[%s6936 + $0x22] sm:$0xff]
    %v7957 = vld [vmem:[%s6936 + $0x32] sm:$0xff]
    %v7958 = vld [vmem:[%s6936 + $0x42] sm:$0xff]
    %v7959 = vld [vmem:[%s6936 + $0x52] sm:$0xff]
    %v7960 = vld [vmem:[%s6936 + $0x62] sm:$0xff]
    %v7961 = vld [vmem:[%s6936 + $0x72] sm:$0xff]
    %v7962 = vld [vmem:[%s6936 + $0xc2] sm:$0xff]
    %v7963 = vld [vmem:[%s6936 + $0xd2] sm:$0xff]
    %v7964 = vld [vmem:[%s6936 + $0xe2] sm:$0xff]
    %v7965 = vld [vmem:[%s6936 + $0xf2] sm:$0xff]
    %v7966 = vld [vmem:[%s6936 + $0x102] sm:$0xff]
    %v7967 = vld [vmem:[%s6936 + $0x112] sm:$0xff]
    %v7968 = vld [vmem:[%s6936 + $0x122] sm:$0xff]
    %v7969 = vld [vmem:[%s6936 + $0x132] sm:$0xff]
    %v7970 = vld [vmem:[%s6936 + $0x3] sm:$0xff]
    %v7971 = vld [vmem:[%s6936 + $0x13] sm:$0xff]
    %v7972 = vld [vmem:[%s6936 + $0x23] sm:$0xff]
    %v7973 = vld [vmem:[%s6936 + $0x33] sm:$0xff]
    %v7974 = vld [vmem:[%s6936 + $0x43] sm:$0xff]
    %v7975 = vld [vmem:[%s6936 + $0x53] sm:$0xff]
    %v7976 = vld [vmem:[%s6936 + $0x63] sm:$0xff]
    %v7977 = vld [vmem:[%s6936 + $0x73] sm:$0xff]
    %v7978 = vld [vmem:[%s6936 + $0xc3] sm:$0xff]
    %v7979 = vld [vmem:[%s6936 + $0xd3] sm:$0xff]
    %v7980 = vld [vmem:[%s6936 + $0xe3] sm:$0xff]
    %v7981 = vld [vmem:[%s6936 + $0xf3] sm:$0xff]
    %v7982 = vld [vmem:[%s6936 + $0x103] sm:$0xff]
    %v7983 = vld [vmem:[%s6936 + $0x113] sm:$0xff]
    %v7984 = vld [vmem:[%s6936 + $0x123] sm:$0xff]
    %v7985 = vld [vmem:[%s6936 + $0x133] sm:$0xff]
    %v7986 = vld [vmem:[%s6936 + $0x4] sm:$0xff]
    %v7987 = vld [vmem:[%s6936 + $0x14] sm:$0xff]
    %v7988 = vld [vmem:[%s6936 + $0x24] sm:$0xff]
    %v7989 = vld [vmem:[%s6936 + $0x34] sm:$0xff]
    %v7990 = vld [vmem:[%s6936 + $0x44] sm:$0xff]
    %v7991 = vld [vmem:[%s6936 + $0x54] sm:$0xff]
    %v7992 = vld [vmem:[%s6936 + $0x64] sm:$0xff]
    %v7993 = vld [vmem:[%s6936 + $0x74] sm:$0xff]
    %v7994 = vld [vmem:[%s6936 + $0xc4] sm:$0xff]
    %v7995 = vld [vmem:[%s6936 + $0xd4] sm:$0xff]
    %v7996 = vld [vmem:[%s6936 + $0xe4] sm:$0xff]
    %v7997 = vld [vmem:[%s6936 + $0xf4] sm:$0xff]
    %v7998 = vld [vmem:[%s6936 + $0x104] sm:$0xff]
    %v7999 = vld [vmem:[%s6936 + $0x114] sm:$0xff]
    %v8000 = vld [vmem:[%s6936 + $0x124] sm:$0xff]
    %v8001 = vld [vmem:[%s6936 + $0x134] sm:$0xff]
    %s8002 = scalar_lea.vmem [#allocation3], 48
    %v8003 = vld [vmem:[%s8002] sm:$0xff]
    %v8004 = vld [vmem:[%s8002 + $0x10] sm:$0xff]
    %v8005 = vld [vmem:[%s8002 + $0x20] sm:$0xff]
    %v8006 = vld [vmem:[%s8002 + $0x30] sm:$0xff]
    %v8007 = vld [vmem:[%s8002 + $0x40] sm:$0xff]
    %v8008 = vld [vmem:[%s8002 + $0x50] sm:$0xff]
    %v8009 = vld [vmem:[%s8002 + $0x60] sm:$0xff]
    %v8010 = vld [vmem:[%s8002 + $0x70] sm:$0xff]
    %v8011 = vld [vmem:[%s8002 + $0xc0] sm:$0xff]
    %v8012 = vld [vmem:[%s8002 + $0xd0] sm:$0xff]
    %v8013 = vld [vmem:[%s8002 + $0xe0] sm:$0xff]
    %v8014 = vld [vmem:[%s8002 + $0xf0] sm:$0xff]
    %v8015 = vld [vmem:[%s8002 + $0x100] sm:$0xff]
    %v8016 = vld [vmem:[%s8002 + $0x110] sm:$0xff]
    %v8017 = vld [vmem:[%s8002 + $0x120] sm:$0xff]
    %v8018 = vld [vmem:[%s8002 + $0x130] sm:$0xff]
    %v8019 = vld [vmem:[%s8002 + $0x1] sm:$0xff]
    %v8020 = vld [vmem:[%s8002 + $0x11] sm:$0xff]
    %v8021 = vld [vmem:[%s8002 + $0x21] sm:$0xff]
    %v8022 = vld [vmem:[%s8002 + $0x31] sm:$0xff]
    %v8023 = vld [vmem:[%s8002 + $0x41] sm:$0xff]
    %v8024 = vld [vmem:[%s8002 + $0x51] sm:$0xff]
    %v8025 = vld [vmem:[%s8002 + $0x61] sm:$0xff]
    %v8026 = vld [vmem:[%s8002 + $0x71] sm:$0xff]
    %v8027 = vld [vmem:[%s8002 + $0xc1] sm:$0xff]
    %v8028 = vld [vmem:[%s8002 + $0xd1] sm:$0xff]
    %v8029 = vld [vmem:[%s8002 + $0xe1] sm:$0xff]
    %v8030 = vld [vmem:[%s8002 + $0xf1] sm:$0xff]
    %v8031 = vld [vmem:[%s8002 + $0x101] sm:$0xff]
    %v8032 = vld [vmem:[%s8002 + $0x111] sm:$0xff]
    %v8033 = vld [vmem:[%s8002 + $0x121] sm:$0xff]
    %v8034 = vld [vmem:[%s8002 + $0x131] sm:$0xff]
    %v8035 = vld [vmem:[%s8002 + $0x2] sm:$0xff]
    %v8036 = vld [vmem:[%s8002 + $0x12] sm:$0xff]
    %v8037 = vld [vmem:[%s8002 + $0x22] sm:$0xff]
    %v8038 = vld [vmem:[%s8002 + $0x32] sm:$0xff]
    %v8039 = vld [vmem:[%s8002 + $0x42] sm:$0xff]
    %v8040 = vld [vmem:[%s8002 + $0x52] sm:$0xff]
    %v8041 = vld [vmem:[%s8002 + $0x62] sm:$0xff]
    %v8042 = vld [vmem:[%s8002 + $0x72] sm:$0xff]
    %v8043 = vld [vmem:[%s8002 + $0xc2] sm:$0xff]
    %v8044 = vld [vmem:[%s8002 + $0xd2] sm:$0xff]
    %v8045 = vld [vmem:[%s8002 + $0xe2] sm:$0xff]
    %v8046 = vld [vmem:[%s8002 + $0xf2] sm:$0xff]
    %v8047 = vld [vmem:[%s8002 + $0x102] sm:$0xff]
    %v8048 = vld [vmem:[%s8002 + $0x112] sm:$0xff]
    %v8049 = vld [vmem:[%s8002 + $0x122] sm:$0xff]
    %v8050 = vld [vmem:[%s8002 + $0x132] sm:$0xff]
    %v8051 = vld [vmem:[%s8002 + $0x3] sm:$0xff]
    %v8052 = vld [vmem:[%s8002 + $0x13] sm:$0xff]
    %v8053 = vld [vmem:[%s8002 + $0x23] sm:$0xff]
    %v8054 = vld [vmem:[%s8002 + $0x33] sm:$0xff]
    %v8055 = vld [vmem:[%s8002 + $0x43] sm:$0xff]
    %v8056 = vld [vmem:[%s8002 + $0x53] sm:$0xff]
    %v8057 = vld [vmem:[%s8002 + $0x63] sm:$0xff]
    %v8058 = vld [vmem:[%s8002 + $0x73] sm:$0xff]
    %v8059 = vld [vmem:[%s8002 + $0xc3] sm:$0xff]
    %v8060 = vld [vmem:[%s8002 + $0xd3] sm:$0xff]
    %v8061 = vld [vmem:[%s8002 + $0xe3] sm:$0xff]
    %v8062 = vld [vmem:[%s8002 + $0xf3] sm:$0xff]
    %v8063 = vld [vmem:[%s8002 + $0x103] sm:$0xff]
    %v8064 = vld [vmem:[%s8002 + $0x113] sm:$0xff]
    %v8065 = vld [vmem:[%s8002 + $0x123] sm:$0xff]
    %v8066 = vld [vmem:[%s8002 + $0x133] sm:$0xff]
    %v8067 = vld [vmem:[%s8002 + $0x4] sm:$0xff]
    %v8068 = vld [vmem:[%s8002 + $0x14] sm:$0xff]
    %v8069 = vld [vmem:[%s8002 + $0x24] sm:$0xff]
    %v8070 = vld [vmem:[%s8002 + $0x34] sm:$0xff]
    %v8071 = vld [vmem:[%s8002 + $0x44] sm:$0xff]
    %v8072 = vld [vmem:[%s8002 + $0x54] sm:$0xff]
    %v8073 = vld [vmem:[%s8002 + $0x64] sm:$0xff]
    %v8074 = vld [vmem:[%s8002 + $0x74] sm:$0xff]
    %v8075 = vld [vmem:[%s8002 + $0xc4] sm:$0xff]
    %v8076 = vld [vmem:[%s8002 + $0xd4] sm:$0xff]
    %v8077 = vld [vmem:[%s8002 + $0xe4] sm:$0xff]
    %v8078 = vld [vmem:[%s8002 + $0xf4] sm:$0xff]
    %v8079 = vld [vmem:[%s8002 + $0x104] sm:$0xff]
    %v8080 = vld [vmem:[%s8002 + $0x114] sm:$0xff]
    %v8081 = vld [vmem:[%s8002 + $0x124] sm:$0xff]
    %v8082 = vld [vmem:[%s8002 + $0x134] sm:$0xff]
    %s8083 = scalar_lea.vmem [#allocation3], 64
    %v8084 = vld [vmem:[%s8083] sm:$0xff]
    %v8085 = vld [vmem:[%s8083 + $0x10] sm:$0xff]
    %v8086 = vld [vmem:[%s8083 + $0x20] sm:$0xff]
    %v8087 = vld [vmem:[%s8083 + $0x30] sm:$0xff]
    %v8088 = vld [vmem:[%s8083 + $0x40] sm:$0xff]
    %v8089 = vld [vmem:[%s8083 + $0x50] sm:$0xff]
    %v8090 = vld [vmem:[%s8083 + $0x60] sm:$0xff]
    %v8091 = vld [vmem:[%s8083 + $0x70] sm:$0xff]
    %v8092 = vld [vmem:[%s8083 + $0xc0] sm:$0xff]
    %v8093 = vld [vmem:[%s8083 + $0xd0] sm:$0xff]
    %v8094 = vld [vmem:[%s8083 + $0xe0] sm:$0xff]
    %v8095 = vld [vmem:[%s8083 + $0xf0] sm:$0xff]
    %v8096 = vld [vmem:[%s8083 + $0x100] sm:$0xff]
    %v8097 = vld [vmem:[%s8083 + $0x110] sm:$0xff]
    %v8098 = vld [vmem:[%s8083 + $0x120] sm:$0xff]
    %v8099 = vld [vmem:[%s8083 + $0x130] sm:$0xff]
    %v8100 = vld [vmem:[%s8083 + $0x1] sm:$0xff]
    %v8101 = vld [vmem:[%s8083 + $0x11] sm:$0xff]
    %v8102 = vld [vmem:[%s8083 + $0x21] sm:$0xff]
    %v8103 = vld [vmem:[%s8083 + $0x31] sm:$0xff]
    %v8104 = vld [vmem:[%s8083 + $0x41] sm:$0xff]
    %v8105 = vld [vmem:[%s8083 + $0x51] sm:$0xff]
    %v8106 = vld [vmem:[%s8083 + $0x61] sm:$0xff]
    %v8107 = vld [vmem:[%s8083 + $0x71] sm:$0xff]
    %v8108 = vld [vmem:[%s8083 + $0xc1] sm:$0xff]
    %v8109 = vld [vmem:[%s8083 + $0xd1] sm:$0xff]
    %v8110 = vld [vmem:[%s8083 + $0xe1] sm:$0xff]
    %v8111 = vld [vmem:[%s8083 + $0xf1] sm:$0xff]
    %v8112 = vld [vmem:[%s8083 + $0x101] sm:$0xff]
    %v8113 = vld [vmem:[%s8083 + $0x111] sm:$0xff]
    %v8114 = vld [vmem:[%s8083 + $0x121] sm:$0xff]
    %v8115 = vld [vmem:[%s8083 + $0x131] sm:$0xff]
    %v8116 = vld [vmem:[%s8083 + $0x2] sm:$0xff]
    %v8117 = vld [vmem:[%s8083 + $0x12] sm:$0xff]
    %v8118 = vld [vmem:[%s8083 + $0x22] sm:$0xff]
    %v8119 = vld [vmem:[%s8083 + $0x32] sm:$0xff]
    %v8120 = vld [vmem:[%s8083 + $0x42] sm:$0xff]
    %v8121 = vld [vmem:[%s8083 + $0x52] sm:$0xff]
    %v8122 = vld [vmem:[%s8083 + $0x62] sm:$0xff]
    %v8123 = vld [vmem:[%s8083 + $0x72] sm:$0xff]
    %v8124 = vld [vmem:[%s8083 + $0xc2] sm:$0xff]
    %v8125 = vld [vmem:[%s8083 + $0xd2] sm:$0xff]
    %v8126 = vld [vmem:[%s8083 + $0xe2] sm:$0xff]
    %v8127 = vld [vmem:[%s8083 + $0xf2] sm:$0xff]
    %v8128 = vld [vmem:[%s8083 + $0x102] sm:$0xff]
    %v8129 = vld [vmem:[%s8083 + $0x112] sm:$0xff]
    %v8130 = vld [vmem:[%s8083 + $0x122] sm:$0xff]
    %v8131 = vld [vmem:[%s8083 + $0x132] sm:$0xff]
    %v8132 = vld [vmem:[%s8083 + $0x3] sm:$0xff]
    %v8133 = vld [vmem:[%s8083 + $0x13] sm:$0xff]
    %v8134 = vld [vmem:[%s8083 + $0x23] sm:$0xff]
    %v8135 = vld [vmem:[%s8083 + $0x33] sm:$0xff]
    %v8136 = vld [vmem:[%s8083 + $0x43] sm:$0xff]
    %v8137 = vld [vmem:[%s8083 + $0x53] sm:$0xff]
    %v8138 = vld [vmem:[%s8083 + $0x63] sm:$0xff]
    %v8139 = vld [vmem:[%s8083 + $0x73] sm:$0xff]
    %v8140 = vld [vmem:[%s8083 + $0xc3] sm:$0xff]
    %v8141 = vld [vmem:[%s8083 + $0xd3] sm:$0xff]
    %v8142 = vld [vmem:[%s8083 + $0xe3] sm:$0xff]
    %v8143 = vld [vmem:[%s8083 + $0xf3] sm:$0xff]
    %v8144 = vld [vmem:[%s8083 + $0x103] sm:$0xff]
    %v8145 = vld [vmem:[%s8083 + $0x113] sm:$0xff]
    %v8146 = vld [vmem:[%s8083 + $0x123] sm:$0xff]
    %v8147 = vld [vmem:[%s8083 + $0x133] sm:$0xff]
    %v8148 = vld [vmem:[%s8083 + $0x4] sm:$0xff]
    %v8149 = vld [vmem:[%s8083 + $0x14] sm:$0xff]
    %v8150 = vld [vmem:[%s8083 + $0x24] sm:$0xff]
    %v8151 = vld [vmem:[%s8083 + $0x34] sm:$0xff]
    %v8152 = vld [vmem:[%s8083 + $0x44] sm:$0xff]
    %v8153 = vld [vmem:[%s8083 + $0x54] sm:$0xff]
    %v8154 = vld [vmem:[%s8083 + $0x64] sm:$0xff]
    %v8155 = vld [vmem:[%s8083 + $0x74] sm:$0xff]
    %v8156 = vld [vmem:[%s8083 + $0xc4] sm:$0xff]
    %v8157 = vld [vmem:[%s8083 + $0xd4] sm:$0xff]
    %v8158 = vld [vmem:[%s8083 + $0xe4] sm:$0xff]
    %v8159 = vld [vmem:[%s8083 + $0xf4] sm:$0xff]
    %v8160 = vld [vmem:[%s8083 + $0x104] sm:$0xff]
    %v8161 = vld [vmem:[%s8083 + $0x114] sm:$0xff]
    %v8162 = vld [vmem:[%s8083 + $0x124] sm:$0xff]
    %v8163 = vld [vmem:[%s8083 + $0x134] sm:$0xff]
    %8180 = vrot.lane.b32.xlu0 %v7777, 32
    %v8181 = vpop.permute.xlu0 %8180
    %8182 = vrot.lane.b32.xlu0 %v7778, 32
    %v8183 = vpop.permute.xlu0 %8182
    %8184 = vrot.lane.b32.xlu0 %v7779, 32
    %v8185 = vpop.permute.xlu0 %8184
    %8186 = vrot.lane.b32.xlu0 %v7780, 32
    %v8187 = vpop.permute.xlu0 %8186
    %8188 = vrot.lane.b32.xlu0 %v7781, 32
    %v8189 = vpop.permute.xlu0 %8188
    %8190 = vrot.lane.b32.xlu0 %v7782, 32
    %v8191 = vpop.permute.xlu0 %8190
    %8192 = vrot.lane.b32.xlu0 %v7783, 32
    %v8193 = vpop.permute.xlu0 %8192
    %8194 = vrot.lane.b32.xlu0 %v7784, 32
    %v8195 = vpop.permute.xlu0 %8194
    %8196 = vrot.lane.b32.xlu0 %v7785, 32
    %v8197 = vpop.permute.xlu0 %8196
    %8198 = vrot.lane.b32.xlu0 %v7786, 32
    %v8199 = vpop.permute.xlu0 %8198
    %8200 = vrot.lane.b32.xlu0 %v7787, 32
    %v8201 = vpop.permute.xlu0 %8200
    %8202 = vrot.lane.b32.xlu0 %v7788, 32
    %v8203 = vpop.permute.xlu0 %8202
    %8204 = vrot.lane.b32.xlu0 %v7789, 32
    %v8205 = vpop.permute.xlu0 %8204
    %8206 = vrot.lane.b32.xlu0 %v7790, 32
    %v8207 = vpop.permute.xlu0 %8206
    %8208 = vrot.lane.b32.xlu0 %v7791, 32
    %v8209 = vpop.permute.xlu0 %8208
    %8210 = vrot.lane.b32.xlu0 %v7792, 32
    %v8211 = vpop.permute.xlu0 %8210
    %8244 = vrot.lane.b32.xlu0 %v7793, 64
    %v8245 = vpop.permute.xlu0 %8244
    %8246 = vrot.lane.b32.xlu0 %v7794, 64
    %v8247 = vpop.permute.xlu0 %8246
    %8248 = vrot.lane.b32.xlu0 %v7795, 64
    %v8249 = vpop.permute.xlu0 %8248
    %8250 = vrot.lane.b32.xlu0 %v7796, 64
    %v8251 = vpop.permute.xlu0 %8250
    %8252 = vrot.lane.b32.xlu0 %v7797, 64
    %v8253 = vpop.permute.xlu0 %8252
    %8254 = vrot.lane.b32.xlu0 %v7798, 64
    %v8255 = vpop.permute.xlu0 %8254
    %8256 = vrot.lane.b32.xlu0 %v7799, 64
    %v8257 = vpop.permute.xlu0 %8256
    %8258 = vrot.lane.b32.xlu0 %v7800, 64
    %v8259 = vpop.permute.xlu0 %8258
    %8260 = vrot.lane.b32.xlu0 %v7801, 64
    %v8261 = vpop.permute.xlu0 %8260
    %8262 = vrot.lane.b32.xlu0 %v7802, 64
    %v8263 = vpop.permute.xlu0 %8262
    %8264 = vrot.lane.b32.xlu0 %v7803, 64
    %v8265 = vpop.permute.xlu0 %8264
    %8266 = vrot.lane.b32.xlu0 %v7804, 64
    %v8267 = vpop.permute.xlu0 %8266
    %8268 = vrot.lane.b32.xlu0 %v7805, 64
    %v8269 = vpop.permute.xlu0 %8268
    %8270 = vrot.lane.b32.xlu0 %v7806, 64
    %v8271 = vpop.permute.xlu0 %8270
    %8272 = vrot.lane.b32.xlu0 %v7807, 64
    %v8273 = vpop.permute.xlu0 %8272
    %8274 = vrot.lane.b32.xlu0 %v7808, 64
    %v8275 = vpop.permute.xlu0 %8274
    %8308 = vrot.lane.b32.xlu0 %v7809, 96
    %v8309 = vpop.permute.xlu0 %8308
    %8310 = vrot.lane.b32.xlu0 %v7810, 96
    %v8311 = vpop.permute.xlu0 %8310
    %8312 = vrot.lane.b32.xlu0 %v7811, 96
    %v8313 = vpop.permute.xlu0 %8312
    %8314 = vrot.lane.b32.xlu0 %v7812, 96
    %v8315 = vpop.permute.xlu0 %8314
    %8316 = vrot.lane.b32.xlu0 %v7813, 96
    %v8317 = vpop.permute.xlu0 %8316
    %8318 = vrot.lane.b32.xlu0 %v7814, 96
    %v8319 = vpop.permute.xlu0 %8318
    %8320 = vrot.lane.b32.xlu0 %v7815, 96
    %v8321 = vpop.permute.xlu0 %8320
    %8322 = vrot.lane.b32.xlu0 %v7816, 96
    %v8323 = vpop.permute.xlu0 %8322
    %8324 = vrot.lane.b32.xlu0 %v7817, 96
    %v8325 = vpop.permute.xlu0 %8324
    %8326 = vrot.lane.b32.xlu0 %v7818, 96
    %v8327 = vpop.permute.xlu0 %8326
    %8328 = vrot.lane.b32.xlu0 %v7819, 96
    %v8329 = vpop.permute.xlu0 %8328
    %8330 = vrot.lane.b32.xlu0 %v7820, 96
    %v8331 = vpop.permute.xlu0 %8330
    %8332 = vrot.lane.b32.xlu0 %v7821, 96
    %v8333 = vpop.permute.xlu0 %8332
    %8334 = vrot.lane.b32.xlu0 %v7822, 96
    %v8335 = vpop.permute.xlu0 %8334
    %8336 = vrot.lane.b32.xlu0 %v7823, 96
    %v8337 = vpop.permute.xlu0 %8336
    %8338 = vrot.lane.b32.xlu0 %v7824, 96
    %v8339 = vpop.permute.xlu0 %8338
    %8372 = vrot.lane.b32.xlu0 %v7842, 32
    %v8373 = vpop.permute.xlu0 %8372
    %8374 = vrot.lane.b32.xlu0 %v7843, 32
    %v8375 = vpop.permute.xlu0 %8374
    %8376 = vrot.lane.b32.xlu0 %v7844, 32
    %v8377 = vpop.permute.xlu0 %8376
    %8378 = vrot.lane.b32.xlu0 %v7845, 32
    %v8379 = vpop.permute.xlu0 %8378
    %8380 = vrot.lane.b32.xlu0 %v7846, 32
    %v8381 = vpop.permute.xlu0 %8380
    %8382 = vrot.lane.b32.xlu0 %v7847, 32
    %v8383 = vpop.permute.xlu0 %8382
    %8384 = vrot.lane.b32.xlu0 %v7848, 32
    %v8385 = vpop.permute.xlu0 %8384
    %8386 = vrot.lane.b32.xlu0 %v7849, 32
    %v8387 = vpop.permute.xlu0 %8386
    %8388 = vrot.lane.b32.xlu0 %v7850, 32
    %v8389 = vpop.permute.xlu0 %8388
    %8390 = vrot.lane.b32.xlu0 %v7851, 32
    %v8391 = vpop.permute.xlu0 %8390
    %8392 = vrot.lane.b32.xlu0 %v7852, 32
    %v8393 = vpop.permute.xlu0 %8392
    %8394 = vrot.lane.b32.xlu0 %v7853, 32
    %v8395 = vpop.permute.xlu0 %8394
    %8396 = vrot.lane.b32.xlu0 %v7854, 32
    %v8397 = vpop.permute.xlu0 %8396
    %8398 = vrot.lane.b32.xlu0 %v7855, 32
    %v8399 = vpop.permute.xlu0 %8398
    %8400 = vrot.lane.b32.xlu0 %v7856, 32
    %v8401 = vpop.permute.xlu0 %8400
    %8402 = vrot.lane.b32.xlu0 %v7857, 32
    %v8403 = vpop.permute.xlu0 %8402
    %8436 = vrot.lane.b32.xlu0 %v7858, 64
    %v8437 = vpop.permute.xlu0 %8436
    %8438 = vrot.lane.b32.xlu0 %v7859, 64
    %v8439 = vpop.permute.xlu0 %8438
    %8440 = vrot.lane.b32.xlu0 %v7860, 64
    %v8441 = vpop.permute.xlu0 %8440
    %8442 = vrot.lane.b32.xlu0 %v7861, 64
    %v8443 = vpop.permute.xlu0 %8442
    %8444 = vrot.lane.b32.xlu0 %v7862, 64
    %v8445 = vpop.permute.xlu0 %8444
    %8446 = vrot.lane.b32.xlu0 %v7863, 64
    %v8447 = vpop.permute.xlu0 %8446
    %8448 = vrot.lane.b32.xlu0 %v7864, 64
    %v8449 = vpop.permute.xlu0 %8448
    %8450 = vrot.lane.b32.xlu0 %v7865, 64
    %v8451 = vpop.permute.xlu0 %8450
    %8452 = vrot.lane.b32.xlu0 %v7866, 64
    %v8453 = vpop.permute.xlu0 %8452
    %8454 = vrot.lane.b32.xlu0 %v7867, 64
    %v8455 = vpop.permute.xlu0 %8454
    %8456 = vrot.lane.b32.xlu0 %v7868, 64
    %v8457 = vpop.permute.xlu0 %8456
    %8458 = vrot.lane.b32.xlu0 %v7869, 64
    %v8459 = vpop.permute.xlu0 %8458
    %8460 = vrot.lane.b32.xlu0 %v7870, 64
    %v8461 = vpop.permute.xlu0 %8460
    %8462 = vrot.lane.b32.xlu0 %v7871, 64
    %v8463 = vpop.permute.xlu0 %8462
    %8464 = vrot.lane.b32.xlu0 %v7872, 64
    %v8465 = vpop.permute.xlu0 %8464
    %8466 = vrot.lane.b32.xlu0 %v7873, 64
    %v8467 = vpop.permute.xlu0 %8466
    %8500 = vrot.lane.b32.xlu0 %v7874, 96
    %v8501 = vpop.permute.xlu0 %8500
    %8502 = vrot.lane.b32.xlu0 %v7875, 96
    %v8503 = vpop.permute.xlu0 %8502
    %8504 = vrot.lane.b32.xlu0 %v7876, 96
    %v8505 = vpop.permute.xlu0 %8504
    %8506 = vrot.lane.b32.xlu0 %v7877, 96
    %v8507 = vpop.permute.xlu0 %8506
    %8508 = vrot.lane.b32.xlu0 %v7878, 96
    %v8509 = vpop.permute.xlu0 %8508
    %8510 = vrot.lane.b32.xlu0 %v7879, 96
    %v8511 = vpop.permute.xlu0 %8510
    %8512 = vrot.lane.b32.xlu0 %v7880, 96
    %v8513 = vpop.permute.xlu0 %8512
    %8514 = vrot.lane.b32.xlu0 %v7881, 96
    %v8515 = vpop.permute.xlu0 %8514
    %8516 = vrot.lane.b32.xlu0 %v7882, 96
    %v8517 = vpop.permute.xlu0 %8516
    %8518 = vrot.lane.b32.xlu0 %v7883, 96
    %v8519 = vpop.permute.xlu0 %8518
    %8520 = vrot.lane.b32.xlu0 %v7884, 96
    %v8521 = vpop.permute.xlu0 %8520
    %8522 = vrot.lane.b32.xlu0 %v7885, 96
    %v8523 = vpop.permute.xlu0 %8522
    %8524 = vrot.lane.b32.xlu0 %v7886, 96
    %v8525 = vpop.permute.xlu0 %8524
    %8526 = vrot.lane.b32.xlu0 %v7887, 96
    %v8527 = vpop.permute.xlu0 %8526
    %8528 = vrot.lane.b32.xlu0 %v7888, 96
    %v8529 = vpop.permute.xlu0 %8528
    %8530 = vrot.lane.b32.xlu0 %v7889, 96
    %v8531 = vpop.permute.xlu0 %8530
    %8564 = vrot.lane.b32.xlu0 %v7906, 32
    %v8565 = vpop.permute.xlu0 %8564
    %8566 = vrot.lane.b32.xlu0 %v7907, 32
    %v8567 = vpop.permute.xlu0 %8566
    %8568 = vrot.lane.b32.xlu0 %v7908, 32
    %v8569 = vpop.permute.xlu0 %8568
    %8570 = vrot.lane.b32.xlu0 %v7909, 32
    %v8571 = vpop.permute.xlu0 %8570
    %8572 = vrot.lane.b32.xlu0 %v7910, 32
    %v8573 = vpop.permute.xlu0 %8572
    %8574 = vrot.lane.b32.xlu0 %v7911, 32
    %v8575 = vpop.permute.xlu0 %8574
    %8576 = vrot.lane.b32.xlu0 %v7912, 32
    %v8577 = vpop.permute.xlu0 %8576
    %8578 = vrot.lane.b32.xlu0 %v7913, 32
    %v8579 = vpop.permute.xlu0 %8578
    %8580 = vrot.lane.b32.xlu0 %v7914, 32
    %v8581 = vpop.permute.xlu0 %8580
    %8582 = vrot.lane.b32.xlu0 %v7915, 32
    %v8583 = vpop.permute.xlu0 %8582
    %8584 = vrot.lane.b32.xlu0 %v7916, 32
    %v8585 = vpop.permute.xlu0 %8584
    %8586 = vrot.lane.b32.xlu0 %v7917, 32
    %v8587 = vpop.permute.xlu0 %8586
    %8588 = vrot.lane.b32.xlu0 %v7918, 32
    %v8589 = vpop.permute.xlu0 %8588
    %8590 = vrot.lane.b32.xlu0 %v7919, 32
    %v8591 = vpop.permute.xlu0 %8590
    %8592 = vrot.lane.b32.xlu0 %v7920, 32
    %v8593 = vpop.permute.xlu0 %8592
    %8594 = vrot.lane.b32.xlu0 %v7921, 32
    %v8595 = vpop.permute.xlu0 %8594
    %8628 = vrot.lane.b32.xlu0 %v7922, 64
    %v8629 = vpop.permute.xlu0 %8628
    %8630 = vrot.lane.b32.xlu0 %v7923, 64
    %v8631 = vpop.permute.xlu0 %8630
    %8632 = vrot.lane.b32.xlu0 %v7924, 64
    %v8633 = vpop.permute.xlu0 %8632
    %8634 = vrot.lane.b32.xlu0 %v7925, 64
    %v8635 = vpop.permute.xlu0 %8634
    %8636 = vrot.lane.b32.xlu0 %v7926, 64
    %v8637 = vpop.permute.xlu0 %8636
    %8638 = vrot.lane.b32.xlu0 %v7927, 64
    %v8639 = vpop.permute.xlu0 %8638
    %8640 = vrot.lane.b32.xlu0 %v7928, 64
    %v8641 = vpop.permute.xlu0 %8640
    %8642 = vrot.lane.b32.xlu0 %v7929, 64
    %v8643 = vpop.permute.xlu0 %8642
    %8644 = vrot.lane.b32.xlu0 %v7930, 64
    %v8645 = vpop.permute.xlu0 %8644
    %8646 = vrot.lane.b32.xlu0 %v7931, 64
    %v8647 = vpop.permute.xlu0 %8646
    %8648 = vrot.lane.b32.xlu0 %v7932, 64
    %v8649 = vpop.permute.xlu0 %8648
    %8650 = vrot.lane.b32.xlu0 %v7933, 64
    %v8651 = vpop.permute.xlu0 %8650
    %8652 = vrot.lane.b32.xlu0 %v7934, 64
    %v8653 = vpop.permute.xlu0 %8652
    %8654 = vrot.lane.b32.xlu0 %v7935, 64
    %v8655 = vpop.permute.xlu0 %8654
    %8656 = vrot.lane.b32.xlu0 %v7936, 64
    %v8657 = vpop.permute.xlu0 %8656
    %8658 = vrot.lane.b32.xlu0 %v7937, 64
    %v8659 = vpop.permute.xlu0 %8658
    %8692 = vrot.lane.b32.xlu0 %v7938, 96
    %v8693 = vpop.permute.xlu0 %8692
    %8694 = vrot.lane.b32.xlu0 %v7939, 96
    %v8695 = vpop.permute.xlu0 %8694
    %8696 = vrot.lane.b32.xlu0 %v7940, 96
    %v8697 = vpop.permute.xlu0 %8696
    %8698 = vrot.lane.b32.xlu0 %v7941, 96
    %v8699 = vpop.permute.xlu0 %8698
    %8700 = vrot.lane.b32.xlu0 %v7942, 96
    %v8701 = vpop.permute.xlu0 %8700
    %8702 = vrot.lane.b32.xlu0 %v7943, 96
    %v8703 = vpop.permute.xlu0 %8702
    %8704 = vrot.lane.b32.xlu0 %v7944, 96
    %v8705 = vpop.permute.xlu0 %8704
    %8706 = vrot.lane.b32.xlu0 %v7945, 96
    %v8707 = vpop.permute.xlu0 %8706
    %8708 = vrot.lane.b32.xlu0 %v7946, 96
    %v8709 = vpop.permute.xlu0 %8708
    %8710 = vrot.lane.b32.xlu0 %v7947, 96
    %v8711 = vpop.permute.xlu0 %8710
    %8712 = vrot.lane.b32.xlu0 %v7948, 96
    %v8713 = vpop.permute.xlu0 %8712
    %8714 = vrot.lane.b32.xlu0 %v7949, 96
    %v8715 = vpop.permute.xlu0 %8714
    %8716 = vrot.lane.b32.xlu0 %v7950, 96
    %v8717 = vpop.permute.xlu0 %8716
    %8718 = vrot.lane.b32.xlu0 %v7951, 96
    %v8719 = vpop.permute.xlu0 %8718
    %8720 = vrot.lane.b32.xlu0 %v7952, 96
    %v8721 = vpop.permute.xlu0 %8720
    %8722 = vrot.lane.b32.xlu0 %v7953, 96
    %v8723 = vpop.permute.xlu0 %8722
    %8756 = vrot.lane.b32.xlu0 %v7970, 32
    %v8757 = vpop.permute.xlu0 %8756
    %8758 = vrot.lane.b32.xlu0 %v7971, 32
    %v8759 = vpop.permute.xlu0 %8758
    %8760 = vrot.lane.b32.xlu0 %v7972, 32
    %v8761 = vpop.permute.xlu0 %8760
    %8762 = vrot.lane.b32.xlu0 %v7973, 32
    %v8763 = vpop.permute.xlu0 %8762
    %8764 = vrot.lane.b32.xlu0 %v7974, 32
    %v8765 = vpop.permute.xlu0 %8764
    %8766 = vrot.lane.b32.xlu0 %v7975, 32
    %v8767 = vpop.permute.xlu0 %8766
    %8768 = vrot.lane.b32.xlu0 %v7976, 32
    %v8769 = vpop.permute.xlu0 %8768
    %8770 = vrot.lane.b32.xlu0 %v7977, 32
    %v8771 = vpop.permute.xlu0 %8770
    %8772 = vrot.lane.b32.xlu0 %v7978, 32
    %v8773 = vpop.permute.xlu0 %8772
    %8774 = vrot.lane.b32.xlu0 %v7979, 32
    %v8775 = vpop.permute.xlu0 %8774
    %8776 = vrot.lane.b32.xlu0 %v7980, 32
    %v8777 = vpop.permute.xlu0 %8776
    %8778 = vrot.lane.b32.xlu0 %v7981, 32
    %v8779 = vpop.permute.xlu0 %8778
    %8780 = vrot.lane.b32.xlu0 %v7982, 32
    %v8781 = vpop.permute.xlu0 %8780
    %8782 = vrot.lane.b32.xlu0 %v7983, 32
    %v8783 = vpop.permute.xlu0 %8782
    %8784 = vrot.lane.b32.xlu0 %v7984, 32
    %v8785 = vpop.permute.xlu0 %8784
    %8786 = vrot.lane.b32.xlu0 %v7985, 32
    %v8787 = vpop.permute.xlu0 %8786
    %8820 = vrot.lane.b32.xlu0 %v7986, 64
    %v8821 = vpop.permute.xlu0 %8820
    %8822 = vrot.lane.b32.xlu0 %v7987, 64
    %v8823 = vpop.permute.xlu0 %8822
    %8824 = vrot.lane.b32.xlu0 %v7988, 64
    %v8825 = vpop.permute.xlu0 %8824
    %8826 = vrot.lane.b32.xlu0 %v7989, 64
    %v8827 = vpop.permute.xlu0 %8826
    %8828 = vrot.lane.b32.xlu0 %v7990, 64
    %v8829 = vpop.permute.xlu0 %8828
    %8830 = vrot.lane.b32.xlu0 %v7991, 64
    %v8831 = vpop.permute.xlu0 %8830
    %8832 = vrot.lane.b32.xlu0 %v7992, 64
    %v8833 = vpop.permute.xlu0 %8832
    %8834 = vrot.lane.b32.xlu0 %v7993, 64
    %v8835 = vpop.permute.xlu0 %8834
    %8836 = vrot.lane.b32.xlu0 %v7994, 64
    %v8837 = vpop.permute.xlu0 %8836
    %8838 = vrot.lane.b32.xlu0 %v7995, 64
    %v8839 = vpop.permute.xlu0 %8838
    %8840 = vrot.lane.b32.xlu0 %v7996, 64
    %v8841 = vpop.permute.xlu0 %8840
    %8842 = vrot.lane.b32.xlu0 %v7997, 64
    %v8843 = vpop.permute.xlu0 %8842
    %8844 = vrot.lane.b32.xlu0 %v7998, 64
    %v8845 = vpop.permute.xlu0 %8844
    %8846 = vrot.lane.b32.xlu0 %v7999, 64
    %v8847 = vpop.permute.xlu0 %8846
    %8848 = vrot.lane.b32.xlu0 %v8000, 64
    %v8849 = vpop.permute.xlu0 %8848
    %8850 = vrot.lane.b32.xlu0 %v8001, 64
    %v8851 = vpop.permute.xlu0 %8850
    %8884 = vrot.lane.b32.xlu0 %v8003, 96
    %v8885 = vpop.permute.xlu0 %8884
    %8886 = vrot.lane.b32.xlu0 %v8004, 96
    %v8887 = vpop.permute.xlu0 %8886
    %8888 = vrot.lane.b32.xlu0 %v8005, 96
    %v8889 = vpop.permute.xlu0 %8888
    %8890 = vrot.lane.b32.xlu0 %v8006, 96
    %v8891 = vpop.permute.xlu0 %8890
    %8892 = vrot.lane.b32.xlu0 %v8007, 96
    %v8893 = vpop.permute.xlu0 %8892
    %8894 = vrot.lane.b32.xlu0 %v8008, 96
    %v8895 = vpop.permute.xlu0 %8894
    %8896 = vrot.lane.b32.xlu0 %v8009, 96
    %v8897 = vpop.permute.xlu0 %8896
    %8898 = vrot.lane.b32.xlu0 %v8010, 96
    %v8899 = vpop.permute.xlu0 %8898
    %8900 = vrot.lane.b32.xlu0 %v8011, 96
    %v8901 = vpop.permute.xlu0 %8900
    %8902 = vrot.lane.b32.xlu0 %v8012, 96
    %v8903 = vpop.permute.xlu0 %8902
    %8904 = vrot.lane.b32.xlu0 %v8013, 96
    %v8905 = vpop.permute.xlu0 %8904
    %8906 = vrot.lane.b32.xlu0 %v8014, 96
    %v8907 = vpop.permute.xlu0 %8906
    %8908 = vrot.lane.b32.xlu0 %v8015, 96
    %v8909 = vpop.permute.xlu0 %8908
    %8910 = vrot.lane.b32.xlu0 %v8016, 96
    %v8911 = vpop.permute.xlu0 %8910
    %8912 = vrot.lane.b32.xlu0 %v8017, 96
    %v8913 = vpop.permute.xlu0 %8912
    %8914 = vrot.lane.b32.xlu0 %v8018, 96
    %v8915 = vpop.permute.xlu0 %8914
    %v8932 = vsel %vm6917, %v7761, %v8181
    %v8933 = vsel %vm6917, %v7762, %v8183
    %v8934 = vsel %vm6917, %v7763, %v8185
    %v8935 = vsel %vm6917, %v7764, %v8187
    %v8936 = vsel %vm6917, %v7765, %v8189
    %v8937 = vsel %vm6917, %v7766, %v8191
    %v8938 = vsel %vm6917, %v7767, %v8193
    %v8939 = vsel %vm6917, %v7768, %v8195
    %v8940 = vsel %vm6917, %v7769, %v8197
    %v8941 = vsel %vm6917, %v7770, %v8199
    %v8942 = vsel %vm6917, %v7771, %v8201
    %v8943 = vsel %vm6917, %v7772, %v8203
    %v8944 = vsel %vm6917, %v7773, %v8205
    %v8945 = vsel %vm6917, %v7774, %v8207
    %v8946 = vsel %vm6917, %v7775, %v8209
    %v8947 = vsel %vm6917, %v7776, %v8211
    %vm8948 = vcmask 523264
    %v8949 = vsel %vm8948, %v8932, %v8245
    %v8950 = vsel %vm8948, %v8933, %v8247
    %v8951 = vsel %vm8948, %v8934, %v8249
    %v8952 = vsel %vm8948, %v8935, %v8251
    %v8953 = vsel %vm8948, %v8936, %v8253
    %v8954 = vsel %vm8948, %v8937, %v8255
    %v8955 = vsel %vm8948, %v8938, %v8257
    %v8956 = vsel %vm8948, %v8939, %v8259
    %v8957 = vsel %vm8948, %v8940, %v8261
    %v8958 = vsel %vm8948, %v8941, %v8263
    %v8959 = vsel %vm8948, %v8942, %v8265
    %v8960 = vsel %vm8948, %v8943, %v8267
    %v8961 = vsel %vm8948, %v8944, %v8269
    %v8962 = vsel %vm8948, %v8945, %v8271
    %v8963 = vsel %vm8948, %v8946, %v8273
    %v8964 = vsel %vm8948, %v8947, %v8275
    %vm8965 = vcmask 785408
    %v8966 = vsel %vm8965, %v8949, %v8309
    %v8967 = vsel %vm8965, %v8950, %v8311
    %v8968 = vsel %vm8965, %v8951, %v8313
    %v8969 = vsel %vm8965, %v8952, %v8315
    %v8970 = vsel %vm8965, %v8953, %v8317
    %v8971 = vsel %vm8965, %v8954, %v8319
    %v8972 = vsel %vm8965, %v8955, %v8321
    %v8973 = vsel %vm8965, %v8956, %v8323
    %v8974 = vsel %vm8965, %v8957, %v8325
    %v8975 = vsel %vm8965, %v8958, %v8327
    %v8976 = vsel %vm8965, %v8959, %v8329
    %v8977 = vsel %vm8965, %v8960, %v8331
    %v8978 = vsel %vm8965, %v8961, %v8333
    %v8979 = vsel %vm8965, %v8962, %v8335
    %v8980 = vsel %vm8965, %v8963, %v8337
    %v8981 = vsel %vm8965, %v8964, %v8339
    %v8982 = vsel %vm6917, %v7825, %v8373
    %v8983 = vsel %vm6917, %v7826, %v8375
    %v8984 = vsel %vm6917, %v7827, %v8377
    %v8985 = vsel %vm6917, %v7828, %v8379
    %v8986 = vsel %vm6917, %v7829, %v8381
    %v8987 = vsel %vm6917, %v7830, %v8383
    %v8988 = vsel %vm6917, %v7831, %v8385
    %v8989 = vsel %vm6917, %v7832, %v8387
    %v8990 = vsel %vm6917, %v7833, %v8389
    %v8991 = vsel %vm6917, %v7834, %v8391
    %v8992 = vsel %vm6917, %v7835, %v8393
    %v8993 = vsel %vm6917, %v7836, %v8395
    %v8994 = vsel %vm6917, %v7837, %v8397
    %v8995 = vsel %vm6917, %v7838, %v8399
    %v8996 = vsel %vm6917, %v7839, %v8401
    %v8997 = vsel %vm6917, %v7840, %v8403
    %v8998 = vsel %vm8948, %v8982, %v8437
    %v8999 = vsel %vm8948, %v8983, %v8439
    %v9000 = vsel %vm8948, %v8984, %v8441
    %v9001 = vsel %vm8948, %v8985, %v8443
    %v9002 = vsel %vm8948, %v8986, %v8445
    %v9003 = vsel %vm8948, %v8987, %v8447
    %v9004 = vsel %vm8948, %v8988, %v8449
    %v9005 = vsel %vm8948, %v8989, %v8451
    %v9006 = vsel %vm8948, %v8990, %v8453
    %v9007 = vsel %vm8948, %v8991, %v8455
    %v9008 = vsel %vm8948, %v8992, %v8457
    %v9009 = vsel %vm8948, %v8993, %v8459
    %v9010 = vsel %vm8948, %v8994, %v8461
    %v9011 = vsel %vm8948, %v8995, %v8463
    %v9012 = vsel %vm8948, %v8996, %v8465
    %v9013 = vsel %vm8948, %v8997, %v8467
    %v9014 = vsel %vm8965, %v8998, %v8501
    %v9015 = vsel %vm8965, %v8999, %v8503
    %v9016 = vsel %vm8965, %v9000, %v8505
    %v9017 = vsel %vm8965, %v9001, %v8507
    %v9018 = vsel %vm8965, %v9002, %v8509
    %v9019 = vsel %vm8965, %v9003, %v8511
    %v9020 = vsel %vm8965, %v9004, %v8513
    %v9021 = vsel %vm8965, %v9005, %v8515
    %v9022 = vsel %vm8965, %v9006, %v8517
    %v9023 = vsel %vm8965, %v9007, %v8519
    %v9024 = vsel %vm8965, %v9008, %v8521
    %v9025 = vsel %vm8965, %v9009, %v8523
    %v9026 = vsel %vm8965, %v9010, %v8525
    %v9027 = vsel %vm8965, %v9011, %v8527
    %v9028 = vsel %vm8965, %v9012, %v8529
    %v9029 = vsel %vm8965, %v9013, %v8531
    %v9030 = vsel %vm6917, %v7890, %v8565
    %v9031 = vsel %vm6917, %v7891, %v8567
    %v9032 = vsel %vm6917, %v7892, %v8569
    %v9033 = vsel %vm6917, %v7893, %v8571
    %v9034 = vsel %vm6917, %v7894, %v8573
    %v9035 = vsel %vm6917, %v7895, %v8575
    %v9036 = vsel %vm6917, %v7896, %v8577
    %v9037 = vsel %vm6917, %v7897, %v8579
    %v9038 = vsel %vm6917, %v7898, %v8581
    %v9039 = vsel %vm6917, %v7899, %v8583
    %v9040 = vsel %vm6917, %v7900, %v8585
    %v9041 = vsel %vm6917, %v7901, %v8587
    %v9042 = vsel %vm6917, %v7902, %v8589
    %v9043 = vsel %vm6917, %v7903, %v8591
    %v9044 = vsel %vm6917, %v7904, %v8593
    %v9045 = vsel %vm6917, %v7905, %v8595
    %v9046 = vsel %vm8948, %v9030, %v8629
    %v9047 = vsel %vm8948, %v9031, %v8631
    %v9048 = vsel %vm8948, %v9032, %v8633
    %v9049 = vsel %vm8948, %v9033, %v8635
    %v9050 = vsel %vm8948, %v9034, %v8637
    %v9051 = vsel %vm8948, %v9035, %v8639
    %v9052 = vsel %vm8948, %v9036, %v8641
    %v9053 = vsel %vm8948, %v9037, %v8643
    %v9054 = vsel %vm8948, %v9038, %v8645
    %v9055 = vsel %vm8948, %v9039, %v8647
    %v9056 = vsel %vm8948, %v9040, %v8649
    %v9057 = vsel %vm8948, %v9041, %v8651
    %v9058 = vsel %vm8948, %v9042, %v8653
    %v9059 = vsel %vm8948, %v9043, %v8655
    %v9060 = vsel %vm8948, %v9044, %v8657
    %v9061 = vsel %vm8948, %v9045, %v8659
    %v9062 = vsel %vm8965, %v9046, %v8693
    %v9063 = vsel %vm8965, %v9047, %v8695
    %v9064 = vsel %vm8965, %v9048, %v8697
    %v9065 = vsel %vm8965, %v9049, %v8699
    %v9066 = vsel %vm8965, %v9050, %v8701
    %v9067 = vsel %vm8965, %v9051, %v8703
    %v9068 = vsel %vm8965, %v9052, %v8705
    %v9069 = vsel %vm8965, %v9053, %v8707
    %v9070 = vsel %vm8965, %v9054, %v8709
    %v9071 = vsel %vm8965, %v9055, %v8711
    %v9072 = vsel %vm8965, %v9056, %v8713
    %v9073 = vsel %vm8965, %v9057, %v8715
    %v9074 = vsel %vm8965, %v9058, %v8717
    %v9075 = vsel %vm8965, %v9059, %v8719
    %v9076 = vsel %vm8965, %v9060, %v8721
    %v9077 = vsel %vm8965, %v9061, %v8723
    %v9078 = vsel %vm6917, %v7954, %v8757
    %v9079 = vsel %vm6917, %v7955, %v8759
    %v9080 = vsel %vm6917, %v7956, %v8761
    %v9081 = vsel %vm6917, %v7957, %v8763
    %v9082 = vsel %vm6917, %v7958, %v8765
    %v9083 = vsel %vm6917, %v7959, %v8767
    %v9084 = vsel %vm6917, %v7960, %v8769
    %v9085 = vsel %vm6917, %v7961, %v8771
    %v9086 = vsel %vm6917, %v7962, %v8773
    %v9087 = vsel %vm6917, %v7963, %v8775
    %v9088 = vsel %vm6917, %v7964, %v8777
    %v9089 = vsel %vm6917, %v7965, %v8779
    %v9090 = vsel %vm6917, %v7966, %v8781
    %v9091 = vsel %vm6917, %v7967, %v8783
    %v9092 = vsel %vm6917, %v7968, %v8785
    %v9093 = vsel %vm6917, %v7969, %v8787
    %v9094 = vsel %vm8948, %v9078, %v8821
    %v9095 = vsel %vm8948, %v9079, %v8823
    %v9096 = vsel %vm8948, %v9080, %v8825
    %v9097 = vsel %vm8948, %v9081, %v8827
    %v9098 = vsel %vm8948, %v9082, %v8829
    %v9099 = vsel %vm8948, %v9083, %v8831
    %v9100 = vsel %vm8948, %v9084, %v8833
    %v9101 = vsel %vm8948, %v9085, %v8835
    %v9102 = vsel %vm8948, %v9086, %v8837
    %v9103 = vsel %vm8948, %v9087, %v8839
    %v9104 = vsel %vm8948, %v9088, %v8841
    %v9105 = vsel %vm8948, %v9089, %v8843
    %v9106 = vsel %vm8948, %v9090, %v8845
    %v9107 = vsel %vm8948, %v9091, %v8847
    %v9108 = vsel %vm8948, %v9092, %v8849
    %v9109 = vsel %vm8948, %v9093, %v8851
    %v9110 = vsel %vm8965, %v9094, %v8885
    %v9111 = vsel %vm8965, %v9095, %v8887
    %v9112 = vsel %vm8965, %v9096, %v8889
    %v9113 = vsel %vm8965, %v9097, %v8891
    %v9114 = vsel %vm8965, %v9098, %v8893
    %v9115 = vsel %vm8965, %v9099, %v8895
    %v9116 = vsel %vm8965, %v9100, %v8897
    %v9117 = vsel %vm8965, %v9101, %v8899
    %v9118 = vsel %vm8965, %v9102, %v8901
    %v9119 = vsel %vm8965, %v9103, %v8903
    %v9120 = vsel %vm8965, %v9104, %v8905
    %v9121 = vsel %vm8965, %v9105, %v8907
    %v9122 = vsel %vm8965, %v9106, %v8909
    %v9123 = vsel %vm8965, %v9107, %v8911
    %v9124 = vsel %vm8965, %v9108, %v8913
    %v9125 = vsel %vm8965, %v9109, %v8915
    %9142 = vrot.lane.b32.xlu0 %v8035, 32
    %v9143 = vpop.permute.xlu0 %9142
    %9144 = vrot.lane.b32.xlu0 %v8036, 32
    %v9145 = vpop.permute.xlu0 %9144
    %9146 = vrot.lane.b32.xlu0 %v8037, 32
    %v9147 = vpop.permute.xlu0 %9146
    %9148 = vrot.lane.b32.xlu0 %v8038, 32
    %v9149 = vpop.permute.xlu0 %9148
    %9150 = vrot.lane.b32.xlu0 %v8039, 32
    %v9151 = vpop.permute.xlu0 %9150
    %9152 = vrot.lane.b32.xlu0 %v8040, 32
    %v9153 = vpop.permute.xlu0 %9152
    %9154 = vrot.lane.b32.xlu0 %v8041, 32
    %v9155 = vpop.permute.xlu0 %9154
    %9156 = vrot.lane.b32.xlu0 %v8042, 32
    %v9157 = vpop.permute.xlu0 %9156
    %9158 = vrot.lane.b32.xlu0 %v8043, 32
    %v9159 = vpop.permute.xlu0 %9158
    %9160 = vrot.lane.b32.xlu0 %v8044, 32
    %v9161 = vpop.permute.xlu0 %9160
    %9162 = vrot.lane.b32.xlu0 %v8045, 32
    %v9163 = vpop.permute.xlu0 %9162
    %9164 = vrot.lane.b32.xlu0 %v8046, 32
    %v9165 = vpop.permute.xlu0 %9164
    %9166 = vrot.lane.b32.xlu0 %v8047, 32
    %v9167 = vpop.permute.xlu0 %9166
    %9168 = vrot.lane.b32.xlu0 %v8048, 32
    %v9169 = vpop.permute.xlu0 %9168
    %9170 = vrot.lane.b32.xlu0 %v8049, 32
    %v9171 = vpop.permute.xlu0 %9170
    %9172 = vrot.lane.b32.xlu0 %v8050, 32
    %v9173 = vpop.permute.xlu0 %9172
    %9206 = vrot.lane.b32.xlu0 %v8051, 64
    %v9207 = vpop.permute.xlu0 %9206
    %9208 = vrot.lane.b32.xlu0 %v8052, 64
    %v9209 = vpop.permute.xlu0 %9208
    %9210 = vrot.lane.b32.xlu0 %v8053, 64
    %v9211 = vpop.permute.xlu0 %9210
    %9212 = vrot.lane.b32.xlu0 %v8054, 64
    %v9213 = vpop.permute.xlu0 %9212
    %9214 = vrot.lane.b32.xlu0 %v8055, 64
    %v9215 = vpop.permute.xlu0 %9214
    %9216 = vrot.lane.b32.xlu0 %v8056, 64
    %v9217 = vpop.permute.xlu0 %9216
    %9218 = vrot.lane.b32.xlu0 %v8057, 64
    %v9219 = vpop.permute.xlu0 %9218
    %9220 = vrot.lane.b32.xlu0 %v8058, 64
    %v9221 = vpop.permute.xlu0 %9220
    %9222 = vrot.lane.b32.xlu0 %v8059, 64
    %v9223 = vpop.permute.xlu0 %9222
    %9224 = vrot.lane.b32.xlu0 %v8060, 64
    %v9225 = vpop.permute.xlu0 %9224
    %9226 = vrot.lane.b32.xlu0 %v8061, 64
    %v9227 = vpop.permute.xlu0 %9226
    %9228 = vrot.lane.b32.xlu0 %v8062, 64
    %v9229 = vpop.permute.xlu0 %9228
    %9230 = vrot.lane.b32.xlu0 %v8063, 64
    %v9231 = vpop.permute.xlu0 %9230
    %9232 = vrot.lane.b32.xlu0 %v8064, 64
    %v9233 = vpop.permute.xlu0 %9232
    %9234 = vrot.lane.b32.xlu0 %v8065, 64
    %v9235 = vpop.permute.xlu0 %9234
    %9236 = vrot.lane.b32.xlu0 %v8066, 64
    %v9237 = vpop.permute.xlu0 %9236
    %9270 = vrot.lane.b32.xlu0 %v8067, 96
    %v9271 = vpop.permute.xlu0 %9270
    %9272 = vrot.lane.b32.xlu0 %v8068, 96
    %v9273 = vpop.permute.xlu0 %9272
    %9274 = vrot.lane.b32.xlu0 %v8069, 96
    %v9275 = vpop.permute.xlu0 %9274
    %9276 = vrot.lane.b32.xlu0 %v8070, 96
    %v9277 = vpop.permute.xlu0 %9276
    %9278 = vrot.lane.b32.xlu0 %v8071, 96
    %v9279 = vpop.permute.xlu0 %9278
    %9280 = vrot.lane.b32.xlu0 %v8072, 96
    %v9281 = vpop.permute.xlu0 %9280
    %9282 = vrot.lane.b32.xlu0 %v8073, 96
    %v9283 = vpop.permute.xlu0 %9282
    %9284 = vrot.lane.b32.xlu0 %v8074, 96
    %v9285 = vpop.permute.xlu0 %9284
    %9286 = vrot.lane.b32.xlu0 %v8075, 96
    %v9287 = vpop.permute.xlu0 %9286
    %9288 = vrot.lane.b32.xlu0 %v8076, 96
    %v9289 = vpop.permute.xlu0 %9288
    %9290 = vrot.lane.b32.xlu0 %v8077, 96
    %v9291 = vpop.permute.xlu0 %9290
    %9292 = vrot.lane.b32.xlu0 %v8078, 96
    %v9293 = vpop.permute.xlu0 %9292
    %9294 = vrot.lane.b32.xlu0 %v8079, 96
    %v9295 = vpop.permute.xlu0 %9294
    %9296 = vrot.lane.b32.xlu0 %v8080, 96
    %v9297 = vpop.permute.xlu0 %9296
    %9298 = vrot.lane.b32.xlu0 %v8081, 96
    %v9299 = vpop.permute.xlu0 %9298
    %9300 = vrot.lane.b32.xlu0 %v8082, 96
    %v9301 = vpop.permute.xlu0 %9300
    %9334 = vrot.lane.b32.xlu0 %v8100, 32
    %v9335 = vpop.permute.xlu0 %9334
    %9336 = vrot.lane.b32.xlu0 %v8101, 32
    %v9337 = vpop.permute.xlu0 %9336
    %9338 = vrot.lane.b32.xlu0 %v8102, 32
    %v9339 = vpop.permute.xlu0 %9338
    %9340 = vrot.lane.b32.xlu0 %v8103, 32
    %v9341 = vpop.permute.xlu0 %9340
    %9342 = vrot.lane.b32.xlu0 %v8104, 32
    %v9343 = vpop.permute.xlu0 %9342
    %9344 = vrot.lane.b32.xlu0 %v8105, 32
    %v9345 = vpop.permute.xlu0 %9344
    %9346 = vrot.lane.b32.xlu0 %v8106, 32
    %v9347 = vpop.permute.xlu0 %9346
    %9348 = vrot.lane.b32.xlu0 %v8107, 32
    %v9349 = vpop.permute.xlu0 %9348
    %9350 = vrot.lane.b32.xlu0 %v8108, 32
    %v9351 = vpop.permute.xlu0 %9350
    %9352 = vrot.lane.b32.xlu0 %v8109, 32
    %v9353 = vpop.permute.xlu0 %9352
    %9354 = vrot.lane.b32.xlu0 %v8110, 32
    %v9355 = vpop.permute.xlu0 %9354
    %9356 = vrot.lane.b32.xlu0 %v8111, 32
    %v9357 = vpop.permute.xlu0 %9356
    %9358 = vrot.lane.b32.xlu0 %v8112, 32
    %v9359 = vpop.permute.xlu0 %9358
    %9360 = vrot.lane.b32.xlu0 %v8113, 32
    %v9361 = vpop.permute.xlu0 %9360
    %9362 = vrot.lane.b32.xlu0 %v8114, 32
    %v9363 = vpop.permute.xlu0 %9362
    %9364 = vrot.lane.b32.xlu0 %v8115, 32
    %v9365 = vpop.permute.xlu0 %9364
    %9398 = vrot.lane.b32.xlu0 %v8116, 64
    %v9399 = vpop.permute.xlu0 %9398
    %9400 = vrot.lane.b32.xlu0 %v8117, 64
    %v9401 = vpop.permute.xlu0 %9400
    %9402 = vrot.lane.b32.xlu0 %v8118, 64
    %v9403 = vpop.permute.xlu0 %9402
    %9404 = vrot.lane.b32.xlu0 %v8119, 64
    %v9405 = vpop.permute.xlu0 %9404
    %9406 = vrot.lane.b32.xlu0 %v8120, 64
    %v9407 = vpop.permute.xlu0 %9406
    %9408 = vrot.lane.b32.xlu0 %v8121, 64
    %v9409 = vpop.permute.xlu0 %9408
    %9410 = vrot.lane.b32.xlu0 %v8122, 64
    %v9411 = vpop.permute.xlu0 %9410
    %9412 = vrot.lane.b32.xlu0 %v8123, 64
    %v9413 = vpop.permute.xlu0 %9412
    %9414 = vrot.lane.b32.xlu0 %v8124, 64
    %v9415 = vpop.permute.xlu0 %9414
    %9416 = vrot.lane.b32.xlu0 %v8125, 64
    %v9417 = vpop.permute.xlu0 %9416
    %9418 = vrot.lane.b32.xlu0 %v8126, 64
    %v9419 = vpop.permute.xlu0 %9418
    %9420 = vrot.lane.b32.xlu0 %v8127, 64
    %v9421 = vpop.permute.xlu0 %9420
    %9422 = vrot.lane.b32.xlu0 %v8128, 64
    %v9423 = vpop.permute.xlu0 %9422
    %9424 = vrot.lane.b32.xlu0 %v8129, 64
    %v9425 = vpop.permute.xlu0 %9424
    %9426 = vrot.lane.b32.xlu0 %v8130, 64
    %v9427 = vpop.permute.xlu0 %9426
    %9428 = vrot.lane.b32.xlu0 %v8131, 64
    %v9429 = vpop.permute.xlu0 %9428
    %9462 = vrot.lane.b32.xlu0 %v8132, 96
    %v9463 = vpop.permute.xlu0 %9462
    %9464 = vrot.lane.b32.xlu0 %v8133, 96
    %v9465 = vpop.permute.xlu0 %9464
    %9466 = vrot.lane.b32.xlu0 %v8134, 96
    %v9467 = vpop.permute.xlu0 %9466
    %9468 = vrot.lane.b32.xlu0 %v8135, 96
    %v9469 = vpop.permute.xlu0 %9468
    %9470 = vrot.lane.b32.xlu0 %v8136, 96
    %v9471 = vpop.permute.xlu0 %9470
    %9472 = vrot.lane.b32.xlu0 %v8137, 96
    %v9473 = vpop.permute.xlu0 %9472
    %9474 = vrot.lane.b32.xlu0 %v8138, 96
    %v9475 = vpop.permute.xlu0 %9474
    %9476 = vrot.lane.b32.xlu0 %v8139, 96
    %v9477 = vpop.permute.xlu0 %9476
    %9478 = vrot.lane.b32.xlu0 %v8140, 96
    %v9479 = vpop.permute.xlu0 %9478
    %9480 = vrot.lane.b32.xlu0 %v8141, 96
    %v9481 = vpop.permute.xlu0 %9480
    %9482 = vrot.lane.b32.xlu0 %v8142, 96
    %v9483 = vpop.permute.xlu0 %9482
    %9484 = vrot.lane.b32.xlu0 %v8143, 96
    %v9485 = vpop.permute.xlu0 %9484
    %9486 = vrot.lane.b32.xlu0 %v8144, 96
    %v9487 = vpop.permute.xlu0 %9486
    %9488 = vrot.lane.b32.xlu0 %v8145, 96
    %v9489 = vpop.permute.xlu0 %9488
    %9490 = vrot.lane.b32.xlu0 %v8146, 96
    %v9491 = vpop.permute.xlu0 %9490
    %9492 = vrot.lane.b32.xlu0 %v8147, 96
    %v9493 = vpop.permute.xlu0 %9492
    %v9510 = vsel %vm6917, %v8019, %v9143
    %v9511 = vsel %vm6917, %v8020, %v9145
    %v9512 = vsel %vm6917, %v8021, %v9147
    %v9513 = vsel %vm6917, %v8022, %v9149
    %v9514 = vsel %vm6917, %v8023, %v9151
    %v9515 = vsel %vm6917, %v8024, %v9153
    %v9516 = vsel %vm6917, %v8025, %v9155
    %v9517 = vsel %vm6917, %v8026, %v9157
    %v9518 = vsel %vm6917, %v8027, %v9159
    %v9519 = vsel %vm6917, %v8028, %v9161
    %v9520 = vsel %vm6917, %v8029, %v9163
    %v9521 = vsel %vm6917, %v8030, %v9165
    %v9522 = vsel %vm6917, %v8031, %v9167
    %v9523 = vsel %vm6917, %v8032, %v9169
    %v9524 = vsel %vm6917, %v8033, %v9171
    %v9525 = vsel %vm6917, %v8034, %v9173
    %v9526 = vsel %vm8948, %v9510, %v9207
    %v9527 = vsel %vm8948, %v9511, %v9209
    %v9528 = vsel %vm8948, %v9512, %v9211
    %v9529 = vsel %vm8948, %v9513, %v9213
    %v9530 = vsel %vm8948, %v9514, %v9215
    %v9531 = vsel %vm8948, %v9515, %v9217
    %v9532 = vsel %vm8948, %v9516, %v9219
    %v9533 = vsel %vm8948, %v9517, %v9221
    %v9534 = vsel %vm8948, %v9518, %v9223
    %v9535 = vsel %vm8948, %v9519, %v9225
    %v9536 = vsel %vm8948, %v9520, %v9227
    %v9537 = vsel %vm8948, %v9521, %v9229
    %v9538 = vsel %vm8948, %v9522, %v9231
    %v9539 = vsel %vm8948, %v9523, %v9233
    %v9540 = vsel %vm8948, %v9524, %v9235
    %v9541 = vsel %vm8948, %v9525, %v9237
    %v9542 = vsel %vm8965, %v9526, %v9271
    %v9543 = vsel %vm8965, %v9527, %v9273
    %v9544 = vsel %vm8965, %v9528, %v9275
    %v9545 = vsel %vm8965, %v9529, %v9277
    %v9546 = vsel %vm8965, %v9530, %v9279
    %v9547 = vsel %vm8965, %v9531, %v9281
    %v9548 = vsel %vm8965, %v9532, %v9283
    %v9549 = vsel %vm8965, %v9533, %v9285
    %v9550 = vsel %vm8965, %v9534, %v9287
    %v9551 = vsel %vm8965, %v9535, %v9289
    %v9552 = vsel %vm8965, %v9536, %v9291
    %v9553 = vsel %vm8965, %v9537, %v9293
    %v9554 = vsel %vm8965, %v9538, %v9295
    %v9555 = vsel %vm8965, %v9539, %v9297
    %v9556 = vsel %vm8965, %v9540, %v9299
    %v9557 = vsel %vm8965, %v9541, %v9301
    %v9558 = vsel %vm6917, %v8084, %v9335
    %v9559 = vsel %vm6917, %v8085, %v9337
    %v9560 = vsel %vm6917, %v8086, %v9339
    %v9561 = vsel %vm6917, %v8087, %v9341
    %v9562 = vsel %vm6917, %v8088, %v9343
    %v9563 = vsel %vm6917, %v8089, %v9345
    %v9564 = vsel %vm6917, %v8090, %v9347
    %v9565 = vsel %vm6917, %v8091, %v9349
    %v9566 = vsel %vm6917, %v8092, %v9351
    %v9567 = vsel %vm6917, %v8093, %v9353
    %v9568 = vsel %vm6917, %v8094, %v9355
    %v9569 = vsel %vm6917, %v8095, %v9357
    %v9570 = vsel %vm6917, %v8096, %v9359
    %v9571 = vsel %vm6917, %v8097, %v9361
    %v9572 = vsel %vm6917, %v8098, %v9363
    %v9573 = vsel %vm6917, %v8099, %v9365
    %v9574 = vsel %vm8948, %v9558, %v9399
    %v9575 = vsel %vm8948, %v9559, %v9401
    %v9576 = vsel %vm8948, %v9560, %v9403
    %v9577 = vsel %vm8948, %v9561, %v9405
    %v9578 = vsel %vm8948, %v9562, %v9407
    %v9579 = vsel %vm8948, %v9563, %v9409
    %v9580 = vsel %vm8948, %v9564, %v9411
    %v9581 = vsel %vm8948, %v9565, %v9413
    %v9582 = vsel %vm8948, %v9566, %v9415
    %v9583 = vsel %vm8948, %v9567, %v9417
    %v9584 = vsel %vm8948, %v9568, %v9419
    %v9585 = vsel %vm8948, %v9569, %v9421
    %v9586 = vsel %vm8948, %v9570, %v9423
    %v9587 = vsel %vm8948, %v9571, %v9425
    %v9588 = vsel %vm8948, %v9572, %v9427
    %v9589 = vsel %vm8948, %v9573, %v9429
    %v9590 = vsel %vm8965, %v9574, %v9463
    %v9591 = vsel %vm8965, %v9575, %v9465
    %v9592 = vsel %vm8965, %v9576, %v9467
    %v9593 = vsel %vm8965, %v9577, %v9469
    %v9594 = vsel %vm8965, %v9578, %v9471
    %v9595 = vsel %vm8965, %v9579, %v9473
    %v9596 = vsel %vm8965, %v9580, %v9475
    %v9597 = vsel %vm8965, %v9581, %v9477
    %v9598 = vsel %vm8965, %v9582, %v9479
    %v9599 = vsel %vm8965, %v9583, %v9481
    %v9600 = vsel %vm8965, %v9584, %v9483
    %v9601 = vsel %vm8965, %v9585, %v9485
    %v9602 = vsel %vm8965, %v9586, %v9487
    %v9603 = vsel %vm8965, %v9587, %v9489
    %v9604 = vsel %vm8965, %v9588, %v9491
    %v9605 = vsel %vm8965, %v9589, %v9493
    %v9606 = vld [vmem:[%s3] sm:$0xff]
    %v9607 = vld [vmem:[%s3 + $0x8] sm:$0xff]
    %v9608 = vld [vmem:[%s3 + $0x10] sm:$0xff]
    %v9609 = vld [vmem:[%s3 + $0x18] sm:$0xff]
    %v9610 = vld [vmem:[%s3 + $0x20] sm:$0xff]
    %v9611 = vld [vmem:[%s3 + $0x28] sm:$0xff]
    %v9612 = vld [vmem:[%s3 + $0x30] sm:$0xff]
    %v9613 = vld [vmem:[%s3 + $0x38] sm:$0xff]
    %v9614 = vld [vmem:[%s3 + $0x40] sm:$0xff]
    %v9615 = vld [vmem:[%s3 + $0x48] sm:$0xff]
    %v9616 = vld [vmem:[%s3 + $0x50] sm:$0xff]
    %v9617 = vld [vmem:[%s3 + $0x58] sm:$0xff]
    %v9618 = vld [vmem:[%s3 + $0x60] sm:$0xff]
    %v9619 = vld [vmem:[%s3 + $0x68] sm:$0xff]
    %v9620 = vld [vmem:[%s3 + $0x70] sm:$0xff]
    %v9621 = vld [vmem:[%s3 + $0x78] sm:$0xff]
    %v9622 = vld [vmem:[%s3 + $0x80] sm:$0xff]
    %v9623 = vld [vmem:[%s3 + $0x88] sm:$0xff]
    %v9624 = vld [vmem:[%s3 + $0x90] sm:$0xff]
    %v9625 = vld [vmem:[%s3 + $0x98] sm:$0xff]
    %v9626 = vld [vmem:[%s3 + $0xa0] sm:$0xff]
    %v9627 = vld [vmem:[%s3 + $0xa8] sm:$0xff]
    %v9628 = vld [vmem:[%s3 + $0xb0] sm:$0xff]
    %v9629 = vld [vmem:[%s3 + $0xb8] sm:$0xff]
    %v9630 = vld [vmem:[%s3 + $0xc0] sm:$0xff]
    %v9631 = vld [vmem:[%s3 + $0xc8] sm:$0xff]
    %v9632 = vld [vmem:[%s3 + $0xd0] sm:$0xff]
    %v9633 = vld [vmem:[%s3 + $0xd8] sm:$0xff]
    %v9634 = vld [vmem:[%s3 + $0xe0] sm:$0xff]
    %v9635 = vld [vmem:[%s3 + $0xe8] sm:$0xff]
    %v9636 = vld [vmem:[%s3 + $0xf0] sm:$0xff]
    %v9637 = vld [vmem:[%s3 + $0xf8] sm:$0xff]
    %v9638 = vld [vmem:[%s3 + $0x100] sm:$0xff]
    %v9639 = vld [vmem:[%s3 + $0x108] sm:$0xff]
    %v9640 = vld [vmem:[%s3 + $0x110] sm:$0xff]
    %v9641 = vld [vmem:[%s3 + $0x118] sm:$0xff]
    %v9642 = vld [vmem:[%s3 + $0x120] sm:$0xff]
    %v9643 = vld [vmem:[%s3 + $0x128] sm:$0xff]
    %v9644 = vld [vmem:[%s3 + $0x130] sm:$0xff]
    %v9645 = vld [vmem:[%s3 + $0x138] sm:$0xff]
    %v9646 = vld [vmem:[%s3 + $0x140] sm:$0xff]
    %v9647 = vld [vmem:[%s3 + $0x148] sm:$0xff]
    %v9648 = vld [vmem:[%s3 + $0x150] sm:$0xff]
    %v9649 = vld [vmem:[%s3 + $0x158] sm:$0xff]
    %v9650 = vld [vmem:[%s3 + $0x160] sm:$0xff]
    %v9651 = vld [vmem:[%s3 + $0x168] sm:$0xff]
    %v9652 = vld [vmem:[%s3 + $0x170] sm:$0xff]
    %v9653 = vld [vmem:[%s3 + $0x178] sm:$0xff]
    %v9654 = vld [vmem:[%s3 + $0x180] sm:$0xff]
    %v9655 = vld [vmem:[%s3 + $0x188] sm:$0xff]
    %v9656 = vld [vmem:[%s3 + $0x190] sm:$0xff]
    %v9657 = vld [vmem:[%s3 + $0x198] sm:$0xff]
    %v9658 = vld [vmem:[%s3 + $0x1a0] sm:$0xff]
    %v9659 = vld [vmem:[%s3 + $0x1a8] sm:$0xff]
    %v9660 = vld [vmem:[%s3 + $0x1b0] sm:$0xff]
    %v9661 = vld [vmem:[%s3 + $0x1b8] sm:$0xff]
    %v9662 = vld [vmem:[%s3 + $0x1c0] sm:$0xff]
    %v9663 = vld [vmem:[%s3 + $0x1c8] sm:$0xff]
    %v9664 = vld [vmem:[%s3 + $0x1d0] sm:$0xff]
    %v9665 = vld [vmem:[%s3 + $0x1d8] sm:$0xff]
    %v9666 = vld [vmem:[%s3 + $0x1e0] sm:$0xff]
    %v9667 = vld [vmem:[%s3 + $0x1e8] sm:$0xff]
    %v9668 = vld [vmem:[%s3 + $0x1f0] sm:$0xff]
    %v9669 = vld [vmem:[%s3 + $0x1f8] sm:$0xff]
    %v9670 = vld [vmem:[%s3 + $0x200] sm:$0xff]
    %v9671 = vld [vmem:[%s3 + $0x208] sm:$0xff]
    %v9672 = vld [vmem:[%s3 + $0x210] sm:$0xff]
    %v9673 = vld [vmem:[%s3 + $0x218] sm:$0xff]
    %v9674 = vld [vmem:[%s3 + $0x220] sm:$0xff]
    %v9675 = vld [vmem:[%s3 + $0x228] sm:$0xff]
    %v9676 = vld [vmem:[%s3 + $0x230] sm:$0xff]
    %v9677 = vld [vmem:[%s3 + $0x238] sm:$0xff]
    %v9678 = vld [vmem:[%s3 + $0x240] sm:$0xff]
    %v9679 = vld [vmem:[%s3 + $0x248] sm:$0xff]
    %v9680 = vld [vmem:[%s3 + $0x250] sm:$0xff]
    %v9681 = vld [vmem:[%s3 + $0x258] sm:$0xff]
    %v9682 = vld [vmem:[%s3 + $0x260] sm:$0xff]
    %v9683 = vld [vmem:[%s3 + $0x268] sm:$0xff]
    %v9684 = vld [vmem:[%s3 + $0x270] sm:$0xff]
    %v9685 = vld [vmem:[%s3 + $0x278] sm:$0xff]
    %v9686 = vld [vmem:[%s3 + $0x280] sm:$0xff]
    %v9687 = vld [vmem:[%s3 + $0x288] sm:$0xff]
    %v9688 = vld [vmem:[%s3 + $0x290] sm:$0xff]
    %v9689 = vld [vmem:[%s3 + $0x298] sm:$0xff]
    %v9690 = vld [vmem:[%s3 + $0x2a0] sm:$0xff]
    %v9691 = vld [vmem:[%s3 + $0x2a8] sm:$0xff]
    %v9692 = vld [vmem:[%s3 + $0x2b0] sm:$0xff]
    %v9693 = vld [vmem:[%s3 + $0x2b8] sm:$0xff]
    %v9694 = vld [vmem:[%s3 + $0x2c0] sm:$0xff]
    %v9695 = vld [vmem:[%s3 + $0x2c8] sm:$0xff]
    %v9696 = vld [vmem:[%s3 + $0x2d0] sm:$0xff]
    %v9697 = vld [vmem:[%s3 + $0x2d8] sm:$0xff]
    %v9698 = vld [vmem:[%s3 + $0x2e0] sm:$0xff]
    %v9699 = vld [vmem:[%s3 + $0x2e8] sm:$0xff]
    %v9700 = vld [vmem:[%s3 + $0x2f0] sm:$0xff]
    %v9701 = vld [vmem:[%s3 + $0x2f8] sm:$0xff]
    %v9702 = vld [vmem:[%s3 + $0x300] sm:$0xff]
    %v9703 = vld [vmem:[%s3 + $0x308] sm:$0xff]
    %v9704 = vld [vmem:[%s3 + $0x310] sm:$0xff]
    %v9705 = vld [vmem:[%s3 + $0x318] sm:$0xff]
    %v9706 = vld [vmem:[%s4] sm:$0x1]
    %v9708 = vlaneseq
    %v9709 = vshrl.u32 %v9708, 7
    %v9710 = vsub.s32 0, %v9709
    %v9711 = vrot.slane %v9706, %v9710
    %v9714 = vsel %vm6917, %v8148, 0
    %v9717 = vsel %vm6917, %v8149, 0
    %v9720 = vsel %vm6917, %v8150, 0
    %v9723 = vsel %vm6917, %v8151, 0
    %v9726 = vsel %vm6917, %v8152, 0
    %v9729 = vsel %vm6917, %v8153, 0
    %v9732 = vsel %vm6917, %v8154, 0
    %v9735 = vsel %vm6917, %v8155, 0
    %v9738 = vsel %vm6917, %v8156, 0
    %v9741 = vsel %vm6917, %v8157, 0
    %v9744 = vsel %vm6917, %v8158, 0
    %v9747 = vsel %vm6917, %v8159, 0
    %v9750 = vsel %vm6917, %v8160, 0
    %v9753 = vsel %vm6917, %v8161, 0
    %v9756 = vsel %vm6917, %v8162, 0
    %v9759 = vsel %vm6917, %v8163, 0
    %9761 = vmatprep.subr.mxu0 0.0
    %9762 = vmatpush1.msra.mxu0 %v9621
    %9763 = vmatprep.subr.mxu0 0.0
    %9764 = vmatpush1.msra.mxu0 %v9620
    %9765 = vmatprep.subr.mxu0 0.0
    %9766 = vmatpush1.msra.mxu0 %v9619
    %9767 = vmatprep.subr.mxu0 0.0
    %9768 = vmatpush1.msra.mxu0 %v9618
    %9769 = vmatprep.subr.mxu0 0.0
    %9770 = vmatpush1.msra.mxu0 %v9617
    %9771 = vmatprep.subr.mxu0 0.0
    %9772 = vmatpush1.msra.mxu0 %v9616
    %9773 = vmatprep.subr.mxu0 0.0
    %9774 = vmatpush1.msra.mxu0 %v9615
    %9775 = vmatprep.subr.mxu0 0.0
    %9776 = vmatpush1.msra.mxu0 %v9614
    %9777 = vmatprep.subr.mxu0 0.0
    %9778 = vmatpush1.msra.mxu0 %v9613
    %9779 = vmatprep.subr.mxu0 0.0
    %9780 = vmatpush1.msra.mxu0 %v9612
    %9781 = vmatprep.subr.mxu0 0.0
    %9782 = vmatpush1.msra.mxu0 %v9611
    %9783 = vmatprep.subr.mxu0 0.0
    %9784 = vmatpush1.msra.mxu0 %v9610
    %9785 = vmatprep.subr.mxu0 0.0
    %9786 = vmatpush1.msra.mxu0 %v9609
    %9787 = vmatprep.subr.mxu0 0.0
    %9788 = vmatpush1.msra.mxu0 %v9608
    %9789 = vmatprep.subr.mxu0 0.0
    %9790 = vmatpush1.msra.mxu0 %v9607
    %9791 = vmatprep.subr.mxu0 0.0
    %9792 = vmatpush1.msra.mxu0 %v9606
    %9793 = vmatprep.subr.mxu0 0.0
    %9794 = vmatpush2.msra.mxu0 %v9637
    %9795 = vmatprep.subr.mxu0 0.0
    %9796 = vmatpush2.msra.mxu0 %v9636
    %9797 = vmatprep.subr.mxu0 0.0
    %9798 = vmatpush2.msra.mxu0 %v9635
    %9799 = vmatprep.subr.mxu0 0.0
    %9800 = vmatpush2.msra.mxu0 %v9634
    %9801 = vmatprep.subr.mxu0 0.0
    %9802 = vmatpush2.msra.mxu0 %v9633
    %9803 = vmatprep.subr.mxu0 0.0
    %9804 = vmatpush2.msra.mxu0 %v9632
    %9805 = vmatprep.subr.mxu0 0.0
    %9806 = vmatpush2.msra.mxu0 %v9631
    %9807 = vmatprep.subr.mxu0 0.0
    %9808 = vmatpush2.msra.mxu0 %v9630
    %9809 = vmatprep.subr.mxu0 0.0
    %9810 = vmatpush2.msra.mxu0 %v9629
    %9811 = vmatprep.subr.mxu0 0.0
    %9812 = vmatpush2.msra.mxu0 %v9628
    %9813 = vmatprep.subr.mxu0 0.0
    %9814 = vmatpush2.msra.mxu0 %v9627
    %9815 = vmatprep.subr.mxu0 0.0
    %9816 = vmatpush2.msra.mxu0 %v9626
    %9817 = vmatprep.subr.mxu0 0.0
    %9818 = vmatpush2.msra.mxu0 %v9625
    %9819 = vmatprep.subr.mxu0 0.0
    %9820 = vmatpush2.msra.mxu0 %v9624
    %9821 = vmatprep.subr.mxu0 0.0
    %9822 = vmatpush2.msra.mxu0 %v9623
    %9823 = vmatprep.subr.mxu0 0.0
    %9824 = vmatpush2.msra.mxu0 %v9622
    %9825 = vmatprep.mubr.f32.mxu0 %v9014
    %9826 = vmatmul.mubr.f32.gmra.mxu0 %v8966
    %v9827 = vpop.f32.mrf.mxu0
    %v9828 = vadd.f32 %v9711, %v9827
    %v9829 = vpop.f32.mrf.mxu0
    %9830 = vmatprep.mubr.f32.mxu0 %v9015
    %9831 = vmatmul.mubr.f32.gmra.mxu0 %v8967
    %v9832 = vpop.f32.mrf.mxu0
    %v9833 = vadd.f32 %v9711, %v9832
    %v9834 = vpop.f32.mrf.mxu0
    %9835 = vmatprep.mubr.f32.mxu0 %v9016
    %9836 = vmatmul.mubr.f32.gmra.mxu0 %v8968
    %v9837 = vpop.f32.mrf.mxu0
    %v9838 = vadd.f32 %v9711, %v9837
    %v9839 = vpop.f32.mrf.mxu0
    %9840 = vmatprep.mubr.f32.mxu0 %v9017
    %9841 = vmatmul.mubr.f32.gmra.mxu0 %v8969
    %v9842 = vpop.f32.mrf.mxu0
    %v9843 = vadd.f32 %v9711, %v9842
    %v9844 = vpop.f32.mrf.mxu0
    %9845 = vmatprep.mubr.f32.mxu0 %v9018
    %9846 = vmatmul.mubr.f32.gmra.mxu0 %v8970
    %v9847 = vpop.f32.mrf.mxu0
    %v9848 = vadd.f32 %v9711, %v9847
    %v9849 = vpop.f32.mrf.mxu0
    %9850 = vmatprep.mubr.f32.mxu0 %v9019
    %9851 = vmatmul.mubr.f32.gmra.mxu0 %v8971
    %v9852 = vpop.f32.mrf.mxu0
    %v9853 = vadd.f32 %v9711, %v9852
    %v9854 = vpop.f32.mrf.mxu0
    %9855 = vmatprep.mubr.f32.mxu0 %v9020
    %9856 = vmatmul.mubr.f32.gmra.mxu0 %v8972
    %v9857 = vpop.f32.mrf.mxu0
    %v9858 = vadd.f32 %v9711, %v9857
    %v9859 = vpop.f32.mrf.mxu0
    %9860 = vmatprep.mubr.f32.mxu0 %v9021
    %9861 = vmatmul.mubr.f32.gmra.mxu0 %v8973
    %v9862 = vpop.f32.mrf.mxu0
    %v9863 = vadd.f32 %v9711, %v9862
    %v9864 = vpop.f32.mrf.mxu0
    %9865 = vmatprep.mubr.f32.mxu0 %v9022
    %9866 = vmatmul.mubr.f32.gmra.mxu0 %v8974
    %v9867 = vpop.f32.mrf.mxu0
    %v9868 = vadd.f32 %v9711, %v9867
    %v9869 = vpop.f32.mrf.mxu0
    %9870 = vmatprep.mubr.f32.mxu0 %v9023
    %9871 = vmatmul.mubr.f32.gmra.mxu0 %v8975
    %v9872 = vpop.f32.mrf.mxu0
    %v9873 = vadd.f32 %v9711, %v9872
    %v9874 = vpop.f32.mrf.mxu0
    %9875 = vmatprep.mubr.f32.mxu0 %v9024
    %9876 = vmatmul.mubr.f32.gmra.mxu0 %v8976
    %v9877 = vpop.f32.mrf.mxu0
    %v9878 = vadd.f32 %v9711, %v9877
    %v9879 = vpop.f32.mrf.mxu0
    %9880 = vmatprep.mubr.f32.mxu0 %v9025
    %9881 = vmatmul.mubr.f32.gmra.mxu0 %v8977
    %v9882 = vpop.f32.mrf.mxu0
    %v9883 = vadd.f32 %v9711, %v9882
    %v9884 = vpop.f32.mrf.mxu0
    %9885 = vmatprep.mubr.f32.mxu0 %v9026
    %9886 = vmatmul.mubr.f32.gmra.mxu0 %v8978
    %v9887 = vpop.f32.mrf.mxu0
    %v9888 = vadd.f32 %v9711, %v9887
    %v9889 = vpop.f32.mrf.mxu0
    %9890 = vmatprep.mubr.f32.mxu0 %v9027
    %9891 = vmatmul.mubr.f32.gmra.mxu0 %v8979
    %v9892 = vpop.f32.mrf.mxu0
    %v9893 = vadd.f32 %v9711, %v9892
    %v9894 = vpop.f32.mrf.mxu0
    %9895 = vmatprep.mubr.f32.mxu0 %v9028
    %9896 = vmatmul.mubr.f32.gmra.mxu0 %v8980
    %v9897 = vpop.f32.mrf.mxu0
    %v9898 = vadd.f32 %v9711, %v9897
    %v9899 = vpop.f32.mrf.mxu0
    %9900 = vmatprep.mubr.f32.mxu0 %v9029
    %9901 = vmatmul.mubr.f32.gmra.mxu0 %v8981
    %v9902 = vpop.f32.mrf.mxu0
    %v9903 = vadd.f32 %v9711, %v9902
    %v9904 = vpop.f32.mrf.mxu0
    %9905 = vdwg.mxu0
    %9906 = vmatprep.subr.mxu0 0.0
    %9907 = vmatpush1.msra.mxu0 %v9653
    %9908 = vmatprep.subr.mxu0 0.0
    %9909 = vmatpush1.msra.mxu0 %v9652
    %9910 = vmatprep.subr.mxu0 0.0
    %9911 = vmatpush1.msra.mxu0 %v9651
    %9912 = vmatprep.subr.mxu0 0.0
    %9913 = vmatpush1.msra.mxu0 %v9650
    %9914 = vmatprep.subr.mxu0 0.0
    %9915 = vmatpush1.msra.mxu0 %v9649
    %9916 = vmatprep.subr.mxu0 0.0
    %9917 = vmatpush1.msra.mxu0 %v9648
    %9918 = vmatprep.subr.mxu0 0.0
    %9919 = vmatpush1.msra.mxu0 %v9647
    %9920 = vmatprep.subr.mxu0 0.0
    %9921 = vmatpush1.msra.mxu0 %v9646
    %9922 = vmatprep.subr.mxu0 0.0
    %9923 = vmatpush1.msra.mxu0 %v9645
    %9924 = vmatprep.subr.mxu0 0.0
    %9925 = vmatpush1.msra.mxu0 %v9644
    %9926 = vmatprep.subr.mxu0 0.0
    %9927 = vmatpush1.msra.mxu0 %v9643
    %9928 = vmatprep.subr.mxu0 0.0
    %9929 = vmatpush1.msra.mxu0 %v9642
    %9930 = vmatprep.subr.mxu0 0.0
    %9931 = vmatpush1.msra.mxu0 %v9641
    %9932 = vmatprep.subr.mxu0 0.0
    %9933 = vmatpush1.msra.mxu0 %v9640
    %9934 = vmatprep.subr.mxu0 0.0
    %9935 = vmatpush1.msra.mxu0 %v9639
    %9936 = vmatprep.subr.mxu0 0.0
    %9937 = vmatpush1.msra.mxu0 %v9638
    %9938 = vmatprep.subr.mxu0 0.0
    %9939 = vmatpush2.msra.mxu0 %v9669
    %9940 = vmatprep.subr.mxu0 0.0
    %9941 = vmatpush2.msra.mxu0 %v9668
    %9942 = vmatprep.subr.mxu0 0.0
    %9943 = vmatpush2.msra.mxu0 %v9667
    %9944 = vmatprep.subr.mxu0 0.0
    %9945 = vmatpush2.msra.mxu0 %v9666
    %9946 = vmatprep.subr.mxu0 0.0
    %9947 = vmatpush2.msra.mxu0 %v9665
    %9948 = vmatprep.subr.mxu0 0.0
    %9949 = vmatpush2.msra.mxu0 %v9664
    %9950 = vmatprep.subr.mxu0 0.0
    %9951 = vmatpush2.msra.mxu0 %v9663
    %9952 = vmatprep.subr.mxu0 0.0
    %9953 = vmatpush2.msra.mxu0 %v9662
    %9954 = vmatprep.subr.mxu0 0.0
    %9955 = vmatpush2.msra.mxu0 %v9661
    %9956 = vmatprep.subr.mxu0 0.0
    %9957 = vmatpush2.msra.mxu0 %v9660
    %9958 = vmatprep.subr.mxu0 0.0
    %9959 = vmatpush2.msra.mxu0 %v9659
    %9960 = vmatprep.subr.mxu0 0.0
    %9961 = vmatpush2.msra.mxu0 %v9658
    %9962 = vmatprep.subr.mxu0 0.0
    %9963 = vmatpush2.msra.mxu0 %v9657
    %9964 = vmatprep.subr.mxu0 0.0
    %9965 = vmatpush2.msra.mxu0 %v9656
    %9966 = vmatprep.subr.mxu0 0.0
    %9967 = vmatpush2.msra.mxu0 %v9655
    %9968 = vmatprep.subr.mxu0 0.0
    %9969 = vmatpush2.msra.mxu0 %v9654
    %9970 = vmatprep.mubr.f32.mxu0 %v9110
    %9971 = vmatmul.mubr.f32.gmra.mxu0 %v9062
    %v9972 = vpop.f32.mrf.mxu0
    %v9973 = vadd.f32 %v9828, %v9972
    %v9974 = vpop.f32.mrf.mxu0
    %9975 = vmatprep.mubr.f32.mxu0 %v9111
    %9976 = vmatmul.mubr.f32.gmra.mxu0 %v9063
    %v9977 = vpop.f32.mrf.mxu0
    %v9978 = vadd.f32 %v9833, %v9977
    %v9979 = vpop.f32.mrf.mxu0
    %9980 = vmatprep.mubr.f32.mxu0 %v9112
    %9981 = vmatmul.mubr.f32.gmra.mxu0 %v9064
    %v9982 = vpop.f32.mrf.mxu0
    %v9983 = vadd.f32 %v9838, %v9982
    %v9984 = vpop.f32.mrf.mxu0
    %9985 = vmatprep.mubr.f32.mxu0 %v9113
    %9986 = vmatmul.mubr.f32.gmra.mxu0 %v9065
    %v9987 = vpop.f32.mrf.mxu0
    %v9988 = vadd.f32 %v9843, %v9987
    %v9989 = vpop.f32.mrf.mxu0
    %9990 = vmatprep.mubr.f32.mxu0 %v9114
    %9991 = vmatmul.mubr.f32.gmra.mxu0 %v9066
    %v9992 = vpop.f32.mrf.mxu0
    %v9993 = vadd.f32 %v9848, %v9992
    %v9994 = vpop.f32.mrf.mxu0
    %9995 = vmatprep.mubr.f32.mxu0 %v9115
    %9996 = vmatmul.mubr.f32.gmra.mxu0 %v9067
    %v9997 = vpop.f32.mrf.mxu0
    %v9998 = vadd.f32 %v9853, %v9997
    %v9999 = vpop.f32.mrf.mxu0
    %10000 = vmatprep.mubr.f32.mxu0 %v9116
    %10001 = vmatmul.mubr.f32.gmra.mxu0 %v9068
    %v10002 = vpop.f32.mrf.mxu0
    %v10003 = vadd.f32 %v9858, %v10002
    %v10004 = vpop.f32.mrf.mxu0
    %10005 = vmatprep.mubr.f32.mxu0 %v9117
    %10006 = vmatmul.mubr.f32.gmra.mxu0 %v9069
    %v10007 = vpop.f32.mrf.mxu0
    %v10008 = vadd.f32 %v9863, %v10007
    %v10009 = vpop.f32.mrf.mxu0
    %10010 = vmatprep.mubr.f32.mxu0 %v9118
    %10011 = vmatmul.mubr.f32.gmra.mxu0 %v9070
    %v10012 = vpop.f32.mrf.mxu0
    %v10013 = vadd.f32 %v9868, %v10012
    %v10014 = vpop.f32.mrf.mxu0
    %10015 = vmatprep.mubr.f32.mxu0 %v9119
    %10016 = vmatmul.mubr.f32.gmra.mxu0 %v9071
    %v10017 = vpop.f32.mrf.mxu0
    %v10018 = vadd.f32 %v9873, %v10017
    %v10019 = vpop.f32.mrf.mxu0
    %10020 = vmatprep.mubr.f32.mxu0 %v9120
    %10021 = vmatmul.mubr.f32.gmra.mxu0 %v9072
    %v10022 = vpop.f32.mrf.mxu0
    %v10023 = vadd.f32 %v9878, %v10022
    %v10024 = vpop.f32.mrf.mxu0
    %10025 = vmatprep.mubr.f32.mxu0 %v9121
    %10026 = vmatmul.mubr.f32.gmra.mxu0 %v9073
    %v10027 = vpop.f32.mrf.mxu0
    %v10028 = vadd.f32 %v9883, %v10027
    %v10029 = vpop.f32.mrf.mxu0
    %10030 = vmatprep.mubr.f32.mxu0 %v9122
    %10031 = vmatmul.mubr.f32.gmra.mxu0 %v9074
    %v10032 = vpop.f32.mrf.mxu0
    %v10033 = vadd.f32 %v9888, %v10032
    %v10034 = vpop.f32.mrf.mxu0
    %10035 = vmatprep.mubr.f32.mxu0 %v9123
    %10036 = vmatmul.mubr.f32.gmra.mxu0 %v9075
    %v10037 = vpop.f32.mrf.mxu0
    %v10038 = vadd.f32 %v9893, %v10037
    %v10039 = vpop.f32.mrf.mxu0
    %10040 = vmatprep.mubr.f32.mxu0 %v9124
    %10041 = vmatmul.mubr.f32.gmra.mxu0 %v9076
    %v10042 = vpop.f32.mrf.mxu0
    %v10043 = vadd.f32 %v9898, %v10042
    %v10044 = vpop.f32.mrf.mxu0
    %10045 = vmatprep.mubr.f32.mxu0 %v9125
    %10046 = vmatmul.mubr.f32.gmra.mxu0 %v9077
    %v10047 = vpop.f32.mrf.mxu0
    %v10048 = vadd.f32 %v9903, %v10047
    %v10049 = vpop.f32.mrf.mxu0
    %10050 = vdwg.mxu0
    %10051 = vmatprep.subr.mxu0 0.0
    %10052 = vmatpush1.msra.mxu0 %v9685
    %10053 = vmatprep.subr.mxu0 0.0
    %10054 = vmatpush1.msra.mxu0 %v9684
    %10055 = vmatprep.subr.mxu0 0.0
    %10056 = vmatpush1.msra.mxu0 %v9683
    %10057 = vmatprep.subr.mxu0 0.0
    %10058 = vmatpush1.msra.mxu0 %v9682
    %10059 = vmatprep.subr.mxu0 0.0
    %10060 = vmatpush1.msra.mxu0 %v9681
    %10061 = vmatprep.subr.mxu0 0.0
    %10062 = vmatpush1.msra.mxu0 %v9680
    %10063 = vmatprep.subr.mxu0 0.0
    %10064 = vmatpush1.msra.mxu0 %v9679
    %10065 = vmatprep.subr.mxu0 0.0
    %10066 = vmatpush1.msra.mxu0 %v9678
    %10067 = vmatprep.subr.mxu0 0.0
    %10068 = vmatpush1.msra.mxu0 %v9677
    %10069 = vmatprep.subr.mxu0 0.0
    %10070 = vmatpush1.msra.mxu0 %v9676
    %10071 = vmatprep.subr.mxu0 0.0
    %10072 = vmatpush1.msra.mxu0 %v9675
    %10073 = vmatprep.subr.mxu0 0.0
    %10074 = vmatpush1.msra.mxu0 %v9674
    %10075 = vmatprep.subr.mxu0 0.0
    %10076 = vmatpush1.msra.mxu0 %v9673
    %10077 = vmatprep.subr.mxu0 0.0
    %10078 = vmatpush1.msra.mxu0 %v9672
    %10079 = vmatprep.subr.mxu0 0.0
    %10080 = vmatpush1.msra.mxu0 %v9671
    %10081 = vmatprep.subr.mxu0 0.0
    %10082 = vmatpush1.msra.mxu0 %v9670
    %10083 = vmatprep.subr.mxu0 0.0
    %10084 = vmatpush2.msra.mxu0 %v9701
    %10085 = vmatprep.subr.mxu0 0.0
    %10086 = vmatpush2.msra.mxu0 %v9700
    %10087 = vmatprep.subr.mxu0 0.0
    %10088 = vmatpush2.msra.mxu0 %v9699
    %10089 = vmatprep.subr.mxu0 0.0
    %10090 = vmatpush2.msra.mxu0 %v9698
    %10091 = vmatprep.subr.mxu0 0.0
    %10092 = vmatpush2.msra.mxu0 %v9697
    %10093 = vmatprep.subr.mxu0 0.0
    %10094 = vmatpush2.msra.mxu0 %v9696
    %10095 = vmatprep.subr.mxu0 0.0
    %10096 = vmatpush2.msra.mxu0 %v9695
    %10097 = vmatprep.subr.mxu0 0.0
    %10098 = vmatpush2.msra.mxu0 %v9694
    %10099 = vmatprep.subr.mxu0 0.0
    %10100 = vmatpush2.msra.mxu0 %v9693
    %10101 = vmatprep.subr.mxu0 0.0
    %10102 = vmatpush2.msra.mxu0 %v9692
    %10103 = vmatprep.subr.mxu0 0.0
    %10104 = vmatpush2.msra.mxu0 %v9691
    %10105 = vmatprep.subr.mxu0 0.0
    %10106 = vmatpush2.msra.mxu0 %v9690
    %10107 = vmatprep.subr.mxu0 0.0
    %10108 = vmatpush2.msra.mxu0 %v9689
    %10109 = vmatprep.subr.mxu0 0.0
    %10110 = vmatpush2.msra.mxu0 %v9688
    %10111 = vmatprep.subr.mxu0 0.0
    %10112 = vmatpush2.msra.mxu0 %v9687
    %10113 = vmatprep.subr.mxu0 0.0
    %10114 = vmatpush2.msra.mxu0 %v9686
    %10115 = vmatprep.mubr.f32.mxu0 %v9590
    %10116 = vmatmul.mubr.f32.gmra.mxu0 %v9542
    %v10117 = vpop.f32.mrf.mxu0
    %v10118 = vadd.f32 %v9973, %v10117
    %v10119 = vpop.f32.mrf.mxu0
    %10120 = vmatprep.mubr.f32.mxu0 %v9591
    %10121 = vmatmul.mubr.f32.gmra.mxu0 %v9543
    %v10122 = vpop.f32.mrf.mxu0
    %v10123 = vadd.f32 %v9978, %v10122
    %v10124 = vpop.f32.mrf.mxu0
    %10125 = vmatprep.mubr.f32.mxu0 %v9592
    %10126 = vmatmul.mubr.f32.gmra.mxu0 %v9544
    %v10127 = vpop.f32.mrf.mxu0
    %v10128 = vadd.f32 %v9983, %v10127
    %v10129 = vpop.f32.mrf.mxu0
    %10130 = vmatprep.mubr.f32.mxu0 %v9593
    %10131 = vmatmul.mubr.f32.gmra.mxu0 %v9545
    %v10132 = vpop.f32.mrf.mxu0
    %v10133 = vadd.f32 %v9988, %v10132
    %v10134 = vpop.f32.mrf.mxu0
    %10135 = vmatprep.mubr.f32.mxu0 %v9594
    %10136 = vmatmul.mubr.f32.gmra.mxu0 %v9546
    %v10137 = vpop.f32.mrf.mxu0
    %v10138 = vadd.f32 %v9993, %v10137
    %v10139 = vpop.f32.mrf.mxu0
    %10140 = vmatprep.mubr.f32.mxu0 %v9595
    %10141 = vmatmul.mubr.f32.gmra.mxu0 %v9547
    %v10142 = vpop.f32.mrf.mxu0
    %v10143 = vadd.f32 %v9998, %v10142
    %v10144 = vpop.f32.mrf.mxu0
    %10145 = vmatprep.mubr.f32.mxu0 %v9596
    %10146 = vmatmul.mubr.f32.gmra.mxu0 %v9548
    %v10147 = vpop.f32.mrf.mxu0
    %v10148 = vadd.f32 %v10003, %v10147
    %v10149 = vpop.f32.mrf.mxu0
    %10150 = vmatprep.mubr.f32.mxu0 %v9597
    %10151 = vmatmul.mubr.f32.gmra.mxu0 %v9549
    %v10152 = vpop.f32.mrf.mxu0
    %v10153 = vadd.f32 %v10008, %v10152
    %v10154 = vpop.f32.mrf.mxu0
    %10155 = vmatprep.mubr.f32.mxu0 %v9598
    %10156 = vmatmul.mubr.f32.gmra.mxu0 %v9550
    %v10157 = vpop.f32.mrf.mxu0
    %v10158 = vadd.f32 %v10013, %v10157
    %v10159 = vpop.f32.mrf.mxu0
    %10160 = vmatprep.mubr.f32.mxu0 %v9599
    %10161 = vmatmul.mubr.f32.gmra.mxu0 %v9551
    %v10162 = vpop.f32.mrf.mxu0
    %v10163 = vadd.f32 %v10018, %v10162
    %v10164 = vpop.f32.mrf.mxu0
    %10165 = vmatprep.mubr.f32.mxu0 %v9600
    %10166 = vmatmul.mubr.f32.gmra.mxu0 %v9552
    %v10167 = vpop.f32.mrf.mxu0
    %v10168 = vadd.f32 %v10023, %v10167
    %v10169 = vpop.f32.mrf.mxu0
    %10170 = vmatprep.mubr.f32.mxu0 %v9601
    %10171 = vmatmul.mubr.f32.gmra.mxu0 %v9553
    %v10172 = vpop.f32.mrf.mxu0
    %v10173 = vadd.f32 %v10028, %v10172
    %v10174 = vpop.f32.mrf.mxu0
    %10175 = vmatprep.mubr.f32.mxu0 %v9602
    %10176 = vmatmul.mubr.f32.gmra.mxu0 %v9554
    %v10177 = vpop.f32.mrf.mxu0
    %v10178 = vadd.f32 %v10033, %v10177
    %v10179 = vpop.f32.mrf.mxu0
    %10180 = vmatprep.mubr.f32.mxu0 %v9603
    %10181 = vmatmul.mubr.f32.gmra.mxu0 %v9555
    %v10182 = vpop.f32.mrf.mxu0
    %v10183 = vadd.f32 %v10038, %v10182
    %v10184 = vpop.f32.mrf.mxu0
    %10185 = vmatprep.mubr.f32.mxu0 %v9604
    %10186 = vmatmul.mubr.f32.gmra.mxu0 %v9556
    %v10187 = vpop.f32.mrf.mxu0
    %v10188 = vadd.f32 %v10043, %v10187
    %v10189 = vpop.f32.mrf.mxu0
    %10190 = vmatprep.mubr.f32.mxu0 %v9605
    %10191 = vmatmul.mubr.f32.gmra.mxu0 %v9557
    %v10192 = vpop.f32.mrf.mxu0
    %v10193 = vadd.f32 %v10048, %v10192
    %v10194 = vpop.f32.mrf.mxu0
    %10195 = vdwg.mxu0
    %10196 = vmatprep.subr.mxu0 0.0
    %10197 = vmatpush1.msra.mxu0 0.0
    %10198 = vmatprep.subr.mxu0 0.0
    %10199 = vmatpush1.msra.mxu0 0.0
    %10200 = vmatprep.subr.mxu0 0.0
    %10201 = vmatpush1.msra.mxu0 0.0
    %10202 = vmatprep.subr.mxu0 0.0
    %10203 = vmatpush1.msra.mxu0 0.0
    %10204 = vmatprep.subr.mxu0 0.0
    %10205 = vmatpush1.msra.mxu0 0.0
    %10206 = vmatprep.subr.mxu0 0.0
    %10207 = vmatpush1.msra.mxu0 0.0
    %10208 = vmatprep.subr.mxu0 0.0
    %10209 = vmatpush1.msra.mxu0 0.0
    %10210 = vmatprep.subr.mxu0 0.0
    %10211 = vmatpush1.msra.mxu0 0.0
    %10212 = vmatprep.subr.mxu0 0.0
    %10213 = vmatpush1.msra.mxu0 0.0
    %10214 = vmatprep.subr.mxu0 0.0
    %10215 = vmatpush1.msra.mxu0 0.0
    %10216 = vmatprep.subr.mxu0 0.0
    %10217 = vmatpush1.msra.mxu0 0.0
    %10218 = vmatprep.subr.mxu0 0.0
    %10219 = vmatpush1.msra.mxu0 0.0
    %10220 = vmatprep.subr.mxu0 0.0
    %10221 = vmatpush1.msra.mxu0 %v9705
    %10222 = vmatprep.subr.mxu0 0.0
    %10223 = vmatpush1.msra.mxu0 %v9704
    %10224 = vmatprep.subr.mxu0 0.0
    %10225 = vmatpush1.msra.mxu0 %v9703
    %10226 = vmatprep.subr.mxu0 0.0
    %10227 = vmatpush1.msra.mxu0 %v9702
    %10228 = vmatprep.subr.mxu0 0.0
    %10229 = vmatpush2.msra.mxu0 0.0
    %10230 = vmatprep.subr.mxu0 0.0
    %10231 = vmatpush2.msra.mxu0 0.0
    %10232 = vmatprep.subr.mxu0 0.0
    %10233 = vmatpush2.msra.mxu0 0.0
    %10234 = vmatprep.subr.mxu0 0.0
    %10235 = vmatpush2.msra.mxu0 0.0
    %10236 = vmatprep.subr.mxu0 0.0
    %10237 = vmatpush2.msra.mxu0 0.0
    %10238 = vmatprep.subr.mxu0 0.0
    %10239 = vmatpush2.msra.mxu0 0.0
    %10240 = vmatprep.subr.mxu0 0.0
    %10241 = vmatpush2.msra.mxu0 0.0
    %10242 = vmatprep.subr.mxu0 0.0
    %10243 = vmatpush2.msra.mxu0 0.0
    %10244 = vmatprep.subr.mxu0 0.0
    %10245 = vmatpush2.msra.mxu0 0.0
    %10246 = vmatprep.subr.mxu0 0.0
    %10247 = vmatpush2.msra.mxu0 0.0
    %10248 = vmatprep.subr.mxu0 0.0
    %10249 = vmatpush2.msra.mxu0 0.0
    %10250 = vmatprep.subr.mxu0 0.0
    %10251 = vmatpush2.msra.mxu0 0.0
    %10252 = vmatprep.subr.mxu0 0.0
    %10253 = vmatpush2.msra.mxu0 0.0
    %10254 = vmatprep.subr.mxu0 0.0
    %10255 = vmatpush2.msra.mxu0 0.0
    %10256 = vmatprep.subr.mxu0 0.0
    %10257 = vmatpush2.msra.mxu0 0.0
    %10258 = vmatprep.subr.mxu0 0.0
    %10259 = vmatpush2.msra.mxu0 0.0
    %10260 = vmatprep.mubr.f32.mxu0 0.0
    %10261 = vmatmul.mubr.f32.gmra.mxu0 %v9714
    %v10262 = vpop.f32.mrf.mxu0
    %v10263 = vadd.f32 %v10118, %v10262
    %v10264 = vpop.f32.mrf.mxu0
    %10265 = vmatprep.mubr.f32.mxu0 0.0
    %10266 = vmatmul.mubr.f32.gmra.mxu0 %v9717
    %v10267 = vpop.f32.mrf.mxu0
    %v10268 = vadd.f32 %v10123, %v10267
    %v10269 = vpop.f32.mrf.mxu0
    %10270 = vmatprep.mubr.f32.mxu0 0.0
    %10271 = vmatmul.mubr.f32.gmra.mxu0 %v9720
    %v10272 = vpop.f32.mrf.mxu0
    %v10273 = vadd.f32 %v10128, %v10272
    %v10274 = vpop.f32.mrf.mxu0
    %10275 = vmatprep.mubr.f32.mxu0 0.0
    %10276 = vmatmul.mubr.f32.gmra.mxu0 %v9723
    %v10277 = vpop.f32.mrf.mxu0
    %v10278 = vadd.f32 %v10133, %v10277
    %v10279 = vpop.f32.mrf.mxu0
    %10280 = vmatprep.mubr.f32.mxu0 0.0
    %10281 = vmatmul.mubr.f32.gmra.mxu0 %v9726
    %v10282 = vpop.f32.mrf.mxu0
    %v10283 = vadd.f32 %v10138, %v10282
    %v10284 = vpop.f32.mrf.mxu0
    %10285 = vmatprep.mubr.f32.mxu0 0.0
    %10286 = vmatmul.mubr.f32.gmra.mxu0 %v9729
    %v10287 = vpop.f32.mrf.mxu0
    %v10288 = vadd.f32 %v10143, %v10287
    %v10289 = vpop.f32.mrf.mxu0
    %10290 = vmatprep.mubr.f32.mxu0 0.0
    %10291 = vmatmul.mubr.f32.gmra.mxu0 %v9732
    %v10292 = vpop.f32.mrf.mxu0
    %v10293 = vadd.f32 %v10148, %v10292
    %v10294 = vpop.f32.mrf.mxu0
    %10295 = vmatprep.mubr.f32.mxu0 0.0
    %10296 = vmatmul.mubr.f32.gmra.mxu0 %v9735
    %v10297 = vpop.f32.mrf.mxu0
    %v10298 = vadd.f32 %v10153, %v10297
    %v10299 = vpop.f32.mrf.mxu0
    %10300 = vmatprep.mubr.f32.mxu0 0.0
    %10301 = vmatmul.mubr.f32.gmra.mxu0 %v9738
    %v10302 = vpop.f32.mrf.mxu0
    %v10303 = vadd.f32 %v10158, %v10302
    %v10304 = vpop.f32.mrf.mxu0
    %10305 = vmatprep.mubr.f32.mxu0 0.0
    %10306 = vmatmul.mubr.f32.gmra.mxu0 %v9741
    %v10307 = vpop.f32.mrf.mxu0
    %v10308 = vadd.f32 %v10163, %v10307
    %v10309 = vpop.f32.mrf.mxu0
    %10310 = vmatprep.mubr.f32.mxu0 0.0
    %10311 = vmatmul.mubr.f32.gmra.mxu0 %v9744
    %v10312 = vpop.f32.mrf.mxu0
    %v10313 = vadd.f32 %v10168, %v10312
    %v10314 = vpop.f32.mrf.mxu0
    %10315 = vmatprep.mubr.f32.mxu0 0.0
    %10316 = vmatmul.mubr.f32.gmra.mxu0 %v9747
    %v10317 = vpop.f32.mrf.mxu0
    %v10318 = vadd.f32 %v10173, %v10317
    %v10319 = vpop.f32.mrf.mxu0
    %10320 = vmatprep.mubr.f32.mxu0 0.0
    %10321 = vmatmul.mubr.f32.gmra.mxu0 %v9750
    %v10322 = vpop.f32.mrf.mxu0
    %v10323 = vadd.f32 %v10178, %v10322
    %v10324 = vpop.f32.mrf.mxu0
    %10325 = vmatprep.mubr.f32.mxu0 0.0
    %10326 = vmatmul.mubr.f32.gmra.mxu0 %v9753
    %v10327 = vpop.f32.mrf.mxu0
    %v10328 = vadd.f32 %v10183, %v10327
    %v10329 = vpop.f32.mrf.mxu0
    %10330 = vmatprep.mubr.f32.mxu0 0.0
    %10331 = vmatmul.mubr.f32.gmra.mxu0 %v9756
    %v10332 = vpop.f32.mrf.mxu0
    %v10333 = vadd.f32 %v10188, %v10332
    %v10334 = vpop.f32.mrf.mxu0
    %10335 = vmatprep.mubr.f32.mxu0 0.0
    %10336 = vmatmul.mubr.f32.gmra.mxu0 %v9759
    %v10337 = vpop.f32.mrf.mxu0
    %v10338 = vadd.f32 %v10193, %v10337
    %v10339 = vpop.f32.mrf.mxu0
    %10340 = vdwg.mxu0
    %v10357 = vcombine.high %v10263, %v10263
    %v10359 = vunpack.c.l.s4 1983009808
    %v10360 = vunpack.c.0.s8 %v10359
    %v10361 = vlaneseq
    %v10362 = vshrl.u32 %v10361, 7
    %v10363 = vsub.s32 %v10360, %v10362
    %v10364 = vrot.slane %v10263, %v10363
    %v10366 = vunpack.c.l.s4 1983009808
    %v10367 = vunpack.c.0.s8 %v10366
    %v10368 = vlaneseq
    %v10369 = vshrl.u32 %v10368, 7
    %v10370 = vsub.s32 %v10367, %v10369
    %v10371 = vrot.slane %v10357, %v10370
    %v10372 = vcombine.high %v10364, %v10364
    %v10373 = vcombine.high %v10371, %v10371
    %v10374 = vcombine.high %v10268, %v10268
    %v10376 = vunpack.c.l.s4 1983009808
    %v10377 = vunpack.c.0.s8 %v10376
    %v10378 = vlaneseq
    %v10379 = vshrl.u32 %v10378, 7
    %v10380 = vsub.s32 %v10377, %v10379
    %v10381 = vrot.slane %v10268, %v10380
    %v10383 = vunpack.c.l.s4 1983009808
    %v10384 = vunpack.c.0.s8 %v10383
    %v10385 = vlaneseq
    %v10386 = vshrl.u32 %v10385, 7
    %v10387 = vsub.s32 %v10384, %v10386
    %v10388 = vrot.slane %v10374, %v10387
    %v10389 = vcombine.high %v10381, %v10381
    %v10390 = vcombine.high %v10388, %v10388
    %v10391 = vcombine.high %v10273, %v10273
    %v10393 = vunpack.c.l.s4 1983009808
    %v10394 = vunpack.c.0.s8 %v10393
    %v10395 = vlaneseq
    %v10396 = vshrl.u32 %v10395, 7
    %v10397 = vsub.s32 %v10394, %v10396
    %v10398 = vrot.slane %v10273, %v10397
    %v10400 = vunpack.c.l.s4 1983009808
    %v10401 = vunpack.c.0.s8 %v10400
    %v10402 = vlaneseq
    %v10403 = vshrl.u32 %v10402, 7
    %v10404 = vsub.s32 %v10401, %v10403
    %v10405 = vrot.slane %v10391, %v10404
    %v10406 = vcombine.high %v10398, %v10398
    %v10407 = vcombine.high %v10405, %v10405
    %v10408 = vcombine.high %v10278, %v10278
    %v10410 = vunpack.c.l.s4 1983009808
    %v10411 = vunpack.c.0.s8 %v10410
    %v10412 = vlaneseq
    %v10413 = vshrl.u32 %v10412, 7
    %v10414 = vsub.s32 %v10411, %v10413
    %v10415 = vrot.slane %v10278, %v10414
    %v10417 = vunpack.c.l.s4 1983009808
    %v10418 = vunpack.c.0.s8 %v10417
    %v10419 = vlaneseq
    %v10420 = vshrl.u32 %v10419, 7
    %v10421 = vsub.s32 %v10418, %v10420
    %v10422 = vrot.slane %v10408, %v10421
    %v10423 = vcombine.high %v10415, %v10415
    %v10424 = vcombine.high %v10422, %v10422
    %v10425 = vcombine.high %v10283, %v10283
    %v10427 = vunpack.c.l.s4 1983009808
    %v10428 = vunpack.c.0.s8 %v10427
    %v10429 = vlaneseq
    %v10430 = vshrl.u32 %v10429, 7
    %v10431 = vsub.s32 %v10428, %v10430
    %v10432 = vrot.slane %v10283, %v10431
    %v10434 = vunpack.c.l.s4 1983009808
    %v10435 = vunpack.c.0.s8 %v10434
    %v10436 = vlaneseq
    %v10437 = vshrl.u32 %v10436, 7
    %v10438 = vsub.s32 %v10435, %v10437
    %v10439 = vrot.slane %v10425, %v10438
    %v10440 = vcombine.high %v10432, %v10432
    %v10441 = vcombine.high %v10439, %v10439
    %v10442 = vcombine.high %v10288, %v10288
    %v10444 = vunpack.c.l.s4 1983009808
    %v10445 = vunpack.c.0.s8 %v10444
    %v10446 = vlaneseq
    %v10447 = vshrl.u32 %v10446, 7
    %v10448 = vsub.s32 %v10445, %v10447
    %v10449 = vrot.slane %v10288, %v10448
    %v10451 = vunpack.c.l.s4 1983009808
    %v10452 = vunpack.c.0.s8 %v10451
    %v10453 = vlaneseq
    %v10454 = vshrl.u32 %v10453, 7
    %v10455 = vsub.s32 %v10452, %v10454
    %v10456 = vrot.slane %v10442, %v10455
    %v10457 = vcombine.high %v10449, %v10449
    %v10458 = vcombine.high %v10456, %v10456
    %v10459 = vcombine.high %v10293, %v10293
    %v10461 = vunpack.c.l.s4 1983009808
    %v10462 = vunpack.c.0.s8 %v10461
    %v10463 = vlaneseq
    %v10464 = vshrl.u32 %v10463, 7
    %v10465 = vsub.s32 %v10462, %v10464
    %v10466 = vrot.slane %v10293, %v10465
    %v10468 = vunpack.c.l.s4 1983009808
    %v10469 = vunpack.c.0.s8 %v10468
    %v10470 = vlaneseq
    %v10471 = vshrl.u32 %v10470, 7
    %v10472 = vsub.s32 %v10469, %v10471
    %v10473 = vrot.slane %v10459, %v10472
    %v10474 = vcombine.high %v10466, %v10466
    %v10475 = vcombine.high %v10473, %v10473
    %v10476 = vcombine.high %v10298, %v10298
    %v10478 = vunpack.c.l.s4 1983009808
    %v10479 = vunpack.c.0.s8 %v10478
    %v10480 = vlaneseq
    %v10481 = vshrl.u32 %v10480, 7
    %v10482 = vsub.s32 %v10479, %v10481
    %v10483 = vrot.slane %v10298, %v10482
    %v10485 = vunpack.c.l.s4 1983009808
    %v10486 = vunpack.c.0.s8 %v10485
    %v10487 = vlaneseq
    %v10488 = vshrl.u32 %v10487, 7
    %v10489 = vsub.s32 %v10486, %v10488
    %v10490 = vrot.slane %v10476, %v10489
    %v10491 = vcombine.high %v10483, %v10483
    %v10492 = vcombine.high %v10490, %v10490
    %v10493 = vcombine.high %v10303, %v10303
    %v10495 = vunpack.c.l.s4 1983009808
    %v10496 = vunpack.c.0.s8 %v10495
    %v10497 = vlaneseq
    %v10498 = vshrl.u32 %v10497, 7
    %v10499 = vsub.s32 %v10496, %v10498
    %v10500 = vrot.slane %v10303, %v10499
    %v10502 = vunpack.c.l.s4 1983009808
    %v10503 = vunpack.c.0.s8 %v10502
    %v10504 = vlaneseq
    %v10505 = vshrl.u32 %v10504, 7
    %v10506 = vsub.s32 %v10503, %v10505
    %v10507 = vrot.slane %v10493, %v10506
    %v10508 = vcombine.high %v10500, %v10500
    %v10509 = vcombine.high %v10507, %v10507
    %v10510 = vcombine.high %v10308, %v10308
    %v10512 = vunpack.c.l.s4 1983009808
    %v10513 = vunpack.c.0.s8 %v10512
    %v10514 = vlaneseq
    %v10515 = vshrl.u32 %v10514, 7
    %v10516 = vsub.s32 %v10513, %v10515
    %v10517 = vrot.slane %v10308, %v10516
    %v10519 = vunpack.c.l.s4 1983009808
    %v10520 = vunpack.c.0.s8 %v10519
    %v10521 = vlaneseq
    %v10522 = vshrl.u32 %v10521, 7
    %v10523 = vsub.s32 %v10520, %v10522
    %v10524 = vrot.slane %v10510, %v10523
    %v10525 = vcombine.high %v10517, %v10517
    %v10526 = vcombine.high %v10524, %v10524
    %v10527 = vcombine.high %v10313, %v10313
    %v10529 = vunpack.c.l.s4 1983009808
    %v10530 = vunpack.c.0.s8 %v10529
    %v10531 = vlaneseq
    %v10532 = vshrl.u32 %v10531, 7
    %v10533 = vsub.s32 %v10530, %v10532
    %v10534 = vrot.slane %v10313, %v10533
    %v10536 = vunpack.c.l.s4 1983009808
    %v10537 = vunpack.c.0.s8 %v10536
    %v10538 = vlaneseq
    %v10539 = vshrl.u32 %v10538, 7
    %v10540 = vsub.s32 %v10537, %v10539
    %v10541 = vrot.slane %v10527, %v10540
    %v10542 = vcombine.high %v10534, %v10534
    %v10543 = vcombine.high %v10541, %v10541
    %v10544 = vcombine.high %v10318, %v10318
    %v10546 = vunpack.c.l.s4 1983009808
    %v10547 = vunpack.c.0.s8 %v10546
    %v10548 = vlaneseq
    %v10549 = vshrl.u32 %v10548, 7
    %v10550 = vsub.s32 %v10547, %v10549
    %v10551 = vrot.slane %v10318, %v10550
    %v10553 = vunpack.c.l.s4 1983009808
    %v10554 = vunpack.c.0.s8 %v10553
    %v10555 = vlaneseq
    %v10556 = vshrl.u32 %v10555, 7
    %v10557 = vsub.s32 %v10554, %v10556
    %v10558 = vrot.slane %v10544, %v10557
    %v10559 = vcombine.high %v10551, %v10551
    %v10560 = vcombine.high %v10558, %v10558
    %v10561 = vcombine.high %v10323, %v10323
    %v10563 = vunpack.c.l.s4 1983009808
    %v10564 = vunpack.c.0.s8 %v10563
    %v10565 = vlaneseq
    %v10566 = vshrl.u32 %v10565, 7
    %v10567 = vsub.s32 %v10564, %v10566
    %v10568 = vrot.slane %v10323, %v10567
    %v10570 = vunpack.c.l.s4 1983009808
    %v10571 = vunpack.c.0.s8 %v10570
    %v10572 = vlaneseq
    %v10573 = vshrl.u32 %v10572, 7
    %v10574 = vsub.s32 %v10571, %v10573
    %v10575 = vrot.slane %v10561, %v10574
    %v10576 = vcombine.high %v10568, %v10568
    %v10577 = vcombine.high %v10575, %v10575
    %v10578 = vcombine.high %v10328, %v10328
    %v10580 = vunpack.c.l.s4 1983009808
    %v10581 = vunpack.c.0.s8 %v10580
    %v10582 = vlaneseq
    %v10583 = vshrl.u32 %v10582, 7
    %v10584 = vsub.s32 %v10581, %v10583
    %v10585 = vrot.slane %v10328, %v10584
    %v10587 = vunpack.c.l.s4 1983009808
    %v10588 = vunpack.c.0.s8 %v10587
    %v10589 = vlaneseq
    %v10590 = vshrl.u32 %v10589, 7
    %v10591 = vsub.s32 %v10588, %v10590
    %v10592 = vrot.slane %v10578, %v10591
    %v10593 = vcombine.high %v10585, %v10585
    %v10594 = vcombine.high %v10592, %v10592
    %v10595 = vcombine.high %v10333, %v10333
    %v10597 = vunpack.c.l.s4 1983009808
    %v10598 = vunpack.c.0.s8 %v10597
    %v10599 = vlaneseq
    %v10600 = vshrl.u32 %v10599, 7
    %v10601 = vsub.s32 %v10598, %v10600
    %v10602 = vrot.slane %v10333, %v10601
    %v10604 = vunpack.c.l.s4 1983009808
    %v10605 = vunpack.c.0.s8 %v10604
    %v10606 = vlaneseq
    %v10607 = vshrl.u32 %v10606, 7
    %v10608 = vsub.s32 %v10605, %v10607
    %v10609 = vrot.slane %v10595, %v10608
    %v10610 = vcombine.high %v10602, %v10602
    %v10611 = vcombine.high %v10609, %v10609
    %v10612 = vcombine.high %v10338, %v10338
    %v10614 = vunpack.c.l.s4 1983009808
    %v10615 = vunpack.c.0.s8 %v10614
    %v10616 = vlaneseq
    %v10617 = vshrl.u32 %v10616, 7
    %v10618 = vsub.s32 %v10615, %v10617
    %v10619 = vrot.slane %v10338, %v10618
    %v10621 = vunpack.c.l.s4 1983009808
    %v10622 = vunpack.c.0.s8 %v10621
    %v10623 = vlaneseq
    %v10624 = vshrl.u32 %v10623, 7
    %v10625 = vsub.s32 %v10622, %v10624
    %v10626 = vrot.slane %v10612, %v10625
    %v10627 = vcombine.high %v10619, %v10619
    %v10628 = vcombine.high %v10626, %v10626
    %v10693 = vrot.slane %v10364, 7
    %v10694 = vrot.slane %v10693, 2
    %v10695 = vrot.slane %v10372, 7
    %v10696 = vrot.slane %v10695, 2
    %v10697 = vrot.slane %v10371, 7
    %v10698 = vrot.slane %v10697, 2
    %v10699 = vrot.slane %v10373, 7
    %v10700 = vrot.slane %v10699, 2
    %v10701 = vrot.slane %v10398, 7
    %v10702 = vrot.slane %v10701, 2
    %v10703 = vrot.slane %v10406, 7
    %v10704 = vrot.slane %v10703, 2
    %v10705 = vrot.slane %v10405, 7
    %v10706 = vrot.slane %v10705, 2
    %v10707 = vrot.slane %v10407, 7
    %v10708 = vrot.slane %v10707, 2
    %v10709 = vrot.slane %v10432, 7
    %v10710 = vrot.slane %v10709, 2
    %v10711 = vrot.slane %v10440, 7
    %v10712 = vrot.slane %v10711, 2
    %v10713 = vrot.slane %v10439, 7
    %v10714 = vrot.slane %v10713, 2
    %v10715 = vrot.slane %v10441, 7
    %v10716 = vrot.slane %v10715, 2
    %v10717 = vrot.slane %v10466, 7
    %v10718 = vrot.slane %v10717, 2
    %v10719 = vrot.slane %v10474, 7
    %v10720 = vrot.slane %v10719, 2
    %v10721 = vrot.slane %v10473, 7
    %v10722 = vrot.slane %v10721, 2
    %v10723 = vrot.slane %v10475, 7
    %v10724 = vrot.slane %v10723, 2
    %v10725 = vrot.slane %v10500, 7
    %v10726 = vrot.slane %v10725, 2
    %v10727 = vrot.slane %v10508, 7
    %v10728 = vrot.slane %v10727, 2
    %v10729 = vrot.slane %v10507, 7
    %v10730 = vrot.slane %v10729, 2
    %v10731 = vrot.slane %v10509, 7
    %v10732 = vrot.slane %v10731, 2
    %v10733 = vrot.slane %v10534, 7
    %v10734 = vrot.slane %v10733, 2
    %v10735 = vrot.slane %v10542, 7
    %v10736 = vrot.slane %v10735, 2
    %v10737 = vrot.slane %v10541, 7
    %v10738 = vrot.slane %v10737, 2
    %v10739 = vrot.slane %v10543, 7
    %v10740 = vrot.slane %v10739, 2
    %v10741 = vrot.slane %v10568, 7
    %v10742 = vrot.slane %v10741, 2
    %v10743 = vrot.slane %v10576, 7
    %v10744 = vrot.slane %v10743, 2
    %v10745 = vrot.slane %v10575, 7
    %v10746 = vrot.slane %v10745, 2
    %v10747 = vrot.slane %v10577, 7
    %v10748 = vrot.slane %v10747, 2
    %v10749 = vrot.slane %v10602, 7
    %v10750 = vrot.slane %v10749, 2
    %v10751 = vrot.slane %v10610, 7
    %v10752 = vrot.slane %v10751, 2
    %v10753 = vrot.slane %v10609, 7
    %v10754 = vrot.slane %v10753, 2
    %v10755 = vrot.slane %v10611, 7
    %v10756 = vrot.slane %v10755, 2
    %v10789 = vadd.f32 %v10364, %v10694
    %v10790 = vadd.f32 %v10372, %v10696
    %v10791 = vadd.f32 %v10371, %v10698
    %v10792 = vadd.f32 %v10373, %v10700
    %v10793 = vadd.f32 %v10398, %v10702
    %v10794 = vadd.f32 %v10406, %v10704
    %v10795 = vadd.f32 %v10405, %v10706
    %v10796 = vadd.f32 %v10407, %v10708
    %v10797 = vadd.f32 %v10432, %v10710
    %v10798 = vadd.f32 %v10440, %v10712
    %v10799 = vadd.f32 %v10439, %v10714
    %v10800 = vadd.f32 %v10441, %v10716
    %v10801 = vadd.f32 %v10466, %v10718
    %v10802 = vadd.f32 %v10474, %v10720
    %v10803 = vadd.f32 %v10473, %v10722
    %v10804 = vadd.f32 %v10475, %v10724
    %v10805 = vadd.f32 %v10500, %v10726
    %v10806 = vadd.f32 %v10508, %v10728
    %v10807 = vadd.f32 %v10507, %v10730
    %v10808 = vadd.f32 %v10509, %v10732
    %v10809 = vadd.f32 %v10534, %v10734
    %v10810 = vadd.f32 %v10542, %v10736
    %v10811 = vadd.f32 %v10541, %v10738
    %v10812 = vadd.f32 %v10543, %v10740
    %v10813 = vadd.f32 %v10568, %v10742
    %v10814 = vadd.f32 %v10576, %v10744
    %v10815 = vadd.f32 %v10575, %v10746
    %v10816 = vadd.f32 %v10577, %v10748
    %v10817 = vadd.f32 %v10602, %v10750
    %v10818 = vadd.f32 %v10610, %v10752
    %v10819 = vadd.f32 %v10609, %v10754
    %v10820 = vadd.f32 %v10611, %v10756
    %v10821 = vadd.f32 %v10789, %v10381
    %v10822 = vadd.f32 %v10790, %v10389
    %v10823 = vadd.f32 %v10791, %v10388
    %v10824 = vadd.f32 %v10792, %v10390
    %v10825 = vadd.f32 %v10793, %v10415
    %v10826 = vadd.f32 %v10794, %v10423
    %v10827 = vadd.f32 %v10795, %v10422
    %v10828 = vadd.f32 %v10796, %v10424
    %v10829 = vadd.f32 %v10797, %v10449
    %v10830 = vadd.f32 %v10798, %v10457
    %v10831 = vadd.f32 %v10799, %v10456
    %v10832 = vadd.f32 %v10800, %v10458
    %v10833 = vadd.f32 %v10801, %v10483
    %v10834 = vadd.f32 %v10802, %v10491
    %v10835 = vadd.f32 %v10803, %v10490
    %v10836 = vadd.f32 %v10804, %v10492
    %v10837 = vadd.f32 %v10805, %v10517
    %v10838 = vadd.f32 %v10806, %v10525
    %v10839 = vadd.f32 %v10807, %v10524
    %v10840 = vadd.f32 %v10808, %v10526
    %v10841 = vadd.f32 %v10809, %v10551
    %v10842 = vadd.f32 %v10810, %v10559
    %v10843 = vadd.f32 %v10811, %v10558
    %v10844 = vadd.f32 %v10812, %v10560
    %v10845 = vadd.f32 %v10813, %v10585
    %v10846 = vadd.f32 %v10814, %v10593
    %v10847 = vadd.f32 %v10815, %v10592
    %v10848 = vadd.f32 %v10816, %v10594
    %v10849 = vadd.f32 %v10817, %v10619
    %v10850 = vadd.f32 %v10818, %v10627
    %v10851 = vadd.f32 %v10819, %v10626
    %v10852 = vadd.f32 %v10820, %v10628
    %v10853 = vrot.slane %v10381, 7
    %v10854 = vrot.slane %v10853, 2
    %v10855 = vrot.slane %v10389, 7
    %v10856 = vrot.slane %v10855, 2
    %v10857 = vrot.slane %v10388, 7
    %v10858 = vrot.slane %v10857, 2
    %v10859 = vrot.slane %v10390, 7
    %v10860 = vrot.slane %v10859, 2
    %v10861 = vrot.slane %v10415, 7
    %v10862 = vrot.slane %v10861, 2
    %v10863 = vrot.slane %v10423, 7
    %v10864 = vrot.slane %v10863, 2
    %v10865 = vrot.slane %v10422, 7
    %v10866 = vrot.slane %v10865, 2
    %v10867 = vrot.slane %v10424, 7
    %v10868 = vrot.slane %v10867, 2
    %v10869 = vrot.slane %v10449, 7
    %v10870 = vrot.slane %v10869, 2
    %v10871 = vrot.slane %v10457, 7
    %v10872 = vrot.slane %v10871, 2
    %v10873 = vrot.slane %v10456, 7
    %v10874 = vrot.slane %v10873, 2
    %v10875 = vrot.slane %v10458, 7
    %v10876 = vrot.slane %v10875, 2
    %v10877 = vrot.slane %v10483, 7
    %v10878 = vrot.slane %v10877, 2
    %v10879 = vrot.slane %v10491, 7
    %v10880 = vrot.slane %v10879, 2
    %v10881 = vrot.slane %v10490, 7
    %v10882 = vrot.slane %v10881, 2
    %v10883 = vrot.slane %v10492, 7
    %v10884 = vrot.slane %v10883, 2
    %v10885 = vrot.slane %v10517, 7
    %v10886 = vrot.slane %v10885, 2
    %v10887 = vrot.slane %v10525, 7
    %v10888 = vrot.slane %v10887, 2
    %v10889 = vrot.slane %v10524, 7
    %v10890 = vrot.slane %v10889, 2
    %v10891 = vrot.slane %v10526, 7
    %v10892 = vrot.slane %v10891, 2
    %v10893 = vrot.slane %v10551, 7
    %v10894 = vrot.slane %v10893, 2
    %v10895 = vrot.slane %v10559, 7
    %v10896 = vrot.slane %v10895, 2
    %v10897 = vrot.slane %v10558, 7
    %v10898 = vrot.slane %v10897, 2
    %v10899 = vrot.slane %v10560, 7
    %v10900 = vrot.slane %v10899, 2
    %v10901 = vrot.slane %v10585, 7
    %v10902 = vrot.slane %v10901, 2
    %v10903 = vrot.slane %v10593, 7
    %v10904 = vrot.slane %v10903, 2
    %v10905 = vrot.slane %v10592, 7
    %v10906 = vrot.slane %v10905, 2
    %v10907 = vrot.slane %v10594, 7
    %v10908 = vrot.slane %v10907, 2
    %v10909 = vrot.slane %v10619, 7
    %v10910 = vrot.slane %v10909, 2
    %v10911 = vrot.slane %v10627, 7
    %v10912 = vrot.slane %v10911, 2
    %v10913 = vrot.slane %v10626, 7
    %v10914 = vrot.slane %v10913, 2
    %v10915 = vrot.slane %v10628, 7
    %v10916 = vrot.slane %v10915, 2
    %v10949 = vadd.f32 %v10821, %v10854
    %v10950 = vadd.f32 %v10822, %v10856
    %v10951 = vadd.f32 %v10823, %v10858
    %v10952 = vadd.f32 %v10824, %v10860
    %v10953 = vadd.f32 %v10825, %v10862
    %v10954 = vadd.f32 %v10826, %v10864
    %v10955 = vadd.f32 %v10827, %v10866
    %v10956 = vadd.f32 %v10828, %v10868
    %v10957 = vadd.f32 %v10829, %v10870
    %v10958 = vadd.f32 %v10830, %v10872
    %v10959 = vadd.f32 %v10831, %v10874
    %v10960 = vadd.f32 %v10832, %v10876
    %v10961 = vadd.f32 %v10833, %v10878
    %v10962 = vadd.f32 %v10834, %v10880
    %v10963 = vadd.f32 %v10835, %v10882
    %v10964 = vadd.f32 %v10836, %v10884
    %v10965 = vadd.f32 %v10837, %v10886
    %v10966 = vadd.f32 %v10838, %v10888
    %v10967 = vadd.f32 %v10839, %v10890
    %v10968 = vadd.f32 %v10840, %v10892
    %v10969 = vadd.f32 %v10841, %v10894
    %v10970 = vadd.f32 %v10842, %v10896
    %v10971 = vadd.f32 %v10843, %v10898
    %v10972 = vadd.f32 %v10844, %v10900
    %v10973 = vadd.f32 %v10845, %v10902
    %v10974 = vadd.f32 %v10846, %v10904
    %v10975 = vadd.f32 %v10847, %v10906
    %v10976 = vadd.f32 %v10848, %v10908
    %v10977 = vadd.f32 %v10849, %v10910
    %v10978 = vadd.f32 %v10850, %v10912
    %v10979 = vadd.f32 %v10851, %v10914
    %v10980 = vadd.f32 %v10852, %v10916
    %v10981 = vmul.f32 %v10949, 0.25
    %v10982 = vmul.f32 %v10950, 0.25
    %v10983 = vmul.f32 %v10951, 0.25
    %v10984 = vmul.f32 %v10952, 0.25
    %v10985 = vmul.f32 %v10953, 0.25
    %v10986 = vmul.f32 %v10954, 0.25
    %v10987 = vmul.f32 %v10955, 0.25
    %v10988 = vmul.f32 %v10956, 0.25
    %v10989 = vmul.f32 %v10957, 0.25
    %v10990 = vmul.f32 %v10958, 0.25
    %v10991 = vmul.f32 %v10959, 0.25
    %v10992 = vmul.f32 %v10960, 0.25
    %v10993 = vmul.f32 %v10961, 0.25
    %v10994 = vmul.f32 %v10962, 0.25
    %v10995 = vmul.f32 %v10963, 0.25
    %v10996 = vmul.f32 %v10964, 0.25
    %v10997 = vmul.f32 %v10965, 0.25
    %v10998 = vmul.f32 %v10966, 0.25
    %v10999 = vmul.f32 %v10967, 0.25
    %v11000 = vmul.f32 %v10968, 0.25
    %v11001 = vmul.f32 %v10969, 0.25
    %v11002 = vmul.f32 %v10970, 0.25
    %v11003 = vmul.f32 %v10971, 0.25
    %v11004 = vmul.f32 %v10972, 0.25
    %v11005 = vmul.f32 %v10973, 0.25
    %v11006 = vmul.f32 %v10974, 0.25
    %v11007 = vmul.f32 %v10975, 0.25
    %v11008 = vmul.f32 %v10976, 0.25
    %v11009 = vmul.f32 %v10977, 0.25
    %v11010 = vmul.f32 %v10978, 0.25
    %v11011 = vmul.f32 %v10979, 0.25
    %v11012 = vmul.f32 %v10980, 0.25
    %v11013 = vmax.f32 %v10981, 0.0
    %v11014 = vmax.f32 %v10982, 0.0
    %v11015 = vmax.f32 %v10983, 0.0
    %v11016 = vmax.f32 %v10984, 0.0
    %v11017 = vmax.f32 %v10985, 0.0
    %v11018 = vmax.f32 %v10986, 0.0
    %v11019 = vmax.f32 %v10987, 0.0
    %v11020 = vmax.f32 %v10988, 0.0
    %v11021 = vmax.f32 %v10989, 0.0
    %v11022 = vmax.f32 %v10990, 0.0
    %v11023 = vmax.f32 %v10991, 0.0
    %v11024 = vmax.f32 %v10992, 0.0
    %v11025 = vmax.f32 %v10993, 0.0
    %v11026 = vmax.f32 %v10994, 0.0
    %v11027 = vmax.f32 %v10995, 0.0
    %v11028 = vmax.f32 %v10996, 0.0
    %v11029 = vmax.f32 %v10997, 0.0
    %v11030 = vmax.f32 %v10998, 0.0
    %v11031 = vmax.f32 %v10999, 0.0
    %v11032 = vmax.f32 %v11000, 0.0
    %v11033 = vmax.f32 %v11001, 0.0
    %v11034 = vmax.f32 %v11002, 0.0
    %v11035 = vmax.f32 %v11003, 0.0
    %v11036 = vmax.f32 %v11004, 0.0
    %v11037 = vmax.f32 %v11005, 0.0
    %v11038 = vmax.f32 %v11006, 0.0
    %v11039 = vmax.f32 %v11007, 0.0
    %v11040 = vmax.f32 %v11008, 0.0
    %v11041 = vmax.f32 %v11009, 0.0
    %v11042 = vmax.f32 %v11010, 0.0
    %v11043 = vmax.f32 %v11011, 0.0
    %v11044 = vmax.f32 %v11012, 0.0
    %v11045 = vmin.f32 %v11013, 6.0
    %v11046 = vmin.f32 %v11014, 6.0
    %v11047 = vmin.f32 %v11015, 6.0
    %v11048 = vmin.f32 %v11016, 6.0
    %v11049 = vmin.f32 %v11017, 6.0
    %v11050 = vmin.f32 %v11018, 6.0
    %v11051 = vmin.f32 %v11019, 6.0
    %v11052 = vmin.f32 %v11020, 6.0
    %v11053 = vmin.f32 %v11021, 6.0
    %v11054 = vmin.f32 %v11022, 6.0
    %v11055 = vmin.f32 %v11023, 6.0
    %v11056 = vmin.f32 %v11024, 6.0
    %v11057 = vmin.f32 %v11025, 6.0
    %v11058 = vmin.f32 %v11026, 6.0
    %v11059 = vmin.f32 %v11027, 6.0
    %v11060 = vmin.f32 %v11028, 6.0
    %v11061 = vmin.f32 %v11029, 6.0
    %v11062 = vmin.f32 %v11030, 6.0
    %v11063 = vmin.f32 %v11031, 6.0
    %v11064 = vmin.f32 %v11032, 6.0
    %v11065 = vmin.f32 %v11033, 6.0
    %v11066 = vmin.f32 %v11034, 6.0
    %v11067 = vmin.f32 %v11035, 6.0
    %v11068 = vmin.f32 %v11036, 6.0
    %v11069 = vmin.f32 %v11037, 6.0
    %v11070 = vmin.f32 %v11038, 6.0
    %v11071 = vmin.f32 %v11039, 6.0
    %v11072 = vmin.f32 %v11040, 6.0
    %v11073 = vmin.f32 %v11041, 6.0
    %v11074 = vmin.f32 %v11042, 6.0
    %v11075 = vmin.f32 %v11043, 6.0
    %v11076 = vmin.f32 %v11044, 6.0
    %v11079 = vlaneseq
    %v11080 = vshrl.u32 %v11079, 7
    %v11081 = vsub.s32 0, %v11080
    %v11082 = vrot.slane %v11045, %v11081
    %v11083 = vlaneseq
    %v11084 = vshrl.u32 %v11083, 7
    %v11085 = vsub.s32 0, %v11084
    %v11086 = vrot.slane %v11061, %v11085
    %v11087 = vsel %vm7610, %v11086, %v11082
    %v11091 = vlaneseq
    %v11092 = vshrl.u32 %v11091, 7
    %v11093 = vsub.s32 0, %v11092
    %v11094 = vrot.slane %v11046, %v11093
    %v11095 = vlaneseq
    %v11096 = vshrl.u32 %v11095, 7
    %v11097 = vsub.s32 0, %v11096
    %v11098 = vrot.slane %v11062, %v11097
    %v11099 = vsel %vm7610, %v11098, %v11094
    %11100 = vrot.lane.b32.xlu0 %v11099, 64
    %v11101 = vpop.permute.xlu0 %11100
    %v11105 = vlaneseq
    %v11106 = vshrl.u32 %v11105, 7
    %v11107 = vsub.s32 0, %v11106
    %v11108 = vrot.slane %v11047, %v11107
    %v11109 = vlaneseq
    %v11110 = vshrl.u32 %v11109, 7
    %v11111 = vsub.s32 0, %v11110
    %v11112 = vrot.slane %v11063, %v11111
    %v11113 = vsel %vm7610, %v11112, %v11108
    %v11117 = vlaneseq
    %v11118 = vshrl.u32 %v11117, 7
    %v11119 = vsub.s32 0, %v11118
    %v11120 = vrot.slane %v11048, %v11119
    %v11121 = vlaneseq
    %v11122 = vshrl.u32 %v11121, 7
    %v11123 = vsub.s32 0, %v11122
    %v11124 = vrot.slane %v11064, %v11123
    %v11125 = vsel %vm7610, %v11124, %v11120
    %11126 = vrot.lane.b32.xlu0 %v11125, 64
    %v11127 = vpop.permute.xlu0 %11126
    %v11131 = vlaneseq
    %v11132 = vshrl.u32 %v11131, 7
    %v11133 = vsub.s32 0, %v11132
    %v11134 = vrot.slane %v11049, %v11133
    %v11135 = vlaneseq
    %v11136 = vshrl.u32 %v11135, 7
    %v11137 = vsub.s32 0, %v11136
    %v11138 = vrot.slane %v11065, %v11137
    %v11139 = vsel %vm7610, %v11138, %v11134
    %v11143 = vlaneseq
    %v11144 = vshrl.u32 %v11143, 7
    %v11145 = vsub.s32 0, %v11144
    %v11146 = vrot.slane %v11050, %v11145
    %v11147 = vlaneseq
    %v11148 = vshrl.u32 %v11147, 7
    %v11149 = vsub.s32 0, %v11148
    %v11150 = vrot.slane %v11066, %v11149
    %v11151 = vsel %vm7610, %v11150, %v11146
    %11152 = vrot.lane.b32.xlu0 %v11151, 64
    %v11153 = vpop.permute.xlu0 %11152
    %v11157 = vlaneseq
    %v11158 = vshrl.u32 %v11157, 7
    %v11159 = vsub.s32 0, %v11158
    %v11160 = vrot.slane %v11051, %v11159
    %v11161 = vlaneseq
    %v11162 = vshrl.u32 %v11161, 7
    %v11163 = vsub.s32 0, %v11162
    %v11164 = vrot.slane %v11067, %v11163
    %v11165 = vsel %vm7610, %v11164, %v11160
    %v11169 = vlaneseq
    %v11170 = vshrl.u32 %v11169, 7
    %v11171 = vsub.s32 0, %v11170
    %v11172 = vrot.slane %v11052, %v11171
    %v11173 = vlaneseq
    %v11174 = vshrl.u32 %v11173, 7
    %v11175 = vsub.s32 0, %v11174
    %v11176 = vrot.slane %v11068, %v11175
    %v11177 = vsel %vm7610, %v11176, %v11172
    %11178 = vrot.lane.b32.xlu0 %v11177, 64
    %v11179 = vpop.permute.xlu0 %11178
    %v11183 = vlaneseq
    %v11184 = vshrl.u32 %v11183, 7
    %v11185 = vsub.s32 0, %v11184
    %v11186 = vrot.slane %v11053, %v11185
    %v11187 = vlaneseq
    %v11188 = vshrl.u32 %v11187, 7
    %v11189 = vsub.s32 0, %v11188
    %v11190 = vrot.slane %v11069, %v11189
    %v11191 = vsel %vm7610, %v11190, %v11186
    %v11195 = vlaneseq
    %v11196 = vshrl.u32 %v11195, 7
    %v11197 = vsub.s32 0, %v11196
    %v11198 = vrot.slane %v11054, %v11197
    %v11199 = vlaneseq
    %v11200 = vshrl.u32 %v11199, 7
    %v11201 = vsub.s32 0, %v11200
    %v11202 = vrot.slane %v11070, %v11201
    %v11203 = vsel %vm7610, %v11202, %v11198
    %11204 = vrot.lane.b32.xlu0 %v11203, 64
    %v11205 = vpop.permute.xlu0 %11204
    %v11209 = vlaneseq
    %v11210 = vshrl.u32 %v11209, 7
    %v11211 = vsub.s32 0, %v11210
    %v11212 = vrot.slane %v11055, %v11211
    %v11213 = vlaneseq
    %v11214 = vshrl.u32 %v11213, 7
    %v11215 = vsub.s32 0, %v11214
    %v11216 = vrot.slane %v11071, %v11215
    %v11217 = vsel %vm7610, %v11216, %v11212
    %v11221 = vlaneseq
    %v11222 = vshrl.u32 %v11221, 7
    %v11223 = vsub.s32 0, %v11222
    %v11224 = vrot.slane %v11056, %v11223
    %v11225 = vlaneseq
    %v11226 = vshrl.u32 %v11225, 7
    %v11227 = vsub.s32 0, %v11226
    %v11228 = vrot.slane %v11072, %v11227
    %v11229 = vsel %vm7610, %v11228, %v11224
    %11230 = vrot.lane.b32.xlu0 %v11229, 64
    %v11231 = vpop.permute.xlu0 %11230
    %v11235 = vlaneseq
    %v11236 = vshrl.u32 %v11235, 7
    %v11237 = vsub.s32 0, %v11236
    %v11238 = vrot.slane %v11057, %v11237
    %v11239 = vlaneseq
    %v11240 = vshrl.u32 %v11239, 7
    %v11241 = vsub.s32 0, %v11240
    %v11242 = vrot.slane %v11073, %v11241
    %v11243 = vsel %vm7610, %v11242, %v11238
    %v11247 = vlaneseq
    %v11248 = vshrl.u32 %v11247, 7
    %v11249 = vsub.s32 0, %v11248
    %v11250 = vrot.slane %v11058, %v11249
    %v11251 = vlaneseq
    %v11252 = vshrl.u32 %v11251, 7
    %v11253 = vsub.s32 0, %v11252
    %v11254 = vrot.slane %v11074, %v11253
    %v11255 = vsel %vm7610, %v11254, %v11250
    %11256 = vrot.lane.b32.xlu0 %v11255, 64
    %v11257 = vpop.permute.xlu0 %11256
    %v11261 = vlaneseq
    %v11262 = vshrl.u32 %v11261, 7
    %v11263 = vsub.s32 0, %v11262
    %v11264 = vrot.slane %v11059, %v11263
    %v11265 = vlaneseq
    %v11266 = vshrl.u32 %v11265, 7
    %v11267 = vsub.s32 0, %v11266
    %v11268 = vrot.slane %v11075, %v11267
    %v11269 = vsel %vm7610, %v11268, %v11264
    %v11273 = vlaneseq
    %v11274 = vshrl.u32 %v11273, 7
    %v11275 = vsub.s32 0, %v11274
    %v11276 = vrot.slane %v11060, %v11275
    %v11277 = vlaneseq
    %v11278 = vshrl.u32 %v11277, 7
    %v11279 = vsub.s32 0, %v11278
    %v11280 = vrot.slane %v11076, %v11279
    %v11281 = vsel %vm7610, %v11280, %v11276
    %11282 = vrot.lane.b32.xlu0 %v11281, 64
    %v11283 = vpop.permute.xlu0 %11282
    %v11285 = vsel %vm8948, %v11087, %v11101
    %v11286 = vsel %vm8948, %v11113, %v11127
    %v11287 = vsel %vm8948, %v11139, %v11153
    %v11288 = vsel %vm8948, %v11165, %v11179
    %v11289 = vsel %vm8948, %v11191, %v11205
    %v11290 = vsel %vm8948, %v11217, %v11231
    %v11291 = vsel %vm8948, %v11243, %v11257
    %v11292 = vsel %vm8948, %v11269, %v11283
    %v11293 = vld [vmem:[%s5] sm:$0xff]
    %v11294 = vld [vmem:[%s5 + $0x8] sm:$0xff]
    %v11295 = vld [vmem:[%s5 + $0x10] sm:$0xff]
    %v11296 = vld [vmem:[%s5 + $0x18] sm:$0xff]
    %v11297 = vld [vmem:[%s5 + $0x20] sm:$0xff]
    %v11298 = vld [vmem:[%s5 + $0x28] sm:$0xff]
    %v11299 = vld [vmem:[%s5 + $0x30] sm:$0xff]
    %v11300 = vld [vmem:[%s5 + $0x38] sm:$0xff]
    %v11301 = vld [vmem:[%s5 + $0x40] sm:$0xff]
    %v11302 = vld [vmem:[%s5 + $0x48] sm:$0xff]
    %v11303 = vld [vmem:[%s5 + $0x50] sm:$0xff]
    %v11304 = vld [vmem:[%s5 + $0x58] sm:$0xff]
    %v11305 = vld [vmem:[%s5 + $0x60] sm:$0xff]
    %v11306 = vld [vmem:[%s5 + $0x68] sm:$0xff]
    %v11307 = vld [vmem:[%s5 + $0x70] sm:$0xff]
    %v11308 = vld [vmem:[%s5 + $0x78] sm:$0xff]
    %v11309 = vld [vmem:[%s5 + $0x80] sm:$0xff]
    %v11310 = vld [vmem:[%s5 + $0x88] sm:$0xff]
    %v11311 = vld [vmem:[%s5 + $0x90] sm:$0xff]
    %v11312 = vld [vmem:[%s5 + $0x98] sm:$0xff]
    %v11313 = vld [vmem:[%s5 + $0xa0] sm:$0xff]
    %v11314 = vld [vmem:[%s5 + $0xa8] sm:$0xff]
    %v11315 = vld [vmem:[%s5 + $0xb0] sm:$0xff]
    %v11316 = vld [vmem:[%s5 + $0xb8] sm:$0xff]
    %v11317 = vld [vmem:[%s5 + $0xc0] sm:$0xff]
    %v11318 = vld [vmem:[%s5 + $0xc8] sm:$0xff]
    %v11319 = vld [vmem:[%s5 + $0xd0] sm:$0xff]
    %v11320 = vld [vmem:[%s5 + $0xd8] sm:$0xff]
    %v11321 = vld [vmem:[%s5 + $0xe0] sm:$0xff]
    %v11322 = vld [vmem:[%s5 + $0xe8] sm:$0xff]
    %v11323 = vld [vmem:[%s5 + $0xf0] sm:$0xff]
    %v11324 = vld [vmem:[%s5 + $0xf8] sm:$0xff]
    %v11325 = vld [vmem:[%s5 + $0x100] sm:$0xff]
    %v11326 = vld [vmem:[%s5 + $0x108] sm:$0xff]
    %v11327 = vld [vmem:[%s5 + $0x110] sm:$0xff]
    %v11328 = vld [vmem:[%s5 + $0x118] sm:$0xff]
    %v11329 = vld [vmem:[%s5 + $0x120] sm:$0xff]
    %v11330 = vld [vmem:[%s5 + $0x128] sm:$0xff]
    %v11331 = vld [vmem:[%s5 + $0x130] sm:$0xff]
    %v11332 = vld [vmem:[%s5 + $0x138] sm:$0xff]
    %v11333 = vld [vmem:[%s5 + $0x140] sm:$0xff]
    %v11334 = vld [vmem:[%s5 + $0x148] sm:$0xff]
    %v11335 = vld [vmem:[%s5 + $0x150] sm:$0xff]
    %v11336 = vld [vmem:[%s5 + $0x158] sm:$0xff]
    %v11337 = vld [vmem:[%s5 + $0x160] sm:$0xff]
    %v11338 = vld [vmem:[%s5 + $0x168] sm:$0xff]
    %v11339 = vld [vmem:[%s5 + $0x170] sm:$0xff]
    %v11340 = vld [vmem:[%s5 + $0x178] sm:$0xff]
    %v11341 = vld [vmem:[%s5 + $0x180] sm:$0xff]
    %v11342 = vld [vmem:[%s5 + $0x188] sm:$0xff]
    %v11343 = vld [vmem:[%s5 + $0x190] sm:$0xff]
    %v11344 = vld [vmem:[%s5 + $0x198] sm:$0xff]
    %v11345 = vld [vmem:[%s5 + $0x1a0] sm:$0xff]
    %v11346 = vld [vmem:[%s5 + $0x1a8] sm:$0xff]
    %v11347 = vld [vmem:[%s5 + $0x1b0] sm:$0xff]
    %v11348 = vld [vmem:[%s5 + $0x1b8] sm:$0xff]
    %v11349 = vld [vmem:[%s5 + $0x1c0] sm:$0xff]
    %v11350 = vld [vmem:[%s5 + $0x1c8] sm:$0xff]
    %v11351 = vld [vmem:[%s5 + $0x1d0] sm:$0xff]
    %v11352 = vld [vmem:[%s5 + $0x1d8] sm:$0xff]
    %v11353 = vld [vmem:[%s5 + $0x1e0] sm:$0xff]
    %v11354 = vld [vmem:[%s5 + $0x1e8] sm:$0xff]
    %v11355 = vld [vmem:[%s5 + $0x1f0] sm:$0xff]
    %v11356 = vld [vmem:[%s5 + $0x1f8] sm:$0xff]
    %v11357 = vld [vmem:[%s5 + $0x200] sm:$0xff]
    %v11358 = vld [vmem:[%s5 + $0x208] sm:$0xff]
    %v11359 = vld [vmem:[%s5 + $0x210] sm:$0xff]
    %v11360 = vld [vmem:[%s5 + $0x218] sm:$0xff]
    %v11361 = vld [vmem:[%s5 + $0x220] sm:$0xff]
    %v11362 = vld [vmem:[%s5 + $0x228] sm:$0xff]
    %v11363 = vld [vmem:[%s5 + $0x230] sm:$0xff]
    %v11364 = vld [vmem:[%s5 + $0x238] sm:$0xff]
    %v11365 = vld [vmem:[%s5 + $0x240] sm:$0xff]
    %v11366 = vld [vmem:[%s5 + $0x248] sm:$0xff]
    %v11367 = vld [vmem:[%s5 + $0x250] sm:$0xff]
    %v11368 = vld [vmem:[%s5 + $0x258] sm:$0xff]
    %v11369 = vld [vmem:[%s5 + $0x260] sm:$0xff]
    %v11370 = vld [vmem:[%s5 + $0x268] sm:$0xff]
    %v11371 = vld [vmem:[%s5 + $0x270] sm:$0xff]
    %v11372 = vld [vmem:[%s5 + $0x278] sm:$0xff]
    %v11373 = vld [vmem:[%s5 + $0x280] sm:$0xff]
    %v11374 = vld [vmem:[%s5 + $0x288] sm:$0xff]
    %v11375 = vld [vmem:[%s5 + $0x290] sm:$0xff]
    %v11376 = vld [vmem:[%s5 + $0x298] sm:$0xff]
    %v11377 = vld [vmem:[%s5 + $0x2a0] sm:$0xff]
    %v11378 = vld [vmem:[%s5 + $0x2a8] sm:$0xff]
    %v11379 = vld [vmem:[%s5 + $0x2b0] sm:$0xff]
    %v11380 = vld [vmem:[%s5 + $0x2b8] sm:$0xff]
    %v11381 = vld [vmem:[%s5 + $0x2c0] sm:$0xff]
    %v11382 = vld [vmem:[%s5 + $0x2c8] sm:$0xff]
    %v11383 = vld [vmem:[%s5 + $0x2d0] sm:$0xff]
    %v11384 = vld [vmem:[%s5 + $0x2d8] sm:$0xff]
    %v11385 = vld [vmem:[%s5 + $0x2e0] sm:$0xff]
    %v11386 = vld [vmem:[%s5 + $0x2e8] sm:$0xff]
    %v11387 = vld [vmem:[%s5 + $0x2f0] sm:$0xff]
    %v11388 = vld [vmem:[%s5 + $0x2f8] sm:$0xff]
    %v11389 = vld [vmem:[%s5 + $0x300] sm:$0xff]
    %v11390 = vld [vmem:[%s5 + $0x308] sm:$0xff]
    %v11391 = vld [vmem:[%s5 + $0x310] sm:$0xff]
    %v11392 = vld [vmem:[%s5 + $0x318] sm:$0xff]
    %v11393 = vld [vmem:[%s5 + $0x320] sm:$0xff]
    %v11394 = vld [vmem:[%s5 + $0x328] sm:$0xff]
    %v11395 = vld [vmem:[%s5 + $0x330] sm:$0xff]
    %v11396 = vld [vmem:[%s5 + $0x338] sm:$0xff]
    %v11397 = vld [vmem:[%s5 + $0x340] sm:$0xff]
    %v11398 = vld [vmem:[%s5 + $0x348] sm:$0xff]
    %v11399 = vld [vmem:[%s5 + $0x350] sm:$0xff]
    %v11400 = vld [vmem:[%s5 + $0x358] sm:$0xff]
    %v11401 = vld [vmem:[%s5 + $0x360] sm:$0xff]
    %v11402 = vld [vmem:[%s5 + $0x368] sm:$0xff]
    %v11403 = vld [vmem:[%s5 + $0x370] sm:$0xff]
    %v11404 = vld [vmem:[%s5 + $0x378] sm:$0xff]
    %v11405 = vld [vmem:[%s5 + $0x380] sm:$0xff]
    %v11406 = vld [vmem:[%s5 + $0x388] sm:$0xff]
    %v11407 = vld [vmem:[%s5 + $0x390] sm:$0xff]
    %v11408 = vld [vmem:[%s5 + $0x398] sm:$0xff]
    %v11409 = vld [vmem:[%s5 + $0x3a0] sm:$0xff]
    %v11410 = vld [vmem:[%s5 + $0x3a8] sm:$0xff]
    %v11411 = vld [vmem:[%s5 + $0x3b0] sm:$0xff]
    %v11412 = vld [vmem:[%s5 + $0x3b8] sm:$0xff]
    %v11413 = vld [vmem:[%s5 + $0x3c0] sm:$0xff]
    %v11414 = vld [vmem:[%s5 + $0x3c8] sm:$0xff]
    %v11415 = vld [vmem:[%s5 + $0x3d0] sm:$0xff]
    %v11416 = vld [vmem:[%s5 + $0x3d8] sm:$0xff]
    %v11417 = vld [vmem:[%s5 + $0x3e0] sm:$0xff]
    %v11418 = vld [vmem:[%s5 + $0x3e8] sm:$0xff]
    %v11419 = vld [vmem:[%s5 + $0x3f0] sm:$0xff]
    %v11420 = vld [vmem:[%s5 + $0x3f8] sm:$0xff]
    %v11421 = vld [vmem:[%s6] sm:$0x1]
    %v11423 = vlaneseq
    %v11424 = vshrl.u32 %v11423, 7
    %v11425 = vsub.s32 0, %v11424
    %v11426 = vrot.slane %v11421, %v11425
    %11428 = vmatprep.subr.mxu0 0.0
    %11429 = vmatpush1.msra.mxu0 %v11308
    %11430 = vmatprep.subr.mxu0 0.0
    %11431 = vmatpush1.msra.mxu0 %v11307
    %11432 = vmatprep.subr.mxu0 0.0
    %11433 = vmatpush1.msra.mxu0 %v11306
    %11434 = vmatprep.subr.mxu0 0.0
    %11435 = vmatpush1.msra.mxu0 %v11305
    %11436 = vmatprep.subr.mxu0 0.0
    %11437 = vmatpush1.msra.mxu0 %v11304
    %11438 = vmatprep.subr.mxu0 0.0
    %11439 = vmatpush1.msra.mxu0 %v11303
    %11440 = vmatprep.subr.mxu0 0.0
    %11441 = vmatpush1.msra.mxu0 %v11302
    %11442 = vmatprep.subr.mxu0 0.0
    %11443 = vmatpush1.msra.mxu0 %v11301
    %11444 = vmatprep.subr.mxu0 0.0
    %11445 = vmatpush1.msra.mxu0 %v11300
    %11446 = vmatprep.subr.mxu0 0.0
    %11447 = vmatpush1.msra.mxu0 %v11299
    %11448 = vmatprep.subr.mxu0 0.0
    %11449 = vmatpush1.msra.mxu0 %v11298
    %11450 = vmatprep.subr.mxu0 0.0
    %11451 = vmatpush1.msra.mxu0 %v11297
    %11452 = vmatprep.subr.mxu0 0.0
    %11453 = vmatpush1.msra.mxu0 %v11296
    %11454 = vmatprep.subr.mxu0 0.0
    %11455 = vmatpush1.msra.mxu0 %v11295
    %11456 = vmatprep.subr.mxu0 0.0
    %11457 = vmatpush1.msra.mxu0 %v11294
    %11458 = vmatprep.subr.mxu0 0.0
    %11459 = vmatpush1.msra.mxu0 %v11293
    %11460 = vmatprep.subr.mxu0 0.0
    %11461 = vmatpush2.msra.mxu0 %v11324
    %11462 = vmatprep.subr.mxu0 0.0
    %11463 = vmatpush2.msra.mxu0 %v11323
    %11464 = vmatprep.subr.mxu0 0.0
    %11465 = vmatpush2.msra.mxu0 %v11322
    %11466 = vmatprep.subr.mxu0 0.0
    %11467 = vmatpush2.msra.mxu0 %v11321
    %11468 = vmatprep.subr.mxu0 0.0
    %11469 = vmatpush2.msra.mxu0 %v11320
    %11470 = vmatprep.subr.mxu0 0.0
    %11471 = vmatpush2.msra.mxu0 %v11319
    %11472 = vmatprep.subr.mxu0 0.0
    %11473 = vmatpush2.msra.mxu0 %v11318
    %11474 = vmatprep.subr.mxu0 0.0
    %11475 = vmatpush2.msra.mxu0 %v11317
    %11476 = vmatprep.subr.mxu0 0.0
    %11477 = vmatpush2.msra.mxu0 %v11316
    %11478 = vmatprep.subr.mxu0 0.0
    %11479 = vmatpush2.msra.mxu0 %v11315
    %11480 = vmatprep.subr.mxu0 0.0
    %11481 = vmatpush2.msra.mxu0 %v11314
    %11482 = vmatprep.subr.mxu0 0.0
    %11483 = vmatpush2.msra.mxu0 %v11313
    %11484 = vmatprep.subr.mxu0 0.0
    %11485 = vmatpush2.msra.mxu0 %v11312
    %11486 = vmatprep.subr.mxu0 0.0
    %11487 = vmatpush2.msra.mxu0 %v11311
    %11488 = vmatprep.subr.mxu0 0.0
    %11489 = vmatpush2.msra.mxu0 %v11310
    %11490 = vmatprep.subr.mxu0 0.0
    %11491 = vmatpush2.msra.mxu0 %v11309
    %11492 = vmatprep.mubr.f32.mxu0 %v11286
    %11493 = vmatmul.mubr.f32.gmra.mxu0 %v11285
    %v11494 = vpop.f32.mrf.mxu0
    %v11495 = vadd.f32 %v11426, %v11494
    %v11496 = vpop.f32.mrf.mxu0
    %11497 = vdwg.mxu0
    %11498 = vmatprep.subr.mxu0 0.0
    %11499 = vmatpush1.msra.mxu0 %v11340
    %11500 = vmatprep.subr.mxu0 0.0
    %11501 = vmatpush1.msra.mxu0 %v11339
    %11502 = vmatprep.subr.mxu0 0.0
    %11503 = vmatpush1.msra.mxu0 %v11338
    %11504 = vmatprep.subr.mxu0 0.0
    %11505 = vmatpush1.msra.mxu0 %v11337
    %11506 = vmatprep.subr.mxu0 0.0
    %11507 = vmatpush1.msra.mxu0 %v11336
    %11508 = vmatprep.subr.mxu0 0.0
    %11509 = vmatpush1.msra.mxu0 %v11335
    %11510 = vmatprep.subr.mxu0 0.0
    %11511 = vmatpush1.msra.mxu0 %v11334
    %11512 = vmatprep.subr.mxu0 0.0
    %11513 = vmatpush1.msra.mxu0 %v11333
    %11514 = vmatprep.subr.mxu0 0.0
    %11515 = vmatpush1.msra.mxu0 %v11332
    %11516 = vmatprep.subr.mxu0 0.0
    %11517 = vmatpush1.msra.mxu0 %v11331
    %11518 = vmatprep.subr.mxu0 0.0
    %11519 = vmatpush1.msra.mxu0 %v11330
    %11520 = vmatprep.subr.mxu0 0.0
    %11521 = vmatpush1.msra.mxu0 %v11329
    %11522 = vmatprep.subr.mxu0 0.0
    %11523 = vmatpush1.msra.mxu0 %v11328
    %11524 = vmatprep.subr.mxu0 0.0
    %11525 = vmatpush1.msra.mxu0 %v11327
    %11526 = vmatprep.subr.mxu0 0.0
    %11527 = vmatpush1.msra.mxu0 %v11326
    %11528 = vmatprep.subr.mxu0 0.0
    %11529 = vmatpush1.msra.mxu0 %v11325
    %11530 = vmatprep.subr.mxu0 0.0
    %11531 = vmatpush2.msra.mxu0 %v11356
    %11532 = vmatprep.subr.mxu0 0.0
    %11533 = vmatpush2.msra.mxu0 %v11355
    %11534 = vmatprep.subr.mxu0 0.0
    %11535 = vmatpush2.msra.mxu0 %v11354
    %11536 = vmatprep.subr.mxu0 0.0
    %11537 = vmatpush2.msra.mxu0 %v11353
    %11538 = vmatprep.subr.mxu0 0.0
    %11539 = vmatpush2.msra.mxu0 %v11352
    %11540 = vmatprep.subr.mxu0 0.0
    %11541 = vmatpush2.msra.mxu0 %v11351
    %11542 = vmatprep.subr.mxu0 0.0
    %11543 = vmatpush2.msra.mxu0 %v11350
    %11544 = vmatprep.subr.mxu0 0.0
    %11545 = vmatpush2.msra.mxu0 %v11349
    %11546 = vmatprep.subr.mxu0 0.0
    %11547 = vmatpush2.msra.mxu0 %v11348
    %11548 = vmatprep.subr.mxu0 0.0
    %11549 = vmatpush2.msra.mxu0 %v11347
    %11550 = vmatprep.subr.mxu0 0.0
    %11551 = vmatpush2.msra.mxu0 %v11346
    %11552 = vmatprep.subr.mxu0 0.0
    %11553 = vmatpush2.msra.mxu0 %v11345
    %11554 = vmatprep.subr.mxu0 0.0
    %11555 = vmatpush2.msra.mxu0 %v11344
    %11556 = vmatprep.subr.mxu0 0.0
    %11557 = vmatpush2.msra.mxu0 %v11343
    %11558 = vmatprep.subr.mxu0 0.0
    %11559 = vmatpush2.msra.mxu0 %v11342
    %11560 = vmatprep.subr.mxu0 0.0
    %11561 = vmatpush2.msra.mxu0 %v11341
    %11562 = vmatprep.mubr.f32.mxu0 %v11288
    %11563 = vmatmul.mubr.f32.gmra.mxu0 %v11287
    %v11564 = vpop.f32.mrf.mxu0
    %v11565 = vadd.f32 %v11495, %v11564
    %v11566 = vpop.f32.mrf.mxu0
    %11567 = vdwg.mxu0
    %11568 = vmatprep.subr.mxu0 0.0
    %11569 = vmatpush1.msra.mxu0 %v11372
    %11570 = vmatprep.subr.mxu0 0.0
    %11571 = vmatpush1.msra.mxu0 %v11371
    %11572 = vmatprep.subr.mxu0 0.0
    %11573 = vmatpush1.msra.mxu0 %v11370
    %11574 = vmatprep.subr.mxu0 0.0
    %11575 = vmatpush1.msra.mxu0 %v11369
    %11576 = vmatprep.subr.mxu0 0.0
    %11577 = vmatpush1.msra.mxu0 %v11368
    %11578 = vmatprep.subr.mxu0 0.0
    %11579 = vmatpush1.msra.mxu0 %v11367
    %11580 = vmatprep.subr.mxu0 0.0
    %11581 = vmatpush1.msra.mxu0 %v11366
    %11582 = vmatprep.subr.mxu0 0.0
    %11583 = vmatpush1.msra.mxu0 %v11365
    %11584 = vmatprep.subr.mxu0 0.0
    %11585 = vmatpush1.msra.mxu0 %v11364
    %11586 = vmatprep.subr.mxu0 0.0
    %11587 = vmatpush1.msra.mxu0 %v11363
    %11588 = vmatprep.subr.mxu0 0.0
    %11589 = vmatpush1.msra.mxu0 %v11362
    %11590 = vmatprep.subr.mxu0 0.0
    %11591 = vmatpush1.msra.mxu0 %v11361
    %11592 = vmatprep.subr.mxu0 0.0
    %11593 = vmatpush1.msra.mxu0 %v11360
    %11594 = vmatprep.subr.mxu0 0.0
    %11595 = vmatpush1.msra.mxu0 %v11359
    %11596 = vmatprep.subr.mxu0 0.0
    %11597 = vmatpush1.msra.mxu0 %v11358
    %11598 = vmatprep.subr.mxu0 0.0
    %11599 = vmatpush1.msra.mxu0 %v11357
    %11600 = vmatprep.subr.mxu0 0.0
    %11601 = vmatpush2.msra.mxu0 %v11388
    %11602 = vmatprep.subr.mxu0 0.0
    %11603 = vmatpush2.msra.mxu0 %v11387
    %11604 = vmatprep.subr.mxu0 0.0
    %11605 = vmatpush2.msra.mxu0 %v11386
    %11606 = vmatprep.subr.mxu0 0.0
    %11607 = vmatpush2.msra.mxu0 %v11385
    %11608 = vmatprep.subr.mxu0 0.0
    %11609 = vmatpush2.msra.mxu0 %v11384
    %11610 = vmatprep.subr.mxu0 0.0
    %11611 = vmatpush2.msra.mxu0 %v11383
    %11612 = vmatprep.subr.mxu0 0.0
    %11613 = vmatpush2.msra.mxu0 %v11382
    %11614 = vmatprep.subr.mxu0 0.0
    %11615 = vmatpush2.msra.mxu0 %v11381
    %11616 = vmatprep.subr.mxu0 0.0
    %11617 = vmatpush2.msra.mxu0 %v11380
    %11618 = vmatprep.subr.mxu0 0.0
    %11619 = vmatpush2.msra.mxu0 %v11379
    %11620 = vmatprep.subr.mxu0 0.0
    %11621 = vmatpush2.msra.mxu0 %v11378
    %11622 = vmatprep.subr.mxu0 0.0
    %11623 = vmatpush2.msra.mxu0 %v11377
    %11624 = vmatprep.subr.mxu0 0.0
    %11625 = vmatpush2.msra.mxu0 %v11376
    %11626 = vmatprep.subr.mxu0 0.0
    %11627 = vmatpush2.msra.mxu0 %v11375
    %11628 = vmatprep.subr.mxu0 0.0
    %11629 = vmatpush2.msra.mxu0 %v11374
    %11630 = vmatprep.subr.mxu0 0.0
    %11631 = vmatpush2.msra.mxu0 %v11373
    %11632 = vmatprep.mubr.f32.mxu0 %v11290
    %11633 = vmatmul.mubr.f32.gmra.mxu0 %v11289
    %v11634 = vpop.f32.mrf.mxu0
    %v11635 = vadd.f32 %v11565, %v11634
    %v11636 = vpop.f32.mrf.mxu0
    %11637 = vdwg.mxu0
    %11638 = vmatprep.subr.mxu0 0.0
    %11639 = vmatpush1.msra.mxu0 %v11404
    %11640 = vmatprep.subr.mxu0 0.0
    %11641 = vmatpush1.msra.mxu0 %v11403
    %11642 = vmatprep.subr.mxu0 0.0
    %11643 = vmatpush1.msra.mxu0 %v11402
    %11644 = vmatprep.subr.mxu0 0.0
    %11645 = vmatpush1.msra.mxu0 %v11401
    %11646 = vmatprep.subr.mxu0 0.0
    %11647 = vmatpush1.msra.mxu0 %v11400
    %11648 = vmatprep.subr.mxu0 0.0
    %11649 = vmatpush1.msra.mxu0 %v11399
    %11650 = vmatprep.subr.mxu0 0.0
    %11651 = vmatpush1.msra.mxu0 %v11398
    %11652 = vmatprep.subr.mxu0 0.0
    %11653 = vmatpush1.msra.mxu0 %v11397
    %11654 = vmatprep.subr.mxu0 0.0
    %11655 = vmatpush1.msra.mxu0 %v11396
    %11656 = vmatprep.subr.mxu0 0.0
    %11657 = vmatpush1.msra.mxu0 %v11395
    %11658 = vmatprep.subr.mxu0 0.0
    %11659 = vmatpush1.msra.mxu0 %v11394
    %11660 = vmatprep.subr.mxu0 0.0
    %11661 = vmatpush1.msra.mxu0 %v11393
    %11662 = vmatprep.subr.mxu0 0.0
    %11663 = vmatpush1.msra.mxu0 %v11392
    %11664 = vmatprep.subr.mxu0 0.0
    %11665 = vmatpush1.msra.mxu0 %v11391
    %11666 = vmatprep.subr.mxu0 0.0
    %11667 = vmatpush1.msra.mxu0 %v11390
    %11668 = vmatprep.subr.mxu0 0.0
    %11669 = vmatpush1.msra.mxu0 %v11389
    %11670 = vmatprep.subr.mxu0 0.0
    %11671 = vmatpush2.msra.mxu0 %v11420
    %11672 = vmatprep.subr.mxu0 0.0
    %11673 = vmatpush2.msra.mxu0 %v11419
    %11674 = vmatprep.subr.mxu0 0.0
    %11675 = vmatpush2.msra.mxu0 %v11418
    %11676 = vmatprep.subr.mxu0 0.0
    %11677 = vmatpush2.msra.mxu0 %v11417
    %11678 = vmatprep.subr.mxu0 0.0
    %11679 = vmatpush2.msra.mxu0 %v11416
    %11680 = vmatprep.subr.mxu0 0.0
    %11681 = vmatpush2.msra.mxu0 %v11415
    %11682 = vmatprep.subr.mxu0 0.0
    %11683 = vmatpush2.msra.mxu0 %v11414
    %11684 = vmatprep.subr.mxu0 0.0
    %11685 = vmatpush2.msra.mxu0 %v11413
    %11686 = vmatprep.subr.mxu0 0.0
    %11687 = vmatpush2.msra.mxu0 %v11412
    %11688 = vmatprep.subr.mxu0 0.0
    %11689 = vmatpush2.msra.mxu0 %v11411
    %11690 = vmatprep.subr.mxu0 0.0
    %11691 = vmatpush2.msra.mxu0 %v11410
    %11692 = vmatprep.subr.mxu0 0.0
    %11693 = vmatpush2.msra.mxu0 %v11409
    %11694 = vmatprep.subr.mxu0 0.0
    %11695 = vmatpush2.msra.mxu0 %v11408
    %11696 = vmatprep.subr.mxu0 0.0
    %11697 = vmatpush2.msra.mxu0 %v11407
    %11698 = vmatprep.subr.mxu0 0.0
    %11699 = vmatpush2.msra.mxu0 %v11406
    %11700 = vmatprep.subr.mxu0 0.0
    %11701 = vmatpush2.msra.mxu0 %v11405
    %11702 = vmatprep.mubr.f32.mxu0 %v11292
    %11703 = vmatmul.mubr.f32.gmra.mxu0 %v11291
    %v11704 = vpop.f32.mrf.mxu0
    %v11705 = vadd.f32 %v11635, %v11704
    %v11706 = vpop.f32.mrf.mxu0
    %11707 = vdwg.mxu0
    %vm11708 = vcmask 58368
    %11709 = vst.msk [vmem:[#allocation4] sm:$0x3] %vm11708, %v11705
    // Predicated region
    $region30: #{simple_nn2d_forward.1} parent=1 // pred_check
      _
    $region31: #{simple_nn2d_forward.1} parent=1 // pred_check_branch
      %11711 = sbr.rel (0) target = $region33
    $region32: #{simple_nn2d_forward.1} parent=1 // pred_region
      %s11713 = ssub.s32 32, 32
      %11714 = vsyncadd [#allocation5], %s11713
      %s11716 = sshll.u32 [#allocation4], 4
      %s11717 = int_to_ptr.vmem [resolvable:$true] %s11716
      %11719 = dma.vmem_to_hbm [thread:$0]  %s11717, 32, %s7, [#allocation5]
    $region33: #{simple_nn2d_forward.1} parent=1 // pred_fallthru
      _
    // Predicated region
    $region34: #{simple_nn2d_forward.1} parent=1 // pred_check
      _
    $region35: #{simple_nn2d_forward.1} parent=1 // pred_check_branch
      %11721 = sbr.rel (0) target = $region37
    $region36: #{simple_nn2d_forward.1} parent=1 // pred_region
      %11722 = dma.done [#allocation5], 32
    $region37: #{simple_nn2d_forward.1} parent=1 // pred_fallthru
      _
    %11723 = vsyncpa [#allocation5], 1

</llo_original>
